<compile_context>
chip_gen: v6e
topology: v6e:2x2x1
jax: 0.10.0
libtpu: 0.0.40
codegen_flags: <defaults>
</compile_context>

<pallas_src>
import functools

import jax
import jax.numpy as jnp
from jax.experimental import pallas as pl
from jax.experimental.pallas import tpu as pltpu


VOCAB = 100
MAX_POS = 64
HIDDEN = 32            # bert_dim; lstm_dim == -1 -> hidden_size = bert_dim
NUM_HEADS = 2
HEAD_DIM = HIDDEN // NUM_HEADS
INTER = 64
NUM_LAYERS = 12        # so hs[12] exists
NUM_CLASSES = 4        # len(punctuation_dict)

_INV_SQRT2 = 0.7071067811865476


def _layernorm(x, g, b):
    mu = jnp.mean(x, axis=-1, keepdims=True)
    var = jnp.mean((x - mu) ** 2, axis=-1, keepdims=True)
    return (x - mu) * jax.lax.rsqrt(var + 1e-12) * g + b


# ---------------------------------------------------------------------------
# Kernel 1: fused 12-layer BERT encoder (single pallas_call, grid over layers)
# ---------------------------------------------------------------------------
def _encoder_kernel(emb_ref, embln_ref, mask_ref,
                    wqkv_ref, wo_ref, w1_ref, w2_ref, vec_ref,
                    hs0_ref, hs6_ref, hs12_ref,
                    x_sc, *, H, nH, dh, scale, inter):
    l = pl.program_id(0)

    @pl.when(l == 0)
    def _():
        # embedding LayerNorm (BERT embeddings output == hs[0])
        x0 = _layernorm(emb_ref[...], embln_ref[0:1, :], embln_ref[1:2, :])
        x_sc[...] = x0
        hs0_ref[...] = x0

    x = x_sc[...]                                            # [B*S, H]

    # Packed per-layer bias / LN vectors: [8, 3H] (one DMA instead of eight).
    vec = vec_ref[...]
    bqkv = vec[0:1, :]                                       # [1, 3H]
    bo = vec[1:2, 0:H]
    ln1g = vec[2:3, 0:H]
    ln1b = vec[3:4, 0:H]
    b1 = vec[4:5, 0:inter]
    b2 = vec[5:6, 0:H]
    ln2g = vec[6:7, 0:H]
    ln2b = vec[7:8, 0:H]

    # --- self-attention: fused QKV, per-head 2-D attention with a
    #     block-diagonal additive mask, output projection accumulated per head.
    qkv = jnp.dot(x, wqkv_ref[...], preferred_element_type=jnp.float32) + bqkv
    mask = mask_ref[...]                                     # [B*S, B*S] additive
    attn = bo                                                # (1, H) -> broadcasts
    for h in range(nH):
        q = qkv[:, h * dh:(h + 1) * dh]
        k = qkv[:, H + h * dh:H + (h + 1) * dh]
        v = qkv[:, 2 * H + h * dh:2 * H + (h + 1) * dh]
        s = jnp.dot(q, k.T, preferred_element_type=jnp.float32) * scale + mask
        p = jax.nn.softmax(s, axis=-1)
        ctx = jnp.dot(p, v, preferred_element_type=jnp.float32)      # [B*S, dh]
        attn = attn + jnp.dot(ctx, wo_ref[h * dh:(h + 1) * dh, :],
                              preferred_element_type=jnp.float32)

    x1 = _layernorm(x + attn, ln1g, ln1b)                    # fused LN1

    # --- feed-forward with fused residual + LayerNorm epilogue
    h1 = jnp.dot(x1, w1_ref[...], preferred_element_type=jnp.float32) + b1
    h1 = 0.5 * h1 * (1.0 + jax.lax.erf(h1 * _INV_SQRT2))     # exact GELU
    h2 = jnp.dot(h1, w2_ref[...], preferred_element_type=jnp.float32) + b2
    x2 = _layernorm(x1 + h2, ln2g, ln2b)                     # fused LN2
    x_sc[...] = x2

    @pl.when(l == 5)
    def _():
        hs6_ref[...] = x2                                    # hs[6]

    @pl.when(l == pl.num_programs(0) - 1)
    def _():
        hs12_ref[...] = x2                                   # hs[12] == last hidden


def bert_encoder(emb2, full_mask, p):
    BS, H = emb2.shape
    L = NUM_LAYERS
    kernel = functools.partial(_encoder_kernel, H=H, nH=NUM_HEADS, dh=HEAD_DIM,
                               scale=1.0 / (HEAD_DIM ** 0.5), inter=INTER)
    const2 = lambda l: (0, 0)
    layer3 = lambda l: (l, 0, 0)
    out_sds = jax.ShapeDtypeStruct((BS, H), jnp.float32)
    return pl.pallas_call(
        kernel,
        out_shape=(out_sds, out_sds, out_sds),
        grid=(L,),
        in_specs=[
            pl.BlockSpec((BS, H), const2),                   # raw embedding sum
            pl.BlockSpec((2, H), const2),                    # emb LN gamma/beta
            pl.BlockSpec((BS, BS), const2),                  # additive attn mask
            pl.BlockSpec((None, H, 3 * H), layer3),          # W_qkv   (streamed)
            pl.BlockSpec((None, H, H), layer3),              # W_o
            pl.BlockSpec((None, H, INTER), layer3),          # W_ffn1
            pl.BlockSpec((None, INTER, H), layer3),          # W_ffn2
            pl.BlockSpec((None, 8, 3 * H), layer3),          # packed bias/LN vecs
        ],
        out_specs=(pl.BlockSpec((BS, H), const2),
                   pl.BlockSpec((BS, H), const2),
                   pl.BlockSpec((BS, H), const2)),
        scratch_shapes=[pltpu.VMEM((BS, H), jnp.float32)],
        compiler_params=pltpu.CompilerParams(
            dimension_semantics=("arbitrary",)),             # layer recurrence
    )(emb2, p["emb_ln"], full_mask,
      p["wqkv"], p["wo"], p["w1"], p["w2"], p["vecs"])


# ---------------------------------------------------------------------------
# Kernel 2: fused bidirectional LSTM + linear head (single pallas_call)
# ---------------------------------------------------------------------------
def _bilstm_head_kernel(x_ref, wih_ref, whh_ref, b_ref, wl_ref, bl_ref, out_ref,
                        h_sc, *, B, S, H, C):
    # PyTorch gate order (i, f, g, o); weights stored as [dir, H, 4H] so every
    # recurrence step is ONE lane-dense [1,H]x[H,4H] matmul (4H = 128 lanes).
    for d in range(2):                                       # 0=fwd, 1=bwd
        wih = wih_ref[d]                                     # [H, 4H]
        whh = whh_ref[d]                                     # [H, 4H]
        bg = b_ref[d]                                        # [1, 4H]
        for b in range(B):                                   # B=2, unrolled
            xb = x_ref[b * S:(b + 1) * S, :]                 # [S, H]
            # input-gate contributions for all timesteps in one matmul
            xg = jnp.dot(xb, wih, preferred_element_type=jnp.float32) + bg  # [S,4H]
            h = jnp.zeros((1, H), jnp.float32)
            c = jnp.zeros((1, H), jnp.float32)
            for t in range(S):                               # fully unrolled (S=8)
                pos = t if d == 0 else S - 1 - t             # bwd reads reversed
                gates = xg[pos:pos + 1, :] + jnp.dot(
                    h, whh, preferred_element_type=jnp.float32)        # [1, 4H]
                i = jax.nn.sigmoid(gates[:, 0:H])
                f = jax.nn.sigmoid(gates[:, H:2 * H])
                g_ = jnp.tanh(gates[:, 2 * H:3 * H])
                o = jax.nn.sigmoid(gates[:, 3 * H:4 * H])
                c = f * c + i * g_
                h = o * jnp.tanh(c)
                row = d * (B * S) + b * S + pos              # static
                h_sc[row:row + 1, :] = h

    # fused linear head: logits = h_fwd @ W_f + h_bwd @ W_b + bias, one store.
    hf = h_sc[0:B * S, :]                                    # [B*S, H]
    hb = h_sc[B * S:2 * B * S, :]                            # [B*S, H]
    out_ref[...] = (
        jnp.dot(hf, wl_ref[0:H, :], preferred_element_type=jnp.float32)
        + jnp.dot(hb, wl_ref[H:2 * H, :], preferred_element_type=jnp.float32)
        + bl_ref[...])


def bilstm_head(x2, p, B, S):
    BS, H = x2.shape
    C = p["lin_w"].shape[1]
    kernel = functools.partial(_bilstm_head_kernel, B=B, S=S, H=H, C=C)
    const2 = lambda i: (0, 0)
    const3 = lambda i: (0, 0, 0)
    return pl.pallas_call(
        kernel,
        out_shape=jax.ShapeDtypeStruct((BS, C), jnp.float32),
        grid=(1,),
        in_specs=[
            pl.BlockSpec((BS, H), const2),                   # last hidden state
            pl.BlockSpec((2, H, 4 * H), const3),             # W_ih^T per dir (i|f|g|o)
            pl.BlockSpec((2, H, 4 * H), const3),             # W_hh^T per dir
            pl.BlockSpec((2, 1, 4 * H), const3),             # b_ih + b_hh per dir
            pl.BlockSpec((2 * H, C), const2),                # linear.weight^T
            pl.BlockSpec((1, C), const2),                    # linear.bias
        ],
        out_specs=pl.BlockSpec((BS, C), const2),
        scratch_shapes=[pltpu.VMEM((2 * BS, H), jnp.float32)],
    )(x2, p["lstm_wih"], p["lstm_whh"], p["lstm_b"], p["lin_w"], p["lin_b"])


# ---------------------------------------------------------------------------
# Parameters & forward pass
# ---------------------------------------------------------------------------
def init_params(key):
    scale = 0.02

    def norm(k, shape):
        return scale * jax.random.normal(k, shape, dtype=jnp.float32)

    ks = iter(jax.random.split(key, 12))
    L, H = NUM_LAYERS, HIDDEN

    # packed per-layer bias / LayerNorm vectors: [L, 8, 3H]
    #   row 0: b_qkv (3H) | 1: b_o | 2: ln1_g | 3: ln1_b | 4: b_ffn1 (INTER)
    #   row 5: b_ffn2     | 6: ln2_g | 7: ln2_b
    vecs = jnp.zeros((L, 8, 3 * H), jnp.float32)
    vecs = vecs.at[:, 2, :H].set(1.0)     # ln1 gamma
    vecs = vecs.at[:, 6, :H].set(1.0)     # ln2 gamma

    emb_ln = jnp.concatenate([jnp.ones((1, H), jnp.float32),     # gamma
                              jnp.zeros((1, H), jnp.float32)])   # beta

    p = {
        "word_emb": norm(next(ks), (VOCAB, H)),
        "pos_emb": norm(next(ks), (MAX_POS, H)),
        "type_emb": norm(next(ks), (2, H)),
        "emb_ln": emb_ln,
        # stacked per-layer encoder weights (streamed layer-by-layer)
        "wqkv": norm(next(ks), (L, H, 3 * H)),
        "wo": norm(next(ks), (L, H, H)),
        "w1": norm(next(ks), (L, H, INTER)),
        "w2": norm(next(ks), (L, INTER, H)),
        "vecs": vecs,
        # BiLSTM: [dir, H, 4H] = W^T with gates (i|f|g|o) along the lane axis
        "lstm_wih": norm(next(ks), (2, H, 4 * H)),
        "lstm_whh": norm(next(ks), (2, H, 4 * H)),
        "lstm_b": jnp.zeros((2, 1, 4 * H), jnp.float32),     # b_ih + b_hh combined
        # classifier head (= linear.weight^T, bias)
        "lin_w": norm(next(ks), (2 * H, NUM_CLASSES)),
        "lin_b": jnp.zeros((1, NUM_CLASSES), jnp.float32),
    }
    return p


def teacher_forward(params, input_ids, attention_mask):
    B, S = input_ids.shape
    H = HIDDEN

    # --- BERT embeddings (LayerNorm runs inside the encoder kernel at l==0)
    # TODO(synk): embedding table gather stays in XLA; a Pallas DMA-gather adds
    # no value at this size.
    emb = (jnp.take(params["word_emb"], input_ids, axis=0)
           + params["pos_emb"][:S][None, :, :]
           + params["type_emb"][0][None, None, :])
    emb2 = emb.reshape(B * S, H)

    # Block-diagonal additive attention mask over flattened (b, s) rows/keys:
    # same-batch keys get the usual 0 / -10000 key mask, cross-batch keys -1e9.
    key_bias = ((1.0 - attention_mask.astype(jnp.float32)) * -10000.0).reshape(1, B * S)
    same_batch = jnp.kron(jnp.eye(B, dtype=jnp.float32),
                          jnp.ones((S, S), jnp.float32))
    full_mask = jnp.where(same_batch > 0.5,
                          jnp.broadcast_to(key_bias, (B * S, B * S)),
                          jnp.float32(-1e9))

    hs0, hs6, hs12 = bert_encoder(emb2, full_mask, params)      # each [B*S, H]

    # --- BiLSTM + linear head (seq-major transpose & reversal are folded into
    #     in-kernel per-batch/per-step slicing; no HBM transposes / reshapes)
    logits = bilstm_head(hs12, params, B, S).reshape(B, S, NUM_CLASSES)

    return (logits,
            hs0.reshape(B, S, H),
            hs6.reshape(B, S, H),
            hs12.reshape(B, S, H))


if __name__ == "__main__":
    B, S = 2, 8
    key = jax.random.PRNGKey(0)
    kp, ki = jax.random.split(key)
    params = init_params(kp)
    input_ids = jax.random.randint(ki, (B, S), 0, VOCAB, dtype=jnp.int32)
    attention_mask = jnp.ones((B, S), dtype=jnp.int32).at[1, -2:].set(0)

    fwd = jax.jit(teacher_forward)
    logits, h0, h6, h12 = fwd(params, input_ids, attention_mask)
    jax.block_until_ready((logits, h0, h6, h12))

    assert logits.shape == (B, S, NUM_CLASSES)
    assert h0.shape == (B, S, HIDDEN)
    assert h6.shape == (B, S, HIDDEN)
    assert h12.shape == (B, S, HIDDEN)
    assert bool(jnp.isfinite(logits).all())
    print("KERNEL_OK")
</pallas_src>

<mosaic_0001>
module attributes {stable_mosaic.version = 11 : i64} {
  func.func @_encoder_kernel(%arg0: i32, %arg1: memref<16x32xf32, #tpu.memory_space<vmem>>, %arg2: memref<2x32xf32, #tpu.memory_space<vmem>>, %arg3: memref<16x16xf32, #tpu.memory_space<vmem>>, %arg4: memref<1x32x96xf32, #tpu.memory_space<vmem>>, %arg5: memref<1x32x32xf32, #tpu.memory_space<vmem>>, %arg6: memref<1x32x64xf32, #tpu.memory_space<vmem>>, %arg7: memref<1x64x32xf32, #tpu.memory_space<vmem>>, %arg8: memref<1x8x96xf32, #tpu.memory_space<vmem>>, %arg9: memref<16x32xf32, #tpu.memory_space<vmem>>, %arg10: memref<16x32xf32, #tpu.memory_space<vmem>>, %arg11: memref<16x32xf32, #tpu.memory_space<vmem>>, %arg12: memref<16x32xf32, #tpu.memory_space<vmem>>) attributes {dimension_semantics = [#tpu.dimension_semantics<arbitrary>], iteration_bounds = array<i64: 12>, scalar_prefetch = 0 : i64, scratch_operands = 1 : i64, tpu.core_type = #tpu.core_type<tc>, window_params = [{pipeline_mode = #tpu.pipeline_mode<synchronous>, transform_indices = @transform_0, window_bounds = array<i64: 16, 32>}, {pipeline_mode = #tpu.pipeline_mode<synchronous>, transform_indices = @transform_1, window_bounds = array<i64: 2, 32>}, {pipeline_mode = #tpu.pipeline_mode<synchronous>, transform_indices = @transform_2, window_bounds = array<i64: 16, 16>}, {transform_indices = @transform_3, window_bounds = array<i64: 1, 32, 96>}, {transform_indices = @transform_4, window_bounds = array<i64: 1, 32, 32>}, {transform_indices = @transform_5, window_bounds = array<i64: 1, 32, 64>}, {transform_indices = @transform_6, window_bounds = array<i64: 1, 64, 32>}, {transform_indices = @transform_7, window_bounds = array<i64: 1, 8, 96>}, {pipeline_mode = #tpu.pipeline_mode<synchronous>, transform_indices = @transform_8, window_bounds = array<i64: 16, 32>}, {pipeline_mode = #tpu.pipeline_mode<synchronous>, transform_indices = @transform_9, window_bounds = array<i64: 16, 32>}, {pipeline_mode = #tpu.pipeline_mode<synchronous>, transform_indices = @transform_10, window_bounds = array<i64: 16, 32>}]} {
    %c0_i32 = arith.constant 0 : i32
    %0 = arith.cmpi eq, %arg0, %c0_i32 : i32
    %1 = arith.extui %0 : i1 to i32
    %c0_i32_0 = arith.constant 0 : i32
    %2 = arith.cmpi ne, %1, %c0_i32_0 : i32
    scf.if %2 {
      %c0_54 = arith.constant 0 : index
      %c0_55 = arith.constant 0 : index
      %140 = vector.load %arg1[%c0_54, %c0_55] : memref<16x32xf32, #tpu.memory_space<vmem>>, vector<16x32xf32>
      %c0_56 = arith.constant 0 : index
      %c0_57 = arith.constant 0 : index
      %141 = vector.load %arg2[%c0_56, %c0_57] : memref<2x32xf32, #tpu.memory_space<vmem>>, vector<1x32xf32>
      %c1 = arith.constant 1 : index
      %c0_58 = arith.constant 0 : index
      %142 = vector.load %arg2[%c1, %c0_58] : memref<2x32xf32, #tpu.memory_space<vmem>>, vector<1x32xf32>
      %cst_59 = arith.constant dense<0.000000e+00> : vector<16xf32>
      %143 = vector.multi_reduction <add>, %140, %cst_59 [1] : vector<16x32xf32> to vector<16xf32>
      %144 = vector.shape_cast %143 : vector<16xf32> to vector<16x1xf32>
      %cst_60 = arith.constant 3.200000e+01 : f32
      %145 = vector.broadcast %cst_60 : f32 to vector<16x1xf32>
      %146 = arith.divf %144, %145 : vector<16x1xf32>
      %147 = vector.broadcast %146 : vector<16x1xf32> to vector<16x32xf32>
      %148 = arith.subf %140, %147 : vector<16x32xf32>
      %149 = arith.mulf %148, %148 : vector<16x32xf32>
      %cst_61 = arith.constant dense<0.000000e+00> : vector<16xf32>
      %150 = vector.multi_reduction <add>, %149, %cst_61 [1] : vector<16x32xf32> to vector<16xf32>
      %151 = vector.shape_cast %150 : vector<16xf32> to vector<16x1xf32>
      %cst_62 = arith.constant 3.200000e+01 : f32
      %152 = vector.broadcast %cst_62 : f32 to vector<16x1xf32>
      %153 = arith.divf %151, %152 : vector<16x1xf32>
      %154 = vector.broadcast %146 : vector<16x1xf32> to vector<16x32xf32>
      %155 = arith.subf %140, %154 : vector<16x32xf32>
      %cst_63 = arith.constant 9.99999996E-13 : f32
      %156 = vector.broadcast %cst_63 : f32 to vector<16x1xf32>
      %157 = arith.addf %153, %156 : vector<16x1xf32>
      %158 = math.rsqrt %157 : vector<16x1xf32>
      %159 = vector.broadcast %158 : vector<16x1xf32> to vector<16x32xf32>
      %160 = arith.mulf %155, %159 : vector<16x32xf32>
      %161 = vector.broadcast %141 : vector<1x32xf32> to vector<16x32xf32>
      %162 = arith.mulf %160, %161 : vector<16x32xf32>
      %163 = vector.broadcast %142 : vector<1x32xf32> to vector<16x32xf32>
      %164 = arith.addf %162, %163 : vector<16x32xf32>
      %c0_64 = arith.constant 0 : index
      %c0_65 = arith.constant 0 : index
      %165 = vector.load %arg12[%c0_64, %c0_65] : memref<16x32xf32, #tpu.memory_space<vmem>>, vector<16x32xf32>
      tpu.vector_store %arg12[%c0_64, %c0_65], %164 {strides = array<i32>} : memref<16x32xf32, #tpu.memory_space<vmem>>, vector<16x32xf32>,
      %c0_66 = arith.constant 0 : index
      %c0_67 = arith.constant 0 : index
      %166 = vector.load %arg9[%c0_66, %c0_67] : memref<16x32xf32, #tpu.memory_space<vmem>>, vector<16x32xf32>
      tpu.vector_store %arg9[%c0_66, %c0_67], %164 {strides = array<i32>} : memref<16x32xf32, #tpu.memory_space<vmem>>, vector<16x32xf32>,
    } else {
    }
    %c0 = arith.constant 0 : index
    %c0_1 = arith.constant 0 : index
    %3 = vector.load %arg12[%c0, %c0_1] : memref<16x32xf32, #tpu.memory_space<vmem>>, vector<16x32xf32>
    %c0_2 = arith.constant 0 : index
    %c0_3 = arith.constant 0 : index
    %c0_4 = arith.constant 0 : index
    %4 = vector.load %arg8[%c0_2, %c0_3, %c0_4] : memref<1x8x96xf32, #tpu.memory_space<vmem>>, vector<1x8x96xf32>
    %5 = vector.shape_cast %4 : vector<1x8x96xf32> to vector<8x96xf32>
    %6 = vector.extract_strided_slice %5 {offsets = [0, 0], sizes = [1, 96], strides = [1, 1]} : vector<8x96xf32> to vector<1x96xf32>
    %7 = vector.extract_strided_slice %5 {offsets = [1, 0], sizes = [1, 32], strides = [1, 1]} : vector<8x96xf32> to vector<1x32xf32>
    %8 = vector.extract_strided_slice %5 {offsets = [2, 0], sizes = [1, 32], strides = [1, 1]} : vector<8x96xf32> to vector<1x32xf32>
    %9 = vector.extract_strided_slice %5 {offsets = [3, 0], sizes = [1, 32], strides = [1, 1]} : vector<8x96xf32> to vector<1x32xf32>
    %10 = vector.extract_strided_slice %5 {offsets = [4, 0], sizes = [1, 64], strides = [1, 1]} : vector<8x96xf32> to vector<1x64xf32>
    %11 = vector.extract_strided_slice %5 {offsets = [5, 0], sizes = [1, 32], strides = [1, 1]} : vector<8x96xf32> to vector<1x32xf32>
    %12 = vector.extract_strided_slice %5 {offsets = [6, 0], sizes = [1, 32], strides = [1, 1]} : vector<8x96xf32> to vector<1x32xf32>
    %13 = vector.extract_strided_slice %5 {offsets = [7, 0], sizes = [1, 32], strides = [1, 1]} : vector<8x96xf32> to vector<1x32xf32>
    %c0_5 = arith.constant 0 : index
    %c0_6 = arith.constant 0 : index
    %c0_7 = arith.constant 0 : index
    %14 = vector.load %arg4[%c0_5, %c0_6, %c0_7] : memref<1x32x96xf32, #tpu.memory_space<vmem>>, vector<1x32x96xf32>
    %15 = vector.shape_cast %14 : vector<1x32x96xf32> to vector<32x96xf32>
    %cst = arith.constant dense<0.000000e+00> : vector<16x96xf32>
    %16 = tpu.matmul %3, %15, %cst {dimension_numbers = #tpu.dot_dimension_numbers<[1], [0], [0], [1], [0, 0, 1, 1], [], []>} : vector<16x32xf32>, vector<32x96xf32>, vector<16x96xf32> -> vector<16x96xf32>
    %17 = vector.broadcast %6 : vector<1x96xf32> to vector<16x96xf32>
    %18 = arith.addf %16, %17 : vector<16x96xf32>
    %c0_8 = arith.constant 0 : index
    %c0_9 = arith.constant 0 : index
    %19 = vector.load %arg3[%c0_8, %c0_9] : memref<16x16xf32, #tpu.memory_space<vmem>>, vector<16x16xf32>
    %20 = vector.extract_strided_slice %18 {offsets = [0, 0], sizes = [16, 16], strides = [1, 1]} : vector<16x96xf32> to vector<16x16xf32>
    %21 = vector.extract_strided_slice %18 {offsets = [0, 32], sizes = [16, 16], strides = [1, 1]} : vector<16x96xf32> to vector<16x16xf32>
    %22 = vector.extract_strided_slice %18 {offsets = [0, 64], sizes = [16, 16], strides = [1, 1]} : vector<16x96xf32> to vector<16x16xf32>
    %23 = tpu.transpose %21, [1, 0] : vector<16x16xf32> -> vector<16x16xf32>
    %cst_10 = arith.constant dense<0.000000e+00> : vector<16x16xf32>
    %24 = tpu.matmul %20, %23, %cst_10 {dimension_numbers = #tpu.dot_dimension_numbers<[1], [0], [0], [1], [0, 0, 1, 1], [], []>} : vector<16x16xf32>, vector<16x16xf32>, vector<16x16xf32> -> vector<16x16xf32>
    %cst_11 = arith.constant 2.500000e-01 : f32
    %25 = vector.broadcast %cst_11 : f32 to vector<16x16xf32>
    %26 = arith.mulf %24, %25 : vector<16x16xf32>
    %27 = arith.addf %26, %19 : vector<16x16xf32>
    %cst_12 = arith.constant dense<0xFF800000> : vector<16xf32>
    %28 = vector.multi_reduction <maximumf>, %27, %cst_12 [1] : vector<16x16xf32> to vector<16xf32>
    %cst_13 = arith.constant 0xFF800000 : f32
    %29 = vector.broadcast %cst_13 : f32 to vector<16xf32>
    %30 = arith.maximumf %29, %28 : vector<16xf32>
    %31 = vector.shape_cast %30 : vector<16xf32> to vector<16x1xf32>
    %32 = vector.broadcast %31 : vector<16x1xf32> to vector<16x16xf32>
    %33 = arith.subf %27, %32 : vector<16x16xf32>
    %34 = math.exp %33 : vector<16x16xf32>
    %cst_14 = arith.constant dense<0.000000e+00> : vector<16xf32>
    %35 = vector.multi_reduction <add>, %34, %cst_14 [1] : vector<16x16xf32> to vector<16xf32>
    %36 = vector.shape_cast %35 : vector<16xf32> to vector<16x1xf32>
    %37 = vector.broadcast %36 : vector<16x1xf32> to vector<16x16xf32>
    %38 = arith.divf %34, %37 : vector<16x16xf32>
    %cst_15 = arith.constant dense<0.000000e+00> : vector<16x16xf32>
    %39 = tpu.matmul %38, %22, %cst_15 {dimension_numbers = #tpu.dot_dimension_numbers<[1], [0], [0], [1], [0, 0, 1, 1], [], []>} : vector<16x16xf32>, vector<16x16xf32>, vector<16x16xf32> -> vector<16x16xf32>
    %c0_16 = arith.constant 0 : index
    %c0_17 = arith.constant 0 : index
    %c0_18 = arith.constant 0 : index
    %40 = vector.load %arg5[%c0_16, %c0_17, %c0_18] : memref<1x32x32xf32, #tpu.memory_space<vmem>>, vector<1x16x32xf32>
    %41 = vector.shape_cast %40 : vector<1x16x32xf32> to vector<16x32xf32>
    %cst_19 = arith.constant dense<0.000000e+00> : vector<16x32xf32>
    %42 = tpu.matmul %39, %41, %cst_19 {dimension_numbers = #tpu.dot_dimension_numbers<[1], [0], [0], [1], [0, 0, 1, 1], [], []>} : vector<16x16xf32>, vector<16x32xf32>, vector<16x32xf32> -> vector<16x32xf32>
    %43 = vector.broadcast %7 : vector<1x32xf32> to vector<16x32xf32>
    %44 = arith.addf %43, %42 : vector<16x32xf32>
    %45 = vector.extract_strided_slice %18 {offsets = [0, 16], sizes = [16, 16], strides = [1, 1]} : vector<16x96xf32> to vector<16x16xf32>
    %46 = vector.extract_strided_slice %18 {offsets = [0, 48], sizes = [16, 16], strides = [1, 1]} : vector<16x96xf32> to vector<16x16xf32>
    %47 = vector.extract_strided_slice %18 {offsets = [0, 80], sizes = [16, 16], strides = [1, 1]} : vector<16x96xf32> to vector<16x16xf32>
    %48 = tpu.transpose %46, [1, 0] : vector<16x16xf32> -> vector<16x16xf32>
    %cst_20 = arith.constant dense<0.000000e+00> : vector<16x16xf32>
    %49 = tpu.matmul %45, %48, %cst_20 {dimension_numbers = #tpu.dot_dimension_numbers<[1], [0], [0], [1], [0, 0, 1, 1], [], []>} : vector<16x16xf32>, vector<16x16xf32>, vector<16x16xf32> -> vector<16x16xf32>
    %cst_21 = arith.constant 2.500000e-01 : f32
    %50 = vector.broadcast %cst_21 : f32 to vector<16x16xf32>
    %51 = arith.mulf %49, %50 : vector<16x16xf32>
    %52 = arith.addf %51, %19 : vector<16x16xf32>
    %cst_22 = arith.constant dense<0xFF800000> : vector<16xf32>
    %53 = vector.multi_reduction <maximumf>, %52, %cst_22 [1] : vector<16x16xf32> to vector<16xf32>
    %cst_23 = arith.constant 0xFF800000 : f32
    %54 = vector.broadcast %cst_23 : f32 to vector<16xf32>
    %55 = arith.maximumf %54, %53 : vector<16xf32>
    %56 = vector.shape_cast %55 : vector<16xf32> to vector<16x1xf32>
    %57 = vector.broadcast %56 : vector<16x1xf32> to vector<16x16xf32>
    %58 = arith.subf %52, %57 : vector<16x16xf32>
    %59 = math.exp %58 : vector<16x16xf32>
    %cst_24 = arith.constant dense<0.000000e+00> : vector<16xf32>
    %60 = vector.multi_reduction <add>, %59, %cst_24 [1] : vector<16x16xf32> to vector<16xf32>
    %61 = vector.shape_cast %60 : vector<16xf32> to vector<16x1xf32>
    %62 = vector.broadcast %61 : vector<16x1xf32> to vector<16x16xf32>
    %63 = arith.divf %59, %62 : vector<16x16xf32>
    %cst_25 = arith.constant dense<0.000000e+00> : vector<16x16xf32>
    %64 = tpu.matmul %63, %47, %cst_25 {dimension_numbers = #tpu.dot_dimension_numbers<[1], [0], [0], [1], [0, 0, 1, 1], [], []>} : vector<16x16xf32>, vector<16x16xf32>, vector<16x16xf32> -> vector<16x16xf32>
    %c0_26 = arith.constant 0 : index
    %c16 = arith.constant 16 : index
    %c0_27 = arith.constant 0 : index
    %65 = vector.load %arg5[%c0_26, %c16, %c0_27] : memref<1x32x32xf32, #tpu.memory_space<vmem>>, vector<1x16x32xf32>
    %66 = vector.shape_cast %65 : vector<1x16x32xf32> to vector<16x32xf32>
    %cst_28 = arith.constant dense<0.000000e+00> : vector<16x32xf32>
    %67 = tpu.matmul %64, %66, %cst_28 {dimension_numbers = #tpu.dot_dimension_numbers<[1], [0], [0], [1], [0, 0, 1, 1], [], []>} : vector<16x16xf32>, vector<16x32xf32>, vector<16x32xf32> -> vector<16x32xf32>
    %68 = arith.addf %44, %67 : vector<16x32xf32>
    %69 = arith.addf %3, %68 : vector<16x32xf32>
    %cst_29 = arith.constant dense<0.000000e+00> : vector<16xf32>
    %70 = vector.multi_reduction <add>, %69, %cst_29 [1] : vector<16x32xf32> to vector<16xf32>
    %71 = vector.shape_cast %70 : vector<16xf32> to vector<16x1xf32>
    %cst_30 = arith.constant 3.200000e+01 : f32
    %72 = vector.broadcast %cst_30 : f32 to vector<16x1xf32>
    %73 = arith.divf %71, %72 : vector<16x1xf32>
    %74 = vector.broadcast %73 : vector<16x1xf32> to vector<16x32xf32>
    %75 = arith.subf %69, %74 : vector<16x32xf32>
    %76 = arith.mulf %75, %75 : vector<16x32xf32>
    %cst_31 = arith.constant dense<0.000000e+00> : vector<16xf32>
    %77 = vector.multi_reduction <add>, %76, %cst_31 [1] : vector<16x32xf32> to vector<16xf32>
    %78 = vector.shape_cast %77 : vector<16xf32> to vector<16x1xf32>
    %cst_32 = arith.constant 3.200000e+01 : f32
    %79 = vector.broadcast %cst_32 : f32 to vector<16x1xf32>
    %80 = arith.divf %78, %79 : vector<16x1xf32>
    %81 = vector.broadcast %73 : vector<16x1xf32> to vector<16x32xf32>
    %82 = arith.subf %69, %81 : vector<16x32xf32>
    %cst_33 = arith.constant 9.99999996E-13 : f32
    %83 = vector.broadcast %cst_33 : f32 to vector<16x1xf32>
    %84 = arith.addf %80, %83 : vector<16x1xf32>
    %85 = math.rsqrt %84 : vector<16x1xf32>
    %86 = vector.broadcast %85 : vector<16x1xf32> to vector<16x32xf32>
    %87 = arith.mulf %82, %86 : vector<16x32xf32>
    %88 = vector.broadcast %8 : vector<1x32xf32> to vector<16x32xf32>
    %89 = arith.mulf %87, %88 : vector<16x32xf32>
    %90 = vector.broadcast %9 : vector<1x32xf32> to vector<16x32xf32>
    %91 = arith.addf %89, %90 : vector<16x32xf32>
    %c0_34 = arith.constant 0 : index
    %c0_35 = arith.constant 0 : index
    %c0_36 = arith.constant 0 : index
    %92 = vector.load %arg6[%c0_34, %c0_35, %c0_36] : memref<1x32x64xf32, #tpu.memory_space<vmem>>, vector<1x32x64xf32>
    %93 = vector.shape_cast %92 : vector<1x32x64xf32> to vector<32x64xf32>
    %cst_37 = arith.constant dense<0.000000e+00> : vector<16x64xf32>
    %94 = tpu.matmul %91, %93, %cst_37 {dimension_numbers = #tpu.dot_dimension_numbers<[1], [0], [0], [1], [0, 0, 1, 1], [], []>} : vector<16x32xf32>, vector<32x64xf32>, vector<16x64xf32> -> vector<16x64xf32>
    %95 = vector.broadcast %10 : vector<1x64xf32> to vector<16x64xf32>
    %96 = arith.addf %94, %95 : vector<16x64xf32>
    %cst_38 = arith.constant 5.000000e-01 : f32
    %97 = vector.broadcast %cst_38 : f32 to vector<16x64xf32>
    %98 = arith.mulf %97, %96 : vector<16x64xf32>
    %cst_39 = arith.constant 0.707106769 : f32
    %99 = vector.broadcast %cst_39 : f32 to vector<16x64xf32>
    %100 = arith.mulf %96, %99 : vector<16x64xf32>
    %101 = math.erf %100 : vector<16x64xf32>
    %cst_40 = arith.constant 1.000000e+00 : f32
    %102 = vector.broadcast %cst_40 : f32 to vector<16x64xf32>
    %103 = arith.addf %102, %101 : vector<16x64xf32>
    %104 = arith.mulf %98, %103 : vector<16x64xf32>
    %c0_41 = arith.constant 0 : index
    %c0_42 = arith.constant 0 : index
    %c0_43 = arith.constant 0 : index
    %105 = vector.load %arg7[%c0_41, %c0_42, %c0_43] : memref<1x64x32xf32, #tpu.memory_space<vmem>>, vector<1x64x32xf32>
    %106 = vector.shape_cast %105 : vector<1x64x32xf32> to vector<64x32xf32>
    %cst_44 = arith.constant dense<0.000000e+00> : vector<16x32xf32>
    %107 = tpu.matmul %104, %106, %cst_44 {dimension_numbers = #tpu.dot_dimension_numbers<[1], [0], [0], [1], [0, 0, 1, 1], [], []>} : vector<16x64xf32>, vector<64x32xf32>, vector<16x32xf32> -> vector<16x32xf32>
    %108 = vector.broadcast %11 : vector<1x32xf32> to vector<16x32xf32>
    %109 = arith.addf %107, %108 : vector<16x32xf32>
    %110 = arith.addf %91, %109 : vector<16x32xf32>
    %cst_45 = arith.constant dense<0.000000e+00> : vector<16xf32>
    %111 = vector.multi_reduction <add>, %110, %cst_45 [1] : vector<16x32xf32> to vector<16xf32>
    %112 = vector.shape_cast %111 : vector<16xf32> to vector<16x1xf32>
    %cst_46 = arith.constant 3.200000e+01 : f32
    %113 = vector.broadcast %cst_46 : f32 to vector<16x1xf32>
    %114 = arith.divf %112, %113 : vector<16x1xf32>
    %115 = vector.broadcast %114 : vector<16x1xf32> to vector<16x32xf32>
    %116 = arith.subf %110, %115 : vector<16x32xf32>
    %117 = arith.mulf %116, %116 : vector<16x32xf32>
    %cst_47 = arith.constant dense<0.000000e+00> : vector<16xf32>
    %118 = vector.multi_reduction <add>, %117, %cst_47 [1] : vector<16x32xf32> to vector<16xf32>
    %119 = vector.shape_cast %118 : vector<16xf32> to vector<16x1xf32>
    %cst_48 = arith.constant 3.200000e+01 : f32
    %120 = vector.broadcast %cst_48 : f32 to vector<16x1xf32>
    %121 = arith.divf %119, %120 : vector<16x1xf32>
    %122 = vector.broadcast %114 : vector<16x1xf32> to vector<16x32xf32>
    %123 = arith.subf %110, %122 : vector<16x32xf32>
    %cst_49 = arith.constant 9.99999996E-13 : f32
    %124 = vector.broadcast %cst_49 : f32 to vector<16x1xf32>
    %125 = arith.addf %121, %124 : vector<16x1xf32>
    %126 = math.rsqrt %125 : vector<16x1xf32>
    %127 = vector.broadcast %126 : vector<16x1xf32> to vector<16x32xf32>
    %128 = arith.mulf %123, %127 : vector<16x32xf32>
    %129 = vector.broadcast %12 : vector<1x32xf32> to vector<16x32xf32>
    %130 = arith.mulf %128, %129 : vector<16x32xf32>
    %131 = vector.broadcast %13 : vector<1x32xf32> to vector<16x32xf32>
    %132 = arith.addf %130, %131 : vector<16x32xf32>
    %c0_50 = arith.constant 0 : index
    %c0_51 = arith.constant 0 : index
    %133 = vector.load %arg12[%c0_50, %c0_51] : memref<16x32xf32, #tpu.memory_space<vmem>>, vector<16x32xf32>
    tpu.vector_store %arg12[%c0_50, %c0_51], %132 {strides = array<i32>} : memref<16x32xf32, #tpu.memory_space<vmem>>, vector<16x32xf32>,
    %c5_i32 = arith.constant 5 : i32
    %134 = arith.cmpi eq, %arg0, %c5_i32 : i32
    %135 = arith.extui %134 : i1 to i32
    %c0_i32_52 = arith.constant 0 : i32
    %136 = arith.cmpi ne, %135, %c0_i32_52 : i32
    scf.if %136 {
      %c0_54 = arith.constant 0 : index
      %c0_55 = arith.constant 0 : index
      %140 = vector.load %arg10[%c0_54, %c0_55] : memref<16x32xf32, #tpu.memory_space<vmem>>, vector<16x32xf32>
      tpu.vector_store %arg10[%c0_54, %c0_55], %132 {strides = array<i32>} : memref<16x32xf32, #tpu.memory_space<vmem>>, vector<16x32xf32>,
    } else {
    }
    %c11_i32 = arith.constant 11 : i32
    %137 = arith.cmpi eq, %arg0, %c11_i32 : i32
    %138 = arith.extui %137 : i1 to i32
    %c0_i32_53 = arith.constant 0 : i32
    %139 = arith.cmpi ne, %138, %c0_i32_53 : i32
    scf.if %139 {
      %c0_54 = arith.constant 0 : index
      %c0_55 = arith.constant 0 : index
      %140 = vector.load %arg11[%c0_54, %c0_55] : memref<16x32xf32, #tpu.memory_space<vmem>>, vector<16x32xf32>
      tpu.vector_store %arg11[%c0_54, %c0_55], %132 {strides = array<i32>} : memref<16x32xf32, #tpu.memory_space<vmem>>, vector<16x32xf32>,
    } else {
    }
    return
  }
  func.func @transform_0(%arg0: i32) -> (i32, i32) {
    %c0_i32 = arith.constant 0 : i32
    %c0_i32_0 = arith.constant 0 : i32
    %c0_i32_1 = arith.constant 0 : i32
    return %c0_i32, %c0_i32_0 : i32, i32
  }
  func.func @transform_1(%arg0: i32) -> (i32, i32) {
    %c0_i32 = arith.constant 0 : i32
    %c0_i32_0 = arith.constant 0 : i32
    %c0_i32_1 = arith.constant 0 : i32
    return %c0_i32, %c0_i32_0 : i32, i32
  }
  func.func @transform_2(%arg0: i32) -> (i32, i32) {
    %c0_i32 = arith.constant 0 : i32
    %c0_i32_0 = arith.constant 0 : i32
    %c0_i32_1 = arith.constant 0 : i32
    return %c0_i32, %c0_i32_0 : i32, i32
  }
  func.func @transform_3(%arg0: i32) -> (i32, i32, i32) {
    %c0_i32 = arith.constant 0 : i32
    %c0_i32_0 = arith.constant 0 : i32
    %c0_i32_1 = arith.constant 0 : i32
    return %arg0, %c0_i32, %c0_i32_0 : i32, i32, i32
  }
  func.func @transform_4(%arg0: i32) -> (i32, i32, i32) {
    %c0_i32 = arith.constant 0 : i32
    %c0_i32_0 = arith.constant 0 : i32
    %c0_i32_1 = arith.constant 0 : i32
    return %arg0, %c0_i32, %c0_i32_0 : i32, i32, i32
  }
  func.func @transform_5(%arg0: i32) -> (i32, i32, i32) {
    %c0_i32 = arith.constant 0 : i32
    %c0_i32_0 = arith.constant 0 : i32
    %c0_i32_1 = arith.constant 0 : i32
    return %arg0, %c0_i32, %c0_i32_0 : i32, i32, i32
  }
  func.func @transform_6(%arg0: i32) -> (i32, i32, i32) {
    %c0_i32 = arith.constant 0 : i32
    %c0_i32_0 = arith.constant 0 : i32
    %c0_i32_1 = arith.constant 0 : i32
    return %arg0, %c0_i32, %c0_i32_0 : i32, i32, i32
  }
  func.func @transform_7(%arg0: i32) -> (i32, i32, i32) {
    %c0_i32 = arith.constant 0 : i32
    %c0_i32_0 = arith.constant 0 : i32
    %c0_i32_1 = arith.constant 0 : i32
    return %arg0, %c0_i32, %c0_i32_0 : i32, i32, i32
  }
  func.func @transform_8(%arg0: i32) -> (i32, i32) {
    %c0_i32 = arith.constant 0 : i32
    %c0_i32_0 = arith.constant 0 : i32
    %c0_i32_1 = arith.constant 0 : i32
    return %c0_i32, %c0_i32_0 : i32, i32
  }
  func.func @transform_9(%arg0: i32) -> (i32, i32) {
    %c0_i32 = arith.constant 0 : i32
    %c0_i32_0 = arith.constant 0 : i32
    %c0_i32_1 = arith.constant 0 : i32
    return %c0_i32, %c0_i32_0 : i32, i32
  }
  func.func @transform_10(%arg0: i32) -> (i32, i32) {
    %c0_i32 = arith.constant 0 : i32
    %c0_i32_0 = arith.constant 0 : i32
    %c0_i32_1 = arith.constant 0 : i32
    return %c0_i32, %c0_i32_0 : i32, i32
  }
}

module attributes {stable_mosaic.version = 11 : i64} {
  func.func @_bilstm_head_kernel(%arg0: i32, %arg1: memref<16x32xf32, #tpu.memory_space<vmem>>, %arg2: memref<2x32x128xf32, #tpu.memory_space<vmem>>, %arg3: memref<2x32x128xf32, #tpu.memory_space<vmem>>, %arg4: memref<2x1x128xf32, #tpu.memory_space<vmem>>, %arg5: memref<64x4xf32, #tpu.memory_space<vmem>>, %arg6: memref<1x4xf32, #tpu.memory_space<vmem>>, %arg7: memref<16x4xf32, #tpu.memory_space<vmem>>, %arg8: memref<32x32xf32, #tpu.memory_space<vmem>>) attributes {dimension_semantics = [#tpu.dimension_semantics<arbitrary>], iteration_bounds = array<i64: 1>, scalar_prefetch = 0 : i64, scratch_operands = 1 : i64, tpu.core_type = #tpu.core_type<tc>, window_params = [{pipeline_mode = #tpu.pipeline_mode<synchronous>, transform_indices = @transform_0, window_bounds = array<i64: 16, 32>}, {pipeline_mode = #tpu.pipeline_mode<synchronous>, transform_indices = @transform_1, window_bounds = array<i64: 2, 32, 128>}, {pipeline_mode = #tpu.pipeline_mode<synchronous>, transform_indices = @transform_2, window_bounds = array<i64: 2, 32, 128>}, {pipeline_mode = #tpu.pipeline_mode<synchronous>, transform_indices = @transform_3, window_bounds = array<i64: 2, 1, 128>}, {pipeline_mode = #tpu.pipeline_mode<synchronous>, transform_indices = @transform_4, window_bounds = array<i64: 64, 4>}, {pipeline_mode = #tpu.pipeline_mode<synchronous>, transform_indices = @transform_5, window_bounds = array<i64: 1, 4>}, {pipeline_mode = #tpu.pipeline_mode<synchronous>, transform_indices = @transform_6, window_bounds = array<i64: 16, 4>}]} {
    %c0 = arith.constant 0 : index
    %c0_0 = arith.constant 0 : index
    %c0_1 = arith.constant 0 : index
    %0 = vector.load %arg2[%c0, %c0_0, %c0_1] : memref<2x32x128xf32, #tpu.memory_space<vmem>>, vector<1x32x128xf32>
    %1 = vector.shape_cast %0 : vector<1x32x128xf32> to vector<32x128xf32>
    %c0_2 = arith.constant 0 : index
    %c0_3 = arith.constant 0 : index
    %c0_4 = arith.constant 0 : index
    %2 = vector.load %arg3[%c0_2, %c0_3, %c0_4] : memref<2x32x128xf32, #tpu.memory_space<vmem>>, vector<1x32x128xf32>
    %3 = vector.shape_cast %2 : vector<1x32x128xf32> to vector<32x128xf32>
    %c0_5 = arith.constant 0 : index
    %c0_6 = arith.constant 0 : index
    %c0_7 = arith.constant 0 : index
    %4 = vector.load %arg4[%c0_5, %c0_6, %c0_7] : memref<2x1x128xf32, #tpu.memory_space<vmem>>, vector<1x1x128xf32>
    %5 = vector.shape_cast %4 : vector<1x1x128xf32> to vector<1x128xf32>
    %c0_8 = arith.constant 0 : index
    %c0_9 = arith.constant 0 : index
    %6 = vector.load %arg1[%c0_8, %c0_9] : memref<16x32xf32, #tpu.memory_space<vmem>>, vector<8x32xf32>
    %cst = arith.constant dense<0.000000e+00> : vector<8x128xf32>
    %7 = tpu.matmul %6, %1, %cst {dimension_numbers = #tpu.dot_dimension_numbers<[1], [0], [0], [1], [0, 0, 1, 1], [], []>} : vector<8x32xf32>, vector<32x128xf32>, vector<8x128xf32> -> vector<8x128xf32>
    %8 = vector.broadcast %5 : vector<1x128xf32> to vector<8x128xf32>
    %9 = arith.addf %7, %8 : vector<8x128xf32>
    %cst_10 = arith.constant 0.000000e+00 : f32
    %10 = vector.broadcast %cst_10 : f32 to vector<1x32xf32>
    %cst_11 = arith.constant 0.000000e+00 : f32
    %11 = vector.broadcast %cst_11 : f32 to vector<1x32xf32>
    %12 = vector.extract_strided_slice %9 {offsets = [0, 0], sizes = [1, 128], strides = [1, 1]} : vector<8x128xf32> to vector<1x128xf32>
    %cst_12 = arith.constant dense<0.000000e+00> : vector<1x128xf32>
    %13 = tpu.matmul %10, %3, %cst_12 {dimension_numbers = #tpu.dot_dimension_numbers<[1], [0], [0], [1], [0, 0, 1, 1], [], []>} : vector<1x32xf32>, vector<32x128xf32>, vector<1x128xf32> -> vector<1x128xf32>
    %14 = arith.addf %12, %13 : vector<1x128xf32>
    %15 = vector.extract_strided_slice %14 {offsets = [0, 0], sizes = [1, 32], strides = [1, 1]} : vector<1x128xf32> to vector<1x32xf32>
    %16 = arith.negf %15 : vector<1x32xf32>
    %17 = math.exp %16 : vector<1x32xf32>
    %cst_13 = arith.constant 1.000000e+00 : f32
    %18 = vector.broadcast %cst_13 : f32 to vector<1x32xf32>
    %19 = arith.addf %18, %17 : vector<1x32xf32>
    %20 = arith.divf %18, %19 : vector<1x32xf32>
    %21 = vector.extract_strided_slice %14 {offsets = [0, 32], sizes = [1, 32], strides = [1, 1]} : vector<1x128xf32> to vector<1x32xf32>
    %22 = arith.negf %21 : vector<1x32xf32>
    %23 = math.exp %22 : vector<1x32xf32>
    %cst_14 = arith.constant 1.000000e+00 : f32
    %24 = vector.broadcast %cst_14 : f32 to vector<1x32xf32>
    %25 = arith.addf %24, %23 : vector<1x32xf32>
    %26 = arith.divf %24, %25 : vector<1x32xf32>
    %27 = vector.extract_strided_slice %14 {offsets = [0, 64], sizes = [1, 32], strides = [1, 1]} : vector<1x128xf32> to vector<1x32xf32>
    %28 = math.tanh %27 : vector<1x32xf32>
    %29 = vector.extract_strided_slice %14 {offsets = [0, 96], sizes = [1, 32], strides = [1, 1]} : vector<1x128xf32> to vector<1x32xf32>
    %30 = arith.negf %29 : vector<1x32xf32>
    %31 = math.exp %30 : vector<1x32xf32>
    %cst_15 = arith.constant 1.000000e+00 : f32
    %32 = vector.broadcast %cst_15 : f32 to vector<1x32xf32>
    %33 = arith.addf %32, %31 : vector<1x32xf32>
    %34 = arith.divf %32, %33 : vector<1x32xf32>
    %35 = arith.mulf %26, %11 : vector<1x32xf32>
    %36 = arith.mulf %20, %28 : vector<1x32xf32>
    %37 = arith.addf %35, %36 : vector<1x32xf32>
    %38 = math.tanh %37 : vector<1x32xf32>
    %39 = arith.mulf %34, %38 : vector<1x32xf32>
    %c0_16 = arith.constant 0 : index
    %c0_17 = arith.constant 0 : index
    %40 = vector.load %arg8[%c0_16, %c0_17] : memref<32x32xf32, #tpu.memory_space<vmem>>, vector<1x32xf32>
    tpu.vector_store %arg8[%c0_16, %c0_17], %39 {strides = array<i32>} : memref<32x32xf32, #tpu.memory_space<vmem>>, vector<1x32xf32>,
    %41 = vector.extract_strided_slice %9 {offsets = [1, 0], sizes = [1, 128], strides = [1, 1]} : vector<8x128xf32> to vector<1x128xf32>
    %cst_18 = arith.constant dense<0.000000e+00> : vector<1x128xf32>
    %42 = tpu.matmul %39, %3, %cst_18 {dimension_numbers = #tpu.dot_dimension_numbers<[1], [0], [0], [1], [0, 0, 1, 1], [], []>} : vector<1x32xf32>, vector<32x128xf32>, vector<1x128xf32> -> vector<1x128xf32>
    %43 = arith.addf %41, %42 : vector<1x128xf32>
    %44 = vector.extract_strided_slice %43 {offsets = [0, 0], sizes = [1, 32], strides = [1, 1]} : vector<1x128xf32> to vector<1x32xf32>
    %45 = arith.negf %44 : vector<1x32xf32>
    %46 = math.exp %45 : vector<1x32xf32>
    %cst_19 = arith.constant 1.000000e+00 : f32
    %47 = vector.broadcast %cst_19 : f32 to vector<1x32xf32>
    %48 = arith.addf %47, %46 : vector<1x32xf32>
    %49 = arith.divf %47, %48 : vector<1x32xf32>
    %50 = vector.extract_strided_slice %43 {offsets = [0, 32], sizes = [1, 32], strides = [1, 1]} : vector<1x128xf32> to vector<1x32xf32>
    %51 = arith.negf %50 : vector<1x32xf32>
    %52 = math.exp %51 : vector<1x32xf32>
    %cst_20 = arith.constant 1.000000e+00 : f32
    %53 = vector.broadcast %cst_20 : f32 to vector<1x32xf32>
    %54 = arith.addf %53, %52 : vector<1x32xf32>
    %55 = arith.divf %53, %54 : vector<1x32xf32>
    %56 = vector.extract_strided_slice %43 {offsets = [0, 64], sizes = [1, 32], strides = [1, 1]} : vector<1x128xf32> to vector<1x32xf32>
    %57 = math.tanh %56 : vector<1x32xf32>
    %58 = vector.extract_strided_slice %43 {offsets = [0, 96], sizes = [1, 32], strides = [1, 1]} : vector<1x128xf32> to vector<1x32xf32>
    %59 = arith.negf %58 : vector<1x32xf32>
    %60 = math.exp %59 : vector<1x32xf32>
    %cst_21 = arith.constant 1.000000e+00 : f32
    %61 = vector.broadcast %cst_21 : f32 to vector<1x32xf32>
    %62 = arith.addf %61, %60 : vector<1x32xf32>
    %63 = arith.divf %61, %62 : vector<1x32xf32>
    %64 = arith.mulf %55, %37 : vector<1x32xf32>
    %65 = arith.mulf %49, %57 : vector<1x32xf32>
    %66 = arith.addf %64, %65 : vector<1x32xf32>
    %67 = math.tanh %66 : vector<1x32xf32>
    %68 = arith.mulf %63, %67 : vector<1x32xf32>
    %c1 = arith.constant 1 : index
    %c0_22 = arith.constant 0 : index
    %69 = vector.load %arg8[%c1, %c0_22] : memref<32x32xf32, #tpu.memory_space<vmem>>, vector<1x32xf32>
    tpu.vector_store %arg8[%c1, %c0_22], %68 {strides = array<i32>} : memref<32x32xf32, #tpu.memory_space<vmem>>, vector<1x32xf32>,
    %70 = vector.extract_strided_slice %9 {offsets = [2, 0], sizes = [1, 128], strides = [1, 1]} : vector<8x128xf32> to vector<1x128xf32>
    %cst_23 = arith.constant dense<0.000000e+00> : vector<1x128xf32>
    %71 = tpu.matmul %68, %3, %cst_23 {dimension_numbers = #tpu.dot_dimension_numbers<[1], [0], [0], [1], [0, 0, 1, 1], [], []>} : vector<1x32xf32>, vector<32x128xf32>, vector<1x128xf32> -> vector<1x128xf32>
    %72 = arith.addf %70, %71 : vector<1x128xf32>
    %73 = vector.extract_strided_slice %72 {offsets = [0, 0], sizes = [1, 32], strides = [1, 1]} : vector<1x128xf32> to vector<1x32xf32>
    %74 = arith.negf %73 : vector<1x32xf32>
    %75 = math.exp %74 : vector<1x32xf32>
    %cst_24 = arith.constant 1.000000e+00 : f32
    %76 = vector.broadcast %cst_24 : f32 to vector<1x32xf32>
    %77 = arith.addf %76, %75 : vector<1x32xf32>
    %78 = arith.divf %76, %77 : vector<1x32xf32>
    %79 = vector.extract_strided_slice %72 {offsets = [0, 32], sizes = [1, 32], strides = [1, 1]} : vector<1x128xf32> to vector<1x32xf32>
    %80 = arith.negf %79 : vector<1x32xf32>
    %81 = math.exp %80 : vector<1x32xf32>
    %cst_25 = arith.constant 1.000000e+00 : f32
    %82 = vector.broadcast %cst_25 : f32 to vector<1x32xf32>
    %83 = arith.addf %82, %81 : vector<1x32xf32>
    %84 = arith.divf %82, %83 : vector<1x32xf32>
    %85 = vector.extract_strided_slice %72 {offsets = [0, 64], sizes = [1, 32], strides = [1, 1]} : vector<1x128xf32> to vector<1x32xf32>
    %86 = math.tanh %85 : vector<1x32xf32>
    %87 = vector.extract_strided_slice %72 {offsets = [0, 96], sizes = [1, 32], strides = [1, 1]} : vector<1x128xf32> to vector<1x32xf32>
    %88 = arith.negf %87 : vector<1x32xf32>
    %89 = math.exp %88 : vector<1x32xf32>
    %cst_26 = arith.constant 1.000000e+00 : f32
    %90 = vector.broadcast %cst_26 : f32 to vector<1x32xf32>
    %91 = arith.addf %90, %89 : vector<1x32xf32>
    %92 = arith.divf %90, %91 : vector<1x32xf32>
    %93 = arith.mulf %84, %66 : vector<1x32xf32>
    %94 = arith.mulf %78, %86 : vector<1x32xf32>
    %95 = arith.addf %93, %94 : vector<1x32xf32>
    %96 = math.tanh %95 : vector<1x32xf32>
    %97 = arith.mulf %92, %96 : vector<1x32xf32>
    %c2 = arith.constant 2 : index
    %c0_27 = arith.constant 0 : index
    %98 = vector.load %arg8[%c2, %c0_27] : memref<32x32xf32, #tpu.memory_space<vmem>>, vector<1x32xf32>
    tpu.vector_store %arg8[%c2, %c0_27], %97 {strides = array<i32>} : memref<32x32xf32, #tpu.memory_space<vmem>>, vector<1x32xf32>,
    %99 = vector.extract_strided_slice %9 {offsets = [3, 0], sizes = [1, 128], strides = [1, 1]} : vector<8x128xf32> to vector<1x128xf32>
    %cst_28 = arith.constant dense<0.000000e+00> : vector<1x128xf32>
    %100 = tpu.matmul %97, %3, %cst_28 {dimension_numbers = #tpu.dot_dimension_numbers<[1], [0], [0], [1], [0, 0, 1, 1], [], []>} : vector<1x32xf32>, vector<32x128xf32>, vector<1x128xf32> -> vector<1x128xf32>
    %101 = arith.addf %99, %100 : vector<1x128xf32>
    %102 = vector.extract_strided_slice %101 {offsets = [0, 0], sizes = [1, 32], strides = [1, 1]} : vector<1x128xf32> to vector<1x32xf32>
    %103 = arith.negf %102 : vector<1x32xf32>
    %104 = math.exp %103 : vector<1x32xf32>
    %cst_29 = arith.constant 1.000000e+00 : f32
    %105 = vector.broadcast %cst_29 : f32 to vector<1x32xf32>
    %106 = arith.addf %105, %104 : vector<1x32xf32>
    %107 = arith.divf %105, %106 : vector<1x32xf32>
    %108 = vector.extract_strided_slice %101 {offsets = [0, 32], sizes = [1, 32], strides = [1, 1]} : vector<1x128xf32> to vector<1x32xf32>
    %109 = arith.negf %108 : vector<1x32xf32>
    %110 = math.exp %109 : vector<1x32xf32>
    %cst_30 = arith.constant 1.000000e+00 : f32
    %111 = vector.broadcast %cst_30 : f32 to vector<1x32xf32>
    %112 = arith.addf %111, %110 : vector<1x32xf32>
    %113 = arith.divf %111, %112 : vector<1x32xf32>
    %114 = vector.extract_strided_slice %101 {offsets = [0, 64], sizes = [1, 32], strides = [1, 1]} : vector<1x128xf32> to vector<1x32xf32>
    %115 = math.tanh %114 : vector<1x32xf32>
    %116 = vector.extract_strided_slice %101 {offsets = [0, 96], sizes = [1, 32], strides = [1, 1]} : vector<1x128xf32> to vector<1x32xf32>
    %117 = arith.negf %116 : vector<1x32xf32>
    %118 = math.exp %117 : vector<1x32xf32>
    %cst_31 = arith.constant 1.000000e+00 : f32
    %119 = vector.broadcast %cst_31 : f32 to vector<1x32xf32>
    %120 = arith.addf %119, %118 : vector<1x32xf32>
    %121 = arith.divf %119, %120 : vector<1x32xf32>
    %122 = arith.mulf %113, %95 : vector<1x32xf32>
    %123 = arith.mulf %107, %115 : vector<1x32xf32>
    %124 = arith.addf %122, %123 : vector<1x32xf32>
    %125 = math.tanh %124 : vector<1x32xf32>
    %126 = arith.mulf %121, %125 : vector<1x32xf32>
    %c3 = arith.constant 3 : index
    %c0_32 = arith.constant 0 : index
    %127 = vector.load %arg8[%c3, %c0_32] : memref<32x32xf32, #tpu.memory_space<vmem>>, vector<1x32xf32>
    tpu.vector_store %arg8[%c3, %c0_32], %126 {strides = array<i32>} : memref<32x32xf32, #tpu.memory_space<vmem>>, vector<1x32xf32>,
    %128 = vector.extract_strided_slice %9 {offsets = [4, 0], sizes = [1, 128], strides = [1, 1]} : vector<8x128xf32> to vector<1x128xf32>
    %cst_33 = arith.constant dense<0.000000e+00> : vector<1x128xf32>
    %129 = tpu.matmul %126, %3, %cst_33 {dimension_numbers = #tpu.dot_dimension_numbers<[1], [0], [0], [1], [0, 0, 1, 1], [], []>} : vector<1x32xf32>, vector<32x128xf32>, vector<1x128xf32> -> vector<1x128xf32>
    %130 = arith.addf %128, %129 : vector<1x128xf32>
    %131 = vector.extract_strided_slice %130 {offsets = [0, 0], sizes = [1, 32], strides = [1, 1]} : vector<1x128xf32> to vector<1x32xf32>
    %132 = arith.negf %131 : vector<1x32xf32>
    %133 = math.exp %132 : vector<1x32xf32>
    %cst_34 = arith.constant 1.000000e+00 : f32
    %134 = vector.broadcast %cst_34 : f32 to vector<1x32xf32>
    %135 = arith.addf %134, %133 : vector<1x32xf32>
    %136 = arith.divf %134, %135 : vector<1x32xf32>
    %137 = vector.extract_strided_slice %130 {offsets = [0, 32], sizes = [1, 32], strides = [1, 1]} : vector<1x128xf32> to vector<1x32xf32>
    %138 = arith.negf %137 : vector<1x32xf32>
    %139 = math.exp %138 : vector<1x32xf32>
    %cst_35 = arith.constant 1.000000e+00 : f32
    %140 = vector.broadcast %cst_35 : f32 to vector<1x32xf32>
    %141 = arith.addf %140, %139 : vector<1x32xf32>
    %142 = arith.divf %140, %141 : vector<1x32xf32>
    %143 = vector.extract_strided_slice %130 {offsets = [0, 64], sizes = [1, 32], strides = [1, 1]} : vector<1x128xf32> to vector<1x32xf32>
    %144 = math.tanh %143 : vector<1x32xf32>
    %145 = vector.extract_strided_slice %130 {offsets = [0, 96], sizes = [1, 32], strides = [1, 1]} : vector<1x128xf32> to vector<1x32xf32>
    %146 = arith.negf %145 : vector<1x32xf32>
    %147 = math.exp %146 : vector<1x32xf32>
    %cst_36 = arith.constant 1.000000e+00 : f32
    %148 = vector.broadcast %cst_36 : f32 to vector<1x32xf32>
    %149 = arith.addf %148, %147 : vector<1x32xf32>
    %150 = arith.divf %148, %149 : vector<1x32xf32>
    %151 = arith.mulf %142, %124 : vector<1x32xf32>
    %152 = arith.mulf %136, %144 : vector<1x32xf32>
    %153 = arith.addf %151, %152 : vector<1x32xf32>
    %154 = math.tanh %153 : vector<1x32xf32>
    %155 = arith.mulf %150, %154 : vector<1x32xf32>
    %c4 = arith.constant 4 : index
    %c0_37 = arith.constant 0 : index
    %156 = vector.load %arg8[%c4, %c0_37] : memref<32x32xf32, #tpu.memory_space<vmem>>, vector<1x32xf32>
    tpu.vector_store %arg8[%c4, %c0_37], %155 {strides = array<i32>} : memref<32x32xf32, #tpu.memory_space<vmem>>, vector<1x32xf32>,
    %157 = vector.extract_strided_slice %9 {offsets = [5, 0], sizes = [1, 128], strides = [1, 1]} : vector<8x128xf32> to vector<1x128xf32>
    %cst_38 = arith.constant dense<0.000000e+00> : vector<1x128xf32>
    %158 = tpu.matmul %155, %3, %cst_38 {dimension_numbers = #tpu.dot_dimension_numbers<[1], [0], [0], [1], [0, 0, 1, 1], [], []>} : vector<1x32xf32>, vector<32x128xf32>, vector<1x128xf32> -> vector<1x128xf32>
    %159 = arith.addf %157, %158 : vector<1x128xf32>
    %160 = vector.extract_strided_slice %159 {offsets = [0, 0], sizes = [1, 32], strides = [1, 1]} : vector<1x128xf32> to vector<1x32xf32>
    %161 = arith.negf %160 : vector<1x32xf32>
    %162 = math.exp %161 : vector<1x32xf32>
    %cst_39 = arith.constant 1.000000e+00 : f32
    %163 = vector.broadcast %cst_39 : f32 to vector<1x32xf32>
    %164 = arith.addf %163, %162 : vector<1x32xf32>
    %165 = arith.divf %163, %164 : vector<1x32xf32>
    %166 = vector.extract_strided_slice %159 {offsets = [0, 32], sizes = [1, 32], strides = [1, 1]} : vector<1x128xf32> to vector<1x32xf32>
    %167 = arith.negf %166 : vector<1x32xf32>
    %168 = math.exp %167 : vector<1x32xf32>
    %cst_40 = arith.constant 1.000000e+00 : f32
    %169 = vector.broadcast %cst_40 : f32 to vector<1x32xf32>
    %170 = arith.addf %169, %168 : vector<1x32xf32>
    %171 = arith.divf %169, %170 : vector<1x32xf32>
    %172 = vector.extract_strided_slice %159 {offsets = [0, 64], sizes = [1, 32], strides = [1, 1]} : vector<1x128xf32> to vector<1x32xf32>
    %173 = math.tanh %172 : vector<1x32xf32>
    %174 = vector.extract_strided_slice %159 {offsets = [0, 96], sizes = [1, 32], strides = [1, 1]} : vector<1x128xf32> to vector<1x32xf32>
    %175 = arith.negf %174 : vector<1x32xf32>
    %176 = math.exp %175 : vector<1x32xf32>
    %cst_41 = arith.constant 1.000000e+00 : f32
    %177 = vector.broadcast %cst_41 : f32 to vector<1x32xf32>
    %178 = arith.addf %177, %176 : vector<1x32xf32>
    %179 = arith.divf %177, %178 : vector<1x32xf32>
    %180 = arith.mulf %171, %153 : vector<1x32xf32>
    %181 = arith.mulf %165, %173 : vector<1x32xf32>
    %182 = arith.addf %180, %181 : vector<1x32xf32>
    %183 = math.tanh %182 : vector<1x32xf32>
    %184 = arith.mulf %179, %183 : vector<1x32xf32>
    %c5 = arith.constant 5 : index
    %c0_42 = arith.constant 0 : index
    %185 = vector.load %arg8[%c5, %c0_42] : memref<32x32xf32, #tpu.memory_space<vmem>>, vector<1x32xf32>
    tpu.vector_store %arg8[%c5, %c0_42], %184 {strides = array<i32>} : memref<32x32xf32, #tpu.memory_space<vmem>>, vector<1x32xf32>,
    %186 = vector.extract_strided_slice %9 {offsets = [6, 0], sizes = [1, 128], strides = [1, 1]} : vector<8x128xf32> to vector<1x128xf32>
    %cst_43 = arith.constant dense<0.000000e+00> : vector<1x128xf32>
    %187 = tpu.matmul %184, %3, %cst_43 {dimension_numbers = #tpu.dot_dimension_numbers<[1], [0], [0], [1], [0, 0, 1, 1], [], []>} : vector<1x32xf32>, vector<32x128xf32>, vector<1x128xf32> -> vector<1x128xf32>
    %188 = arith.addf %186, %187 : vector<1x128xf32>
    %189 = vector.extract_strided_slice %188 {offsets = [0, 0], sizes = [1, 32], strides = [1, 1]} : vector<1x128xf32> to vector<1x32xf32>
    %190 = arith.negf %189 : vector<1x32xf32>
    %191 = math.exp %190 : vector<1x32xf32>
    %cst_44 = arith.constant 1.000000e+00 : f32
    %192 = vector.broadcast %cst_44 : f32 to vector<1x32xf32>
    %193 = arith.addf %192, %191 : vector<1x32xf32>
    %194 = arith.divf %192, %193 : vector<1x32xf32>
    %195 = vector.extract_strided_slice %188 {offsets = [0, 32], sizes = [1, 32], strides = [1, 1]} : vector<1x128xf32> to vector<1x32xf32>
    %196 = arith.negf %195 : vector<1x32xf32>
    %197 = math.exp %196 : vector<1x32xf32>
    %cst_45 = arith.constant 1.000000e+00 : f32
    %198 = vector.broadcast %cst_45 : f32 to vector<1x32xf32>
    %199 = arith.addf %198, %197 : vector<1x32xf32>
    %200 = arith.divf %198, %199 : vector<1x32xf32>
    %201 = vector.extract_strided_slice %188 {offsets = [0, 64], sizes = [1, 32], strides = [1, 1]} : vector<1x128xf32> to vector<1x32xf32>
    %202 = math.tanh %201 : vector<1x32xf32>
    %203 = vector.extract_strided_slice %188 {offsets = [0, 96], sizes = [1, 32], strides = [1, 1]} : vector<1x128xf32> to vector<1x32xf32>
    %204 = arith.negf %203 : vector<1x32xf32>
    %205 = math.exp %204 : vector<1x32xf32>
    %cst_46 = arith.constant 1.000000e+00 : f32
    %206 = vector.broadcast %cst_46 : f32 to vector<1x32xf32>
    %207 = arith.addf %206, %205 : vector<1x32xf32>
    %208 = arith.divf %206, %207 : vector<1x32xf32>
    %209 = arith.mulf %200, %182 : vector<1x32xf32>
    %210 = arith.mulf %194, %202 : vector<1x32xf32>
    %211 = arith.addf %209, %210 : vector<1x32xf32>
    %212 = math.tanh %211 : vector<1x32xf32>
    %213 = arith.mulf %208, %212 : vector<1x32xf32>
    %c6 = arith.constant 6 : index
    %c0_47 = arith.constant 0 : index
    %214 = vector.load %arg8[%c6, %c0_47] : memref<32x32xf32, #tpu.memory_space<vmem>>, vector<1x32xf32>
    tpu.vector_store %arg8[%c6, %c0_47], %213 {strides = array<i32>} : memref<32x32xf32, #tpu.memory_space<vmem>>, vector<1x32xf32>,
    %215 = vector.extract_strided_slice %9 {offsets = [7, 0], sizes = [1, 128], strides = [1, 1]} : vector<8x128xf32> to vector<1x128xf32>
    %cst_48 = arith.constant dense<0.000000e+00> : vector<1x128xf32>
    %216 = tpu.matmul %213, %3, %cst_48 {dimension_numbers = #tpu.dot_dimension_numbers<[1], [0], [0], [1], [0, 0, 1, 1], [], []>} : vector<1x32xf32>, vector<32x128xf32>, vector<1x128xf32> -> vector<1x128xf32>
    %217 = arith.addf %215, %216 : vector<1x128xf32>
    %218 = vector.extract_strided_slice %217 {offsets = [0, 0], sizes = [1, 32], strides = [1, 1]} : vector<1x128xf32> to vector<1x32xf32>
    %219 = arith.negf %218 : vector<1x32xf32>
    %220 = math.exp %219 : vector<1x32xf32>
    %cst_49 = arith.constant 1.000000e+00 : f32
    %221 = vector.broadcast %cst_49 : f32 to vector<1x32xf32>
    %222 = arith.addf %221, %220 : vector<1x32xf32>
    %223 = arith.divf %221, %222 : vector<1x32xf32>
    %224 = vector.extract_strided_slice %217 {offsets = [0, 32], sizes = [1, 32], strides = [1, 1]} : vector<1x128xf32> to vector<1x32xf32>
    %225 = arith.negf %224 : vector<1x32xf32>
    %226 = math.exp %225 : vector<1x32xf32>
    %cst_50 = arith.constant 1.000000e+00 : f32
    %227 = vector.broadcast %cst_50 : f32 to vector<1x32xf32>
    %228 = arith.addf %227, %226 : vector<1x32xf32>
    %229 = arith.divf %227, %228 : vector<1x32xf32>
    %230 = vector.extract_strided_slice %217 {offsets = [0, 64], sizes = [1, 32], strides = [1, 1]} : vector<1x128xf32> to vector<1x32xf32>
    %231 = math.tanh %230 : vector<1x32xf32>
    %232 = vector.extract_strided_slice %217 {offsets = [0, 96], sizes = [1, 32], strides = [1, 1]} : vector<1x128xf32> to vector<1x32xf32>
    %233 = arith.negf %232 : vector<1x32xf32>
    %234 = math.exp %233 : vector<1x32xf32>
    %cst_51 = arith.constant 1.000000e+00 : f32
    %235 = vector.broadcast %cst_51 : f32 to vector<1x32xf32>
    %236 = arith.addf %235, %234 : vector<1x32xf32>
    %237 = arith.divf %235, %236 : vector<1x32xf32>
    %238 = arith.mulf %229, %211 : vector<1x32xf32>
    %239 = arith.mulf %223, %231 : vector<1x32xf32>
    %240 = arith.addf %238, %239 : vector<1x32xf32>
    %241 = math.tanh %240 : vector<1x32xf32>
    %242 = arith.mulf %237, %241 : vector<1x32xf32>
    %c7 = arith.constant 7 : index
    %c0_52 = arith.constant 0 : index
    %243 = vector.load %arg8[%c7, %c0_52] : memref<32x32xf32, #tpu.memory_space<vmem>>, vector<1x32xf32>
    tpu.vector_store %arg8[%c7, %c0_52], %242 {strides = array<i32>} : memref<32x32xf32, #tpu.memory_space<vmem>>, vector<1x32xf32>,
    %c8 = arith.constant 8 : index
    %c0_53 = arith.constant 0 : index
    %244 = vector.load %arg1[%c8, %c0_53] : memref<16x32xf32, #tpu.memory_space<vmem>>, vector<8x32xf32>
    %cst_54 = arith.constant dense<0.000000e+00> : vector<8x128xf32>
    %245 = tpu.matmul %244, %1, %cst_54 {dimension_numbers = #tpu.dot_dimension_numbers<[1], [0], [0], [1], [0, 0, 1, 1], [], []>} : vector<8x32xf32>, vector<32x128xf32>, vector<8x128xf32> -> vector<8x128xf32>
    %246 = vector.broadcast %5 : vector<1x128xf32> to vector<8x128xf32>
    %247 = arith.addf %245, %246 : vector<8x128xf32>
    %cst_55 = arith.constant 0.000000e+00 : f32
    %248 = vector.broadcast %cst_55 : f32 to vector<1x32xf32>
    %cst_56 = arith.constant 0.000000e+00 : f32
    %249 = vector.broadcast %cst_56 : f32 to vector<1x32xf32>
    %250 = vector.extract_strided_slice %247 {offsets = [0, 0], sizes = [1, 128], strides = [1, 1]} : vector<8x128xf32> to vector<1x128xf32>
    %cst_57 = arith.constant dense<0.000000e+00> : vector<1x128xf32>
    %251 = tpu.matmul %248, %3, %cst_57 {dimension_numbers = #tpu.dot_dimension_numbers<[1], [0], [0], [1], [0, 0, 1, 1], [], []>} : vector<1x32xf32>, vector<32x128xf32>, vector<1x128xf32> -> vector<1x128xf32>
    %252 = arith.addf %250, %251 : vector<1x128xf32>
    %253 = vector.extract_strided_slice %252 {offsets = [0, 0], sizes = [1, 32], strides = [1, 1]} : vector<1x128xf32> to vector<1x32xf32>
    %254 = arith.negf %253 : vector<1x32xf32>
    %255 = math.exp %254 : vector<1x32xf32>
    %cst_58 = arith.constant 1.000000e+00 : f32
    %256 = vector.broadcast %cst_58 : f32 to vector<1x32xf32>
    %257 = arith.addf %256, %255 : vector<1x32xf32>
    %258 = arith.divf %256, %257 : vector<1x32xf32>
    %259 = vector.extract_strided_slice %252 {offsets = [0, 32], sizes = [1, 32], strides = [1, 1]} : vector<1x128xf32> to vector<1x32xf32>
    %260 = arith.negf %259 : vector<1x32xf32>
    %261 = math.exp %260 : vector<1x32xf32>
    %cst_59 = arith.constant 1.000000e+00 : f32
    %262 = vector.broadcast %cst_59 : f32 to vector<1x32xf32>
    %263 = arith.addf %262, %261 : vector<1x32xf32>
    %264 = arith.divf %262, %263 : vector<1x32xf32>
    %265 = vector.extract_strided_slice %252 {offsets = [0, 64], sizes = [1, 32], strides = [1, 1]} : vector<1x128xf32> to vector<1x32xf32>
    %266 = math.tanh %265 : vector<1x32xf32>
    %267 = vector.extract_strided_slice %252 {offsets = [0, 96], sizes = [1, 32], strides = [1, 1]} : vector<1x128xf32> to vector<1x32xf32>
    %268 = arith.negf %267 : vector<1x32xf32>
    %269 = math.exp %268 : vector<1x32xf32>
    %cst_60 = arith.constant 1.000000e+00 : f32
    %270 = vector.broadcast %cst_60 : f32 to vector<1x32xf32>
    %271 = arith.addf %270, %269 : vector<1x32xf32>
    %272 = arith.divf %270, %271 : vector<1x32xf32>
    %273 = arith.mulf %264, %249 : vector<1x32xf32>
    %274 = arith.mulf %258, %266 : vector<1x32xf32>
    %275 = arith.addf %273, %274 : vector<1x32xf32>
    %276 = math.tanh %275 : vector<1x32xf32>
    %277 = arith.mulf %272, %276 : vector<1x32xf32>
    %c8_61 = arith.constant 8 : index
    %c0_62 = arith.constant 0 : index
    %278 = vector.load %arg8[%c8_61, %c0_62] : memref<32x32xf32, #tpu.memory_space<vmem>>, vector<1x32xf32>
    tpu.vector_store %arg8[%c8_61, %c0_62], %277 {strides = array<i32>} : memref<32x32xf32, #tpu.memory_space<vmem>>, vector<1x32xf32>,
    %279 = vector.extract_strided_slice %247 {offsets = [1, 0], sizes = [1, 128], strides = [1, 1]} : vector<8x128xf32> to vector<1x128xf32>
    %cst_63 = arith.constant dense<0.000000e+00> : vector<1x128xf32>
    %280 = tpu.matmul %277, %3, %cst_63 {dimension_numbers = #tpu.dot_dimension_numbers<[1], [0], [0], [1], [0, 0, 1, 1], [], []>} : vector<1x32xf32>, vector<32x128xf32>, vector<1x128xf32> -> vector<1x128xf32>
    %281 = arith.addf %279, %280 : vector<1x128xf32>
    %282 = vector.extract_strided_slice %281 {offsets = [0, 0], sizes = [1, 32], strides = [1, 1]} : vector<1x128xf32> to vector<1x32xf32>
    %283 = arith.negf %282 : vector<1x32xf32>
    %284 = math.exp %283 : vector<1x32xf32>
    %cst_64 = arith.constant 1.000000e+00 : f32
    %285 = vector.broadcast %cst_64 : f32 to vector<1x32xf32>
    %286 = arith.addf %285, %284 : vector<1x32xf32>
    %287 = arith.divf %285, %286 : vector<1x32xf32>
    %288 = vector.extract_strided_slice %281 {offsets = [0, 32], sizes = [1, 32], strides = [1, 1]} : vector<1x128xf32> to vector<1x32xf32>
    %289 = arith.negf %288 : vector<1x32xf32>
    %290 = math.exp %289 : vector<1x32xf32>
    %cst_65 = arith.constant 1.000000e+00 : f32
    %291 = vector.broadcast %cst_65 : f32 to vector<1x32xf32>
    %292 = arith.addf %291, %290 : vector<1x32xf32>
    %293 = arith.divf %291, %292 : vector<1x32xf32>
    %294 = vector.extract_strided_slice %281 {offsets = [0, 64], sizes = [1, 32], strides = [1, 1]} : vector<1x128xf32> to vector<1x32xf32>
    %295 = math.tanh %294 : vector<1x32xf32>
    %296 = vector.extract_strided_slice %281 {offsets = [0, 96], sizes = [1, 32], strides = [1, 1]} : vector<1x128xf32> to vector<1x32xf32>
    %297 = arith.negf %296 : vector<1x32xf32>
    %298 = math.exp %297 : vector<1x32xf32>
    %cst_66 = arith.constant 1.000000e+00 : f32
    %299 = vector.broadcast %cst_66 : f32 to vector<1x32xf32>
    %300 = arith.addf %299, %298 : vector<1x32xf32>
    %301 = arith.divf %299, %300 : vector<1x32xf32>
    %302 = arith.mulf %293, %275 : vector<1x32xf32>
    %303 = arith.mulf %287, %295 : vector<1x32xf32>
    %304 = arith.addf %302, %303 : vector<1x32xf32>
    %305 = math.tanh %304 : vector<1x32xf32>
    %306 = arith.mulf %301, %305 : vector<1x32xf32>
    %c9 = arith.constant 9 : index
    %c0_67 = arith.constant 0 : index
    %307 = vector.load %arg8[%c9, %c0_67] : memref<32x32xf32, #tpu.memory_space<vmem>>, vector<1x32xf32>
    tpu.vector_store %arg8[%c9, %c0_67], %306 {strides = array<i32>} : memref<32x32xf32, #tpu.memory_space<vmem>>, vector<1x32xf32>,
    %308 = vector.extract_strided_slice %247 {offsets = [2, 0], sizes = [1, 128], strides = [1, 1]} : vector<8x128xf32> to vector<1x128xf32>
    %cst_68 = arith.constant dense<0.000000e+00> : vector<1x128xf32>
    %309 = tpu.matmul %306, %3, %cst_68 {dimension_numbers = #tpu.dot_dimension_numbers<[1], [0], [0], [1], [0, 0, 1, 1], [], []>} : vector<1x32xf32>, vector<32x128xf32>, vector<1x128xf32> -> vector<1x128xf32>
    %310 = arith.addf %308, %309 : vector<1x128xf32>
    %311 = vector.extract_strided_slice %310 {offsets = [0, 0], sizes = [1, 32], strides = [1, 1]} : vector<1x128xf32> to vector<1x32xf32>
    %312 = arith.negf %311 : vector<1x32xf32>
    %313 = math.exp %312 : vector<1x32xf32>
    %cst_69 = arith.constant 1.000000e+00 : f32
    %314 = vector.broadcast %cst_69 : f32 to vector<1x32xf32>
    %315 = arith.addf %314, %313 : vector<1x32xf32>
    %316 = arith.divf %314, %315 : vector<1x32xf32>
    %317 = vector.extract_strided_slice %310 {offsets = [0, 32], sizes = [1, 32], strides = [1, 1]} : vector<1x128xf32> to vector<1x32xf32>
    %318 = arith.negf %317 : vector<1x32xf32>
    %319 = math.exp %318 : vector<1x32xf32>
    %cst_70 = arith.constant 1.000000e+00 : f32
    %320 = vector.broadcast %cst_70 : f32 to vector<1x32xf32>
    %321 = arith.addf %320, %319 : vector<1x32xf32>
    %322 = arith.divf %320, %321 : vector<1x32xf32>
    %323 = vector.extract_strided_slice %310 {offsets = [0, 64], sizes = [1, 32], strides = [1, 1]} : vector<1x128xf32> to vector<1x32xf32>
    %324 = math.tanh %323 : vector<1x32xf32>
    %325 = vector.extract_strided_slice %310 {offsets = [0, 96], sizes = [1, 32], strides = [1, 1]} : vector<1x128xf32> to vector<1x32xf32>
    %326 = arith.negf %325 : vector<1x32xf32>
    %327 = math.exp %326 : vector<1x32xf32>
    %cst_71 = arith.constant 1.000000e+00 : f32
    %328 = vector.broadcast %cst_71 : f32 to vector<1x32xf32>
    %329 = arith.addf %328, %327 : vector<1x32xf32>
    %330 = arith.divf %328, %329 : vector<1x32xf32>
    %331 = arith.mulf %322, %304 : vector<1x32xf32>
    %332 = arith.mulf %316, %324 : vector<1x32xf32>
    %333 = arith.addf %331, %332 : vector<1x32xf32>
    %334 = math.tanh %333 : vector<1x32xf32>
    %335 = arith.mulf %330, %334 : vector<1x32xf32>
    %c10 = arith.constant 10 : index
    %c0_72 = arith.constant 0 : index
    %336 = vector.load %arg8[%c10, %c0_72] : memref<32x32xf32, #tpu.memory_space<vmem>>, vector<1x32xf32>
    tpu.vector_store %arg8[%c10, %c0_72], %335 {strides = array<i32>} : memref<32x32xf32, #tpu.memory_space<vmem>>, vector<1x32xf32>,
    %337 = vector.extract_strided_slice %247 {offsets = [3, 0], sizes = [1, 128], strides = [1, 1]} : vector<8x128xf32> to vector<1x128xf32>
    %cst_73 = arith.constant dense<0.000000e+00> : vector<1x128xf32>
    %338 = tpu.matmul %335, %3, %cst_73 {dimension_numbers = #tpu.dot_dimension_numbers<[1], [0], [0], [1], [0, 0, 1, 1], [], []>} : vector<1x32xf32>, vector<32x128xf32>, vector<1x128xf32> -> vector<1x128xf32>
    %339 = arith.addf %337, %338 : vector<1x128xf32>
    %340 = vector.extract_strided_slice %339 {offsets = [0, 0], sizes = [1, 32], strides = [1, 1]} : vector<1x128xf32> to vector<1x32xf32>
    %341 = arith.negf %340 : vector<1x32xf32>
    %342 = math.exp %341 : vector<1x32xf32>
    %cst_74 = arith.constant 1.000000e+00 : f32
    %343 = vector.broadcast %cst_74 : f32 to vector<1x32xf32>
    %344 = arith.addf %343, %342 : vector<1x32xf32>
    %345 = arith.divf %343, %344 : vector<1x32xf32>
    %346 = vector.extract_strided_slice %339 {offsets = [0, 32], sizes = [1, 32], strides = [1, 1]} : vector<1x128xf32> to vector<1x32xf32>
    %347 = arith.negf %346 : vector<1x32xf32>
    %348 = math.exp %347 : vector<1x32xf32>
    %cst_75 = arith.constant 1.000000e+00 : f32
    %349 = vector.broadcast %cst_75 : f32 to vector<1x32xf32>
    %350 = arith.addf %349, %348 : vector<1x32xf32>
    %351 = arith.divf %349, %350 : vector<1x32xf32>
    %352 = vector.extract_strided_slice %339 {offsets = [0, 64], sizes = [1, 32], strides = [1, 1]} : vector<1x128xf32> to vector<1x32xf32>
    %353 = math.tanh %352 : vector<1x32xf32>
    %354 = vector.extract_strided_slice %339 {offsets = [0, 96], sizes = [1, 32], strides = [1, 1]} : vector<1x128xf32> to vector<1x32xf32>
    %355 = arith.negf %354 : vector<1x32xf32>
    %356 = math.exp %355 : vector<1x32xf32>
    %cst_76 = arith.constant 1.000000e+00 : f32
    %357 = vector.broadcast %cst_76 : f32 to vector<1x32xf32>
    %358 = arith.addf %357, %356 : vector<1x32xf32>
    %359 = arith.divf %357, %358 : vector<1x32xf32>
    %360 = arith.mulf %351, %333 : vector<1x32xf32>
    %361 = arith.mulf %345, %353 : vector<1x32xf32>
    %362 = arith.addf %360, %361 : vector<1x32xf32>
    %363 = math.tanh %362 : vector<1x32xf32>
    %364 = arith.mulf %359, %363 : vector<1x32xf32>
    %c11 = arith.constant 11 : index
    %c0_77 = arith.constant 0 : index
    %365 = vector.load %arg8[%c11, %c0_77] : memref<32x32xf32, #tpu.memory_space<vmem>>, vector<1x32xf32>
    tpu.vector_store %arg8[%c11, %c0_77], %364 {strides = array<i32>} : memref<32x32xf32, #tpu.memory_space<vmem>>, vector<1x32xf32>,
    %366 = vector.extract_strided_slice %247 {offsets = [4, 0], sizes = [1, 128], strides = [1, 1]} : vector<8x128xf32> to vector<1x128xf32>
    %cst_78 = arith.constant dense<0.000000e+00> : vector<1x128xf32>
    %367 = tpu.matmul %364, %3, %cst_78 {dimension_numbers = #tpu.dot_dimension_numbers<[1], [0], [0], [1], [0, 0, 1, 1], [], []>} : vector<1x32xf32>, vector<32x128xf32>, vector<1x128xf32> -> vector<1x128xf32>
    %368 = arith.addf %366, %367 : vector<1x128xf32>
    %369 = vector.extract_strided_slice %368 {offsets = [0, 0], sizes = [1, 32], strides = [1, 1]} : vector<1x128xf32> to vector<1x32xf32>
    %370 = arith.negf %369 : vector<1x32xf32>
    %371 = math.exp %370 : vector<1x32xf32>
    %cst_79 = arith.constant 1.000000e+00 : f32
    %372 = vector.broadcast %cst_79 : f32 to vector<1x32xf32>
    %373 = arith.addf %372, %371 : vector<1x32xf32>
    %374 = arith.divf %372, %373 : vector<1x32xf32>
    %375 = vector.extract_strided_slice %368 {offsets = [0, 32], sizes = [1, 32], strides = [1, 1]} : vector<1x128xf32> to vector<1x32xf32>
    %376 = arith.negf %375 : vector<1x32xf32>
    %377 = math.exp %376 : vector<1x32xf32>
    %cst_80 = arith.constant 1.000000e+00 : f32
    %378 = vector.broadcast %cst_80 : f32 to vector<1x32xf32>
    %379 = arith.addf %378, %377 : vector<1x32xf32>
    %380 = arith.divf %378, %379 : vector<1x32xf32>
    %381 = vector.extract_strided_slice %368 {offsets = [0, 64], sizes = [1, 32], strides = [1, 1]} : vector<1x128xf32> to vector<1x32xf32>
    %382 = math.tanh %381 : vector<1x32xf32>
    %383 = vector.extract_strided_slice %368 {offsets = [0, 96], sizes = [1, 32], strides = [1, 1]} : vector<1x128xf32> to vector<1x32xf32>
    %384 = arith.negf %383 : vector<1x32xf32>
    %385 = math.exp %384 : vector<1x32xf32>
    %cst_81 = arith.constant 1.000000e+00 : f32
    %386 = vector.broadcast %cst_81 : f32 to vector<1x32xf32>
    %387 = arith.addf %386, %385 : vector<1x32xf32>
    %388 = arith.divf %386, %387 : vector<1x32xf32>
    %389 = arith.mulf %380, %362 : vector<1x32xf32>
    %390 = arith.mulf %374, %382 : vector<1x32xf32>
    %391 = arith.addf %389, %390 : vector<1x32xf32>
    %392 = math.tanh %391 : vector<1x32xf32>
    %393 = arith.mulf %388, %392 : vector<1x32xf32>
    %c12 = arith.constant 12 : index
    %c0_82 = arith.constant 0 : index
    %394 = vector.load %arg8[%c12, %c0_82] : memref<32x32xf32, #tpu.memory_space<vmem>>, vector<1x32xf32>
    tpu.vector_store %arg8[%c12, %c0_82], %393 {strides = array<i32>} : memref<32x32xf32, #tpu.memory_space<vmem>>, vector<1x32xf32>,
    %395 = vector.extract_strided_slice %247 {offsets = [5, 0], sizes = [1, 128], strides = [1, 1]} : vector<8x128xf32> to vector<1x128xf32>
    %cst_83 = arith.constant dense<0.000000e+00> : vector<1x128xf32>
    %396 = tpu.matmul %393, %3, %cst_83 {dimension_numbers = #tpu.dot_dimension_numbers<[1], [0], [0], [1], [0, 0, 1, 1], [], []>} : vector<1x32xf32>, vector<32x128xf32>, vector<1x128xf32> -> vector<1x128xf32>
    %397 = arith.addf %395, %396 : vector<1x128xf32>
    %398 = vector.extract_strided_slice %397 {offsets = [0, 0], sizes = [1, 32], strides = [1, 1]} : vector<1x128xf32> to vector<1x32xf32>
    %399 = arith.negf %398 : vector<1x32xf32>
    %400 = math.exp %399 : vector<1x32xf32>
    %cst_84 = arith.constant 1.000000e+00 : f32
    %401 = vector.broadcast %cst_84 : f32 to vector<1x32xf32>
    %402 = arith.addf %401, %400 : vector<1x32xf32>
    %403 = arith.divf %401, %402 : vector<1x32xf32>
    %404 = vector.extract_strided_slice %397 {offsets = [0, 32], sizes = [1, 32], strides = [1, 1]} : vector<1x128xf32> to vector<1x32xf32>
    %405 = arith.negf %404 : vector<1x32xf32>
    %406 = math.exp %405 : vector<1x32xf32>
    %cst_85 = arith.constant 1.000000e+00 : f32
    %407 = vector.broadcast %cst_85 : f32 to vector<1x32xf32>
    %408 = arith.addf %407, %406 : vector<1x32xf32>
    %409 = arith.divf %407, %408 : vector<1x32xf32>
    %410 = vector.extract_strided_slice %397 {offsets = [0, 64], sizes = [1, 32], strides = [1, 1]} : vector<1x128xf32> to vector<1x32xf32>
    %411 = math.tanh %410 : vector<1x32xf32>
    %412 = vector.extract_strided_slice %397 {offsets = [0, 96], sizes = [1, 32], strides = [1, 1]} : vector<1x128xf32> to vector<1x32xf32>
    %413 = arith.negf %412 : vector<1x32xf32>
    %414 = math.exp %413 : vector<1x32xf32>
    %cst_86 = arith.constant 1.000000e+00 : f32
    %415 = vector.broadcast %cst_86 : f32 to vector<1x32xf32>
    %416 = arith.addf %415, %414 : vector<1x32xf32>
    %417 = arith.divf %415, %416 : vector<1x32xf32>
    %418 = arith.mulf %409, %391 : vector<1x32xf32>
    %419 = arith.mulf %403, %411 : vector<1x32xf32>
    %420 = arith.addf %418, %419 : vector<1x32xf32>
    %421 = math.tanh %420 : vector<1x32xf32>
    %422 = arith.mulf %417, %421 : vector<1x32xf32>
    %c13 = arith.constant 13 : index
    %c0_87 = arith.constant 0 : index
    %423 = vector.load %arg8[%c13, %c0_87] : memref<32x32xf32, #tpu.memory_space<vmem>>, vector<1x32xf32>
    tpu.vector_store %arg8[%c13, %c0_87], %422 {strides = array<i32>} : memref<32x32xf32, #tpu.memory_space<vmem>>, vector<1x32xf32>,
    %424 = vector.extract_strided_slice %247 {offsets = [6, 0], sizes = [1, 128], strides = [1, 1]} : vector<8x128xf32> to vector<1x128xf32>
    %cst_88 = arith.constant dense<0.000000e+00> : vector<1x128xf32>
    %425 = tpu.matmul %422, %3, %cst_88 {dimension_numbers = #tpu.dot_dimension_numbers<[1], [0], [0], [1], [0, 0, 1, 1], [], []>} : vector<1x32xf32>, vector<32x128xf32>, vector<1x128xf32> -> vector<1x128xf32>
    %426 = arith.addf %424, %425 : vector<1x128xf32>
    %427 = vector.extract_strided_slice %426 {offsets = [0, 0], sizes = [1, 32], strides = [1, 1]} : vector<1x128xf32> to vector<1x32xf32>
    %428 = arith.negf %427 : vector<1x32xf32>
    %429 = math.exp %428 : vector<1x32xf32>
    %cst_89 = arith.constant 1.000000e+00 : f32
    %430 = vector.broadcast %cst_89 : f32 to vector<1x32xf32>
    %431 = arith.addf %430, %429 : vector<1x32xf32>
    %432 = arith.divf %430, %431 : vector<1x32xf32>
    %433 = vector.extract_strided_slice %426 {offsets = [0, 32], sizes = [1, 32], strides = [1, 1]} : vector<1x128xf32> to vector<1x32xf32>
    %434 = arith.negf %433 : vector<1x32xf32>
    %435 = math.exp %434 : vector<1x32xf32>
    %cst_90 = arith.constant 1.000000e+00 : f32
    %436 = vector.broadcast %cst_90 : f32 to vector<1x32xf32>
    %437 = arith.addf %436, %435 : vector<1x32xf32>
    %438 = arith.divf %436, %437 : vector<1x32xf32>
    %439 = vector.extract_strided_slice %426 {offsets = [0, 64], sizes = [1, 32], strides = [1, 1]} : vector<1x128xf32> to vector<1x32xf32>
    %440 = math.tanh %439 : vector<1x32xf32>
    %441 = vector.extract_strided_slice %426 {offsets = [0, 96], sizes = [1, 32], strides = [1, 1]} : vector<1x128xf32> to vector<1x32xf32>
    %442 = arith.negf %441 : vector<1x32xf32>
    %443 = math.exp %442 : vector<1x32xf32>
    %cst_91 = arith.constant 1.000000e+00 : f32
    %444 = vector.broadcast %cst_91 : f32 to vector<1x32xf32>
    %445 = arith.addf %444, %443 : vector<1x32xf32>
    %446 = arith.divf %444, %445 : vector<1x32xf32>
    %447 = arith.mulf %438, %420 : vector<1x32xf32>
    %448 = arith.mulf %432, %440 : vector<1x32xf32>
    %449 = arith.addf %447, %448 : vector<1x32xf32>
    %450 = math.tanh %449 : vector<1x32xf32>
    %451 = arith.mulf %446, %450 : vector<1x32xf32>
    %c14 = arith.constant 14 : index
    %c0_92 = arith.constant 0 : index
    %452 = vector.load %arg8[%c14, %c0_92] : memref<32x32xf32, #tpu.memory_space<vmem>>, vector<1x32xf32>
    tpu.vector_store %arg8[%c14, %c0_92], %451 {strides = array<i32>} : memref<32x32xf32, #tpu.memory_space<vmem>>, vector<1x32xf32>,
    %453 = vector.extract_strided_slice %247 {offsets = [7, 0], sizes = [1, 128], strides = [1, 1]} : vector<8x128xf32> to vector<1x128xf32>
    %cst_93 = arith.constant dense<0.000000e+00> : vector<1x128xf32>
    %454 = tpu.matmul %451, %3, %cst_93 {dimension_numbers = #tpu.dot_dimension_numbers<[1], [0], [0], [1], [0, 0, 1, 1], [], []>} : vector<1x32xf32>, vector<32x128xf32>, vector<1x128xf32> -> vector<1x128xf32>
    %455 = arith.addf %453, %454 : vector<1x128xf32>
    %456 = vector.extract_strided_slice %455 {offsets = [0, 0], sizes = [1, 32], strides = [1, 1]} : vector<1x128xf32> to vector<1x32xf32>
    %457 = arith.negf %456 : vector<1x32xf32>
    %458 = math.exp %457 : vector<1x32xf32>
    %cst_94 = arith.constant 1.000000e+00 : f32
    %459 = vector.broadcast %cst_94 : f32 to vector<1x32xf32>
    %460 = arith.addf %459, %458 : vector<1x32xf32>
    %461 = arith.divf %459, %460 : vector<1x32xf32>
    %462 = vector.extract_strided_slice %455 {offsets = [0, 32], sizes = [1, 32], strides = [1, 1]} : vector<1x128xf32> to vector<1x32xf32>
    %463 = arith.negf %462 : vector<1x32xf32>
    %464 = math.exp %463 : vector<1x32xf32>
    %cst_95 = arith.constant 1.000000e+00 : f32
    %465 = vector.broadcast %cst_95 : f32 to vector<1x32xf32>
    %466 = arith.addf %465, %464 : vector<1x32xf32>
    %467 = arith.divf %465, %466 : vector<1x32xf32>
    %468 = vector.extract_strided_slice %455 {offsets = [0, 64], sizes = [1, 32], strides = [1, 1]} : vector<1x128xf32> to vector<1x32xf32>
    %469 = math.tanh %468 : vector<1x32xf32>
    %470 = vector.extract_strided_slice %455 {offsets = [0, 96], sizes = [1, 32], strides = [1, 1]} : vector<1x128xf32> to vector<1x32xf32>
    %471 = arith.negf %470 : vector<1x32xf32>
    %472 = math.exp %471 : vector<1x32xf32>
    %cst_96 = arith.constant 1.000000e+00 : f32
    %473 = vector.broadcast %cst_96 : f32 to vector<1x32xf32>
    %474 = arith.addf %473, %472 : vector<1x32xf32>
    %475 = arith.divf %473, %474 : vector<1x32xf32>
    %476 = arith.mulf %467, %449 : vector<1x32xf32>
    %477 = arith.mulf %461, %469 : vector<1x32xf32>
    %478 = arith.addf %476, %477 : vector<1x32xf32>
    %479 = math.tanh %478 : vector<1x32xf32>
    %480 = arith.mulf %475, %479 : vector<1x32xf32>
    %c15 = arith.constant 15 : index
    %c0_97 = arith.constant 0 : index
    %481 = vector.load %arg8[%c15, %c0_97] : memref<32x32xf32, #tpu.memory_space<vmem>>, vector<1x32xf32>
    tpu.vector_store %arg8[%c15, %c0_97], %480 {strides = array<i32>} : memref<32x32xf32, #tpu.memory_space<vmem>>, vector<1x32xf32>,
    %c1_98 = arith.constant 1 : index
    %c0_99 = arith.constant 0 : index
    %c0_100 = arith.constant 0 : index
    %482 = vector.load %arg2[%c1_98, %c0_99, %c0_100] : memref<2x32x128xf32, #tpu.memory_space<vmem>>, vector<1x32x128xf32>
    %483 = vector.shape_cast %482 : vector<1x32x128xf32> to vector<32x128xf32>
    %c1_101 = arith.constant 1 : index
    %c0_102 = arith.constant 0 : index
    %c0_103 = arith.constant 0 : index
    %484 = vector.load %arg3[%c1_101, %c0_102, %c0_103] : memref<2x32x128xf32, #tpu.memory_space<vmem>>, vector<1x32x128xf32>
    %485 = vector.shape_cast %484 : vector<1x32x128xf32> to vector<32x128xf32>
    %c1_104 = arith.constant 1 : index
    %c0_105 = arith.constant 0 : index
    %c0_106 = arith.constant 0 : index
    %486 = vector.load %arg4[%c1_104, %c0_105, %c0_106] : memref<2x1x128xf32, #tpu.memory_space<vmem>>, vector<1x1x128xf32>
    %487 = vector.shape_cast %486 : vector<1x1x128xf32> to vector<1x128xf32>
    %c0_107 = arith.constant 0 : index
    %c0_108 = arith.constant 0 : index
    %488 = vector.load %arg1[%c0_107, %c0_108] : memref<16x32xf32, #tpu.memory_space<vmem>>, vector<8x32xf32>
    %cst_109 = arith.constant dense<0.000000e+00> : vector<8x128xf32>
    %489 = tpu.matmul %488, %483, %cst_109 {dimension_numbers = #tpu.dot_dimension_numbers<[1], [0], [0], [1], [0, 0, 1, 1], [], []>} : vector<8x32xf32>, vector<32x128xf32>, vector<8x128xf32> -> vector<8x128xf32>
    %490 = vector.broadcast %487 : vector<1x128xf32> to vector<8x128xf32>
    %491 = arith.addf %489, %490 : vector<8x128xf32>
    %cst_110 = arith.constant 0.000000e+00 : f32
    %492 = vector.broadcast %cst_110 : f32 to vector<1x32xf32>
    %cst_111 = arith.constant 0.000000e+00 : f32
    %493 = vector.broadcast %cst_111 : f32 to vector<1x32xf32>
    %494 = vector.extract_strided_slice %491 {offsets = [7, 0], sizes = [1, 128], strides = [1, 1]} : vector<8x128xf32> to vector<1x128xf32>
    %cst_112 = arith.constant dense<0.000000e+00> : vector<1x128xf32>
    %495 = tpu.matmul %492, %485, %cst_112 {dimension_numbers = #tpu.dot_dimension_numbers<[1], [0], [0], [1], [0, 0, 1, 1], [], []>} : vector<1x32xf32>, vector<32x128xf32>, vector<1x128xf32> -> vector<1x128xf32>
    %496 = arith.addf %494, %495 : vector<1x128xf32>
    %497 = vector.extract_strided_slice %496 {offsets = [0, 0], sizes = [1, 32], strides = [1, 1]} : vector<1x128xf32> to vector<1x32xf32>
    %498 = arith.negf %497 : vector<1x32xf32>
    %499 = math.exp %498 : vector<1x32xf32>
    %cst_113 = arith.constant 1.000000e+00 : f32
    %500 = vector.broadcast %cst_113 : f32 to vector<1x32xf32>
    %501 = arith.addf %500, %499 : vector<1x32xf32>
    %502 = arith.divf %500, %501 : vector<1x32xf32>
    %503 = vector.extract_strided_slice %496 {offsets = [0, 32], sizes = [1, 32], strides = [1, 1]} : vector<1x128xf32> to vector<1x32xf32>
    %504 = arith.negf %503 : vector<1x32xf32>
    %505 = math.exp %504 : vector<1x32xf32>
    %cst_114 = arith.constant 1.000000e+00 : f32
    %506 = vector.broadcast %cst_114 : f32 to vector<1x32xf32>
    %507 = arith.addf %506, %505 : vector<1x32xf32>
    %508 = arith.divf %506, %507 : vector<1x32xf32>
    %509 = vector.extract_strided_slice %496 {offsets = [0, 64], sizes = [1, 32], strides = [1, 1]} : vector<1x128xf32> to vector<1x32xf32>
    %510 = math.tanh %509 : vector<1x32xf32>
    %511 = vector.extract_strided_slice %496 {offsets = [0, 96], sizes = [1, 32], strides = [1, 1]} : vector<1x128xf32> to vector<1x32xf32>
    %512 = arith.negf %511 : vector<1x32xf32>
    %513 = math.exp %512 : vector<1x32xf32>
    %cst_115 = arith.constant 1.000000e+00 : f32
    %514 = vector.broadcast %cst_115 : f32 to vector<1x32xf32>
    %515 = arith.addf %514, %513 : vector<1x32xf32>
    %516 = arith.divf %514, %515 : vector<1x32xf32>
    %517 = arith.mulf %508, %493 : vector<1x32xf32>
    %518 = arith.mulf %502, %510 : vector<1x32xf32>
    %519 = arith.addf %517, %518 : vector<1x32xf32>
    %520 = math.tanh %519 : vector<1x32xf32>
    %521 = arith.mulf %516, %520 : vector<1x32xf32>
    %c23 = arith.constant 23 : index
    %c0_116 = arith.constant 0 : index
    %522 = vector.load %arg8[%c23, %c0_116] : memref<32x32xf32, #tpu.memory_space<vmem>>, vector<1x32xf32>
    tpu.vector_store %arg8[%c23, %c0_116], %521 {strides = array<i32>} : memref<32x32xf32, #tpu.memory_space<vmem>>, vector<1x32xf32>,
    %523 = vector.extract_strided_slice %491 {offsets = [6, 0], sizes = [1, 128], strides = [1, 1]} : vector<8x128xf32> to vector<1x128xf32>
    %cst_117 = arith.constant dense<0.000000e+00> : vector<1x128xf32>
    %524 = tpu.matmul %521, %485, %cst_117 {dimension_numbers = #tpu.dot_dimension_numbers<[1], [0], [0], [1], [0, 0, 1, 1], [], []>} : vector<1x32xf32>, vector<32x128xf32>, vector<1x128xf32> -> vector<1x128xf32>
    %525 = arith.addf %523, %524 : vector<1x128xf32>
    %526 = vector.extract_strided_slice %525 {offsets = [0, 0], sizes = [1, 32], strides = [1, 1]} : vector<1x128xf32> to vector<1x32xf32>
    %527 = arith.negf %526 : vector<1x32xf32>
    %528 = math.exp %527 : vector<1x32xf32>
    %cst_118 = arith.constant 1.000000e+00 : f32
    %529 = vector.broadcast %cst_118 : f32 to vector<1x32xf32>
    %530 = arith.addf %529, %528 : vector<1x32xf32>
    %531 = arith.divf %529, %530 : vector<1x32xf32>
    %532 = vector.extract_strided_slice %525 {offsets = [0, 32], sizes = [1, 32], strides = [1, 1]} : vector<1x128xf32> to vector<1x32xf32>
    %533 = arith.negf %532 : vector<1x32xf32>
    %534 = math.exp %533 : vector<1x32xf32>
    %cst_119 = arith.constant 1.000000e+00 : f32
    %535 = vector.broadcast %cst_119 : f32 to vector<1x32xf32>
    %536 = arith.addf %535, %534 : vector<1x32xf32>
    %537 = arith.divf %535, %536 : vector<1x32xf32>
    %538 = vector.extract_strided_slice %525 {offsets = [0, 64], sizes = [1, 32], strides = [1, 1]} : vector<1x128xf32> to vector<1x32xf32>
    %539 = math.tanh %538 : vector<1x32xf32>
    %540 = vector.extract_strided_slice %525 {offsets = [0, 96], sizes = [1, 32], strides = [1, 1]} : vector<1x128xf32> to vector<1x32xf32>
    %541 = arith.negf %540 : vector<1x32xf32>
    %542 = math.exp %541 : vector<1x32xf32>
    %cst_120 = arith.constant 1.000000e+00 : f32
    %543 = vector.broadcast %cst_120 : f32 to vector<1x32xf32>
    %544 = arith.addf %543, %542 : vector<1x32xf32>
    %545 = arith.divf %543, %544 : vector<1x32xf32>
    %546 = arith.mulf %537, %519 : vector<1x32xf32>
    %547 = arith.mulf %531, %539 : vector<1x32xf32>
    %548 = arith.addf %546, %547 : vector<1x32xf32>
    %549 = math.tanh %548 : vector<1x32xf32>
    %550 = arith.mulf %545, %549 : vector<1x32xf32>
    %c22 = arith.constant 22 : index
    %c0_121 = arith.constant 0 : index
    %551 = vector.load %arg8[%c22, %c0_121] : memref<32x32xf32, #tpu.memory_space<vmem>>, vector<1x32xf32>
    tpu.vector_store %arg8[%c22, %c0_121], %550 {strides = array<i32>} : memref<32x32xf32, #tpu.memory_space<vmem>>, vector<1x32xf32>,
    %552 = vector.extract_strided_slice %491 {offsets = [5, 0], sizes = [1, 128], strides = [1, 1]} : vector<8x128xf32> to vector<1x128xf32>
    %cst_122 = arith.constant dense<0.000000e+00> : vector<1x128xf32>
    %553 = tpu.matmul %550, %485, %cst_122 {dimension_numbers = #tpu.dot_dimension_numbers<[1], [0], [0], [1], [0, 0, 1, 1], [], []>} : vector<1x32xf32>, vector<32x128xf32>, vector<1x128xf32> -> vector<1x128xf32>
    %554 = arith.addf %552, %553 : vector<1x128xf32>
    %555 = vector.extract_strided_slice %554 {offsets = [0, 0], sizes = [1, 32], strides = [1, 1]} : vector<1x128xf32> to vector<1x32xf32>
    %556 = arith.negf %555 : vector<1x32xf32>
    %557 = math.exp %556 : vector<1x32xf32>
    %cst_123 = arith.constant 1.000000e+00 : f32
    %558 = vector.broadcast %cst_123 : f32 to vector<1x32xf32>
    %559 = arith.addf %558, %557 : vector<1x32xf32>
    %560 = arith.divf %558, %559 : vector<1x32xf32>
    %561 = vector.extract_strided_slice %554 {offsets = [0, 32], sizes = [1, 32], strides = [1, 1]} : vector<1x128xf32> to vector<1x32xf32>
    %562 = arith.negf %561 : vector<1x32xf32>
    %563 = math.exp %562 : vector<1x32xf32>
    %cst_124 = arith.constant 1.000000e+00 : f32
    %564 = vector.broadcast %cst_124 : f32 to vector<1x32xf32>
    %565 = arith.addf %564, %563 : vector<1x32xf32>
    %566 = arith.divf %564, %565 : vector<1x32xf32>
    %567 = vector.extract_strided_slice %554 {offsets = [0, 64], sizes = [1, 32], strides = [1, 1]} : vector<1x128xf32> to vector<1x32xf32>
    %568 = math.tanh %567 : vector<1x32xf32>
    %569 = vector.extract_strided_slice %554 {offsets = [0, 96], sizes = [1, 32], strides = [1, 1]} : vector<1x128xf32> to vector<1x32xf32>
    %570 = arith.negf %569 : vector<1x32xf32>
    %571 = math.exp %570 : vector<1x32xf32>
    %cst_125 = arith.constant 1.000000e+00 : f32
    %572 = vector.broadcast %cst_125 : f32 to vector<1x32xf32>
    %573 = arith.addf %572, %571 : vector<1x32xf32>
    %574 = arith.divf %572, %573 : vector<1x32xf32>
    %575 = arith.mulf %566, %548 : vector<1x32xf32>
    %576 = arith.mulf %560, %568 : vector<1x32xf32>
    %577 = arith.addf %575, %576 : vector<1x32xf32>
    %578 = math.tanh %577 : vector<1x32xf32>
    %579 = arith.mulf %574, %578 : vector<1x32xf32>
    %c21 = arith.constant 21 : index
    %c0_126 = arith.constant 0 : index
    %580 = vector.load %arg8[%c21, %c0_126] : memref<32x32xf32, #tpu.memory_space<vmem>>, vector<1x32xf32>
    tpu.vector_store %arg8[%c21, %c0_126], %579 {strides = array<i32>} : memref<32x32xf32, #tpu.memory_space<vmem>>, vector<1x32xf32>,
    %581 = vector.extract_strided_slice %491 {offsets = [4, 0], sizes = [1, 128], strides = [1, 1]} : vector<8x128xf32> to vector<1x128xf32>
    %cst_127 = arith.constant dense<0.000000e+00> : vector<1x128xf32>
    %582 = tpu.matmul %579, %485, %cst_127 {dimension_numbers = #tpu.dot_dimension_numbers<[1], [0], [0], [1], [0, 0, 1, 1], [], []>} : vector<1x32xf32>, vector<32x128xf32>, vector<1x128xf32> -> vector<1x128xf32>
    %583 = arith.addf %581, %582 : vector<1x128xf32>
    %584 = vector.extract_strided_slice %583 {offsets = [0, 0], sizes = [1, 32], strides = [1, 1]} : vector<1x128xf32> to vector<1x32xf32>
    %585 = arith.negf %584 : vector<1x32xf32>
    %586 = math.exp %585 : vector<1x32xf32>
    %cst_128 = arith.constant 1.000000e+00 : f32
    %587 = vector.broadcast %cst_128 : f32 to vector<1x32xf32>
    %588 = arith.addf %587, %586 : vector<1x32xf32>
    %589 = arith.divf %587, %588 : vector<1x32xf32>
    %590 = vector.extract_strided_slice %583 {offsets = [0, 32], sizes = [1, 32], strides = [1, 1]} : vector<1x128xf32> to vector<1x32xf32>
    %591 = arith.negf %590 : vector<1x32xf32>
    %592 = math.exp %591 : vector<1x32xf32>
    %cst_129 = arith.constant 1.000000e+00 : f32
    %593 = vector.broadcast %cst_129 : f32 to vector<1x32xf32>
    %594 = arith.addf %593, %592 : vector<1x32xf32>
    %595 = arith.divf %593, %594 : vector<1x32xf32>
    %596 = vector.extract_strided_slice %583 {offsets = [0, 64], sizes = [1, 32], strides = [1, 1]} : vector<1x128xf32> to vector<1x32xf32>
    %597 = math.tanh %596 : vector<1x32xf32>
    %598 = vector.extract_strided_slice %583 {offsets = [0, 96], sizes = [1, 32], strides = [1, 1]} : vector<1x128xf32> to vector<1x32xf32>
    %599 = arith.negf %598 : vector<1x32xf32>
    %600 = math.exp %599 : vector<1x32xf32>
    %cst_130 = arith.constant 1.000000e+00 : f32
    %601 = vector.broadcast %cst_130 : f32 to vector<1x32xf32>
    %602 = arith.addf %601, %600 : vector<1x32xf32>
    %603 = arith.divf %601, %602 : vector<1x32xf32>
    %604 = arith.mulf %595, %577 : vector<1x32xf32>
    %605 = arith.mulf %589, %597 : vector<1x32xf32>
    %606 = arith.addf %604, %605 : vector<1x32xf32>
    %607 = math.tanh %606 : vector<1x32xf32>
    %608 = arith.mulf %603, %607 : vector<1x32xf32>
    %c20 = arith.constant 20 : index
    %c0_131 = arith.constant 0 : index
    %609 = vector.load %arg8[%c20, %c0_131] : memref<32x32xf32, #tpu.memory_space<vmem>>, vector<1x32xf32>
    tpu.vector_store %arg8[%c20, %c0_131], %608 {strides = array<i32>} : memref<32x32xf32, #tpu.memory_space<vmem>>, vector<1x32xf32>,
    %610 = vector.extract_strided_slice %491 {offsets = [3, 0], sizes = [1, 128], strides = [1, 1]} : vector<8x128xf32> to vector<1x128xf32>
    %cst_132 = arith.constant dense<0.000000e+00> : vector<1x128xf32>
    %611 = tpu.matmul %608, %485, %cst_132 {dimension_numbers = #tpu.dot_dimension_numbers<[1], [0], [0], [1], [0, 0, 1, 1], [], []>} : vector<1x32xf32>, vector<32x128xf32>, vector<1x128xf32> -> vector<1x128xf32>
    %612 = arith.addf %610, %611 : vector<1x128xf32>
    %613 = vector.extract_strided_slice %612 {offsets = [0, 0], sizes = [1, 32], strides = [1, 1]} : vector<1x128xf32> to vector<1x32xf32>
    %614 = arith.negf %613 : vector<1x32xf32>
    %615 = math.exp %614 : vector<1x32xf32>
    %cst_133 = arith.constant 1.000000e+00 : f32
    %616 = vector.broadcast %cst_133 : f32 to vector<1x32xf32>
    %617 = arith.addf %616, %615 : vector<1x32xf32>
    %618 = arith.divf %616, %617 : vector<1x32xf32>
    %619 = vector.extract_strided_slice %612 {offsets = [0, 32], sizes = [1, 32], strides = [1, 1]} : vector<1x128xf32> to vector<1x32xf32>
    %620 = arith.negf %619 : vector<1x32xf32>
    %621 = math.exp %620 : vector<1x32xf32>
    %cst_134 = arith.constant 1.000000e+00 : f32
    %622 = vector.broadcast %cst_134 : f32 to vector<1x32xf32>
    %623 = arith.addf %622, %621 : vector<1x32xf32>
    %624 = arith.divf %622, %623 : vector<1x32xf32>
    %625 = vector.extract_strided_slice %612 {offsets = [0, 64], sizes = [1, 32], strides = [1, 1]} : vector<1x128xf32> to vector<1x32xf32>
    %626 = math.tanh %625 : vector<1x32xf32>
    %627 = vector.extract_strided_slice %612 {offsets = [0, 96], sizes = [1, 32], strides = [1, 1]} : vector<1x128xf32> to vector<1x32xf32>
    %628 = arith.negf %627 : vector<1x32xf32>
    %629 = math.exp %628 : vector<1x32xf32>
    %cst_135 = arith.constant 1.000000e+00 : f32
    %630 = vector.broadcast %cst_135 : f32 to vector<1x32xf32>
    %631 = arith.addf %630, %629 : vector<1x32xf32>
    %632 = arith.divf %630, %631 : vector<1x32xf32>
    %633 = arith.mulf %624, %606 : vector<1x32xf32>
    %634 = arith.mulf %618, %626 : vector<1x32xf32>
    %635 = arith.addf %633, %634 : vector<1x32xf32>
    %636 = math.tanh %635 : vector<1x32xf32>
    %637 = arith.mulf %632, %636 : vector<1x32xf32>
    %c19 = arith.constant 19 : index
    %c0_136 = arith.constant 0 : index
    %638 = vector.load %arg8[%c19, %c0_136] : memref<32x32xf32, #tpu.memory_space<vmem>>, vector<1x32xf32>
    tpu.vector_store %arg8[%c19, %c0_136], %637 {strides = array<i32>} : memref<32x32xf32, #tpu.memory_space<vmem>>, vector<1x32xf32>,
    %639 = vector.extract_strided_slice %491 {offsets = [2, 0], sizes = [1, 128], strides = [1, 1]} : vector<8x128xf32> to vector<1x128xf32>
    %cst_137 = arith.constant dense<0.000000e+00> : vector<1x128xf32>
    %640 = tpu.matmul %637, %485, %cst_137 {dimension_numbers = #tpu.dot_dimension_numbers<[1], [0], [0], [1], [0, 0, 1, 1], [], []>} : vector<1x32xf32>, vector<32x128xf32>, vector<1x128xf32> -> vector<1x128xf32>
    %641 = arith.addf %639, %640 : vector<1x128xf32>
    %642 = vector.extract_strided_slice %641 {offsets = [0, 0], sizes = [1, 32], strides = [1, 1]} : vector<1x128xf32> to vector<1x32xf32>
    %643 = arith.negf %642 : vector<1x32xf32>
    %644 = math.exp %643 : vector<1x32xf32>
    %cst_138 = arith.constant 1.000000e+00 : f32
    %645 = vector.broadcast %cst_138 : f32 to vector<1x32xf32>
    %646 = arith.addf %645, %644 : vector<1x32xf32>
    %647 = arith.divf %645, %646 : vector<1x32xf32>
    %648 = vector.extract_strided_slice %641 {offsets = [0, 32], sizes = [1, 32], strides = [1, 1]} : vector<1x128xf32> to vector<1x32xf32>
    %649 = arith.negf %648 : vector<1x32xf32>
    %650 = math.exp %649 : vector<1x32xf32>
    %cst_139 = arith.constant 1.000000e+00 : f32
    %651 = vector.broadcast %cst_139 : f32 to vector<1x32xf32>
    %652 = arith.addf %651, %650 : vector<1x32xf32>
    %653 = arith.divf %651, %652 : vector<1x32xf32>
    %654 = vector.extract_strided_slice %641 {offsets = [0, 64], sizes = [1, 32], strides = [1, 1]} : vector<1x128xf32> to vector<1x32xf32>
    %655 = math.tanh %654 : vector<1x32xf32>
    %656 = vector.extract_strided_slice %641 {offsets = [0, 96], sizes = [1, 32], strides = [1, 1]} : vector<1x128xf32> to vector<1x32xf32>
    %657 = arith.negf %656 : vector<1x32xf32>
    %658 = math.exp %657 : vector<1x32xf32>
    %cst_140 = arith.constant 1.000000e+00 : f32
    %659 = vector.broadcast %cst_140 : f32 to vector<1x32xf32>
    %660 = arith.addf %659, %658 : vector<1x32xf32>
    %661 = arith.divf %659, %660 : vector<1x32xf32>
    %662 = arith.mulf %653, %635 : vector<1x32xf32>
    %663 = arith.mulf %647, %655 : vector<1x32xf32>
    %664 = arith.addf %662, %663 : vector<1x32xf32>
    %665 = math.tanh %664 : vector<1x32xf32>
    %666 = arith.mulf %661, %665 : vector<1x32xf32>
    %c18 = arith.constant 18 : index
    %c0_141 = arith.constant 0 : index
    %667 = vector.load %arg8[%c18, %c0_141] : memref<32x32xf32, #tpu.memory_space<vmem>>, vector<1x32xf32>
    tpu.vector_store %arg8[%c18, %c0_141], %666 {strides = array<i32>} : memref<32x32xf32, #tpu.memory_space<vmem>>, vector<1x32xf32>,
    %668 = vector.extract_strided_slice %491 {offsets = [1, 0], sizes = [1, 128], strides = [1, 1]} : vector<8x128xf32> to vector<1x128xf32>
    %cst_142 = arith.constant dense<0.000000e+00> : vector<1x128xf32>
    %669 = tpu.matmul %666, %485, %cst_142 {dimension_numbers = #tpu.dot_dimension_numbers<[1], [0], [0], [1], [0, 0, 1, 1], [], []>} : vector<1x32xf32>, vector<32x128xf32>, vector<1x128xf32> -> vector<1x128xf32>
    %670 = arith.addf %668, %669 : vector<1x128xf32>
    %671 = vector.extract_strided_slice %670 {offsets = [0, 0], sizes = [1, 32], strides = [1, 1]} : vector<1x128xf32> to vector<1x32xf32>
    %672 = arith.negf %671 : vector<1x32xf32>
    %673 = math.exp %672 : vector<1x32xf32>
    %cst_143 = arith.constant 1.000000e+00 : f32
    %674 = vector.broadcast %cst_143 : f32 to vector<1x32xf32>
    %675 = arith.addf %674, %673 : vector<1x32xf32>
    %676 = arith.divf %674, %675 : vector<1x32xf32>
    %677 = vector.extract_strided_slice %670 {offsets = [0, 32], sizes = [1, 32], strides = [1, 1]} : vector<1x128xf32> to vector<1x32xf32>
    %678 = arith.negf %677 : vector<1x32xf32>
    %679 = math.exp %678 : vector<1x32xf32>
    %cst_144 = arith.constant 1.000000e+00 : f32
    %680 = vector.broadcast %cst_144 : f32 to vector<1x32xf32>
    %681 = arith.addf %680, %679 : vector<1x32xf32>
    %682 = arith.divf %680, %681 : vector<1x32xf32>
    %683 = vector.extract_strided_slice %670 {offsets = [0, 64], sizes = [1, 32], strides = [1, 1]} : vector<1x128xf32> to vector<1x32xf32>
    %684 = math.tanh %683 : vector<1x32xf32>
    %685 = vector.extract_strided_slice %670 {offsets = [0, 96], sizes = [1, 32], strides = [1, 1]} : vector<1x128xf32> to vector<1x32xf32>
    %686 = arith.negf %685 : vector<1x32xf32>
    %687 = math.exp %686 : vector<1x32xf32>
    %cst_145 = arith.constant 1.000000e+00 : f32
    %688 = vector.broadcast %cst_145 : f32 to vector<1x32xf32>
    %689 = arith.addf %688, %687 : vector<1x32xf32>
    %690 = arith.divf %688, %689 : vector<1x32xf32>
    %691 = arith.mulf %682, %664 : vector<1x32xf32>
    %692 = arith.mulf %676, %684 : vector<1x32xf32>
    %693 = arith.addf %691, %692 : vector<1x32xf32>
    %694 = math.tanh %693 : vector<1x32xf32>
    %695 = arith.mulf %690, %694 : vector<1x32xf32>
    %c17 = arith.constant 17 : index
    %c0_146 = arith.constant 0 : index
    %696 = vector.load %arg8[%c17, %c0_146] : memref<32x32xf32, #tpu.memory_space<vmem>>, vector<1x32xf32>
    tpu.vector_store %arg8[%c17, %c0_146], %695 {strides = array<i32>} : memref<32x32xf32, #tpu.memory_space<vmem>>, vector<1x32xf32>,
    %697 = vector.extract_strided_slice %491 {offsets = [0, 0], sizes = [1, 128], strides = [1, 1]} : vector<8x128xf32> to vector<1x128xf32>
    %cst_147 = arith.constant dense<0.000000e+00> : vector<1x128xf32>
    %698 = tpu.matmul %695, %485, %cst_147 {dimension_numbers = #tpu.dot_dimension_numbers<[1], [0], [0], [1], [0, 0, 1, 1], [], []>} : vector<1x32xf32>, vector<32x128xf32>, vector<1x128xf32> -> vector<1x128xf32>
    %699 = arith.addf %697, %698 : vector<1x128xf32>
    %700 = vector.extract_strided_slice %699 {offsets = [0, 0], sizes = [1, 32], strides = [1, 1]} : vector<1x128xf32> to vector<1x32xf32>
    %701 = arith.negf %700 : vector<1x32xf32>
    %702 = math.exp %701 : vector<1x32xf32>
    %cst_148 = arith.constant 1.000000e+00 : f32
    %703 = vector.broadcast %cst_148 : f32 to vector<1x32xf32>
    %704 = arith.addf %703, %702 : vector<1x32xf32>
    %705 = arith.divf %703, %704 : vector<1x32xf32>
    %706 = vector.extract_strided_slice %699 {offsets = [0, 32], sizes = [1, 32], strides = [1, 1]} : vector<1x128xf32> to vector<1x32xf32>
    %707 = arith.negf %706 : vector<1x32xf32>
    %708 = math.exp %707 : vector<1x32xf32>
    %cst_149 = arith.constant 1.000000e+00 : f32
    %709 = vector.broadcast %cst_149 : f32 to vector<1x32xf32>
    %710 = arith.addf %709, %708 : vector<1x32xf32>
    %711 = arith.divf %709, %710 : vector<1x32xf32>
    %712 = vector.extract_strided_slice %699 {offsets = [0, 64], sizes = [1, 32], strides = [1, 1]} : vector<1x128xf32> to vector<1x32xf32>
    %713 = math.tanh %712 : vector<1x32xf32>
    %714 = vector.extract_strided_slice %699 {offsets = [0, 96], sizes = [1, 32], strides = [1, 1]} : vector<1x128xf32> to vector<1x32xf32>
    %715 = arith.negf %714 : vector<1x32xf32>
    %716 = math.exp %715 : vector<1x32xf32>
    %cst_150 = arith.constant 1.000000e+00 : f32
    %717 = vector.broadcast %cst_150 : f32 to vector<1x32xf32>
    %718 = arith.addf %717, %716 : vector<1x32xf32>
    %719 = arith.divf %717, %718 : vector<1x32xf32>
    %720 = arith.mulf %711, %693 : vector<1x32xf32>
    %721 = arith.mulf %705, %713 : vector<1x32xf32>
    %722 = arith.addf %720, %721 : vector<1x32xf32>
    %723 = math.tanh %722 : vector<1x32xf32>
    %724 = arith.mulf %719, %723 : vector<1x32xf32>
    %c16 = arith.constant 16 : index
    %c0_151 = arith.constant 0 : index
    %725 = vector.load %arg8[%c16, %c0_151] : memref<32x32xf32, #tpu.memory_space<vmem>>, vector<1x32xf32>
    tpu.vector_store %arg8[%c16, %c0_151], %724 {strides = array<i32>} : memref<32x32xf32, #tpu.memory_space<vmem>>, vector<1x32xf32>,
    %c8_152 = arith.constant 8 : index
    %c0_153 = arith.constant 0 : index
    %726 = vector.load %arg1[%c8_152, %c0_153] : memref<16x32xf32, #tpu.memory_space<vmem>>, vector<8x32xf32>
    %cst_154 = arith.constant dense<0.000000e+00> : vector<8x128xf32>
    %727 = tpu.matmul %726, %483, %cst_154 {dimension_numbers = #tpu.dot_dimension_numbers<[1], [0], [0], [1], [0, 0, 1, 1], [], []>} : vector<8x32xf32>, vector<32x128xf32>, vector<8x128xf32> -> vector<8x128xf32>
    %728 = vector.broadcast %487 : vector<1x128xf32> to vector<8x128xf32>
    %729 = arith.addf %727, %728 : vector<8x128xf32>
    %cst_155 = arith.constant 0.000000e+00 : f32
    %730 = vector.broadcast %cst_155 : f32 to vector<1x32xf32>
    %cst_156 = arith.constant 0.000000e+00 : f32
    %731 = vector.broadcast %cst_156 : f32 to vector<1x32xf32>
    %732 = vector.extract_strided_slice %729 {offsets = [7, 0], sizes = [1, 128], strides = [1, 1]} : vector<8x128xf32> to vector<1x128xf32>
    %cst_157 = arith.constant dense<0.000000e+00> : vector<1x128xf32>
    %733 = tpu.matmul %730, %485, %cst_157 {dimension_numbers = #tpu.dot_dimension_numbers<[1], [0], [0], [1], [0, 0, 1, 1], [], []>} : vector<1x32xf32>, vector<32x128xf32>, vector<1x128xf32> -> vector<1x128xf32>
    %734 = arith.addf %732, %733 : vector<1x128xf32>
    %735 = vector.extract_strided_slice %734 {offsets = [0, 0], sizes = [1, 32], strides = [1, 1]} : vector<1x128xf32> to vector<1x32xf32>
    %736 = arith.negf %735 : vector<1x32xf32>
    %737 = math.exp %736 : vector<1x32xf32>
    %cst_158 = arith.constant 1.000000e+00 : f32
    %738 = vector.broadcast %cst_158 : f32 to vector<1x32xf32>
    %739 = arith.addf %738, %737 : vector<1x32xf32>
    %740 = arith.divf %738, %739 : vector<1x32xf32>
    %741 = vector.extract_strided_slice %734 {offsets = [0, 32], sizes = [1, 32], strides = [1, 1]} : vector<1x128xf32> to vector<1x32xf32>
    %742 = arith.negf %741 : vector<1x32xf32>
    %743 = math.exp %742 : vector<1x32xf32>
    %cst_159 = arith.constant 1.000000e+00 : f32
    %744 = vector.broadcast %cst_159 : f32 to vector<1x32xf32>
    %745 = arith.addf %744, %743 : vector<1x32xf32>
    %746 = arith.divf %744, %745 : vector<1x32xf32>
    %747 = vector.extract_strided_slice %734 {offsets = [0, 64], sizes = [1, 32], strides = [1, 1]} : vector<1x128xf32> to vector<1x32xf32>
    %748 = math.tanh %747 : vector<1x32xf32>
    %749 = vector.extract_strided_slice %734 {offsets = [0, 96], sizes = [1, 32], strides = [1, 1]} : vector<1x128xf32> to vector<1x32xf32>
    %750 = arith.negf %749 : vector<1x32xf32>
    %751 = math.exp %750 : vector<1x32xf32>
    %cst_160 = arith.constant 1.000000e+00 : f32
    %752 = vector.broadcast %cst_160 : f32 to vector<1x32xf32>
    %753 = arith.addf %752, %751 : vector<1x32xf32>
    %754 = arith.divf %752, %753 : vector<1x32xf32>
    %755 = arith.mulf %746, %731 : vector<1x32xf32>
    %756 = arith.mulf %740, %748 : vector<1x32xf32>
    %757 = arith.addf %755, %756 : vector<1x32xf32>
    %758 = math.tanh %757 : vector<1x32xf32>
    %759 = arith.mulf %754, %758 : vector<1x32xf32>
    %c31 = arith.constant 31 : index
    %c0_161 = arith.constant 0 : index
    %760 = vector.load %arg8[%c31, %c0_161] : memref<32x32xf32, #tpu.memory_space<vmem>>, vector<1x32xf32>
    tpu.vector_store %arg8[%c31, %c0_161], %759 {strides = array<i32>} : memref<32x32xf32, #tpu.memory_space<vmem>>, vector<1x32xf32>,
    %761 = vector.extract_strided_slice %729 {offsets = [6, 0], sizes = [1, 128], strides = [1, 1]} : vector<8x128xf32> to vector<1x128xf32>
    %cst_162 = arith.constant dense<0.000000e+00> : vector<1x128xf32>
    %762 = tpu.matmul %759, %485, %cst_162 {dimension_numbers = #tpu.dot_dimension_numbers<[1], [0], [0], [1], [0, 0, 1, 1], [], []>} : vector<1x32xf32>, vector<32x128xf32>, vector<1x128xf32> -> vector<1x128xf32>
    %763 = arith.addf %761, %762 : vector<1x128xf32>
    %764 = vector.extract_strided_slice %763 {offsets = [0, 0], sizes = [1, 32], strides = [1, 1]} : vector<1x128xf32> to vector<1x32xf32>
    %765 = arith.negf %764 : vector<1x32xf32>
    %766 = math.exp %765 : vector<1x32xf32>
    %cst_163 = arith.constant 1.000000e+00 : f32
    %767 = vector.broadcast %cst_163 : f32 to vector<1x32xf32>
    %768 = arith.addf %767, %766 : vector<1x32xf32>
    %769 = arith.divf %767, %768 : vector<1x32xf32>
    %770 = vector.extract_strided_slice %763 {offsets = [0, 32], sizes = [1, 32], strides = [1, 1]} : vector<1x128xf32> to vector<1x32xf32>
    %771 = arith.negf %770 : vector<1x32xf32>
    %772 = math.exp %771 : vector<1x32xf32>
    %cst_164 = arith.constant 1.000000e+00 : f32
    %773 = vector.broadcast %cst_164 : f32 to vector<1x32xf32>
    %774 = arith.addf %773, %772 : vector<1x32xf32>
    %775 = arith.divf %773, %774 : vector<1x32xf32>
    %776 = vector.extract_strided_slice %763 {offsets = [0, 64], sizes = [1, 32], strides = [1, 1]} : vector<1x128xf32> to vector<1x32xf32>
    %777 = math.tanh %776 : vector<1x32xf32>
    %778 = vector.extract_strided_slice %763 {offsets = [0, 96], sizes = [1, 32], strides = [1, 1]} : vector<1x128xf32> to vector<1x32xf32>
    %779 = arith.negf %778 : vector<1x32xf32>
    %780 = math.exp %779 : vector<1x32xf32>
    %cst_165 = arith.constant 1.000000e+00 : f32
    %781 = vector.broadcast %cst_165 : f32 to vector<1x32xf32>
    %782 = arith.addf %781, %780 : vector<1x32xf32>
    %783 = arith.divf %781, %782 : vector<1x32xf32>
    %784 = arith.mulf %775, %757 : vector<1x32xf32>
    %785 = arith.mulf %769, %777 : vector<1x32xf32>
    %786 = arith.addf %784, %785 : vector<1x32xf32>
    %787 = math.tanh %786 : vector<1x32xf32>
    %788 = arith.mulf %783, %787 : vector<1x32xf32>
    %c30 = arith.constant 30 : index
    %c0_166 = arith.constant 0 : index
    %789 = vector.load %arg8[%c30, %c0_166] : memref<32x32xf32, #tpu.memory_space<vmem>>, vector<1x32xf32>
    tpu.vector_store %arg8[%c30, %c0_166], %788 {strides = array<i32>} : memref<32x32xf32, #tpu.memory_space<vmem>>, vector<1x32xf32>,
    %790 = vector.extract_strided_slice %729 {offsets = [5, 0], sizes = [1, 128], strides = [1, 1]} : vector<8x128xf32> to vector<1x128xf32>
    %cst_167 = arith.constant dense<0.000000e+00> : vector<1x128xf32>
    %791 = tpu.matmul %788, %485, %cst_167 {dimension_numbers = #tpu.dot_dimension_numbers<[1], [0], [0], [1], [0, 0, 1, 1], [], []>} : vector<1x32xf32>, vector<32x128xf32>, vector<1x128xf32> -> vector<1x128xf32>
    %792 = arith.addf %790, %791 : vector<1x128xf32>
    %793 = vector.extract_strided_slice %792 {offsets = [0, 0], sizes = [1, 32], strides = [1, 1]} : vector<1x128xf32> to vector<1x32xf32>
    %794 = arith.negf %793 : vector<1x32xf32>
    %795 = math.exp %794 : vector<1x32xf32>
    %cst_168 = arith.constant 1.000000e+00 : f32
    %796 = vector.broadcast %cst_168 : f32 to vector<1x32xf32>
    %797 = arith.addf %796, %795 : vector<1x32xf32>
    %798 = arith.divf %796, %797 : vector<1x32xf32>
    %799 = vector.extract_strided_slice %792 {offsets = [0, 32], sizes = [1, 32], strides = [1, 1]} : vector<1x128xf32> to vector<1x32xf32>
    %800 = arith.negf %799 : vector<1x32xf32>
    %801 = math.exp %800 : vector<1x32xf32>
    %cst_169 = arith.constant 1.000000e+00 : f32
    %802 = vector.broadcast %cst_169 : f32 to vector<1x32xf32>
    %803 = arith.addf %802, %801 : vector<1x32xf32>
    %804 = arith.divf %802, %803 : vector<1x32xf32>
    %805 = vector.extract_strided_slice %792 {offsets = [0, 64], sizes = [1, 32], strides = [1, 1]} : vector<1x128xf32> to vector<1x32xf32>
    %806 = math.tanh %805 : vector<1x32xf32>
    %807 = vector.extract_strided_slice %792 {offsets = [0, 96], sizes = [1, 32], strides = [1, 1]} : vector<1x128xf32> to vector<1x32xf32>
    %808 = arith.negf %807 : vector<1x32xf32>
    %809 = math.exp %808 : vector<1x32xf32>
    %cst_170 = arith.constant 1.000000e+00 : f32
    %810 = vector.broadcast %cst_170 : f32 to vector<1x32xf32>
    %811 = arith.addf %810, %809 : vector<1x32xf32>
    %812 = arith.divf %810, %811 : vector<1x32xf32>
    %813 = arith.mulf %804, %786 : vector<1x32xf32>
    %814 = arith.mulf %798, %806 : vector<1x32xf32>
    %815 = arith.addf %813, %814 : vector<1x32xf32>
    %816 = math.tanh %815 : vector<1x32xf32>
    %817 = arith.mulf %812, %816 : vector<1x32xf32>
    %c29 = arith.constant 29 : index
    %c0_171 = arith.constant 0 : index
    %818 = vector.load %arg8[%c29, %c0_171] : memref<32x32xf32, #tpu.memory_space<vmem>>, vector<1x32xf32>
    tpu.vector_store %arg8[%c29, %c0_171], %817 {strides = array<i32>} : memref<32x32xf32, #tpu.memory_space<vmem>>, vector<1x32xf32>,
    %819 = vector.extract_strided_slice %729 {offsets = [4, 0], sizes = [1, 128], strides = [1, 1]} : vector<8x128xf32> to vector<1x128xf32>
    %cst_172 = arith.constant dense<0.000000e+00> : vector<1x128xf32>
    %820 = tpu.matmul %817, %485, %cst_172 {dimension_numbers = #tpu.dot_dimension_numbers<[1], [0], [0], [1], [0, 0, 1, 1], [], []>} : vector<1x32xf32>, vector<32x128xf32>, vector<1x128xf32> -> vector<1x128xf32>
    %821 = arith.addf %819, %820 : vector<1x128xf32>
    %822 = vector.extract_strided_slice %821 {offsets = [0, 0], sizes = [1, 32], strides = [1, 1]} : vector<1x128xf32> to vector<1x32xf32>
    %823 = arith.negf %822 : vector<1x32xf32>
    %824 = math.exp %823 : vector<1x32xf32>
    %cst_173 = arith.constant 1.000000e+00 : f32
    %825 = vector.broadcast %cst_173 : f32 to vector<1x32xf32>
    %826 = arith.addf %825, %824 : vector<1x32xf32>
    %827 = arith.divf %825, %826 : vector<1x32xf32>
    %828 = vector.extract_strided_slice %821 {offsets = [0, 32], sizes = [1, 32], strides = [1, 1]} : vector<1x128xf32> to vector<1x32xf32>
    %829 = arith.negf %828 : vector<1x32xf32>
    %830 = math.exp %829 : vector<1x32xf32>
    %cst_174 = arith.constant 1.000000e+00 : f32
    %831 = vector.broadcast %cst_174 : f32 to vector<1x32xf32>
    %832 = arith.addf %831, %830 : vector<1x32xf32>
    %833 = arith.divf %831, %832 : vector<1x32xf32>
    %834 = vector.extract_strided_slice %821 {offsets = [0, 64], sizes = [1, 32], strides = [1, 1]} : vector<1x128xf32> to vector<1x32xf32>
    %835 = math.tanh %834 : vector<1x32xf32>
    %836 = vector.extract_strided_slice %821 {offsets = [0, 96], sizes = [1, 32], strides = [1, 1]} : vector<1x128xf32> to vector<1x32xf32>
    %837 = arith.negf %836 : vector<1x32xf32>
    %838 = math.exp %837 : vector<1x32xf32>
    %cst_175 = arith.constant 1.000000e+00 : f32
    %839 = vector.broadcast %cst_175 : f32 to vector<1x32xf32>
    %840 = arith.addf %839, %838 : vector<1x32xf32>
    %841 = arith.divf %839, %840 : vector<1x32xf32>
    %842 = arith.mulf %833, %815 : vector<1x32xf32>
    %843 = arith.mulf %827, %835 : vector<1x32xf32>
    %844 = arith.addf %842, %843 : vector<1x32xf32>
    %845 = math.tanh %844 : vector<1x32xf32>
    %846 = arith.mulf %841, %845 : vector<1x32xf32>
    %c28 = arith.constant 28 : index
    %c0_176 = arith.constant 0 : index
    %847 = vector.load %arg8[%c28, %c0_176] : memref<32x32xf32, #tpu.memory_space<vmem>>, vector<1x32xf32>
    tpu.vector_store %arg8[%c28, %c0_176], %846 {strides = array<i32>} : memref<32x32xf32, #tpu.memory_space<vmem>>, vector<1x32xf32>,
    %848 = vector.extract_strided_slice %729 {offsets = [3, 0], sizes = [1, 128], strides = [1, 1]} : vector<8x128xf32> to vector<1x128xf32>
    %cst_177 = arith.constant dense<0.000000e+00> : vector<1x128xf32>
    %849 = tpu.matmul %846, %485, %cst_177 {dimension_numbers = #tpu.dot_dimension_numbers<[1], [0], [0], [1], [0, 0, 1, 1], [], []>} : vector<1x32xf32>, vector<32x128xf32>, vector<1x128xf32> -> vector<1x128xf32>
    %850 = arith.addf %848, %849 : vector<1x128xf32>
    %851 = vector.extract_strided_slice %850 {offsets = [0, 0], sizes = [1, 32], strides = [1, 1]} : vector<1x128xf32> to vector<1x32xf32>
    %852 = arith.negf %851 : vector<1x32xf32>
    %853 = math.exp %852 : vector<1x32xf32>
    %cst_178 = arith.constant 1.000000e+00 : f32
    %854 = vector.broadcast %cst_178 : f32 to vector<1x32xf32>
    %855 = arith.addf %854, %853 : vector<1x32xf32>
    %856 = arith.divf %854, %855 : vector<1x32xf32>
    %857 = vector.extract_strided_slice %850 {offsets = [0, 32], sizes = [1, 32], strides = [1, 1]} : vector<1x128xf32> to vector<1x32xf32>
    %858 = arith.negf %857 : vector<1x32xf32>
    %859 = math.exp %858 : vector<1x32xf32>
    %cst_179 = arith.constant 1.000000e+00 : f32
    %860 = vector.broadcast %cst_179 : f32 to vector<1x32xf32>
    %861 = arith.addf %860, %859 : vector<1x32xf32>
    %862 = arith.divf %860, %861 : vector<1x32xf32>
    %863 = vector.extract_strided_slice %850 {offsets = [0, 64], sizes = [1, 32], strides = [1, 1]} : vector<1x128xf32> to vector<1x32xf32>
    %864 = math.tanh %863 : vector<1x32xf32>
    %865 = vector.extract_strided_slice %850 {offsets = [0, 96], sizes = [1, 32], strides = [1, 1]} : vector<1x128xf32> to vector<1x32xf32>
    %866 = arith.negf %865 : vector<1x32xf32>
    %867 = math.exp %866 : vector<1x32xf32>
    %cst_180 = arith.constant 1.000000e+00 : f32
    %868 = vector.broadcast %cst_180 : f32 to vector<1x32xf32>
    %869 = arith.addf %868, %867 : vector<1x32xf32>
    %870 = arith.divf %868, %869 : vector<1x32xf32>
    %871 = arith.mulf %862, %844 : vector<1x32xf32>
    %872 = arith.mulf %856, %864 : vector<1x32xf32>
    %873 = arith.addf %871, %872 : vector<1x32xf32>
    %874 = math.tanh %873 : vector<1x32xf32>
    %875 = arith.mulf %870, %874 : vector<1x32xf32>
    %c27 = arith.constant 27 : index
    %c0_181 = arith.constant 0 : index
    %876 = vector.load %arg8[%c27, %c0_181] : memref<32x32xf32, #tpu.memory_space<vmem>>, vector<1x32xf32>
    tpu.vector_store %arg8[%c27, %c0_181], %875 {strides = array<i32>} : memref<32x32xf32, #tpu.memory_space<vmem>>, vector<1x32xf32>,
    %877 = vector.extract_strided_slice %729 {offsets = [2, 0], sizes = [1, 128], strides = [1, 1]} : vector<8x128xf32> to vector<1x128xf32>
    %cst_182 = arith.constant dense<0.000000e+00> : vector<1x128xf32>
    %878 = tpu.matmul %875, %485, %cst_182 {dimension_numbers = #tpu.dot_dimension_numbers<[1], [0], [0], [1], [0, 0, 1, 1], [], []>} : vector<1x32xf32>, vector<32x128xf32>, vector<1x128xf32> -> vector<1x128xf32>
    %879 = arith.addf %877, %878 : vector<1x128xf32>
    %880 = vector.extract_strided_slice %879 {offsets = [0, 0], sizes = [1, 32], strides = [1, 1]} : vector<1x128xf32> to vector<1x32xf32>
    %881 = arith.negf %880 : vector<1x32xf32>
    %882 = math.exp %881 : vector<1x32xf32>
    %cst_183 = arith.constant 1.000000e+00 : f32
    %883 = vector.broadcast %cst_183 : f32 to vector<1x32xf32>
    %884 = arith.addf %883, %882 : vector<1x32xf32>
    %885 = arith.divf %883, %884 : vector<1x32xf32>
    %886 = vector.extract_strided_slice %879 {offsets = [0, 32], sizes = [1, 32], strides = [1, 1]} : vector<1x128xf32> to vector<1x32xf32>
    %887 = arith.negf %886 : vector<1x32xf32>
    %888 = math.exp %887 : vector<1x32xf32>
    %cst_184 = arith.constant 1.000000e+00 : f32
    %889 = vector.broadcast %cst_184 : f32 to vector<1x32xf32>
    %890 = arith.addf %889, %888 : vector<1x32xf32>
    %891 = arith.divf %889, %890 : vector<1x32xf32>
    %892 = vector.extract_strided_slice %879 {offsets = [0, 64], sizes = [1, 32], strides = [1, 1]} : vector<1x128xf32> to vector<1x32xf32>
    %893 = math.tanh %892 : vector<1x32xf32>
    %894 = vector.extract_strided_slice %879 {offsets = [0, 96], sizes = [1, 32], strides = [1, 1]} : vector<1x128xf32> to vector<1x32xf32>
    %895 = arith.negf %894 : vector<1x32xf32>
    %896 = math.exp %895 : vector<1x32xf32>
    %cst_185 = arith.constant 1.000000e+00 : f32
    %897 = vector.broadcast %cst_185 : f32 to vector<1x32xf32>
    %898 = arith.addf %897, %896 : vector<1x32xf32>
    %899 = arith.divf %897, %898 : vector<1x32xf32>
    %900 = arith.mulf %891, %873 : vector<1x32xf32>
    %901 = arith.mulf %885, %893 : vector<1x32xf32>
    %902 = arith.addf %900, %901 : vector<1x32xf32>
    %903 = math.tanh %902 : vector<1x32xf32>
    %904 = arith.mulf %899, %903 : vector<1x32xf32>
    %c26 = arith.constant 26 : index
    %c0_186 = arith.constant 0 : index
    %905 = vector.load %arg8[%c26, %c0_186] : memref<32x32xf32, #tpu.memory_space<vmem>>, vector<1x32xf32>
    tpu.vector_store %arg8[%c26, %c0_186], %904 {strides = array<i32>} : memref<32x32xf32, #tpu.memory_space<vmem>>, vector<1x32xf32>,
    %906 = vector.extract_strided_slice %729 {offsets = [1, 0], sizes = [1, 128], strides = [1, 1]} : vector<8x128xf32> to vector<1x128xf32>
    %cst_187 = arith.constant dense<0.000000e+00> : vector<1x128xf32>
    %907 = tpu.matmul %904, %485, %cst_187 {dimension_numbers = #tpu.dot_dimension_numbers<[1], [0], [0], [1], [0, 0, 1, 1], [], []>} : vector<1x32xf32>, vector<32x128xf32>, vector<1x128xf32> -> vector<1x128xf32>
    %908 = arith.addf %906, %907 : vector<1x128xf32>
    %909 = vector.extract_strided_slice %908 {offsets = [0, 0], sizes = [1, 32], strides = [1, 1]} : vector<1x128xf32> to vector<1x32xf32>
    %910 = arith.negf %909 : vector<1x32xf32>
    %911 = math.exp %910 : vector<1x32xf32>
    %cst_188 = arith.constant 1.000000e+00 : f32
    %912 = vector.broadcast %cst_188 : f32 to vector<1x32xf32>
    %913 = arith.addf %912, %911 : vector<1x32xf32>
    %914 = arith.divf %912, %913 : vector<1x32xf32>
    %915 = vector.extract_strided_slice %908 {offsets = [0, 32], sizes = [1, 32], strides = [1, 1]} : vector<1x128xf32> to vector<1x32xf32>
    %916 = arith.negf %915 : vector<1x32xf32>
    %917 = math.exp %916 : vector<1x32xf32>
    %cst_189 = arith.constant 1.000000e+00 : f32
    %918 = vector.broadcast %cst_189 : f32 to vector<1x32xf32>
    %919 = arith.addf %918, %917 : vector<1x32xf32>
    %920 = arith.divf %918, %919 : vector<1x32xf32>
    %921 = vector.extract_strided_slice %908 {offsets = [0, 64], sizes = [1, 32], strides = [1, 1]} : vector<1x128xf32> to vector<1x32xf32>
    %922 = math.tanh %921 : vector<1x32xf32>
    %923 = vector.extract_strided_slice %908 {offsets = [0, 96], sizes = [1, 32], strides = [1, 1]} : vector<1x128xf32> to vector<1x32xf32>
    %924 = arith.negf %923 : vector<1x32xf32>
    %925 = math.exp %924 : vector<1x32xf32>
    %cst_190 = arith.constant 1.000000e+00 : f32
    %926 = vector.broadcast %cst_190 : f32 to vector<1x32xf32>
    %927 = arith.addf %926, %925 : vector<1x32xf32>
    %928 = arith.divf %926, %927 : vector<1x32xf32>
    %929 = arith.mulf %920, %902 : vector<1x32xf32>
    %930 = arith.mulf %914, %922 : vector<1x32xf32>
    %931 = arith.addf %929, %930 : vector<1x32xf32>
    %932 = math.tanh %931 : vector<1x32xf32>
    %933 = arith.mulf %928, %932 : vector<1x32xf32>
    %c25 = arith.constant 25 : index
    %c0_191 = arith.constant 0 : index
    %934 = vector.load %arg8[%c25, %c0_191] : memref<32x32xf32, #tpu.memory_space<vmem>>, vector<1x32xf32>
    tpu.vector_store %arg8[%c25, %c0_191], %933 {strides = array<i32>} : memref<32x32xf32, #tpu.memory_space<vmem>>, vector<1x32xf32>,
    %935 = vector.extract_strided_slice %729 {offsets = [0, 0], sizes = [1, 128], strides = [1, 1]} : vector<8x128xf32> to vector<1x128xf32>
    %cst_192 = arith.constant dense<0.000000e+00> : vector<1x128xf32>
    %936 = tpu.matmul %933, %485, %cst_192 {dimension_numbers = #tpu.dot_dimension_numbers<[1], [0], [0], [1], [0, 0, 1, 1], [], []>} : vector<1x32xf32>, vector<32x128xf32>, vector<1x128xf32> -> vector<1x128xf32>
    %937 = arith.addf %935, %936 : vector<1x128xf32>
    %938 = vector.extract_strided_slice %937 {offsets = [0, 0], sizes = [1, 32], strides = [1, 1]} : vector<1x128xf32> to vector<1x32xf32>
    %939 = arith.negf %938 : vector<1x32xf32>
    %940 = math.exp %939 : vector<1x32xf32>
    %cst_193 = arith.constant 1.000000e+00 : f32
    %941 = vector.broadcast %cst_193 : f32 to vector<1x32xf32>
    %942 = arith.addf %941, %940 : vector<1x32xf32>
    %943 = arith.divf %941, %942 : vector<1x32xf32>
    %944 = vector.extract_strided_slice %937 {offsets = [0, 32], sizes = [1, 32], strides = [1, 1]} : vector<1x128xf32> to vector<1x32xf32>
    %945 = arith.negf %944 : vector<1x32xf32>
    %946 = math.exp %945 : vector<1x32xf32>
    %cst_194 = arith.constant 1.000000e+00 : f32
    %947 = vector.broadcast %cst_194 : f32 to vector<1x32xf32>
    %948 = arith.addf %947, %946 : vector<1x32xf32>
    %949 = arith.divf %947, %948 : vector<1x32xf32>
    %950 = vector.extract_strided_slice %937 {offsets = [0, 64], sizes = [1, 32], strides = [1, 1]} : vector<1x128xf32> to vector<1x32xf32>
    %951 = math.tanh %950 : vector<1x32xf32>
    %952 = vector.extract_strided_slice %937 {offsets = [0, 96], sizes = [1, 32], strides = [1, 1]} : vector<1x128xf32> to vector<1x32xf32>
    %953 = arith.negf %952 : vector<1x32xf32>
    %954 = math.exp %953 : vector<1x32xf32>
    %cst_195 = arith.constant 1.000000e+00 : f32
    %955 = vector.broadcast %cst_195 : f32 to vector<1x32xf32>
    %956 = arith.addf %955, %954 : vector<1x32xf32>
    %957 = arith.divf %955, %956 : vector<1x32xf32>
    %958 = arith.mulf %949, %931 : vector<1x32xf32>
    %959 = arith.mulf %943, %951 : vector<1x32xf32>
    %960 = arith.addf %958, %959 : vector<1x32xf32>
    %961 = math.tanh %960 : vector<1x32xf32>
    %962 = arith.mulf %957, %961 : vector<1x32xf32>
    %c24 = arith.constant 24 : index
    %c0_196 = arith.constant 0 : index
    %963 = vector.load %arg8[%c24, %c0_196] : memref<32x32xf32, #tpu.memory_space<vmem>>, vector<1x32xf32>
    tpu.vector_store %arg8[%c24, %c0_196], %962 {strides = array<i32>} : memref<32x32xf32, #tpu.memory_space<vmem>>, vector<1x32xf32>,
    %c0_197 = arith.constant 0 : index
    %c0_198 = arith.constant 0 : index
    %964 = vector.load %arg8[%c0_197, %c0_198] : memref<32x32xf32, #tpu.memory_space<vmem>>, vector<16x32xf32>
    %c16_199 = arith.constant 16 : index
    %c0_200 = arith.constant 0 : index
    %965 = vector.load %arg8[%c16_199, %c0_200] : memref<32x32xf32, #tpu.memory_space<vmem>>, vector<16x32xf32>
    %c0_201 = arith.constant 0 : index
    %c0_202 = arith.constant 0 : index
    %966 = vector.load %arg5[%c0_201, %c0_202] : memref<64x4xf32, #tpu.memory_space<vmem>>, vector<32x4xf32>
    %cst_203 = arith.constant dense<0.000000e+00> : vector<16x4xf32>
    %967 = tpu.matmul %964, %966, %cst_203 {dimension_numbers = #tpu.dot_dimension_numbers<[1], [0], [0], [1], [0, 0, 1, 1], [], []>} : vector<16x32xf32>, vector<32x4xf32>, vector<16x4xf32> -> vector<16x4xf32>
    %c32 = arith.constant 32 : index
    %c0_204 = arith.constant 0 : index
    %968 = vector.load %arg5[%c32, %c0_204] : memref<64x4xf32, #tpu.memory_space<vmem>>, vector<32x4xf32>
    %cst_205 = arith.constant dense<0.000000e+00> : vector<16x4xf32>
    %969 = tpu.matmul %965, %968, %cst_205 {dimension_numbers = #tpu.dot_dimension_numbers<[1], [0], [0], [1], [0, 0, 1, 1], [], []>} : vector<16x32xf32>, vector<32x4xf32>, vector<16x4xf32> -> vector<16x4xf32>
    %970 = arith.addf %967, %969 : vector<16x4xf32>
    %c0_206 = arith.constant 0 : index
    %c0_207 = arith.constant 0 : index
    %971 = vector.load %arg6[%c0_206, %c0_207] : memref<1x4xf32, #tpu.memory_space<vmem>>, vector<1x4xf32>
    %972 = vector.broadcast %971 : vector<1x4xf32> to vector<16x4xf32>
    %973 = arith.addf %970, %972 : vector<16x4xf32>
    %c0_208 = arith.constant 0 : index
    %c0_209 = arith.constant 0 : index
    %974 = vector.load %arg7[%c0_208, %c0_209] : memref<16x4xf32, #tpu.memory_space<vmem>>, vector<16x4xf32>
    tpu.vector_store %arg7[%c0_208, %c0_209], %973 {strides = array<i32>} : memref<16x4xf32, #tpu.memory_space<vmem>>, vector<16x4xf32>,
    return
  }
  func.func @transform_0(%arg0: i32) -> (i32, i32) {
    %c0_i32 = arith.constant 0 : i32
    %c0_i32_0 = arith.constant 0 : i32
    %c0_i32_1 = arith.constant 0 : i32
    return %c0_i32, %c0_i32_0 : i32, i32
  }
  func.func @transform_1(%arg0: i32) -> (i32, i32, i32) {
    %c0_i32 = arith.constant 0 : i32
    %c0_i32_0 = arith.constant 0 : i32
    %c0_i32_1 = arith.constant 0 : i32
    %c0_i32_2 = arith.constant 0 : i32
    return %c0_i32, %c0_i32_0, %c0_i32_1 : i32, i32, i32
  }
  func.func @transform_2(%arg0: i32) -> (i32, i32, i32) {
    %c0_i32 = arith.constant 0 : i32
    %c0_i32_0 = arith.constant 0 : i32
    %c0_i32_1 = arith.constant 0 : i32
    %c0_i32_2 = arith.constant 0 : i32
    return %c0_i32, %c0_i32_0, %c0_i32_1 : i32, i32, i32
  }
  func.func @transform_3(%arg0: i32) -> (i32, i32, i32) {
    %c0_i32 = arith.constant 0 : i32
    %c0_i32_0 = arith.constant 0 : i32
    %c0_i32_1 = arith.constant 0 : i32
    %c0_i32_2 = arith.constant 0 : i32
    return %c0_i32, %c0_i32_0, %c0_i32_1 : i32, i32, i32
  }
  func.func @transform_4(%arg0: i32) -> (i32, i32) {
    %c0_i32 = arith.constant 0 : i32
    %c0_i32_0 = arith.constant 0 : i32
    %c0_i32_1 = arith.constant 0 : i32
    return %c0_i32, %c0_i32_0 : i32, i32
  }
  func.func @transform_5(%arg0: i32) -> (i32, i32) {
    %c0_i32 = arith.constant 0 : i32
    %c0_i32_0 = arith.constant 0 : i32
    %c0_i32_1 = arith.constant 0 : i32
    return %c0_i32, %c0_i32_0 : i32, i32
  }
  func.func @transform_6(%arg0: i32) -> (i32, i32) {
    %c0_i32 = arith.constant 0 : i32
    %c0_i32_0 = arith.constant 0 : i32
    %c0_i32_1 = arith.constant 0 : i32
    return %c0_i32, %c0_i32_0 : i32, i32
  }
}

</mosaic_0001>

<llo_original>
// kernel: teacher_forward.2
$region0: #{teacher_forward.2}
  #allocation0 [shape = 'u32[]', space=smem, size = 0x4, offset = 0x4, fixed_abs, tag = 'smem constant byte address 0x4 - core index']
  #allocation1 [shape = 'u32[144,128]{1,0:T(1,128)}', space=vmem, size = 0x12000, scoped, tag = 'internal scratch']
  #allocation2 [shape = 'f32[16,32]{1,0:T(8,128)}', space=vmem, size = 0x2000, scoped, tag = 'scratch operand']
  %s0 = inlined_call_operand.vmem [shape: f32[16,32], index: 0, kind: input, shape index: {}]
  %s1 = inlined_call_operand.vmem [shape: f32[2,32], index: 1, kind: input, shape index: {}]
  %s2 = inlined_call_operand.vmem [shape: f32[16,16], index: 2, kind: input, shape index: {}]
  %s3 = inlined_call_operand.vmem [shape: f32[12,32,96], index: 3, kind: input, shape index: {}]
  %s4 = inlined_call_operand.vmem [shape: f32[12,32,32], index: 4, kind: input, shape index: {}]
  %s5 = inlined_call_operand.vmem [shape: f32[12,32,64], index: 5, kind: input, shape index: {}]
  %s6 = inlined_call_operand.vmem [shape: f32[12,64,32], index: 6, kind: input, shape index: {}]
  %s7 = inlined_call_operand.hbm [shape: f32[12,8,96], index: 7, kind: input, shape index: {}]
  %s8 = inlined_call_operand.hbm [shape: f32[16,32], index: 8, kind: output, shape index: {0}]
  %s9 = inlined_call_operand.hbm [shape: f32[16,32], index: 9, kind: output, shape index: {1}]
  %s10 = inlined_call_operand.vmem [shape: f32[16,32], index: 10, kind: output, shape index: {2}]
  %11 = xla_tuple %s8, %s9, %s10
  %s12 = sld [smem:[#allocation0]]
  $region97: #{teacher_forward.2} parent=0
    _
  %s14 = ssub.s32 1, %s12
  %s15 = scalar_select 0, %s14, %s12
  $region1: #{teacher_forward.2} parent=0
    #allocation3 [shape = 'u8[8192]{0}', space=vmem, size = 0x2000, scoped, tag = 'input window, operand 7']
    #allocation4 [shape = 's32[2]{0}', space=sflag, size = 0x8, scoped, tag = 'scoped memory for teacher_forward.2']
    #allocation5 [shape = 's32[2]{0}', space=sflag, size = 0x8, scoped, tag = 'scoped memory for teacher_forward.2']
    #allocation6 [shape = 'u8[8192]{0}', space=vmem, size = 0x2000, scoped, tag = 'output window, operand 0, single buffered']
    #allocation7 [shape = 'u8[8192]{0}', space=vmem, size = 0x2000, scoped, tag = 'output window, operand 1, single buffered']
    #allocation8 [shape = 's32[1]{0}', space=sflag, size = 0x4, scoped, tag = 'scoped memory for teacher_forward.2']
    %16 = vsyncpa [#allocation4], 0
    %s17 = scalar_lea.sflag [#allocation4], 1
    %18 = vsyncpa %s17, 0
    %19 = vsyncpa [#allocation5], 0
    %20 = vsyncpa [#allocation8], 0
    loop: start=0, step=1, limit=14
    $region2: #{teacher_forward.2} parent=1 // loop_pre_header
      _
    $region3: #{teacher_forward.2} parent=1 // loop_header
      %s22 = sphi 0, %s26
      %p23 = scmp.ge.s32.totalorder %s22, 14
      %s30 = sphi 0, %s30
      %s32 = sphi 0, %s30
      %s33 = sphi 0, %s32
      %s47 = sphi 0, %s33
      %s51 = sphi 0, %s51
      %s53 = sphi 0, %s51
      %s54 = sphi 0, %s53
      %s68 = sphi 0, %s54
      %s72 = sphi 0, %s72
      %s74 = sphi 0, %s72
      %s75 = sphi 0, %s74
      %s89 = sphi 0, %s75
      %s95 = sphi 0, %s97
      %s98 = sphi 0, %s95
      %s99 = sphi 0, %s98
      %s115 = sphi 0, %s99
      %s121 = sphi 0, %s123
      %s124 = sphi 0, %s121
      %s125 = sphi 0, %s124
      %s141 = sphi 0, %s125
      %s147 = sphi 0, %s149
      %s150 = sphi 0, %s147
      %s151 = sphi 0, %s150
      %s167 = sphi 0, %s151
      %s173 = sphi 0, %s175
      %s176 = sphi 0, %s173
      %s177 = sphi 0, %s176
      %s193 = sphi 0, %s177
      %s199 = sphi 0, %s201
      %s202 = sphi 0, %s199
      %s203 = sphi 0, %s202
      %s219 = sphi 0, %s203
      %s223 = sphi 0, %s223
      %s225 = sphi 0, %s223
      %s226 = sphi 0, %s225
      %s240 = sphi 0, %s226
      %s244 = sphi 0, %s244
      %s246 = sphi 0, %s244
      %s247 = sphi 0, %s246
      %s261 = sphi 0, %s247
      %s265 = sphi 0, %s265
      %s267 = sphi 0, %s265
      %s268 = sphi 0, %s267
      %s282 = sphi 0, %s268
    $region4: #{teacher_forward.2} parent=1 // loop_header_branch
      %25 = sbr.rel (%p23) target = $region8
    $region5: #{teacher_forward.2} parent=1 // loop_body
      %s27 = ssub.s32 %s22, 1
      %s28 = ssub.s32 %s22, 2
      %s29 = sadd.s32 %s22, 1
      %s31 = sadd.s32 %s30, 1
      %p34 = scmp.eq.s32.totalorder %s22, 11
      %p35 = scmp.ne.s32.totalorder %s30, %s32
      %p36 = scmp.eq.s32.totalorder %s22, 0
      %p37 = por %p35, %p36
      %p38 = scmp.ne.s32.totalorder %s30, %s32
      %p39 = scmp.eq.s32.totalorder %s27, 11
      %p40 = por %p38, %p39
      %p41 = scmp.ne.s32.totalorder %s32, %s33
      %p42 = scmp.eq.s32.totalorder %s27, 0
      %p43 = por %p41, %p42
      %p44 = scmp.ne.s32.totalorder %s32, %s33
      %p45 = scmp.eq.s32.totalorder %s28, 11
      %p46 = por %p44, %p45
      %p48 = scmp.ne.s32.totalorder %s33, %s47
      %p49 = scmp.eq.s32.totalorder %s28, 0
      %p50 = por %p48, %p49
      %s52 = sadd.s32 %s51, 1
      %p55 = scmp.eq.s32.totalorder %s22, 11
      %p56 = scmp.ne.s32.totalorder %s51, %s53
      %p57 = scmp.eq.s32.totalorder %s22, 0
      %p58 = por %p56, %p57
      %p59 = scmp.ne.s32.totalorder %s51, %s53
      %p60 = scmp.eq.s32.totalorder %s27, 11
      %p61 = por %p59, %p60
      %p62 = scmp.ne.s32.totalorder %s53, %s54
      %p63 = scmp.eq.s32.totalorder %s27, 0
      %p64 = por %p62, %p63
      %p65 = scmp.ne.s32.totalorder %s53, %s54
      %p66 = scmp.eq.s32.totalorder %s28, 11
      %p67 = por %p65, %p66
      %p69 = scmp.ne.s32.totalorder %s54, %s68
      %p70 = scmp.eq.s32.totalorder %s28, 0
      %p71 = por %p69, %p70
      %s73 = sadd.s32 %s72, 1
      %p76 = scmp.eq.s32.totalorder %s22, 11
      %p77 = scmp.ne.s32.totalorder %s72, %s74
      %p78 = scmp.eq.s32.totalorder %s22, 0
      %p79 = por %p77, %p78
      %p80 = scmp.ne.s32.totalorder %s72, %s74
      %p81 = scmp.eq.s32.totalorder %s27, 11
      %p82 = por %p80, %p81
      %p83 = scmp.ne.s32.totalorder %s74, %s75
      %p84 = scmp.eq.s32.totalorder %s27, 0
      %p85 = por %p83, %p84
      %p86 = scmp.ne.s32.totalorder %s74, %s75
      %p87 = scmp.eq.s32.totalorder %s28, 11
      %p88 = por %p86, %p87
      %p90 = scmp.ne.s32.totalorder %s75, %s89
      %p91 = scmp.eq.s32.totalorder %s28, 0
      %p92 = por %p90, %p91
      %s93 = ssub.s32 %s22, %s29
      %p94 = scmp.eq.s32.totalorder %s93, 0
      %s96 = sadd.s32 %s95, 1
      %s97 = scalar_select %p94, %s95, %s96
      %p100 = pneg %p94
      %p101 = scmp.eq.s32.totalorder %s22, 11
      %p102 = por %p100, %p101
      %p103 = scmp.ne.s32.totalorder %s95, %s98
      %p104 = scmp.eq.s32.totalorder %s22, 0
      %p105 = por %p103, %p104
      %p106 = scmp.ne.s32.totalorder %s95, %s98
      %p107 = scmp.eq.s32.totalorder %s27, 11
      %p108 = por %p106, %p107
      %p109 = scmp.ne.s32.totalorder %s98, %s99
      %p110 = scmp.eq.s32.totalorder %s27, 0
      %p111 = por %p109, %p110
      %p112 = scmp.ne.s32.totalorder %s98, %s99
      %p113 = scmp.eq.s32.totalorder %s28, 11
      %p114 = por %p112, %p113
      %p116 = scmp.ne.s32.totalorder %s99, %s115
      %p117 = scmp.eq.s32.totalorder %s28, 0
      %p118 = por %p116, %p117
      %s119 = ssub.s32 %s22, %s29
      %p120 = scmp.eq.s32.totalorder %s119, 0
      %s122 = sadd.s32 %s121, 1
      %s123 = scalar_select %p120, %s121, %s122
      %p126 = pneg %p120
      %p127 = scmp.eq.s32.totalorder %s22, 11
      %p128 = por %p126, %p127
      %p129 = scmp.ne.s32.totalorder %s121, %s124
      %p130 = scmp.eq.s32.totalorder %s22, 0
      %p131 = por %p129, %p130
      %p132 = scmp.ne.s32.totalorder %s121, %s124
      %p133 = scmp.eq.s32.totalorder %s27, 11
      %p134 = por %p132, %p133
      %p135 = scmp.ne.s32.totalorder %s124, %s125
      %p136 = scmp.eq.s32.totalorder %s27, 0
      %p137 = por %p135, %p136
      %p138 = scmp.ne.s32.totalorder %s124, %s125
      %p139 = scmp.eq.s32.totalorder %s28, 11
      %p140 = por %p138, %p139
      %p142 = scmp.ne.s32.totalorder %s125, %s141
      %p143 = scmp.eq.s32.totalorder %s28, 0
      %p144 = por %p142, %p143
      %s145 = ssub.s32 %s22, %s29
      %p146 = scmp.eq.s32.totalorder %s145, 0
      %s148 = sadd.s32 %s147, 1
      %s149 = scalar_select %p146, %s147, %s148
      %p152 = pneg %p146
      %p153 = scmp.eq.s32.totalorder %s22, 11
      %p154 = por %p152, %p153
      %p155 = scmp.ne.s32.totalorder %s147, %s150
      %p156 = scmp.eq.s32.totalorder %s22, 0
      %p157 = por %p155, %p156
      %p158 = scmp.ne.s32.totalorder %s147, %s150
      %p159 = scmp.eq.s32.totalorder %s27, 11
      %p160 = por %p158, %p159
      %p161 = scmp.ne.s32.totalorder %s150, %s151
      %p162 = scmp.eq.s32.totalorder %s27, 0
      %p163 = por %p161, %p162
      %p164 = scmp.ne.s32.totalorder %s150, %s151
      %p165 = scmp.eq.s32.totalorder %s28, 11
      %p166 = por %p164, %p165
      %p168 = scmp.ne.s32.totalorder %s151, %s167
      %p169 = scmp.eq.s32.totalorder %s28, 0
      %p170 = por %p168, %p169
      %s171 = ssub.s32 %s22, %s29
      %p172 = scmp.eq.s32.totalorder %s171, 0
      %s174 = sadd.s32 %s173, 1
      %s175 = scalar_select %p172, %s173, %s174
      %p178 = pneg %p172
      %p179 = scmp.eq.s32.totalorder %s22, 11
      %p180 = por %p178, %p179
      %p181 = scmp.ne.s32.totalorder %s173, %s176
      %p182 = scmp.eq.s32.totalorder %s22, 0
      %p183 = por %p181, %p182
      %p184 = scmp.ne.s32.totalorder %s173, %s176
      %p185 = scmp.eq.s32.totalorder %s27, 11
      %p186 = por %p184, %p185
      %p187 = scmp.ne.s32.totalorder %s176, %s177
      %p188 = scmp.eq.s32.totalorder %s27, 0
      %p189 = por %p187, %p188
      %p190 = scmp.ne.s32.totalorder %s176, %s177
      %p191 = scmp.eq.s32.totalorder %s28, 11
      %p192 = por %p190, %p191
      %p194 = scmp.ne.s32.totalorder %s177, %s193
      %p195 = scmp.eq.s32.totalorder %s28, 0
      %p196 = por %p194, %p195
      %s197 = ssub.s32 %s22, %s29
      %p198 = scmp.eq.s32.totalorder %s197, 0
      %s200 = sadd.s32 %s199, 1
      %s201 = scalar_select %p198, %s199, %s200
      %p204 = pneg %p198
      %p205 = scmp.eq.s32.totalorder %s22, 11
      %p206 = por %p204, %p205
      %p207 = scmp.ne.s32.totalorder %s199, %s202
      %p208 = scmp.eq.s32.totalorder %s22, 0
      %p209 = por %p207, %p208
      %p210 = scmp.ne.s32.totalorder %s199, %s202
      %p211 = scmp.eq.s32.totalorder %s27, 11
      %p212 = por %p210, %p211
      %p213 = scmp.ne.s32.totalorder %s202, %s203
      %p214 = scmp.eq.s32.totalorder %s27, 0
      %p215 = por %p213, %p214
      %p216 = scmp.ne.s32.totalorder %s202, %s203
      %p217 = scmp.eq.s32.totalorder %s28, 11
      %p218 = por %p216, %p217
      %p220 = scmp.ne.s32.totalorder %s203, %s219
      %p221 = scmp.eq.s32.totalorder %s28, 0
      %p222 = por %p220, %p221
      %s224 = sadd.s32 %s223, 1
      %p227 = scmp.eq.s32.totalorder %s22, 11
      %p228 = scmp.ne.s32.totalorder %s223, %s225
      %p229 = scmp.eq.s32.totalorder %s22, 0
      %p230 = por %p228, %p229
      %p231 = scmp.ne.s32.totalorder %s223, %s225
      %p232 = scmp.eq.s32.totalorder %s27, 11
      %p233 = por %p231, %p232
      %p234 = scmp.ne.s32.totalorder %s225, %s226
      %p235 = scmp.eq.s32.totalorder %s27, 0
      %p236 = por %p234, %p235
      %p237 = scmp.ne.s32.totalorder %s225, %s226
      %p238 = scmp.eq.s32.totalorder %s28, 11
      %p239 = por %p237, %p238
      %p241 = scmp.ne.s32.totalorder %s226, %s240
      %p242 = scmp.eq.s32.totalorder %s28, 0
      %p243 = por %p241, %p242
      %s245 = sadd.s32 %s244, 1
      %p248 = scmp.eq.s32.totalorder %s22, 11
      %p249 = scmp.ne.s32.totalorder %s244, %s246
      %p250 = scmp.eq.s32.totalorder %s22, 0
      %p251 = por %p249, %p250
      %p252 = scmp.ne.s32.totalorder %s244, %s246
      %p253 = scmp.eq.s32.totalorder %s27, 11
      %p254 = por %p252, %p253
      %p255 = scmp.ne.s32.totalorder %s246, %s247
      %p256 = scmp.eq.s32.totalorder %s27, 0
      %p257 = por %p255, %p256
      %p258 = scmp.ne.s32.totalorder %s246, %s247
      %p259 = scmp.eq.s32.totalorder %s28, 11
      %p260 = por %p258, %p259
      %p262 = scmp.ne.s32.totalorder %s247, %s261
      %p263 = scmp.eq.s32.totalorder %s28, 0
      %p264 = por %p262, %p263
      %s266 = sadd.s32 %s265, 1
      %p269 = scmp.eq.s32.totalorder %s22, 11
      %p270 = scmp.ne.s32.totalorder %s265, %s267
      %p271 = scmp.eq.s32.totalorder %s22, 0
      %p272 = por %p270, %p271
      %p273 = scmp.ne.s32.totalorder %s265, %s267
      %p274 = scmp.eq.s32.totalorder %s27, 11
      %p275 = por %p273, %p274
      %p276 = scmp.ne.s32.totalorder %s267, %s268
      %p277 = scmp.eq.s32.totalorder %s27, 0
      %p278 = por %p276, %p277
      %p279 = scmp.ne.s32.totalorder %s267, %s268
      %p280 = scmp.eq.s32.totalorder %s28, 11
      %p281 = por %p279, %p280
      %p283 = scmp.ne.s32.totalorder %s268, %s282
      %p284 = scmp.eq.s32.totalorder %s28, 0
      %p285 = por %p283, %p284
      %p286 = scmp.le.s32.totalorder 1, %s22
      %p287 = scmp.lt.s32.totalorder %s22, 13
      %p288 = pnand %p286, %p287
      %p289 = pneg %p288
      // Predicated region
      $region9: #{teacher_forward.2} parent=5 // pred_check
        _
      $region10: #{teacher_forward.2} parent=5 // pred_check_branch
        %291 = sbr.rel (%p288) target = $region12
      $region11: #{teacher_forward.2} parent=5 // pred_region
        %s292 = ssub.s32 %s22, 1
        // Predicated region
        $region13: #{teacher_forward.2} parent=11 // pred_check
          %p293 = pneg %p43
        $region14: #{teacher_forward.2} parent=11 // pred_check_branch
          %295 = sbr.rel (%p293) target = $region16
        $region15: #{teacher_forward.2} parent=11 // pred_region
          _
        $region16: #{teacher_forward.2} parent=11 // pred_fallthru
          _
        // Predicated region
        $region17: #{teacher_forward.2} parent=11 // pred_check
          %p296 = pneg %p64
        $region18: #{teacher_forward.2} parent=11 // pred_check_branch
          %298 = sbr.rel (%p296) target = $region20
        $region19: #{teacher_forward.2} parent=11 // pred_region
          _
        $region20: #{teacher_forward.2} parent=11 // pred_fallthru
          _
        // Predicated region
        $region21: #{teacher_forward.2} parent=11 // pred_check
          %p299 = pneg %p85
        $region22: #{teacher_forward.2} parent=11 // pred_check_branch
          %301 = sbr.rel (%p299) target = $region24
        $region23: #{teacher_forward.2} parent=11 // pred_region
          _
        $region24: #{teacher_forward.2} parent=11 // pred_fallthru
          _
      $region12: #{teacher_forward.2} parent=5 // pred_fallthru
        _
      %p302 = scmp.lt.s32.totalorder %s22, 12
      // Predicated region
      $region25: #{teacher_forward.2} parent=5 // pred_check
        %p303 = pneg %p302
      $region26: #{teacher_forward.2} parent=5 // pred_check_branch
        %305 = sbr.rel (%p303) target = $region28
      $region27: #{teacher_forward.2} parent=5 // pred_region
        // Predicated region
        $region29: #{teacher_forward.2} parent=27 // pred_check
          %p306 = pneg %p105
        $region30: #{teacher_forward.2} parent=27 // pred_check_branch
          %308 = sbr.rel (%p306) target = $region32
        $region31: #{teacher_forward.2} parent=27 // pred_region
          %p309 = scmp.lt.s32.totalorder %s22, 11
          %s310 = scalar_select %p309, %s22, 11
          %s311 = smul.addr %s310, 4
          %s312 = smul.addr %s311, 8
          %s313 = scalar_lea.vmem %s3, %s312
        $region32: #{teacher_forward.2} parent=27 // pred_fallthru
          _
        // Predicated region
        $region33: #{teacher_forward.2} parent=27 // pred_check
          %p314 = pneg %p131
        $region34: #{teacher_forward.2} parent=27 // pred_check_branch
          %316 = sbr.rel (%p314) target = $region36
        $region35: #{teacher_forward.2} parent=27 // pred_region
          %p317 = scmp.lt.s32.totalorder %s22, 11
          %s318 = scalar_select %p317, %s22, 11
          %s319 = smul.addr %s318, 4
          %s320 = smul.addr %s319, 8
          %s321 = scalar_lea.vmem %s4, %s320
        $region36: #{teacher_forward.2} parent=27 // pred_fallthru
          _
        // Predicated region
        $region37: #{teacher_forward.2} parent=27 // pred_check
          %p322 = pneg %p157
        $region38: #{teacher_forward.2} parent=27 // pred_check_branch
          %324 = sbr.rel (%p322) target = $region40
        $region39: #{teacher_forward.2} parent=27 // pred_region
          %p325 = scmp.lt.s32.totalorder %s22, 11
          %s326 = scalar_select %p325, %s22, 11
          %s327 = smul.addr %s326, 4
          %s328 = smul.addr %s327, 8
          %s329 = scalar_lea.vmem %s5, %s328
        $region40: #{teacher_forward.2} parent=27 // pred_fallthru
          _
        // Predicated region
        $region41: #{teacher_forward.2} parent=27 // pred_check
          %p330 = pneg %p183
        $region42: #{teacher_forward.2} parent=27 // pred_check_branch
          %332 = sbr.rel (%p330) target = $region44
        $region43: #{teacher_forward.2} parent=27 // pred_region
          %p333 = scmp.lt.s32.totalorder %s22, 11
          %s334 = scalar_select %p333, %s22, 11
          %s335 = smul.addr %s334, 8
          %s336 = smul.addr %s335, 8
          %s337 = scalar_lea.vmem %s6, %s336
        $region44: #{teacher_forward.2} parent=27 // pred_fallthru
          _
        // Predicated region
        $region45: #{teacher_forward.2} parent=27 // pred_check
          %p338 = pneg %p209
        $region46: #{teacher_forward.2} parent=27 // pred_check_branch
          %340 = sbr.rel (%p338) target = $region48
        $region47: #{teacher_forward.2} parent=27 // pred_region
          %s341 = sand.u32 %s199, 1
          %s342 = scalar_lea.sflag [#allocation4], %s341
          %s343 = sand.u32 %s199, 1
          %s344 = smul.addr %s343, 8
          %s345 = scalar_lea.vmem [#allocation3], %s344
          %s347 = ssub.s32 128, 128
          %348 = vsyncadd %s342, %s347
          %s349 = smul.addr %s22, 128
          %s350 = scalar_lea.hbm %s7, %s349
          %s352 = sshll.u32 %s345, 4
          %s353 = int_to_ptr.vmem [resolvable:$true] %s352
          %355 = dma.hbm_to_vmem [thread:$0]  %s350, 128, %s353, %s342
        $region48: #{teacher_forward.2} parent=27 // pred_fallthru
          _
      $region28: #{teacher_forward.2} parent=5 // pred_fallthru
        _
      %p356 = scmp.le.s32.totalorder 1, %s22
      %p357 = scmp.lt.s32.totalorder %s22, 13
      %p358 = pnand %p356, %p357
      %p359 = pneg %p358
      // Predicated region
      $region49: #{teacher_forward.2} parent=5 // pred_check
        _
      $region50: #{teacher_forward.2} parent=5 // pred_check_branch
        %361 = sbr.rel (%p358) target = $region52
      $region51: #{teacher_forward.2} parent=5 // pred_region
        %s362 = ssub.s32 %s22, 1
        %s363 = sand.u32 %s202, 1
        %s364 = scalar_lea.sflag [#allocation4], %s363
        %s365 = sand.u32 %s202, 1
        %s366 = smul.addr %s365, 8
        %s367 = scalar_lea.vmem [#allocation3], %s366
        // Predicated region
        $region53: #{teacher_forward.2} parent=51 // pred_check
          %p368 = pneg %p215
        $region54: #{teacher_forward.2} parent=51 // pred_check_branch
          %370 = sbr.rel (%p368) target = $region56
        $region55: #{teacher_forward.2} parent=51 // pred_region
          %371 = dma.done %s364, 128
        $region56: #{teacher_forward.2} parent=51 // pred_fallthru
          _
        %p372 = pneg %p43
        %p373 = pneg %p40
        %p374 = pneg %p64
        %p375 = pneg %p61
        %p376 = pneg %p85
        %p377 = pneg %p82
        %p378 = scmp.lt.s32.totalorder %s27, 11
        %s379 = scalar_select %p378, %s27, 11
        %s380 = smul.addr %s379, 4
        %s381 = smul.addr %s380, 8
        %s382 = scalar_lea.vmem %s3, %s381
        %p383 = pneg %p111
        %p384 = pneg %p108
        %p385 = scmp.lt.s32.totalorder %s27, 11
        %s386 = scalar_select %p385, %s27, 11
        %s387 = smul.addr %s386, 4
        %s388 = smul.addr %s387, 8
        %s389 = scalar_lea.vmem %s4, %s388
        %p390 = pneg %p137
        %p391 = pneg %p134
        %p392 = scmp.lt.s32.totalorder %s27, 11
        %s393 = scalar_select %p392, %s27, 11
        %s394 = smul.addr %s393, 4
        %s395 = smul.addr %s394, 8
        %s396 = scalar_lea.vmem %s5, %s395
        %p397 = pneg %p163
        %p398 = pneg %p160
        %p399 = scmp.lt.s32.totalorder %s27, 11
        %s400 = scalar_select %p399, %s27, 11
        %s401 = smul.addr %s400, 8
        %s402 = smul.addr %s401, 8
        %s403 = scalar_lea.vmem %s6, %s402
        %p404 = pneg %p189
        %p405 = pneg %p186
        %s406 = sand.u32 %s202, 1
        %s407 = scalar_lea.sflag [#allocation4], %s406
        %s408 = sand.u32 %s202, 1
        %s409 = smul.addr %s408, 8
        %s410 = scalar_lea.vmem [#allocation3], %s409
        %p411 = pneg %p215
        %p412 = pneg %p212
        %p413 = pneg %p236
        %p414 = pneg %p233
        %p415 = pneg %p257
        %p416 = pneg %p254
        %p417 = pneg %p278
        %p418 = pneg %p275
        %p419 = scmp.lt.s32.totalorder %s27, 11
        %s420 = scalar_select %p419, %s27, 11
        %s421 = smul.addr %s420, 4
        %s422 = smul.addr %s421, 8
        %s423 = scalar_lea.vmem %s3, %s422
        %p424 = scmp.lt.s32.totalorder %s27, 11
        %s425 = scalar_select %p424, %s27, 11
        %s426 = smul.addr %s425, 4
        %s427 = smul.addr %s426, 8
        %s428 = scalar_lea.vmem %s4, %s427
        %p429 = scmp.lt.s32.totalorder %s27, 11
        %s430 = scalar_select %p429, %s27, 11
        %s431 = smul.addr %s430, 4
        %s432 = smul.addr %s431, 8
        %s433 = scalar_lea.vmem %s5, %s432
        %p434 = scmp.lt.s32.totalorder %s27, 11
        %s435 = scalar_select %p434, %s27, 11
        %s436 = smul.addr %s435, 8
        %s437 = smul.addr %s436, 8
        %s438 = scalar_lea.vmem %s6, %s437
        %p439 = scmp.eq.s32.totalorder %s27, 0
        // Predicated region
        $region57: #{teacher_forward.2} parent=51 // pred_check
          %p440 = pneg %p439
        $region58: #{teacher_forward.2} parent=51 // pred_check_branch
          %442 = sbr.rel (%p440) target = $region60
        $region59: #{teacher_forward.2} parent=51 // pred_region
          %v443 = vld [vmem:[%s0] sm:$0xff]
          %v444 = vld [vmem:[%s0 + $0x8] sm:$0xff]
          %v445 = vld [vmem:[%s1] sm:$0x1]
          %v446 = vld [vmem:[%s1 + $0x1] sm:$0x1]
          %vm447 = vcmask 261120
          %v448 = vsel %vm447, %v443, 0.0
          %449 = vadd.xlane.f32.xlu0 %v448
          %v450 = vpop.xlane.xlu0 %449
          %v451 = vsel %vm447, %v444, 0.0
          %452 = vadd.xlane.f32.xlu0 %v451
          %v453 = vpop.xlane.xlu0 %452
          %v454 = vrcp.pop 32.0
          %v455 = vmul.f32 %v450, %v454
          %v456 = vmul.f32 %v453, %v454
          %v457 = vsub.f32 %v443, %v455
          %v458 = vsub.f32 %v444, %v456
          %v459 = vmul.f32 %v457, %v457
          %v460 = vmul.f32 %v458, %v458
          %v461 = vsel %vm447, %v459, 0.0
          %462 = vadd.xlane.f32.xlu0 %v461
          %v463 = vpop.xlane.xlu0 %462
          %v464 = vsel %vm447, %v460, 0.0
          %465 = vadd.xlane.f32.xlu0 %v464
          %v466 = vpop.xlane.xlu0 %465
          %v467 = vmul.f32 %v463, %v454
          %v468 = vmul.f32 %v466, %v454
          %v469 = vadd.f32 %v467, 1e-12
          %v470 = vadd.f32 %v468, 1e-12
          %v471 = vrsqrt.pop %v469
          %v472 = vrsqrt.pop %v470
          %v473 = vmul.f32 %v457, %v471
          %v474 = vmul.f32 %v458, %v472
          %v475 = vlaneseq
          %v476 = vshrl.u32 %v475, 7
          %v477 = vsub.s32 0, %v476
          %v478 = vrot.slane %v445, %v477
          %v479 = vmul.f32 %v473, %v478
          %v480 = vmul.f32 %v474, %v478
          %v481 = vlaneseq
          %v482 = vshrl.u32 %v481, 7
          %v483 = vsub.s32 0, %v482
          %v484 = vrot.slane %v446, %v483
          %v485 = vadd.f32 %v479, %v484
          %v486 = vadd.f32 %v480, %v484
          %487 = vst.msk [vmem:[#allocation2] sm:$0xff] %vm447, %v485
          %488 = vst.msk [vmem:[#allocation2 + $0x8] sm:$0xff] %vm447, %v486
          %489 = vst.msk [vmem:[#allocation6] sm:$0xff] %vm447, %v485
          %490 = vst.msk [vmem:[#allocation6 + $0x8] sm:$0xff] %vm447, %v486
        $region60: #{teacher_forward.2} parent=51 // pred_fallthru
          _
        %v491 = vld [vmem:[#allocation2] sm:$0xff]
        %v492 = vld [vmem:[#allocation2 + $0x8] sm:$0xff]
        %v493 = vld [vmem:[%s367] sm:$0xff]
        %v494 = vld [vmem:[%s423] sm:$0xff]
        %v495 = vld [vmem:[%s423 + $0x8] sm:$0xff]
        %v496 = vld [vmem:[%s423 + $0x10] sm:$0xff]
        %v497 = vld [vmem:[%s423 + $0x18] sm:$0xff]
        %v498 = vlaneseq
        %v499 = vshrl.u32 %v498, 7
        %v500 = vsub.s32 0, %v499
        %v501 = vrot.slane %v493, %v500
        %vm502 = vcmask 261120
        %v504 = vsel %vm502, %v491, 0
        %v507 = vsel %vm502, %v492, 0
        %509 = vmatprep.subr.mxu0 0.0
        %510 = vmatpush1.msra.mxu0 0.0
        %511 = vmatprep.subr.mxu0 0.0
        %512 = vmatpush1.msra.mxu0 0.0
        %513 = vmatprep.subr.mxu0 0.0
        %514 = vmatpush1.msra.mxu0 0.0
        %515 = vmatprep.subr.mxu0 0.0
        %516 = vmatpush1.msra.mxu0 0.0
        %517 = vmatprep.subr.mxu0 0.0
        %518 = vmatpush1.msra.mxu0 0.0
        %519 = vmatprep.subr.mxu0 0.0
        %520 = vmatpush1.msra.mxu0 0.0
        %521 = vmatprep.subr.mxu0 0.0
        %522 = vmatpush1.msra.mxu0 0.0
        %523 = vmatprep.subr.mxu0 0.0
        %524 = vmatpush1.msra.mxu0 0.0
        %525 = vmatprep.subr.mxu0 0.0
        %526 = vmatpush1.msra.mxu0 0.0
        %527 = vmatprep.subr.mxu0 0.0
        %528 = vmatpush1.msra.mxu0 0.0
        %529 = vmatprep.subr.mxu0 0.0
        %530 = vmatpush1.msra.mxu0 0.0
        %531 = vmatprep.subr.mxu0 0.0
        %532 = vmatpush1.msra.mxu0 0.0
        %533 = vmatprep.subr.mxu0 0.0
        %534 = vmatpush1.msra.mxu0 %v497
        %535 = vmatprep.subr.mxu0 0.0
        %536 = vmatpush1.msra.mxu0 %v496
        %537 = vmatprep.subr.mxu0 0.0
        %538 = vmatpush1.msra.mxu0 %v495
        %539 = vmatprep.subr.mxu0 0.0
        %540 = vmatpush1.msra.mxu0 %v494
        %541 = vmatprep.subr.mxu0 0.0
        %542 = vmatpush2.msra.mxu0 0.0
        %543 = vmatprep.subr.mxu0 0.0
        %544 = vmatpush2.msra.mxu0 0.0
        %545 = vmatprep.subr.mxu0 0.0
        %546 = vmatpush2.msra.mxu0 0.0
        %547 = vmatprep.subr.mxu0 0.0
        %548 = vmatpush2.msra.mxu0 0.0
        %549 = vmatprep.subr.mxu0 0.0
        %550 = vmatpush2.msra.mxu0 0.0
        %551 = vmatprep.subr.mxu0 0.0
        %552 = vmatpush2.msra.mxu0 0.0
        %553 = vmatprep.subr.mxu0 0.0
        %554 = vmatpush2.msra.mxu0 0.0
        %555 = vmatprep.subr.mxu0 0.0
        %556 = vmatpush2.msra.mxu0 0.0
        %557 = vmatprep.subr.mxu0 0.0
        %558 = vmatpush2.msra.mxu0 0.0
        %559 = vmatprep.subr.mxu0 0.0
        %560 = vmatpush2.msra.mxu0 0.0
        %561 = vmatprep.subr.mxu0 0.0
        %562 = vmatpush2.msra.mxu0 0.0
        %563 = vmatprep.subr.mxu0 0.0
        %564 = vmatpush2.msra.mxu0 0.0
        %565 = vmatprep.subr.mxu0 0.0
        %566 = vmatpush2.msra.mxu0 0.0
        %567 = vmatprep.subr.mxu0 0.0
        %568 = vmatpush2.msra.mxu0 0.0
        %569 = vmatprep.subr.mxu0 0.0
        %570 = vmatpush2.msra.mxu0 0.0
        %571 = vmatprep.subr.mxu0 0.0
        %572 = vmatpush2.msra.mxu0 0.0
        %573 = vmatprep.mubr.f32.mxu0 0.0
        %574 = vmatmul.mubr.f32.gmra.mxu0 %v504
        %v575 = vpop.f32.mrf.mxu0
        %v576 = vadd.f32 %v501, %v575
        %v577 = vpop.f32.mrf.mxu0
        %578 = vmatprep.mubr.f32.mxu0 0.0
        %579 = vmatmul.mubr.f32.gmra.mxu0 %v507
        %v580 = vpop.f32.mrf.mxu0
        %v581 = vadd.f32 %v501, %v580
        %v582 = vpop.f32.mrf.mxu0
        %583 = vdwg.mxu0
        %v584 = vld [vmem:[%s2] sm:$0xff]
        %v585 = vld [vmem:[%s2 + $0x8] sm:$0xff]
        %588 = vrot.lane.b32.xlu0 %v576, 96
        %v589 = vpop.permute.xlu0 %588
        %590 = vrot.lane.b32.xlu0 %v581, 96
        %v591 = vpop.permute.xlu0 %590
        %vm592 = vcmask 130048
        %v593 = vsel %vm592, %v576, 0
        %v595 = vsel %vm592, %v581, 0
        %v597 = vsel %vm592, %v589, 0
        %v599 = vsel %vm592, %v591, 0
        %601 = vmatprep.subr.mxu0 0.0
        %602 = vmatpush1.xpose.msra.mxu0 0.0
        %603 = vmatprep.subr.mxu0 0.0
        %604 = vmatpush1.xpose.msra.mxu0 0.0
        %605 = vmatprep.subr.mxu0 0.0
        %606 = vmatpush1.xpose.msra.mxu0 0.0
        %607 = vmatprep.subr.mxu0 0.0
        %608 = vmatpush1.xpose.msra.mxu0 0.0
        %609 = vmatprep.subr.mxu0 0.0
        %610 = vmatpush1.xpose.msra.mxu0 0.0
        %611 = vmatprep.subr.mxu0 0.0
        %612 = vmatpush1.xpose.msra.mxu0 0.0
        %613 = vmatprep.subr.mxu0 0.0
        %614 = vmatpush1.xpose.msra.mxu0 0.0
        %615 = vmatprep.subr.mxu0 0.0
        %616 = vmatpush1.xpose.msra.mxu0 0.0
        %617 = vmatprep.subr.mxu0 0.0
        %618 = vmatpush1.xpose.msra.mxu0 0.0
        %619 = vmatprep.subr.mxu0 0.0
        %620 = vmatpush1.xpose.msra.mxu0 0.0
        %621 = vmatprep.subr.mxu0 0.0
        %622 = vmatpush1.xpose.msra.mxu0 0.0
        %623 = vmatprep.subr.mxu0 0.0
        %624 = vmatpush1.xpose.msra.mxu0 0.0
        %625 = vmatprep.subr.mxu0 0.0
        %626 = vmatpush1.xpose.msra.mxu0 0.0
        %627 = vmatprep.subr.mxu0 0.0
        %628 = vmatpush1.xpose.msra.mxu0 0.0
        %629 = vmatprep.subr.mxu0 0.0
        %630 = vmatpush1.xpose.msra.mxu0 %v599
        %631 = vmatprep.subr.mxu0 0.0
        %632 = vmatpush1.xpose.msra.mxu0 %v597
        %633 = vmatprep.subr.mxu0 0.0
        %634 = vmatpush2.xpose.msra.mxu0 0.0
        %635 = vmatprep.subr.mxu0 0.0
        %636 = vmatpush2.xpose.msra.mxu0 0.0
        %637 = vmatprep.subr.mxu0 0.0
        %638 = vmatpush2.xpose.msra.mxu0 0.0
        %639 = vmatprep.subr.mxu0 0.0
        %640 = vmatpush2.xpose.msra.mxu0 0.0
        %641 = vmatprep.subr.mxu0 0.0
        %642 = vmatpush2.xpose.msra.mxu0 0.0
        %643 = vmatprep.subr.mxu0 0.0
        %644 = vmatpush2.xpose.msra.mxu0 0.0
        %645 = vmatprep.subr.mxu0 0.0
        %646 = vmatpush2.xpose.msra.mxu0 0.0
        %647 = vmatprep.subr.mxu0 0.0
        %648 = vmatpush2.xpose.msra.mxu0 0.0
        %649 = vmatprep.subr.mxu0 0.0
        %650 = vmatpush2.xpose.msra.mxu0 0.0
        %651 = vmatprep.subr.mxu0 0.0
        %652 = vmatpush2.xpose.msra.mxu0 0.0
        %653 = vmatprep.subr.mxu0 0.0
        %654 = vmatpush2.xpose.msra.mxu0 0.0
        %655 = vmatprep.subr.mxu0 0.0
        %656 = vmatpush2.xpose.msra.mxu0 0.0
        %657 = vmatprep.subr.mxu0 0.0
        %658 = vmatpush2.xpose.msra.mxu0 0.0
        %659 = vmatprep.subr.mxu0 0.0
        %660 = vmatpush2.xpose.msra.mxu0 0.0
        %661 = vmatprep.subr.mxu0 0.0
        %662 = vmatpush2.xpose.msra.mxu0 0.0
        %663 = vmatprep.subr.mxu0 0.0
        %664 = vmatpush2.xpose.msra.mxu0 0.0
        %665 = vmatprep.mubr.f32.mxu0 0.0
        %666 = vmatmul.mubr.f32.gmra.mxu0 %v593
        %v667 = vpop.f32.mrf.mxu0
        %v668 = vadd.f32 0.0, %v667
        %v669 = vpop.f32.mrf.mxu0
        %670 = vmatprep.mubr.f32.mxu0 0.0
        %671 = vmatmul.mubr.f32.gmra.mxu0 %v595
        %v672 = vpop.f32.mrf.mxu0
        %v673 = vadd.f32 0.0, %v672
        %v674 = vpop.f32.mrf.mxu0
        %675 = vdwg.mxu0
        %v676 = vmul.f32 %v668, 0.25
        %v677 = vmul.f32 %v673, 0.25
        %v678 = vadd.f32 %v676, %v584
        %v679 = vadd.f32 %v677, %v585
        %v680 = vsel %vm592, %v678, -inf
        %681 = vmax.xlane.f32.xlu0 %v680
        %v682 = vpop.xlane.xlu0 %681
        %v683 = vsel %vm592, %v679, -inf
        %684 = vmax.xlane.f32.xlu0 %v683
        %v685 = vpop.xlane.xlu0 %684
        %v686 = vsub.f32 %v678, %v682
        %v687 = vsub.f32 %v679, %v685
        %v688 = vmul.f32 %v686, 1.442695
        %v689 = vpow.pop %v688
        %v690 = vmul.f32 %v687, 1.442695
        %v691 = vpow.pop %v690
        %v692 = vsel %vm592, %v689, 0.0
        %693 = vadd.xlane.f32.xlu0 %v692
        %v694 = vpop.xlane.xlu0 %693
        %v695 = vsel %vm592, %v691, 0.0
        %696 = vadd.xlane.f32.xlu0 %v695
        %v697 = vpop.xlane.xlu0 %696
        %v698 = vrcp.pop %v694
        %v699 = vmul.f32 %v689, %v698
        %v700 = vrcp.pop %v697
        %v701 = vmul.f32 %v691, %v700
        %702 = vrot.lane.b32.xlu0 %v576, 64
        %v703 = vpop.permute.xlu0 %702
        %704 = vrot.lane.b32.xlu0 %v581, 64
        %v705 = vpop.permute.xlu0 %704
        %v709 = vsel %vm592, %v699, 0
        %v712 = vsel %vm592, %v701, 0
        %714 = vmatprep.subr.mxu0 0.0
        %715 = vmatpush1.msra.mxu0 0.0
        %716 = vmatprep.subr.mxu0 0.0
        %717 = vmatpush1.msra.mxu0 0.0
        %718 = vmatprep.subr.mxu0 0.0
        %719 = vmatpush1.msra.mxu0 0.0
        %720 = vmatprep.subr.mxu0 0.0
        %721 = vmatpush1.msra.mxu0 0.0
        %722 = vmatprep.subr.mxu0 0.0
        %723 = vmatpush1.msra.mxu0 0.0
        %724 = vmatprep.subr.mxu0 0.0
        %725 = vmatpush1.msra.mxu0 0.0
        %726 = vmatprep.subr.mxu0 0.0
        %727 = vmatpush1.msra.mxu0 0.0
        %728 = vmatprep.subr.mxu0 0.0
        %729 = vmatpush1.msra.mxu0 0.0
        %730 = vmatprep.subr.mxu0 0.0
        %731 = vmatpush1.msra.mxu0 0.0
        %732 = vmatprep.subr.mxu0 0.0
        %733 = vmatpush1.msra.mxu0 0.0
        %734 = vmatprep.subr.mxu0 0.0
        %735 = vmatpush1.msra.mxu0 0.0
        %736 = vmatprep.subr.mxu0 0.0
        %737 = vmatpush1.msra.mxu0 0.0
        %738 = vmatprep.subr.mxu0 0.0
        %739 = vmatpush1.msra.mxu0 0.0
        %740 = vmatprep.subr.mxu0 0.0
        %741 = vmatpush1.msra.mxu0 0.0
        %742 = vmatprep.subr.mxu0 0.0
        %743 = vmatpush1.msra.mxu0 %v705
        %744 = vmatprep.subr.mxu0 0.0
        %745 = vmatpush1.msra.mxu0 %v703
        %746 = vmatprep.subr.mxu0 0.0
        %747 = vmatpush2.msra.mxu0 0.0
        %748 = vmatprep.subr.mxu0 0.0
        %749 = vmatpush2.msra.mxu0 0.0
        %750 = vmatprep.subr.mxu0 0.0
        %751 = vmatpush2.msra.mxu0 0.0
        %752 = vmatprep.subr.mxu0 0.0
        %753 = vmatpush2.msra.mxu0 0.0
        %754 = vmatprep.subr.mxu0 0.0
        %755 = vmatpush2.msra.mxu0 0.0
        %756 = vmatprep.subr.mxu0 0.0
        %757 = vmatpush2.msra.mxu0 0.0
        %758 = vmatprep.subr.mxu0 0.0
        %759 = vmatpush2.msra.mxu0 0.0
        %760 = vmatprep.subr.mxu0 0.0
        %761 = vmatpush2.msra.mxu0 0.0
        %762 = vmatprep.subr.mxu0 0.0
        %763 = vmatpush2.msra.mxu0 0.0
        %764 = vmatprep.subr.mxu0 0.0
        %765 = vmatpush2.msra.mxu0 0.0
        %766 = vmatprep.subr.mxu0 0.0
        %767 = vmatpush2.msra.mxu0 0.0
        %768 = vmatprep.subr.mxu0 0.0
        %769 = vmatpush2.msra.mxu0 0.0
        %770 = vmatprep.subr.mxu0 0.0
        %771 = vmatpush2.msra.mxu0 0.0
        %772 = vmatprep.subr.mxu0 0.0
        %773 = vmatpush2.msra.mxu0 0.0
        %774 = vmatprep.subr.mxu0 0.0
        %775 = vmatpush2.msra.mxu0 0.0
        %776 = vmatprep.subr.mxu0 0.0
        %777 = vmatpush2.msra.mxu0 0.0
        %778 = vmatprep.mubr.f32.mxu0 0.0
        %779 = vmatmul.mubr.f32.gmra.mxu0 %v709
        %v780 = vpop.f32.mrf.mxu0
        %v781 = vadd.f32 0.0, %v780
        %v782 = vpop.f32.mrf.mxu0
        %783 = vmatprep.mubr.f32.mxu0 0.0
        %784 = vmatmul.mubr.f32.gmra.mxu0 %v712
        %v785 = vpop.f32.mrf.mxu0
        %v786 = vadd.f32 0.0, %v785
        %v787 = vpop.f32.mrf.mxu0
        %788 = vdwg.mxu0
        %v789 = vld [vmem:[%s428] sm:$0xff]
        %v790 = vld [vmem:[%s428 + $0x8] sm:$0xff]
        %v792 = vsel %vm592, %v781, 0
        %v795 = vsel %vm592, %v786, 0
        %797 = vmatprep.subr.mxu0 0.0
        %798 = vmatpush1.msra.mxu0 0.0
        %799 = vmatprep.subr.mxu0 0.0
        %800 = vmatpush1.msra.mxu0 0.0
        %801 = vmatprep.subr.mxu0 0.0
        %802 = vmatpush1.msra.mxu0 0.0
        %803 = vmatprep.subr.mxu0 0.0
        %804 = vmatpush1.msra.mxu0 0.0
        %805 = vmatprep.subr.mxu0 0.0
        %806 = vmatpush1.msra.mxu0 0.0
        %807 = vmatprep.subr.mxu0 0.0
        %808 = vmatpush1.msra.mxu0 0.0
        %809 = vmatprep.subr.mxu0 0.0
        %810 = vmatpush1.msra.mxu0 0.0
        %811 = vmatprep.subr.mxu0 0.0
        %812 = vmatpush1.msra.mxu0 0.0
        %813 = vmatprep.subr.mxu0 0.0
        %814 = vmatpush1.msra.mxu0 0.0
        %815 = vmatprep.subr.mxu0 0.0
        %816 = vmatpush1.msra.mxu0 0.0
        %817 = vmatprep.subr.mxu0 0.0
        %818 = vmatpush1.msra.mxu0 0.0
        %819 = vmatprep.subr.mxu0 0.0
        %820 = vmatpush1.msra.mxu0 0.0
        %821 = vmatprep.subr.mxu0 0.0
        %822 = vmatpush1.msra.mxu0 0.0
        %823 = vmatprep.subr.mxu0 0.0
        %824 = vmatpush1.msra.mxu0 0.0
        %825 = vmatprep.subr.mxu0 0.0
        %826 = vmatpush1.msra.mxu0 %v790
        %827 = vmatprep.subr.mxu0 0.0
        %828 = vmatpush1.msra.mxu0 %v789
        %829 = vmatprep.subr.mxu0 0.0
        %830 = vmatpush2.msra.mxu0 0.0
        %831 = vmatprep.subr.mxu0 0.0
        %832 = vmatpush2.msra.mxu0 0.0
        %833 = vmatprep.subr.mxu0 0.0
        %834 = vmatpush2.msra.mxu0 0.0
        %835 = vmatprep.subr.mxu0 0.0
        %836 = vmatpush2.msra.mxu0 0.0
        %837 = vmatprep.subr.mxu0 0.0
        %838 = vmatpush2.msra.mxu0 0.0
        %839 = vmatprep.subr.mxu0 0.0
        %840 = vmatpush2.msra.mxu0 0.0
        %841 = vmatprep.subr.mxu0 0.0
        %842 = vmatpush2.msra.mxu0 0.0
        %843 = vmatprep.subr.mxu0 0.0
        %844 = vmatpush2.msra.mxu0 0.0
        %845 = vmatprep.subr.mxu0 0.0
        %846 = vmatpush2.msra.mxu0 0.0
        %847 = vmatprep.subr.mxu0 0.0
        %848 = vmatpush2.msra.mxu0 0.0
        %849 = vmatprep.subr.mxu0 0.0
        %850 = vmatpush2.msra.mxu0 0.0
        %851 = vmatprep.subr.mxu0 0.0
        %852 = vmatpush2.msra.mxu0 0.0
        %853 = vmatprep.subr.mxu0 0.0
        %854 = vmatpush2.msra.mxu0 0.0
        %855 = vmatprep.subr.mxu0 0.0
        %856 = vmatpush2.msra.mxu0 0.0
        %857 = vmatprep.subr.mxu0 0.0
        %858 = vmatpush2.msra.mxu0 0.0
        %859 = vmatprep.subr.mxu0 0.0
        %860 = vmatpush2.msra.mxu0 0.0
        %861 = vmatprep.mubr.f32.mxu0 0.0
        %862 = vmatmul.mubr.f32.gmra.mxu0 %v792
        %v863 = vpop.f32.mrf.mxu0
        %v864 = vadd.f32 0.0, %v863
        %v865 = vpop.f32.mrf.mxu0
        %866 = vmatprep.mubr.f32.mxu0 0.0
        %867 = vmatmul.mubr.f32.gmra.mxu0 %v795
        %v868 = vpop.f32.mrf.mxu0
        %v869 = vadd.f32 0.0, %v868
        %v870 = vpop.f32.mrf.mxu0
        %871 = vdwg.mxu0
        %v872 = vlaneseq
        %v873 = vshrl.u32 %v872, 7
        %v874 = vsub.s32 1, %v873
        %v875 = vrot.slane %v493, %v874
        %v876 = vadd.f32 %v875, %v864
        %v877 = vadd.f32 %v875, %v869
        %878 = vrot.lane.b32.xlu0 %v576, 112
        %v879 = vpop.permute.xlu0 %878
        %880 = vrot.lane.b32.xlu0 %v581, 112
        %v881 = vpop.permute.xlu0 %880
        %882 = vrot.lane.b32.xlu0 %v576, 80
        %v883 = vpop.permute.xlu0 %882
        %884 = vrot.lane.b32.xlu0 %v581, 80
        %v885 = vpop.permute.xlu0 %884
        %v886 = vsel %vm592, %v879, 0
        %v888 = vsel %vm592, %v881, 0
        %v890 = vsel %vm592, %v883, 0
        %v892 = vsel %vm592, %v885, 0
        %894 = vmatprep.subr.mxu0 0.0
        %895 = vmatpush1.xpose.msra.mxu0 0.0
        %896 = vmatprep.subr.mxu0 0.0
        %897 = vmatpush1.xpose.msra.mxu0 0.0
        %898 = vmatprep.subr.mxu0 0.0
        %899 = vmatpush1.xpose.msra.mxu0 0.0
        %900 = vmatprep.subr.mxu0 0.0
        %901 = vmatpush1.xpose.msra.mxu0 0.0
        %902 = vmatprep.subr.mxu0 0.0
        %903 = vmatpush1.xpose.msra.mxu0 0.0
        %904 = vmatprep.subr.mxu0 0.0
        %905 = vmatpush1.xpose.msra.mxu0 0.0
        %906 = vmatprep.subr.mxu0 0.0
        %907 = vmatpush1.xpose.msra.mxu0 0.0
        %908 = vmatprep.subr.mxu0 0.0
        %909 = vmatpush1.xpose.msra.mxu0 0.0
        %910 = vmatprep.subr.mxu0 0.0
        %911 = vmatpush1.xpose.msra.mxu0 0.0
        %912 = vmatprep.subr.mxu0 0.0
        %913 = vmatpush1.xpose.msra.mxu0 0.0
        %914 = vmatprep.subr.mxu0 0.0
        %915 = vmatpush1.xpose.msra.mxu0 0.0
        %916 = vmatprep.subr.mxu0 0.0
        %917 = vmatpush1.xpose.msra.mxu0 0.0
        %918 = vmatprep.subr.mxu0 0.0
        %919 = vmatpush1.xpose.msra.mxu0 0.0
        %920 = vmatprep.subr.mxu0 0.0
        %921 = vmatpush1.xpose.msra.mxu0 0.0
        %922 = vmatprep.subr.mxu0 0.0
        %923 = vmatpush1.xpose.msra.mxu0 %v892
        %924 = vmatprep.subr.mxu0 0.0
        %925 = vmatpush1.xpose.msra.mxu0 %v890
        %926 = vmatprep.subr.mxu0 0.0
        %927 = vmatpush2.xpose.msra.mxu0 0.0
        %928 = vmatprep.subr.mxu0 0.0
        %929 = vmatpush2.xpose.msra.mxu0 0.0
        %930 = vmatprep.subr.mxu0 0.0
        %931 = vmatpush2.xpose.msra.mxu0 0.0
        %932 = vmatprep.subr.mxu0 0.0
        %933 = vmatpush2.xpose.msra.mxu0 0.0
        %934 = vmatprep.subr.mxu0 0.0
        %935 = vmatpush2.xpose.msra.mxu0 0.0
        %936 = vmatprep.subr.mxu0 0.0
        %937 = vmatpush2.xpose.msra.mxu0 0.0
        %938 = vmatprep.subr.mxu0 0.0
        %939 = vmatpush2.xpose.msra.mxu0 0.0
        %940 = vmatprep.subr.mxu0 0.0
        %941 = vmatpush2.xpose.msra.mxu0 0.0
        %942 = vmatprep.subr.mxu0 0.0
        %943 = vmatpush2.xpose.msra.mxu0 0.0
        %944 = vmatprep.subr.mxu0 0.0
        %945 = vmatpush2.xpose.msra.mxu0 0.0
        %946 = vmatprep.subr.mxu0 0.0
        %947 = vmatpush2.xpose.msra.mxu0 0.0
        %948 = vmatprep.subr.mxu0 0.0
        %949 = vmatpush2.xpose.msra.mxu0 0.0
        %950 = vmatprep.subr.mxu0 0.0
        %951 = vmatpush2.xpose.msra.mxu0 0.0
        %952 = vmatprep.subr.mxu0 0.0
        %953 = vmatpush2.xpose.msra.mxu0 0.0
        %954 = vmatprep.subr.mxu0 0.0
        %955 = vmatpush2.xpose.msra.mxu0 0.0
        %956 = vmatprep.subr.mxu0 0.0
        %957 = vmatpush2.xpose.msra.mxu0 0.0
        %958 = vmatprep.mubr.f32.mxu0 0.0
        %959 = vmatmul.mubr.f32.gmra.mxu0 %v886
        %v960 = vpop.f32.mrf.mxu0
        %v961 = vadd.f32 0.0, %v960
        %v962 = vpop.f32.mrf.mxu0
        %963 = vmatprep.mubr.f32.mxu0 0.0
        %964 = vmatmul.mubr.f32.gmra.mxu0 %v888
        %v965 = vpop.f32.mrf.mxu0
        %v966 = vadd.f32 0.0, %v965
        %v967 = vpop.f32.mrf.mxu0
        %968 = vdwg.mxu0
        %v969 = vmul.f32 %v961, 0.25
        %v970 = vmul.f32 %v966, 0.25
        %v971 = vadd.f32 %v969, %v584
        %v972 = vadd.f32 %v970, %v585
        %v973 = vsel %vm592, %v971, -inf
        %974 = vmax.xlane.f32.xlu0 %v973
        %v975 = vpop.xlane.xlu0 %974
        %v976 = vsel %vm592, %v972, -inf
        %977 = vmax.xlane.f32.xlu0 %v976
        %v978 = vpop.xlane.xlu0 %977
        %v979 = vsub.f32 %v971, %v975
        %v980 = vsub.f32 %v972, %v978
        %v981 = vmul.f32 %v979, 1.442695
        %v982 = vpow.pop %v981
        %v983 = vmul.f32 %v980, 1.442695
        %v984 = vpow.pop %v983
        %v985 = vsel %vm592, %v982, 0.0
        %986 = vadd.xlane.f32.xlu0 %v985
        %v987 = vpop.xlane.xlu0 %986
        %v988 = vsel %vm592, %v984, 0.0
        %989 = vadd.xlane.f32.xlu0 %v988
        %v990 = vpop.xlane.xlu0 %989
        %v991 = vrcp.pop %v987
        %v992 = vmul.f32 %v982, %v991
        %v993 = vrcp.pop %v990
        %v994 = vmul.f32 %v984, %v993
        %995 = vrot.lane.b32.xlu0 %v576, 48
        %v996 = vpop.permute.xlu0 %995
        %997 = vrot.lane.b32.xlu0 %v581, 48
        %v998 = vpop.permute.xlu0 %997
        %v1002 = vsel %vm592, %v992, 0
        %v1005 = vsel %vm592, %v994, 0
        %1007 = vmatprep.subr.mxu0 0.0
        %1008 = vmatpush1.msra.mxu0 0.0
        %1009 = vmatprep.subr.mxu0 0.0
        %1010 = vmatpush1.msra.mxu0 0.0
        %1011 = vmatprep.subr.mxu0 0.0
        %1012 = vmatpush1.msra.mxu0 0.0
        %1013 = vmatprep.subr.mxu0 0.0
        %1014 = vmatpush1.msra.mxu0 0.0
        %1015 = vmatprep.subr.mxu0 0.0
        %1016 = vmatpush1.msra.mxu0 0.0
        %1017 = vmatprep.subr.mxu0 0.0
        %1018 = vmatpush1.msra.mxu0 0.0
        %1019 = vmatprep.subr.mxu0 0.0
        %1020 = vmatpush1.msra.mxu0 0.0
        %1021 = vmatprep.subr.mxu0 0.0
        %1022 = vmatpush1.msra.mxu0 0.0
        %1023 = vmatprep.subr.mxu0 0.0
        %1024 = vmatpush1.msra.mxu0 0.0
        %1025 = vmatprep.subr.mxu0 0.0
        %1026 = vmatpush1.msra.mxu0 0.0
        %1027 = vmatprep.subr.mxu0 0.0
        %1028 = vmatpush1.msra.mxu0 0.0
        %1029 = vmatprep.subr.mxu0 0.0
        %1030 = vmatpush1.msra.mxu0 0.0
        %1031 = vmatprep.subr.mxu0 0.0
        %1032 = vmatpush1.msra.mxu0 0.0
        %1033 = vmatprep.subr.mxu0 0.0
        %1034 = vmatpush1.msra.mxu0 0.0
        %1035 = vmatprep.subr.mxu0 0.0
        %1036 = vmatpush1.msra.mxu0 %v998
        %1037 = vmatprep.subr.mxu0 0.0
        %1038 = vmatpush1.msra.mxu0 %v996
        %1039 = vmatprep.subr.mxu0 0.0
        %1040 = vmatpush2.msra.mxu0 0.0
        %1041 = vmatprep.subr.mxu0 0.0
        %1042 = vmatpush2.msra.mxu0 0.0
        %1043 = vmatprep.subr.mxu0 0.0
        %1044 = vmatpush2.msra.mxu0 0.0
        %1045 = vmatprep.subr.mxu0 0.0
        %1046 = vmatpush2.msra.mxu0 0.0
        %1047 = vmatprep.subr.mxu0 0.0
        %1048 = vmatpush2.msra.mxu0 0.0
        %1049 = vmatprep.subr.mxu0 0.0
        %1050 = vmatpush2.msra.mxu0 0.0
        %1051 = vmatprep.subr.mxu0 0.0
        %1052 = vmatpush2.msra.mxu0 0.0
        %1053 = vmatprep.subr.mxu0 0.0
        %1054 = vmatpush2.msra.mxu0 0.0
        %1055 = vmatprep.subr.mxu0 0.0
        %1056 = vmatpush2.msra.mxu0 0.0
        %1057 = vmatprep.subr.mxu0 0.0
        %1058 = vmatpush2.msra.mxu0 0.0
        %1059 = vmatprep.subr.mxu0 0.0
        %1060 = vmatpush2.msra.mxu0 0.0
        %1061 = vmatprep.subr.mxu0 0.0
        %1062 = vmatpush2.msra.mxu0 0.0
        %1063 = vmatprep.subr.mxu0 0.0
        %1064 = vmatpush2.msra.mxu0 0.0
        %1065 = vmatprep.subr.mxu0 0.0
        %1066 = vmatpush2.msra.mxu0 0.0
        %1067 = vmatprep.subr.mxu0 0.0
        %1068 = vmatpush2.msra.mxu0 0.0
        %1069 = vmatprep.subr.mxu0 0.0
        %1070 = vmatpush2.msra.mxu0 0.0
        %1071 = vmatprep.mubr.f32.mxu0 0.0
        %1072 = vmatmul.mubr.f32.gmra.mxu0 %v1002
        %v1073 = vpop.f32.mrf.mxu0
        %v1074 = vadd.f32 0.0, %v1073
        %v1075 = vpop.f32.mrf.mxu0
        %1076 = vmatprep.mubr.f32.mxu0 0.0
        %1077 = vmatmul.mubr.f32.gmra.mxu0 %v1005
        %v1078 = vpop.f32.mrf.mxu0
        %v1079 = vadd.f32 0.0, %v1078
        %v1080 = vpop.f32.mrf.mxu0
        %1081 = vdwg.mxu0
        %v1082 = vld [vmem:[%s428 + $0x10] sm:$0xff]
        %v1083 = vld [vmem:[%s428 + $0x18] sm:$0xff]
        %v1085 = vsel %vm592, %v1074, 0
        %v1088 = vsel %vm592, %v1079, 0
        %1090 = vmatprep.subr.mxu0 0.0
        %1091 = vmatpush1.msra.mxu0 0.0
        %1092 = vmatprep.subr.mxu0 0.0
        %1093 = vmatpush1.msra.mxu0 0.0
        %1094 = vmatprep.subr.mxu0 0.0
        %1095 = vmatpush1.msra.mxu0 0.0
        %1096 = vmatprep.subr.mxu0 0.0
        %1097 = vmatpush1.msra.mxu0 0.0
        %1098 = vmatprep.subr.mxu0 0.0
        %1099 = vmatpush1.msra.mxu0 0.0
        %1100 = vmatprep.subr.mxu0 0.0
        %1101 = vmatpush1.msra.mxu0 0.0
        %1102 = vmatprep.subr.mxu0 0.0
        %1103 = vmatpush1.msra.mxu0 0.0
        %1104 = vmatprep.subr.mxu0 0.0
        %1105 = vmatpush1.msra.mxu0 0.0
        %1106 = vmatprep.subr.mxu0 0.0
        %1107 = vmatpush1.msra.mxu0 0.0
        %1108 = vmatprep.subr.mxu0 0.0
        %1109 = vmatpush1.msra.mxu0 0.0
        %1110 = vmatprep.subr.mxu0 0.0
        %1111 = vmatpush1.msra.mxu0 0.0
        %1112 = vmatprep.subr.mxu0 0.0
        %1113 = vmatpush1.msra.mxu0 0.0
        %1114 = vmatprep.subr.mxu0 0.0
        %1115 = vmatpush1.msra.mxu0 0.0
        %1116 = vmatprep.subr.mxu0 0.0
        %1117 = vmatpush1.msra.mxu0 0.0
        %1118 = vmatprep.subr.mxu0 0.0
        %1119 = vmatpush1.msra.mxu0 %v1083
        %1120 = vmatprep.subr.mxu0 0.0
        %1121 = vmatpush1.msra.mxu0 %v1082
        %1122 = vmatprep.subr.mxu0 0.0
        %1123 = vmatpush2.msra.mxu0 0.0
        %1124 = vmatprep.subr.mxu0 0.0
        %1125 = vmatpush2.msra.mxu0 0.0
        %1126 = vmatprep.subr.mxu0 0.0
        %1127 = vmatpush2.msra.mxu0 0.0
        %1128 = vmatprep.subr.mxu0 0.0
        %1129 = vmatpush2.msra.mxu0 0.0
        %1130 = vmatprep.subr.mxu0 0.0
        %1131 = vmatpush2.msra.mxu0 0.0
        %1132 = vmatprep.subr.mxu0 0.0
        %1133 = vmatpush2.msra.mxu0 0.0
        %1134 = vmatprep.subr.mxu0 0.0
        %1135 = vmatpush2.msra.mxu0 0.0
        %1136 = vmatprep.subr.mxu0 0.0
        %1137 = vmatpush2.msra.mxu0 0.0
        %1138 = vmatprep.subr.mxu0 0.0
        %1139 = vmatpush2.msra.mxu0 0.0
        %1140 = vmatprep.subr.mxu0 0.0
        %1141 = vmatpush2.msra.mxu0 0.0
        %1142 = vmatprep.subr.mxu0 0.0
        %1143 = vmatpush2.msra.mxu0 0.0
        %1144 = vmatprep.subr.mxu0 0.0
        %1145 = vmatpush2.msra.mxu0 0.0
        %1146 = vmatprep.subr.mxu0 0.0
        %1147 = vmatpush2.msra.mxu0 0.0
        %1148 = vmatprep.subr.mxu0 0.0
        %1149 = vmatpush2.msra.mxu0 0.0
        %1150 = vmatprep.subr.mxu0 0.0
        %1151 = vmatpush2.msra.mxu0 0.0
        %1152 = vmatprep.subr.mxu0 0.0
        %1153 = vmatpush2.msra.mxu0 0.0
        %1154 = vmatprep.mubr.f32.mxu0 0.0
        %1155 = vmatmul.mubr.f32.gmra.mxu0 %v1085
        %v1156 = vpop.f32.mrf.mxu0
        %v1157 = vadd.f32 0.0, %v1156
        %v1158 = vpop.f32.mrf.mxu0
        %1159 = vmatprep.mubr.f32.mxu0 0.0
        %1160 = vmatmul.mubr.f32.gmra.mxu0 %v1088
        %v1161 = vpop.f32.mrf.mxu0
        %v1162 = vadd.f32 0.0, %v1161
        %v1163 = vpop.f32.mrf.mxu0
        %1164 = vdwg.mxu0
        %v1165 = vadd.f32 %v876, %v1157
        %v1166 = vadd.f32 %v877, %v1162
        %v1167 = vadd.f32 %v491, %v1165
        %v1168 = vadd.f32 %v492, %v1166
        %v1169 = vsel %vm502, %v1167, 0.0
        %1170 = vadd.xlane.f32.xlu0 %v1169
        %v1171 = vpop.xlane.xlu0 %1170
        %v1172 = vsel %vm502, %v1168, 0.0
        %1173 = vadd.xlane.f32.xlu0 %v1172
        %v1174 = vpop.xlane.xlu0 %1173
        %v1175 = vrcp.pop 32.0
        %v1176 = vmul.f32 %v1171, %v1175
        %v1177 = vmul.f32 %v1174, %v1175
        %v1178 = vsub.f32 %v1167, %v1176
        %v1179 = vsub.f32 %v1168, %v1177
        %v1180 = vmul.f32 %v1178, %v1178
        %v1181 = vmul.f32 %v1179, %v1179
        %v1182 = vsel %vm502, %v1180, 0.0
        %1183 = vadd.xlane.f32.xlu0 %v1182
        %v1184 = vpop.xlane.xlu0 %1183
        %v1185 = vsel %vm502, %v1181, 0.0
        %1186 = vadd.xlane.f32.xlu0 %v1185
        %v1187 = vpop.xlane.xlu0 %1186
        %v1188 = vmul.f32 %v1184, %v1175
        %v1189 = vmul.f32 %v1187, %v1175
        %v1190 = vadd.f32 %v1188, 1e-12
        %v1191 = vadd.f32 %v1189, 1e-12
        %v1192 = vrsqrt.pop %v1190
        %v1193 = vrsqrt.pop %v1191
        %v1194 = vmul.f32 %v1178, %v1192
        %v1195 = vmul.f32 %v1179, %v1193
        %v1196 = vlaneseq
        %v1197 = vshrl.u32 %v1196, 7
        %v1198 = vsub.s32 2, %v1197
        %v1199 = vrot.slane %v493, %v1198
        %v1200 = vmul.f32 %v1194, %v1199
        %v1201 = vmul.f32 %v1195, %v1199
        %v1202 = vlaneseq
        %v1203 = vshrl.u32 %v1202, 7
        %v1204 = vsub.s32 3, %v1203
        %v1205 = vrot.slane %v493, %v1204
        %v1206 = vadd.f32 %v1200, %v1205
        %v1207 = vadd.f32 %v1201, %v1205
        %v1208 = vld [vmem:[%s433] sm:$0xff]
        %v1209 = vld [vmem:[%s433 + $0x8] sm:$0xff]
        %v1210 = vld [vmem:[%s433 + $0x10] sm:$0xff]
        %v1211 = vld [vmem:[%s433 + $0x18] sm:$0xff]
        %v1212 = vlaneseq
        %v1213 = vshrl.u32 %v1212, 7
        %v1214 = vsub.s32 4, %v1213
        %v1215 = vrot.slane %v493, %v1214
        %v1217 = vsel %vm502, %v1206, 0
        %v1220 = vsel %vm502, %v1207, 0
        %1222 = vmatprep.subr.mxu0 0.0
        %1223 = vmatpush1.msra.mxu0 0.0
        %1224 = vmatprep.subr.mxu0 0.0
        %1225 = vmatpush1.msra.mxu0 0.0
        %1226 = vmatprep.subr.mxu0 0.0
        %1227 = vmatpush1.msra.mxu0 0.0
        %1228 = vmatprep.subr.mxu0 0.0
        %1229 = vmatpush1.msra.mxu0 0.0
        %1230 = vmatprep.subr.mxu0 0.0
        %1231 = vmatpush1.msra.mxu0 0.0
        %1232 = vmatprep.subr.mxu0 0.0
        %1233 = vmatpush1.msra.mxu0 0.0
        %1234 = vmatprep.subr.mxu0 0.0
        %1235 = vmatpush1.msra.mxu0 0.0
        %1236 = vmatprep.subr.mxu0 0.0
        %1237 = vmatpush1.msra.mxu0 0.0
        %1238 = vmatprep.subr.mxu0 0.0
        %1239 = vmatpush1.msra.mxu0 0.0
        %1240 = vmatprep.subr.mxu0 0.0
        %1241 = vmatpush1.msra.mxu0 0.0
        %1242 = vmatprep.subr.mxu0 0.0
        %1243 = vmatpush1.msra.mxu0 0.0
        %1244 = vmatprep.subr.mxu0 0.0
        %1245 = vmatpush1.msra.mxu0 0.0
        %1246 = vmatprep.subr.mxu0 0.0
        %1247 = vmatpush1.msra.mxu0 %v1211
        %1248 = vmatprep.subr.mxu0 0.0
        %1249 = vmatpush1.msra.mxu0 %v1210
        %1250 = vmatprep.subr.mxu0 0.0
        %1251 = vmatpush1.msra.mxu0 %v1209
        %1252 = vmatprep.subr.mxu0 0.0
        %1253 = vmatpush1.msra.mxu0 %v1208
        %1254 = vmatprep.subr.mxu0 0.0
        %1255 = vmatpush2.msra.mxu0 0.0
        %1256 = vmatprep.subr.mxu0 0.0
        %1257 = vmatpush2.msra.mxu0 0.0
        %1258 = vmatprep.subr.mxu0 0.0
        %1259 = vmatpush2.msra.mxu0 0.0
        %1260 = vmatprep.subr.mxu0 0.0
        %1261 = vmatpush2.msra.mxu0 0.0
        %1262 = vmatprep.subr.mxu0 0.0
        %1263 = vmatpush2.msra.mxu0 0.0
        %1264 = vmatprep.subr.mxu0 0.0
        %1265 = vmatpush2.msra.mxu0 0.0
        %1266 = vmatprep.subr.mxu0 0.0
        %1267 = vmatpush2.msra.mxu0 0.0
        %1268 = vmatprep.subr.mxu0 0.0
        %1269 = vmatpush2.msra.mxu0 0.0
        %1270 = vmatprep.subr.mxu0 0.0
        %1271 = vmatpush2.msra.mxu0 0.0
        %1272 = vmatprep.subr.mxu0 0.0
        %1273 = vmatpush2.msra.mxu0 0.0
        %1274 = vmatprep.subr.mxu0 0.0
        %1275 = vmatpush2.msra.mxu0 0.0
        %1276 = vmatprep.subr.mxu0 0.0
        %1277 = vmatpush2.msra.mxu0 0.0
        %1278 = vmatprep.subr.mxu0 0.0
        %1279 = vmatpush2.msra.mxu0 0.0
        %1280 = vmatprep.subr.mxu0 0.0
        %1281 = vmatpush2.msra.mxu0 0.0
        %1282 = vmatprep.subr.mxu0 0.0
        %1283 = vmatpush2.msra.mxu0 0.0
        %1284 = vmatprep.subr.mxu0 0.0
        %1285 = vmatpush2.msra.mxu0 0.0
        %1286 = vmatprep.mubr.f32.mxu0 0.0
        %1287 = vmatmul.mubr.f32.gmra.mxu0 %v1217
        %v1288 = vpop.f32.mrf.mxu0
        %v1289 = vadd.f32 %v1215, %v1288
        %v1290 = vpop.f32.mrf.mxu0
        %1291 = vmatprep.mubr.f32.mxu0 0.0
        %1292 = vmatmul.mubr.f32.gmra.mxu0 %v1220
        %v1293 = vpop.f32.mrf.mxu0
        %v1294 = vadd.f32 %v1215, %v1293
        %v1295 = vpop.f32.mrf.mxu0
        %1296 = vdwg.mxu0
        %v1297 = vmul.f32 %v1289, 0.5
        %v1298 = vmul.f32 %v1294, 0.5
        %v1299 = vmul.f32 %v1289, 0.70710677
        %v1300 = vmul.f32 %v1294, 0.70710677
        %v1301 = verf.f32.pop %v1299
        %v1302 = verf.f32.pop %v1300
        %v1303 = vadd.f32 %v1301, 1.0
        %v1304 = vadd.f32 %v1302, 1.0
        %v1305 = vmul.f32 %v1297, %v1303
        %v1306 = vmul.f32 %v1298, %v1304
        %v1307 = vld [vmem:[%s438] sm:$0xff]
        %v1308 = vld [vmem:[%s438 + $0x8] sm:$0xff]
        %v1309 = vld [vmem:[%s438 + $0x10] sm:$0xff]
        %v1310 = vld [vmem:[%s438 + $0x18] sm:$0xff]
        %v1311 = vld [vmem:[%s438 + $0x20] sm:$0xff]
        %v1312 = vld [vmem:[%s438 + $0x28] sm:$0xff]
        %v1313 = vld [vmem:[%s438 + $0x30] sm:$0xff]
        %v1314 = vld [vmem:[%s438 + $0x38] sm:$0xff]
        %v1315 = vlaneseq
        %v1316 = vshrl.u32 %v1315, 7
        %v1317 = vsub.s32 5, %v1316
        %v1318 = vrot.slane %v493, %v1317
        %vm1319 = vcmask 523264
        %v1321 = vsel %vm1319, %v1305, 0
        %v1324 = vsel %vm1319, %v1306, 0
        %1326 = vmatprep.subr.mxu0 0.0
        %1327 = vmatpush1.msra.mxu0 0.0
        %1328 = vmatprep.subr.mxu0 0.0
        %1329 = vmatpush1.msra.mxu0 0.0
        %1330 = vmatprep.subr.mxu0 0.0
        %1331 = vmatpush1.msra.mxu0 0.0
        %1332 = vmatprep.subr.mxu0 0.0
        %1333 = vmatpush1.msra.mxu0 0.0
        %1334 = vmatprep.subr.mxu0 0.0
        %1335 = vmatpush1.msra.mxu0 0.0
        %1336 = vmatprep.subr.mxu0 0.0
        %1337 = vmatpush1.msra.mxu0 0.0
        %1338 = vmatprep.subr.mxu0 0.0
        %1339 = vmatpush1.msra.mxu0 0.0
        %1340 = vmatprep.subr.mxu0 0.0
        %1341 = vmatpush1.msra.mxu0 0.0
        %1342 = vmatprep.subr.mxu0 0.0
        %1343 = vmatpush1.msra.mxu0 %v1314
        %1344 = vmatprep.subr.mxu0 0.0
        %1345 = vmatpush1.msra.mxu0 %v1313
        %1346 = vmatprep.subr.mxu0 0.0
        %1347 = vmatpush1.msra.mxu0 %v1312
        %1348 = vmatprep.subr.mxu0 0.0
        %1349 = vmatpush1.msra.mxu0 %v1311
        %1350 = vmatprep.subr.mxu0 0.0
        %1351 = vmatpush1.msra.mxu0 %v1310
        %1352 = vmatprep.subr.mxu0 0.0
        %1353 = vmatpush1.msra.mxu0 %v1309
        %1354 = vmatprep.subr.mxu0 0.0
        %1355 = vmatpush1.msra.mxu0 %v1308
        %1356 = vmatprep.subr.mxu0 0.0
        %1357 = vmatpush1.msra.mxu0 %v1307
        %1358 = vmatprep.subr.mxu0 0.0
        %1359 = vmatpush2.msra.mxu0 0.0
        %1360 = vmatprep.subr.mxu0 0.0
        %1361 = vmatpush2.msra.mxu0 0.0
        %1362 = vmatprep.subr.mxu0 0.0
        %1363 = vmatpush2.msra.mxu0 0.0
        %1364 = vmatprep.subr.mxu0 0.0
        %1365 = vmatpush2.msra.mxu0 0.0
        %1366 = vmatprep.subr.mxu0 0.0
        %1367 = vmatpush2.msra.mxu0 0.0
        %1368 = vmatprep.subr.mxu0 0.0
        %1369 = vmatpush2.msra.mxu0 0.0
        %1370 = vmatprep.subr.mxu0 0.0
        %1371 = vmatpush2.msra.mxu0 0.0
        %1372 = vmatprep.subr.mxu0 0.0
        %1373 = vmatpush2.msra.mxu0 0.0
        %1374 = vmatprep.subr.mxu0 0.0
        %1375 = vmatpush2.msra.mxu0 0.0
        %1376 = vmatprep.subr.mxu0 0.0
        %1377 = vmatpush2.msra.mxu0 0.0
        %1378 = vmatprep.subr.mxu0 0.0
        %1379 = vmatpush2.msra.mxu0 0.0
        %1380 = vmatprep.subr.mxu0 0.0
        %1381 = vmatpush2.msra.mxu0 0.0
        %1382 = vmatprep.subr.mxu0 0.0
        %1383 = vmatpush2.msra.mxu0 0.0
        %1384 = vmatprep.subr.mxu0 0.0
        %1385 = vmatpush2.msra.mxu0 0.0
        %1386 = vmatprep.subr.mxu0 0.0
        %1387 = vmatpush2.msra.mxu0 0.0
        %1388 = vmatprep.subr.mxu0 0.0
        %1389 = vmatpush2.msra.mxu0 0.0
        %1390 = vmatprep.mubr.f32.mxu0 0.0
        %1391 = vmatmul.mubr.f32.gmra.mxu0 %v1321
        %v1392 = vpop.f32.mrf.mxu0
        %v1393 = vadd.f32 %v1318, %v1392
        %v1394 = vpop.f32.mrf.mxu0
        %1395 = vmatprep.mubr.f32.mxu0 0.0
        %1396 = vmatmul.mubr.f32.gmra.mxu0 %v1324
        %v1397 = vpop.f32.mrf.mxu0
        %v1398 = vadd.f32 %v1318, %v1397
        %v1399 = vpop.f32.mrf.mxu0
        %1400 = vdwg.mxu0
        %v1401 = vadd.f32 %v1206, %v1393
        %v1402 = vadd.f32 %v1207, %v1398
        %v1403 = vsel %vm502, %v1401, 0.0
        %1404 = vadd.xlane.f32.xlu0 %v1403
        %v1405 = vpop.xlane.xlu0 %1404
        %v1406 = vsel %vm502, %v1402, 0.0
        %1407 = vadd.xlane.f32.xlu0 %v1406
        %v1408 = vpop.xlane.xlu0 %1407
        %v1409 = vmul.f32 %v1405, %v1175
        %v1410 = vmul.f32 %v1408, %v1175
        %v1411 = vsub.f32 %v1401, %v1409
        %v1412 = vsub.f32 %v1402, %v1410
        %v1413 = vmul.f32 %v1411, %v1411
        %v1414 = vmul.f32 %v1412, %v1412
        %v1415 = vsel %vm502, %v1413, 0.0
        %1416 = vadd.xlane.f32.xlu0 %v1415
        %v1417 = vpop.xlane.xlu0 %1416
        %v1418 = vsel %vm502, %v1414, 0.0
        %1419 = vadd.xlane.f32.xlu0 %v1418
        %v1420 = vpop.xlane.xlu0 %1419
        %v1421 = vmul.f32 %v1417, %v1175
        %v1422 = vmul.f32 %v1420, %v1175
        %v1423 = vadd.f32 %v1421, 1e-12
        %v1424 = vadd.f32 %v1422, 1e-12
        %v1425 = vrsqrt.pop %v1423
        %v1426 = vrsqrt.pop %v1424
        %v1427 = vmul.f32 %v1411, %v1425
        %v1428 = vmul.f32 %v1412, %v1426
        %v1429 = vlaneseq
        %v1430 = vshrl.u32 %v1429, 7
        %v1431 = vsub.s32 6, %v1430
        %v1432 = vrot.slane %v493, %v1431
        %v1433 = vmul.f32 %v1427, %v1432
        %v1434 = vmul.f32 %v1428, %v1432
        %v1435 = vlaneseq
        %v1436 = vshrl.u32 %v1435, 7
        %v1437 = vsub.s32 7, %v1436
        %v1438 = vrot.slane %v493, %v1437
        %v1439 = vadd.f32 %v1433, %v1438
        %v1440 = vadd.f32 %v1434, %v1438
        %1441 = vst.msk [vmem:[#allocation2] sm:$0xff] %vm502, %v1439
        %1442 = vst.msk [vmem:[#allocation2 + $0x8] sm:$0xff] %vm502, %v1440
        %p1443 = scmp.eq.s32.totalorder %s27, 5
        // Predicated region
        $region61: #{teacher_forward.2} parent=51 // pred_check
          %p1444 = pneg %p1443
        $region62: #{teacher_forward.2} parent=51 // pred_check_branch
          %1446 = sbr.rel (%p1444) target = $region64
        $region63: #{teacher_forward.2} parent=51 // pred_region
          %1447 = vst.msk [vmem:[#allocation7] sm:$0xff] %vm502, %v1439
          %1448 = vst.msk [vmem:[#allocation7 + $0x8] sm:$0xff] %vm502, %v1440
        $region64: #{teacher_forward.2} parent=51 // pred_fallthru
          _
        %p1449 = scmp.eq.s32.totalorder %s27, 11
        // Predicated region
        $region65: #{teacher_forward.2} parent=51 // pred_check
          %p1450 = pneg %p1449
        $region66: #{teacher_forward.2} parent=51 // pred_check_branch
          %1452 = sbr.rel (%p1450) target = $region68
        $region67: #{teacher_forward.2} parent=51 // pred_region
          %1453 = vst.msk [vmem:[%s10] sm:$0xff] %vm502, %v1439
          %1454 = vst.msk [vmem:[%s10 + $0x8] sm:$0xff] %vm502, %v1440
        $region68: #{teacher_forward.2} parent=51 // pred_fallthru
          _
        // Predicated region
        $region69: #{teacher_forward.2} parent=51 // pred_check
          %p1455 = pneg %p233
        $region70: #{teacher_forward.2} parent=51 // pred_check_branch
          %1457 = sbr.rel (%p1455) target = $region72
        $region71: #{teacher_forward.2} parent=51 // pred_region
          %s1459 = ssub.s32 256, 256
          %1460 = vsyncadd [#allocation5], %s1459
          %s1461 = sshll.u32 [#allocation6], 4
          %s1462 = int_to_ptr.vmem [resolvable:$true] %s1461
          %1467 = dma.vmem_to_hbm [thread:$0]  %s1462, 256, %s8, [#allocation5], 128, 128, 8
        $region72: #{teacher_forward.2} parent=51 // pred_fallthru
          _
        // Predicated region
        $region73: #{teacher_forward.2} parent=51 // pred_check
          %p1468 = pneg %p254
        $region74: #{teacher_forward.2} parent=51 // pred_check_branch
          %1470 = sbr.rel (%p1468) target = $region76
        $region75: #{teacher_forward.2} parent=51 // pred_region
          %s1472 = ssub.s32 256, 256
          %1473 = vsyncadd [#allocation8], %s1472
          %s1474 = sshll.u32 [#allocation7], 4
          %s1475 = int_to_ptr.vmem [resolvable:$true] %s1474
          %1480 = dma.vmem_to_hbm [thread:$0]  %s1475, 256, %s9, [#allocation8], 128, 128, 8
        $region76: #{teacher_forward.2} parent=51 // pred_fallthru
          _
        // Predicated region
        $region77: #{teacher_forward.2} parent=51 // pred_check
          %p1481 = pneg %p275
        $region78: #{teacher_forward.2} parent=51 // pred_check_branch
          %1483 = sbr.rel (%p1481) target = $region80
        $region79: #{teacher_forward.2} parent=51 // pred_region
          _
        $region80: #{teacher_forward.2} parent=51 // pred_fallthru
          _
        // Predicated region
        $region81: #{teacher_forward.2} parent=51 // pred_check
          %p1484 = pneg %p233
        $region82: #{teacher_forward.2} parent=51 // pred_check_branch
          %1486 = sbr.rel (%p1484) target = $region84
        $region83: #{teacher_forward.2} parent=51 // pred_region
          %1487 = dma.done [#allocation5], 256
        $region84: #{teacher_forward.2} parent=51 // pred_fallthru
          _
        // Predicated region
        $region85: #{teacher_forward.2} parent=51 // pred_check
          %p1488 = pneg %p254
        $region86: #{teacher_forward.2} parent=51 // pred_check_branch
          %1490 = sbr.rel (%p1488) target = $region88
        $region87: #{teacher_forward.2} parent=51 // pred_region
          %1491 = dma.done [#allocation8], 256
        $region88: #{teacher_forward.2} parent=51 // pred_fallthru
          _
        // Predicated region
        $region89: #{teacher_forward.2} parent=51 // pred_check
          %p1492 = pneg %p275
        $region90: #{teacher_forward.2} parent=51 // pred_check_branch
          %1494 = sbr.rel (%p1492) target = $region92
        $region91: #{teacher_forward.2} parent=51 // pred_region
          _
        $region92: #{teacher_forward.2} parent=51 // pred_fallthru
          _
      $region52: #{teacher_forward.2} parent=5 // pred_fallthru
        _
      %p1495 = scmp.le.s32.totalorder 2, %s22
      // Predicated region
      $region93: #{teacher_forward.2} parent=5 // pred_check
        %p1496 = pneg %p1495
      $region94: #{teacher_forward.2} parent=5 // pred_check_branch
        %1498 = sbr.rel (%p1496) target = $region96
      $region95: #{teacher_forward.2} parent=5 // pred_region
        %s1499 = ssub.s32 %s22, 2
      $region96: #{teacher_forward.2} parent=5 // pred_fallthru
        _
    $region6: #{teacher_forward.2} parent=1 // loop_footer
      %s26 = sadd.s32 1, %s22
    $region7: #{teacher_forward.2} parent=1 // loop_footer_branch
      %21 = sbr.rel target = $region3
    $region8: #{teacher_forward.2} parent=1 // loop_exit
      _
    %1500 = vsyncpa [#allocation4], 1
    %s1501 = scalar_lea.sflag [#allocation4], 1
    %1502 = vsyncpa %s1501, 1
    %1503 = vsyncpa [#allocation5], 1
    %s1504 = scalar_lea.sflag [#allocation5], 1
    %1505 = vsyncpa %s1504, 1
    %1506 = vsyncpa [#allocation8], 1

// kernel: teacher_forward.3
$region0: #{teacher_forward.3}
  #allocation0 [shape = 'u32[]', space=smem, size = 0x4, offset = 0x4, fixed_abs, tag = 'smem constant byte address 0x4 - core index']
  #allocation1 [shape = 'u32[144,128]{1,0:T(1,128)}', space=vmem, size = 0x12000, scoped, tag = 'internal scratch']
  #allocation2 [shape = 'f32[32,32]{1,0:T(8,128)}', space=vmem, size = 0x4000, scoped, tag = 'scratch operand']
  %s0 = inlined_call_operand.vmem [shape: f32[16,32], index: 0, kind: input, shape index: {}]
  %s1 = inlined_call_operand.vmem [shape: f32[2,32,128], index: 1, kind: input, shape index: {}]
  %s2 = inlined_call_operand.vmem [shape: f32[2,32,128], index: 2, kind: input, shape index: {}]
  %s3 = inlined_call_operand.vmem [shape: f32[2,1,128], index: 3, kind: input, shape index: {}]
  %s4 = inlined_call_operand.vmem [shape: f32[64,4], index: 4, kind: input, shape index: {}]
  %s5 = inlined_call_operand.vmem [shape: f32[1,4], index: 5, kind: input, shape index: {}]
  %s6 = inlined_call_operand.vmem [shape: f32[16,4], index: 6, kind: output, shape index: {}]
  %s7 = sld [smem:[#allocation0]]
  $region34: #{teacher_forward.3} parent=0
    _
  %s9 = ssub.s32 1, %s7
  %s10 = scalar_select 0, %s9, %s7
  // Predicated region
  $region2: #{teacher_forward.3} parent=0 // pred_check
    _
  $region3: #{teacher_forward.3} parent=0 // pred_check_branch
    %12 = sbr.rel (0) target = $region5
  $region4: #{teacher_forward.3} parent=0 // pred_region
    _
  $region5: #{teacher_forward.3} parent=0 // pred_fallthru
    _
  // Predicated region
  $region6: #{teacher_forward.3} parent=0 // pred_check
    _
  $region7: #{teacher_forward.3} parent=0 // pred_check_branch
    %14 = sbr.rel (0) target = $region9
  $region8: #{teacher_forward.3} parent=0 // pred_region
    _
  $region9: #{teacher_forward.3} parent=0 // pred_fallthru
    _
  // Predicated region
  $region10: #{teacher_forward.3} parent=0 // pred_check
    _
  $region11: #{teacher_forward.3} parent=0 // pred_check_branch
    %16 = sbr.rel (0) target = $region13
  $region12: #{teacher_forward.3} parent=0 // pred_region
    _
  $region13: #{teacher_forward.3} parent=0 // pred_fallthru
    _
  // Predicated region
  $region14: #{teacher_forward.3} parent=0 // pred_check
    _
  $region15: #{teacher_forward.3} parent=0 // pred_check_branch
    %18 = sbr.rel (0) target = $region17
  $region16: #{teacher_forward.3} parent=0 // pred_region
    _
  $region17: #{teacher_forward.3} parent=0 // pred_fallthru
    _
  // Predicated region
  $region18: #{teacher_forward.3} parent=0 // pred_check
    _
  $region19: #{teacher_forward.3} parent=0 // pred_check_branch
    %20 = sbr.rel (0) target = $region21
  $region20: #{teacher_forward.3} parent=0 // pred_region
    _
  $region21: #{teacher_forward.3} parent=0 // pred_fallthru
    _
  // Predicated region
  $region22: #{teacher_forward.3} parent=0 // pred_check
    _
  $region23: #{teacher_forward.3} parent=0 // pred_check_branch
    %22 = sbr.rel (0) target = $region25
  $region24: #{teacher_forward.3} parent=0 // pred_region
    _
  $region25: #{teacher_forward.3} parent=0 // pred_fallthru
    _
  %v23 = vld [vmem:[%s1] sm:$0xff]
  %v24 = vld [vmem:[%s1 + $0x8] sm:$0xff]
  %v25 = vld [vmem:[%s1 + $0x10] sm:$0xff]
  %v26 = vld [vmem:[%s1 + $0x18] sm:$0xff]
  %v27 = vld [vmem:[%s2] sm:$0xff]
  %v28 = vld [vmem:[%s2 + $0x8] sm:$0xff]
  %v29 = vld [vmem:[%s2 + $0x10] sm:$0xff]
  %v30 = vld [vmem:[%s2 + $0x18] sm:$0xff]
  %v31 = vld [vmem:[%s3] sm:$0x1]
  %v32 = vld [vmem:[%s0] sm:$0xff]
  %v34 = vlaneseq
  %v35 = vshrl.u32 %v34, 7
  %v36 = vsub.s32 0, %v35
  %v37 = vrot.slane %v31, %v36
  %vm39 = vcmask 261120
  %v41 = vsel %vm39, %v32, 0
  %43 = vmatprep.subr.mxu0 0.0
  %44 = vmatpush1.msra.mxu0 0.0
  %45 = vmatprep.subr.mxu0 0.0
  %46 = vmatpush1.msra.mxu0 0.0
  %47 = vmatprep.subr.mxu0 0.0
  %48 = vmatpush1.msra.mxu0 0.0
  %49 = vmatprep.subr.mxu0 0.0
  %50 = vmatpush1.msra.mxu0 0.0
  %51 = vmatprep.subr.mxu0 0.0
  %52 = vmatpush1.msra.mxu0 0.0
  %53 = vmatprep.subr.mxu0 0.0
  %54 = vmatpush1.msra.mxu0 0.0
  %55 = vmatprep.subr.mxu0 0.0
  %56 = vmatpush1.msra.mxu0 0.0
  %57 = vmatprep.subr.mxu0 0.0
  %58 = vmatpush1.msra.mxu0 0.0
  %59 = vmatprep.subr.mxu0 0.0
  %60 = vmatpush1.msra.mxu0 0.0
  %61 = vmatprep.subr.mxu0 0.0
  %62 = vmatpush1.msra.mxu0 0.0
  %63 = vmatprep.subr.mxu0 0.0
  %64 = vmatpush1.msra.mxu0 0.0
  %65 = vmatprep.subr.mxu0 0.0
  %66 = vmatpush1.msra.mxu0 0.0
  %67 = vmatprep.subr.mxu0 0.0
  %68 = vmatpush1.msra.mxu0 %v26
  %69 = vmatprep.subr.mxu0 0.0
  %70 = vmatpush1.msra.mxu0 %v25
  %71 = vmatprep.subr.mxu0 0.0
  %72 = vmatpush1.msra.mxu0 %v24
  %73 = vmatprep.subr.mxu0 0.0
  %74 = vmatpush1.msra.mxu0 %v23
  %75 = vmatprep.subr.mxu0 0.0
  %76 = vmatpush2.msra.mxu0 0.0
  %77 = vmatprep.subr.mxu0 0.0
  %78 = vmatpush2.msra.mxu0 0.0
  %79 = vmatprep.subr.mxu0 0.0
  %80 = vmatpush2.msra.mxu0 0.0
  %81 = vmatprep.subr.mxu0 0.0
  %82 = vmatpush2.msra.mxu0 0.0
  %83 = vmatprep.subr.mxu0 0.0
  %84 = vmatpush2.msra.mxu0 0.0
  %85 = vmatprep.subr.mxu0 0.0
  %86 = vmatpush2.msra.mxu0 0.0
  %87 = vmatprep.subr.mxu0 0.0
  %88 = vmatpush2.msra.mxu0 0.0
  %89 = vmatprep.subr.mxu0 0.0
  %90 = vmatpush2.msra.mxu0 0.0
  %91 = vmatprep.subr.mxu0 0.0
  %92 = vmatpush2.msra.mxu0 0.0
  %93 = vmatprep.subr.mxu0 0.0
  %94 = vmatpush2.msra.mxu0 0.0
  %95 = vmatprep.subr.mxu0 0.0
  %96 = vmatpush2.msra.mxu0 0.0
  %97 = vmatprep.subr.mxu0 0.0
  %98 = vmatpush2.msra.mxu0 0.0
  %99 = vmatprep.subr.mxu0 0.0
  %100 = vmatpush2.msra.mxu0 0.0
  %101 = vmatprep.subr.mxu0 0.0
  %102 = vmatpush2.msra.mxu0 0.0
  %103 = vmatprep.subr.mxu0 0.0
  %104 = vmatpush2.msra.mxu0 0.0
  %105 = vmatprep.subr.mxu0 0.0
  %106 = vmatpush2.msra.mxu0 0.0
  %107 = vmatprep.mubr.f32.mxu0 0.0
  %108 = vmatmul.mubr.f32.gmra.mxu0 %v41
  %v109 = vpop.f32.mrf.mxu0
  %v110 = vadd.f32 %v37, %v109
  %v111 = vpop.f32.mrf.mxu0
  %112 = vdwg.mxu0
  %v114 = vsel %vm39, 0.0, 0
  %116 = vmatprep.subr.mxu0 0.0
  %117 = vmatpush1.msra.mxu0 0.0
  %118 = vmatprep.subr.mxu0 0.0
  %119 = vmatpush1.msra.mxu0 0.0
  %120 = vmatprep.subr.mxu0 0.0
  %121 = vmatpush1.msra.mxu0 0.0
  %122 = vmatprep.subr.mxu0 0.0
  %123 = vmatpush1.msra.mxu0 0.0
  %124 = vmatprep.subr.mxu0 0.0
  %125 = vmatpush1.msra.mxu0 0.0
  %126 = vmatprep.subr.mxu0 0.0
  %127 = vmatpush1.msra.mxu0 0.0
  %128 = vmatprep.subr.mxu0 0.0
  %129 = vmatpush1.msra.mxu0 0.0
  %130 = vmatprep.subr.mxu0 0.0
  %131 = vmatpush1.msra.mxu0 0.0
  %132 = vmatprep.subr.mxu0 0.0
  %133 = vmatpush1.msra.mxu0 0.0
  %134 = vmatprep.subr.mxu0 0.0
  %135 = vmatpush1.msra.mxu0 0.0
  %136 = vmatprep.subr.mxu0 0.0
  %137 = vmatpush1.msra.mxu0 0.0
  %138 = vmatprep.subr.mxu0 0.0
  %139 = vmatpush1.msra.mxu0 0.0
  %140 = vmatprep.subr.mxu0 0.0
  %141 = vmatpush1.msra.mxu0 %v30
  %142 = vmatprep.subr.mxu0 0.0
  %143 = vmatpush1.msra.mxu0 %v29
  %144 = vmatprep.subr.mxu0 0.0
  %145 = vmatpush1.msra.mxu0 %v28
  %146 = vmatprep.subr.mxu0 0.0
  %147 = vmatpush1.msra.mxu0 %v27
  %148 = vmatprep.subr.mxu0 0.0
  %149 = vmatpush2.msra.mxu0 0.0
  %150 = vmatprep.subr.mxu0 0.0
  %151 = vmatpush2.msra.mxu0 0.0
  %152 = vmatprep.subr.mxu0 0.0
  %153 = vmatpush2.msra.mxu0 0.0
  %154 = vmatprep.subr.mxu0 0.0
  %155 = vmatpush2.msra.mxu0 0.0
  %156 = vmatprep.subr.mxu0 0.0
  %157 = vmatpush2.msra.mxu0 0.0
  %158 = vmatprep.subr.mxu0 0.0
  %159 = vmatpush2.msra.mxu0 0.0
  %160 = vmatprep.subr.mxu0 0.0
  %161 = vmatpush2.msra.mxu0 0.0
  %162 = vmatprep.subr.mxu0 0.0
  %163 = vmatpush2.msra.mxu0 0.0
  %164 = vmatprep.subr.mxu0 0.0
  %165 = vmatpush2.msra.mxu0 0.0
  %166 = vmatprep.subr.mxu0 0.0
  %167 = vmatpush2.msra.mxu0 0.0
  %168 = vmatprep.subr.mxu0 0.0
  %169 = vmatpush2.msra.mxu0 0.0
  %170 = vmatprep.subr.mxu0 0.0
  %171 = vmatpush2.msra.mxu0 0.0
  %172 = vmatprep.subr.mxu0 0.0
  %173 = vmatpush2.msra.mxu0 0.0
  %174 = vmatprep.subr.mxu0 0.0
  %175 = vmatpush2.msra.mxu0 0.0
  %176 = vmatprep.subr.mxu0 0.0
  %177 = vmatpush2.msra.mxu0 0.0
  %178 = vmatprep.subr.mxu0 0.0
  %179 = vmatpush2.msra.mxu0 0.0
  %180 = vmatprep.mubr.f32.mxu0 0.0
  %181 = vmatmul.mubr.f32.gmra.mxu0 %v114
  %v182 = vpop.f32.mrf.mxu0
  %v183 = vadd.f32 0.0, %v182
  %v184 = vpop.f32.mrf.mxu0
  %185 = vdwg.mxu0
  %v186 = vadd.f32 %v110, %v183
  %v187 = vxor.u32 %v186, 2147483648
  %v188 = vmul.f32 %v187, 1.442695
  %v189 = vpow.pop %v188
  %v190 = vadd.f32 %v189, 1.0
  %v191 = vrcp.pop %v190
  %v192 = vmul.f32 1.0, %v191
  %v193 = vtanh.pop %v186
  %v194 = vmul.f32 %v192, 0.0
  %196 = vrot.lane.b32.xlu0 %v193, 64
  %v197 = vpop.permute.xlu0 %196
  %v199 = vmul.f32 %v192, %v197
  %201 = vrot.lane.b32.xlu0 %v199, 32
  %v202 = vpop.permute.xlu0 %201
  %v204 = vadd.f32 %v194, %v202
  %v205 = vtanh.pop %v204
  %207 = vrot.lane.b32.xlu0 %v205, 64
  %v208 = vpop.permute.xlu0 %207
  %v210 = vmul.f32 %v192, %v208
  %212 = vrot.lane.b32.xlu0 %v210, 32
  %v213 = vpop.permute.xlu0 %212
  %vm215 = vcmask 253952
  %216 = vst.msk [vmem:[#allocation2] sm:$0x1] %vm215, %v213
  %v217 = vsel %vm39, %v213, 0
  %219 = vmatprep.subr.mxu0 0.0
  %220 = vmatpush1.msra.mxu0 0.0
  %221 = vmatprep.subr.mxu0 0.0
  %222 = vmatpush1.msra.mxu0 0.0
  %223 = vmatprep.subr.mxu0 0.0
  %224 = vmatpush1.msra.mxu0 0.0
  %225 = vmatprep.subr.mxu0 0.0
  %226 = vmatpush1.msra.mxu0 0.0
  %227 = vmatprep.subr.mxu0 0.0
  %228 = vmatpush1.msra.mxu0 0.0
  %229 = vmatprep.subr.mxu0 0.0
  %230 = vmatpush1.msra.mxu0 0.0
  %231 = vmatprep.subr.mxu0 0.0
  %232 = vmatpush1.msra.mxu0 0.0
  %233 = vmatprep.subr.mxu0 0.0
  %234 = vmatpush1.msra.mxu0 0.0
  %235 = vmatprep.subr.mxu0 0.0
  %236 = vmatpush1.msra.mxu0 0.0
  %237 = vmatprep.subr.mxu0 0.0
  %238 = vmatpush1.msra.mxu0 0.0
  %239 = vmatprep.subr.mxu0 0.0
  %240 = vmatpush1.msra.mxu0 0.0
  %241 = vmatprep.subr.mxu0 0.0
  %242 = vmatpush1.msra.mxu0 0.0
  %243 = vmatprep.subr.mxu0 0.0
  %244 = vmatpush1.msra.mxu0 %v30
  %245 = vmatprep.subr.mxu0 0.0
  %246 = vmatpush1.msra.mxu0 %v29
  %247 = vmatprep.subr.mxu0 0.0
  %248 = vmatpush1.msra.mxu0 %v28
  %249 = vmatprep.subr.mxu0 0.0
  %250 = vmatpush1.msra.mxu0 %v27
  %251 = vmatprep.subr.mxu0 0.0
  %252 = vmatpush2.msra.mxu0 0.0
  %253 = vmatprep.subr.mxu0 0.0
  %254 = vmatpush2.msra.mxu0 0.0
  %255 = vmatprep.subr.mxu0 0.0
  %256 = vmatpush2.msra.mxu0 0.0
  %257 = vmatprep.subr.mxu0 0.0
  %258 = vmatpush2.msra.mxu0 0.0
  %259 = vmatprep.subr.mxu0 0.0
  %260 = vmatpush2.msra.mxu0 0.0
  %261 = vmatprep.subr.mxu0 0.0
  %262 = vmatpush2.msra.mxu0 0.0
  %263 = vmatprep.subr.mxu0 0.0
  %264 = vmatpush2.msra.mxu0 0.0
  %265 = vmatprep.subr.mxu0 0.0
  %266 = vmatpush2.msra.mxu0 0.0
  %267 = vmatprep.subr.mxu0 0.0
  %268 = vmatpush2.msra.mxu0 0.0
  %269 = vmatprep.subr.mxu0 0.0
  %270 = vmatpush2.msra.mxu0 0.0
  %271 = vmatprep.subr.mxu0 0.0
  %272 = vmatpush2.msra.mxu0 0.0
  %273 = vmatprep.subr.mxu0 0.0
  %274 = vmatpush2.msra.mxu0 0.0
  %275 = vmatprep.subr.mxu0 0.0
  %276 = vmatpush2.msra.mxu0 0.0
  %277 = vmatprep.subr.mxu0 0.0
  %278 = vmatpush2.msra.mxu0 0.0
  %279 = vmatprep.subr.mxu0 0.0
  %280 = vmatpush2.msra.mxu0 0.0
  %281 = vmatprep.subr.mxu0 0.0
  %282 = vmatpush2.msra.mxu0 0.0
  %283 = vmatprep.mubr.f32.mxu0 0.0
  %284 = vmatmul.mubr.f32.gmra.mxu0 %v217
  %v285 = vpop.f32.mrf.mxu0
  %v286 = vadd.f32 0.0, %v285
  %v287 = vpop.f32.mrf.mxu0
  %288 = vdwg.mxu0
  %v290 = vrot.slane %v286, 7
  %v292 = vadd.f32 %v110, %v290
  %v293 = vxor.u32 %v292, 2147483648
  %v294 = vmul.f32 %v293, 1.442695
  %v295 = vpow.pop %v294
  %v296 = vadd.f32 %v295, 1.0
  %v297 = vrcp.pop %v296
  %v298 = vmul.f32 1.0, %v297
  %v299 = vtanh.pop %v292
  %v301 = vrot.slane %v204, 7
  %v303 = vmul.f32 %v298, %v301
  %305 = vrot.lane.b32.xlu0 %v299, 64
  %v306 = vpop.permute.xlu0 %305
  %v308 = vmul.f32 %v298, %v306
  %310 = vrot.lane.b32.xlu0 %v308, 32
  %v311 = vpop.permute.xlu0 %310
  %v313 = vadd.f32 %v303, %v311
  %v314 = vtanh.pop %v313
  %316 = vrot.lane.b32.xlu0 %v314, 64
  %v317 = vpop.permute.xlu0 %316
  %v319 = vmul.f32 %v298, %v317
  %321 = vrot.lane.b32.xlu0 %v319, 32
  %v322 = vpop.permute.xlu0 %321
  %vm324 = vcmask 254977
  %325 = vst.msk [vmem:[#allocation2] sm:$0x2] %vm324, %v322
  %v326 = vrot.slane %v319, 1
  %327 = vrot.lane.b32.xlu0 %v326, 32
  %v328 = vpop.permute.xlu0 %327
  %v329 = vsel %vm39, %v328, 0
  %331 = vmatprep.subr.mxu0 0.0
  %332 = vmatpush1.msra.mxu0 0.0
  %333 = vmatprep.subr.mxu0 0.0
  %334 = vmatpush1.msra.mxu0 0.0
  %335 = vmatprep.subr.mxu0 0.0
  %336 = vmatpush1.msra.mxu0 0.0
  %337 = vmatprep.subr.mxu0 0.0
  %338 = vmatpush1.msra.mxu0 0.0
  %339 = vmatprep.subr.mxu0 0.0
  %340 = vmatpush1.msra.mxu0 0.0
  %341 = vmatprep.subr.mxu0 0.0
  %342 = vmatpush1.msra.mxu0 0.0
  %343 = vmatprep.subr.mxu0 0.0
  %344 = vmatpush1.msra.mxu0 0.0
  %345 = vmatprep.subr.mxu0 0.0
  %346 = vmatpush1.msra.mxu0 0.0
  %347 = vmatprep.subr.mxu0 0.0
  %348 = vmatpush1.msra.mxu0 0.0
  %349 = vmatprep.subr.mxu0 0.0
  %350 = vmatpush1.msra.mxu0 0.0
  %351 = vmatprep.subr.mxu0 0.0
  %352 = vmatpush1.msra.mxu0 0.0
  %353 = vmatprep.subr.mxu0 0.0
  %354 = vmatpush1.msra.mxu0 0.0
  %355 = vmatprep.subr.mxu0 0.0
  %356 = vmatpush1.msra.mxu0 %v30
  %357 = vmatprep.subr.mxu0 0.0
  %358 = vmatpush1.msra.mxu0 %v29
  %359 = vmatprep.subr.mxu0 0.0
  %360 = vmatpush1.msra.mxu0 %v28
  %361 = vmatprep.subr.mxu0 0.0
  %362 = vmatpush1.msra.mxu0 %v27
  %363 = vmatprep.subr.mxu0 0.0
  %364 = vmatpush2.msra.mxu0 0.0
  %365 = vmatprep.subr.mxu0 0.0
  %366 = vmatpush2.msra.mxu0 0.0
  %367 = vmatprep.subr.mxu0 0.0
  %368 = vmatpush2.msra.mxu0 0.0
  %369 = vmatprep.subr.mxu0 0.0
  %370 = vmatpush2.msra.mxu0 0.0
  %371 = vmatprep.subr.mxu0 0.0
  %372 = vmatpush2.msra.mxu0 0.0
  %373 = vmatprep.subr.mxu0 0.0
  %374 = vmatpush2.msra.mxu0 0.0
  %375 = vmatprep.subr.mxu0 0.0
  %376 = vmatpush2.msra.mxu0 0.0
  %377 = vmatprep.subr.mxu0 0.0
  %378 = vmatpush2.msra.mxu0 0.0
  %379 = vmatprep.subr.mxu0 0.0
  %380 = vmatpush2.msra.mxu0 0.0
  %381 = vmatprep.subr.mxu0 0.0
  %382 = vmatpush2.msra.mxu0 0.0
  %383 = vmatprep.subr.mxu0 0.0
  %384 = vmatpush2.msra.mxu0 0.0
  %385 = vmatprep.subr.mxu0 0.0
  %386 = vmatpush2.msra.mxu0 0.0
  %387 = vmatprep.subr.mxu0 0.0
  %388 = vmatpush2.msra.mxu0 0.0
  %389 = vmatprep.subr.mxu0 0.0
  %390 = vmatpush2.msra.mxu0 0.0
  %391 = vmatprep.subr.mxu0 0.0
  %392 = vmatpush2.msra.mxu0 0.0
  %393 = vmatprep.subr.mxu0 0.0
  %394 = vmatpush2.msra.mxu0 0.0
  %395 = vmatprep.mubr.f32.mxu0 0.0
  %396 = vmatmul.mubr.f32.gmra.mxu0 %v329
  %v397 = vpop.f32.mrf.mxu0
  %v398 = vadd.f32 0.0, %v397
  %v399 = vpop.f32.mrf.mxu0
  %400 = vdwg.mxu0
  %v402 = vrot.slane %v398, 6
  %v404 = vadd.f32 %v110, %v402
  %v405 = vxor.u32 %v404, 2147483648
  %v406 = vmul.f32 %v405, 1.442695
  %v407 = vpow.pop %v406
  %v408 = vadd.f32 %v407, 1.0
  %v409 = vrcp.pop %v408
  %v410 = vmul.f32 1.0, %v409
  %v411 = vtanh.pop %v404
  %v413 = vrot.slane %v313, 7
  %v415 = vmul.f32 %v410, %v413
  %417 = vrot.lane.b32.xlu0 %v411, 64
  %v418 = vpop.permute.xlu0 %417
  %v420 = vmul.f32 %v410, %v418
  %422 = vrot.lane.b32.xlu0 %v420, 32
  %v423 = vpop.permute.xlu0 %422
  %v425 = vadd.f32 %v415, %v423
  %v426 = vtanh.pop %v425
  %428 = vrot.lane.b32.xlu0 %v426, 64
  %v429 = vpop.permute.xlu0 %428
  %v431 = vmul.f32 %v410, %v429
  %433 = vrot.lane.b32.xlu0 %v431, 32
  %v434 = vpop.permute.xlu0 %433
  %vm436 = vcmask 256002
  %437 = vst.msk [vmem:[#allocation2] sm:$0x4] %vm436, %v434
  %v438 = vrot.slane %v431, 2
  %439 = vrot.lane.b32.xlu0 %v438, 32
  %v440 = vpop.permute.xlu0 %439
  %v441 = vsel %vm39, %v440, 0
  %443 = vmatprep.subr.mxu0 0.0
  %444 = vmatpush1.msra.mxu0 0.0
  %445 = vmatprep.subr.mxu0 0.0
  %446 = vmatpush1.msra.mxu0 0.0
  %447 = vmatprep.subr.mxu0 0.0
  %448 = vmatpush1.msra.mxu0 0.0
  %449 = vmatprep.subr.mxu0 0.0
  %450 = vmatpush1.msra.mxu0 0.0
  %451 = vmatprep.subr.mxu0 0.0
  %452 = vmatpush1.msra.mxu0 0.0
  %453 = vmatprep.subr.mxu0 0.0
  %454 = vmatpush1.msra.mxu0 0.0
  %455 = vmatprep.subr.mxu0 0.0
  %456 = vmatpush1.msra.mxu0 0.0
  %457 = vmatprep.subr.mxu0 0.0
  %458 = vmatpush1.msra.mxu0 0.0
  %459 = vmatprep.subr.mxu0 0.0
  %460 = vmatpush1.msra.mxu0 0.0
  %461 = vmatprep.subr.mxu0 0.0
  %462 = vmatpush1.msra.mxu0 0.0
  %463 = vmatprep.subr.mxu0 0.0
  %464 = vmatpush1.msra.mxu0 0.0
  %465 = vmatprep.subr.mxu0 0.0
  %466 = vmatpush1.msra.mxu0 0.0
  %467 = vmatprep.subr.mxu0 0.0
  %468 = vmatpush1.msra.mxu0 %v30
  %469 = vmatprep.subr.mxu0 0.0
  %470 = vmatpush1.msra.mxu0 %v29
  %471 = vmatprep.subr.mxu0 0.0
  %472 = vmatpush1.msra.mxu0 %v28
  %473 = vmatprep.subr.mxu0 0.0
  %474 = vmatpush1.msra.mxu0 %v27
  %475 = vmatprep.subr.mxu0 0.0
  %476 = vmatpush2.msra.mxu0 0.0
  %477 = vmatprep.subr.mxu0 0.0
  %478 = vmatpush2.msra.mxu0 0.0
  %479 = vmatprep.subr.mxu0 0.0
  %480 = vmatpush2.msra.mxu0 0.0
  %481 = vmatprep.subr.mxu0 0.0
  %482 = vmatpush2.msra.mxu0 0.0
  %483 = vmatprep.subr.mxu0 0.0
  %484 = vmatpush2.msra.mxu0 0.0
  %485 = vmatprep.subr.mxu0 0.0
  %486 = vmatpush2.msra.mxu0 0.0
  %487 = vmatprep.subr.mxu0 0.0
  %488 = vmatpush2.msra.mxu0 0.0
  %489 = vmatprep.subr.mxu0 0.0
  %490 = vmatpush2.msra.mxu0 0.0
  %491 = vmatprep.subr.mxu0 0.0
  %492 = vmatpush2.msra.mxu0 0.0
  %493 = vmatprep.subr.mxu0 0.0
  %494 = vmatpush2.msra.mxu0 0.0
  %495 = vmatprep.subr.mxu0 0.0
  %496 = vmatpush2.msra.mxu0 0.0
  %497 = vmatprep.subr.mxu0 0.0
  %498 = vmatpush2.msra.mxu0 0.0
  %499 = vmatprep.subr.mxu0 0.0
  %500 = vmatpush2.msra.mxu0 0.0
  %501 = vmatprep.subr.mxu0 0.0
  %502 = vmatpush2.msra.mxu0 0.0
  %503 = vmatprep.subr.mxu0 0.0
  %504 = vmatpush2.msra.mxu0 0.0
  %505 = vmatprep.subr.mxu0 0.0
  %506 = vmatpush2.msra.mxu0 0.0
  %507 = vmatprep.mubr.f32.mxu0 0.0
  %508 = vmatmul.mubr.f32.gmra.mxu0 %v441
  %v509 = vpop.f32.mrf.mxu0
  %v510 = vadd.f32 0.0, %v509
  %v511 = vpop.f32.mrf.mxu0
  %512 = vdwg.mxu0
  %v514 = vrot.slane %v510, 5
  %v516 = vadd.f32 %v110, %v514
  %v517 = vxor.u32 %v516, 2147483648
  %v518 = vmul.f32 %v517, 1.442695
  %v519 = vpow.pop %v518
  %v520 = vadd.f32 %v519, 1.0
  %v521 = vrcp.pop %v520
  %v522 = vmul.f32 1.0, %v521
  %v523 = vtanh.pop %v516
  %v525 = vrot.slane %v425, 7
  %v527 = vmul.f32 %v522, %v525
  %529 = vrot.lane.b32.xlu0 %v523, 64
  %v530 = vpop.permute.xlu0 %529
  %v532 = vmul.f32 %v522, %v530
  %534 = vrot.lane.b32.xlu0 %v532, 32
  %v535 = vpop.permute.xlu0 %534
  %v537 = vadd.f32 %v527, %v535
  %v538 = vtanh.pop %v537
  %540 = vrot.lane.b32.xlu0 %v538, 64
  %v541 = vpop.permute.xlu0 %540
  %v543 = vmul.f32 %v522, %v541
  %545 = vrot.lane.b32.xlu0 %v543, 32
  %v546 = vpop.permute.xlu0 %545
  %vm548 = vcmask 257027
  %549 = vst.msk [vmem:[#allocation2] sm:$0x8] %vm548, %v546
  %v550 = vrot.slane %v543, 3
  %551 = vrot.lane.b32.xlu0 %v550, 32
  %v552 = vpop.permute.xlu0 %551
  %v553 = vsel %vm39, %v552, 0
  %555 = vmatprep.subr.mxu0 0.0
  %556 = vmatpush1.msra.mxu0 0.0
  %557 = vmatprep.subr.mxu0 0.0
  %558 = vmatpush1.msra.mxu0 0.0
  %559 = vmatprep.subr.mxu0 0.0
  %560 = vmatpush1.msra.mxu0 0.0
  %561 = vmatprep.subr.mxu0 0.0
  %562 = vmatpush1.msra.mxu0 0.0
  %563 = vmatprep.subr.mxu0 0.0
  %564 = vmatpush1.msra.mxu0 0.0
  %565 = vmatprep.subr.mxu0 0.0
  %566 = vmatpush1.msra.mxu0 0.0
  %567 = vmatprep.subr.mxu0 0.0
  %568 = vmatpush1.msra.mxu0 0.0
  %569 = vmatprep.subr.mxu0 0.0
  %570 = vmatpush1.msra.mxu0 0.0
  %571 = vmatprep.subr.mxu0 0.0
  %572 = vmatpush1.msra.mxu0 0.0
  %573 = vmatprep.subr.mxu0 0.0
  %574 = vmatpush1.msra.mxu0 0.0
  %575 = vmatprep.subr.mxu0 0.0
  %576 = vmatpush1.msra.mxu0 0.0
  %577 = vmatprep.subr.mxu0 0.0
  %578 = vmatpush1.msra.mxu0 0.0
  %579 = vmatprep.subr.mxu0 0.0
  %580 = vmatpush1.msra.mxu0 %v30
  %581 = vmatprep.subr.mxu0 0.0
  %582 = vmatpush1.msra.mxu0 %v29
  %583 = vmatprep.subr.mxu0 0.0
  %584 = vmatpush1.msra.mxu0 %v28
  %585 = vmatprep.subr.mxu0 0.0
  %586 = vmatpush1.msra.mxu0 %v27
  %587 = vmatprep.subr.mxu0 0.0
  %588 = vmatpush2.msra.mxu0 0.0
  %589 = vmatprep.subr.mxu0 0.0
  %590 = vmatpush2.msra.mxu0 0.0
  %591 = vmatprep.subr.mxu0 0.0
  %592 = vmatpush2.msra.mxu0 0.0
  %593 = vmatprep.subr.mxu0 0.0
  %594 = vmatpush2.msra.mxu0 0.0
  %595 = vmatprep.subr.mxu0 0.0
  %596 = vmatpush2.msra.mxu0 0.0
  %597 = vmatprep.subr.mxu0 0.0
  %598 = vmatpush2.msra.mxu0 0.0
  %599 = vmatprep.subr.mxu0 0.0
  %600 = vmatpush2.msra.mxu0 0.0
  %601 = vmatprep.subr.mxu0 0.0
  %602 = vmatpush2.msra.mxu0 0.0
  %603 = vmatprep.subr.mxu0 0.0
  %604 = vmatpush2.msra.mxu0 0.0
  %605 = vmatprep.subr.mxu0 0.0
  %606 = vmatpush2.msra.mxu0 0.0
  %607 = vmatprep.subr.mxu0 0.0
  %608 = vmatpush2.msra.mxu0 0.0
  %609 = vmatprep.subr.mxu0 0.0
  %610 = vmatpush2.msra.mxu0 0.0
  %611 = vmatprep.subr.mxu0 0.0
  %612 = vmatpush2.msra.mxu0 0.0
  %613 = vmatprep.subr.mxu0 0.0
  %614 = vmatpush2.msra.mxu0 0.0
  %615 = vmatprep.subr.mxu0 0.0
  %616 = vmatpush2.msra.mxu0 0.0
  %617 = vmatprep.subr.mxu0 0.0
  %618 = vmatpush2.msra.mxu0 0.0
  %619 = vmatprep.mubr.f32.mxu0 0.0
  %620 = vmatmul.mubr.f32.gmra.mxu0 %v553
  %v621 = vpop.f32.mrf.mxu0
  %v622 = vadd.f32 0.0, %v621
  %v623 = vpop.f32.mrf.mxu0
  %624 = vdwg.mxu0
  %v626 = vrot.slane %v622, 4
  %v628 = vadd.f32 %v110, %v626
  %v629 = vxor.u32 %v628, 2147483648
  %v630 = vmul.f32 %v629, 1.442695
  %v631 = vpow.pop %v630
  %v632 = vadd.f32 %v631, 1.0
  %v633 = vrcp.pop %v632
  %v634 = vmul.f32 1.0, %v633
  %v635 = vtanh.pop %v628
  %v637 = vrot.slane %v537, 7
  %v639 = vmul.f32 %v634, %v637
  %641 = vrot.lane.b32.xlu0 %v635, 64
  %v642 = vpop.permute.xlu0 %641
  %v644 = vmul.f32 %v634, %v642
  %646 = vrot.lane.b32.xlu0 %v644, 32
  %v647 = vpop.permute.xlu0 %646
  %v649 = vadd.f32 %v639, %v647
  %v650 = vtanh.pop %v649
  %652 = vrot.lane.b32.xlu0 %v650, 64
  %v653 = vpop.permute.xlu0 %652
  %v655 = vmul.f32 %v634, %v653
  %657 = vrot.lane.b32.xlu0 %v655, 32
  %v658 = vpop.permute.xlu0 %657
  %vm660 = vcmask 258052
  %661 = vst.msk [vmem:[#allocation2] sm:$0x10] %vm660, %v658
  %v662 = vrot.slane %v655, 4
  %663 = vrot.lane.b32.xlu0 %v662, 32
  %v664 = vpop.permute.xlu0 %663
  %v665 = vsel %vm39, %v664, 0
  %667 = vmatprep.subr.mxu0 0.0
  %668 = vmatpush1.msra.mxu0 0.0
  %669 = vmatprep.subr.mxu0 0.0
  %670 = vmatpush1.msra.mxu0 0.0
  %671 = vmatprep.subr.mxu0 0.0
  %672 = vmatpush1.msra.mxu0 0.0
  %673 = vmatprep.subr.mxu0 0.0
  %674 = vmatpush1.msra.mxu0 0.0
  %675 = vmatprep.subr.mxu0 0.0
  %676 = vmatpush1.msra.mxu0 0.0
  %677 = vmatprep.subr.mxu0 0.0
  %678 = vmatpush1.msra.mxu0 0.0
  %679 = vmatprep.subr.mxu0 0.0
  %680 = vmatpush1.msra.mxu0 0.0
  %681 = vmatprep.subr.mxu0 0.0
  %682 = vmatpush1.msra.mxu0 0.0
  %683 = vmatprep.subr.mxu0 0.0
  %684 = vmatpush1.msra.mxu0 0.0
  %685 = vmatprep.subr.mxu0 0.0
  %686 = vmatpush1.msra.mxu0 0.0
  %687 = vmatprep.subr.mxu0 0.0
  %688 = vmatpush1.msra.mxu0 0.0
  %689 = vmatprep.subr.mxu0 0.0
  %690 = vmatpush1.msra.mxu0 0.0
  %691 = vmatprep.subr.mxu0 0.0
  %692 = vmatpush1.msra.mxu0 %v30
  %693 = vmatprep.subr.mxu0 0.0
  %694 = vmatpush1.msra.mxu0 %v29
  %695 = vmatprep.subr.mxu0 0.0
  %696 = vmatpush1.msra.mxu0 %v28
  %697 = vmatprep.subr.mxu0 0.0
  %698 = vmatpush1.msra.mxu0 %v27
  %699 = vmatprep.subr.mxu0 0.0
  %700 = vmatpush2.msra.mxu0 0.0
  %701 = vmatprep.subr.mxu0 0.0
  %702 = vmatpush2.msra.mxu0 0.0
  %703 = vmatprep.subr.mxu0 0.0
  %704 = vmatpush2.msra.mxu0 0.0
  %705 = vmatprep.subr.mxu0 0.0
  %706 = vmatpush2.msra.mxu0 0.0
  %707 = vmatprep.subr.mxu0 0.0
  %708 = vmatpush2.msra.mxu0 0.0
  %709 = vmatprep.subr.mxu0 0.0
  %710 = vmatpush2.msra.mxu0 0.0
  %711 = vmatprep.subr.mxu0 0.0
  %712 = vmatpush2.msra.mxu0 0.0
  %713 = vmatprep.subr.mxu0 0.0
  %714 = vmatpush2.msra.mxu0 0.0
  %715 = vmatprep.subr.mxu0 0.0
  %716 = vmatpush2.msra.mxu0 0.0
  %717 = vmatprep.subr.mxu0 0.0
  %718 = vmatpush2.msra.mxu0 0.0
  %719 = vmatprep.subr.mxu0 0.0
  %720 = vmatpush2.msra.mxu0 0.0
  %721 = vmatprep.subr.mxu0 0.0
  %722 = vmatpush2.msra.mxu0 0.0
  %723 = vmatprep.subr.mxu0 0.0
  %724 = vmatpush2.msra.mxu0 0.0
  %725 = vmatprep.subr.mxu0 0.0
  %726 = vmatpush2.msra.mxu0 0.0
  %727 = vmatprep.subr.mxu0 0.0
  %728 = vmatpush2.msra.mxu0 0.0
  %729 = vmatprep.subr.mxu0 0.0
  %730 = vmatpush2.msra.mxu0 0.0
  %731 = vmatprep.mubr.f32.mxu0 0.0
  %732 = vmatmul.mubr.f32.gmra.mxu0 %v665
  %v733 = vpop.f32.mrf.mxu0
  %v734 = vadd.f32 0.0, %v733
  %v735 = vpop.f32.mrf.mxu0
  %736 = vdwg.mxu0
  %v738 = vrot.slane %v734, 3
  %v740 = vadd.f32 %v110, %v738
  %v741 = vxor.u32 %v740, 2147483648
  %v742 = vmul.f32 %v741, 1.442695
  %v743 = vpow.pop %v742
  %v744 = vadd.f32 %v743, 1.0
  %v745 = vrcp.pop %v744
  %v746 = vmul.f32 1.0, %v745
  %v747 = vtanh.pop %v740
  %v749 = vrot.slane %v649, 7
  %v751 = vmul.f32 %v746, %v749
  %753 = vrot.lane.b32.xlu0 %v747, 64
  %v754 = vpop.permute.xlu0 %753
  %v756 = vmul.f32 %v746, %v754
  %758 = vrot.lane.b32.xlu0 %v756, 32
  %v759 = vpop.permute.xlu0 %758
  %v761 = vadd.f32 %v751, %v759
  %v762 = vtanh.pop %v761
  %764 = vrot.lane.b32.xlu0 %v762, 64
  %v765 = vpop.permute.xlu0 %764
  %v767 = vmul.f32 %v746, %v765
  %769 = vrot.lane.b32.xlu0 %v767, 32
  %v770 = vpop.permute.xlu0 %769
  %vm772 = vcmask 259077
  %773 = vst.msk [vmem:[#allocation2] sm:$0x20] %vm772, %v770
  %v774 = vrot.slane %v767, 5
  %775 = vrot.lane.b32.xlu0 %v774, 32
  %v776 = vpop.permute.xlu0 %775
  %v777 = vsel %vm39, %v776, 0
  %779 = vmatprep.subr.mxu0 0.0
  %780 = vmatpush1.msra.mxu0 0.0
  %781 = vmatprep.subr.mxu0 0.0
  %782 = vmatpush1.msra.mxu0 0.0
  %783 = vmatprep.subr.mxu0 0.0
  %784 = vmatpush1.msra.mxu0 0.0
  %785 = vmatprep.subr.mxu0 0.0
  %786 = vmatpush1.msra.mxu0 0.0
  %787 = vmatprep.subr.mxu0 0.0
  %788 = vmatpush1.msra.mxu0 0.0
  %789 = vmatprep.subr.mxu0 0.0
  %790 = vmatpush1.msra.mxu0 0.0
  %791 = vmatprep.subr.mxu0 0.0
  %792 = vmatpush1.msra.mxu0 0.0
  %793 = vmatprep.subr.mxu0 0.0
  %794 = vmatpush1.msra.mxu0 0.0
  %795 = vmatprep.subr.mxu0 0.0
  %796 = vmatpush1.msra.mxu0 0.0
  %797 = vmatprep.subr.mxu0 0.0
  %798 = vmatpush1.msra.mxu0 0.0
  %799 = vmatprep.subr.mxu0 0.0
  %800 = vmatpush1.msra.mxu0 0.0
  %801 = vmatprep.subr.mxu0 0.0
  %802 = vmatpush1.msra.mxu0 0.0
  %803 = vmatprep.subr.mxu0 0.0
  %804 = vmatpush1.msra.mxu0 %v30
  %805 = vmatprep.subr.mxu0 0.0
  %806 = vmatpush1.msra.mxu0 %v29
  %807 = vmatprep.subr.mxu0 0.0
  %808 = vmatpush1.msra.mxu0 %v28
  %809 = vmatprep.subr.mxu0 0.0
  %810 = vmatpush1.msra.mxu0 %v27
  %811 = vmatprep.subr.mxu0 0.0
  %812 = vmatpush2.msra.mxu0 0.0
  %813 = vmatprep.subr.mxu0 0.0
  %814 = vmatpush2.msra.mxu0 0.0
  %815 = vmatprep.subr.mxu0 0.0
  %816 = vmatpush2.msra.mxu0 0.0
  %817 = vmatprep.subr.mxu0 0.0
  %818 = vmatpush2.msra.mxu0 0.0
  %819 = vmatprep.subr.mxu0 0.0
  %820 = vmatpush2.msra.mxu0 0.0
  %821 = vmatprep.subr.mxu0 0.0
  %822 = vmatpush2.msra.mxu0 0.0
  %823 = vmatprep.subr.mxu0 0.0
  %824 = vmatpush2.msra.mxu0 0.0
  %825 = vmatprep.subr.mxu0 0.0
  %826 = vmatpush2.msra.mxu0 0.0
  %827 = vmatprep.subr.mxu0 0.0
  %828 = vmatpush2.msra.mxu0 0.0
  %829 = vmatprep.subr.mxu0 0.0
  %830 = vmatpush2.msra.mxu0 0.0
  %831 = vmatprep.subr.mxu0 0.0
  %832 = vmatpush2.msra.mxu0 0.0
  %833 = vmatprep.subr.mxu0 0.0
  %834 = vmatpush2.msra.mxu0 0.0
  %835 = vmatprep.subr.mxu0 0.0
  %836 = vmatpush2.msra.mxu0 0.0
  %837 = vmatprep.subr.mxu0 0.0
  %838 = vmatpush2.msra.mxu0 0.0
  %839 = vmatprep.subr.mxu0 0.0
  %840 = vmatpush2.msra.mxu0 0.0
  %841 = vmatprep.subr.mxu0 0.0
  %842 = vmatpush2.msra.mxu0 0.0
  %843 = vmatprep.mubr.f32.mxu0 0.0
  %844 = vmatmul.mubr.f32.gmra.mxu0 %v777
  %v845 = vpop.f32.mrf.mxu0
  %v846 = vadd.f32 0.0, %v845
  %v847 = vpop.f32.mrf.mxu0
  %848 = vdwg.mxu0
  %v850 = vrot.slane %v846, 2
  %v852 = vadd.f32 %v110, %v850
  %v853 = vxor.u32 %v852, 2147483648
  %v854 = vmul.f32 %v853, 1.442695
  %v855 = vpow.pop %v854
  %v856 = vadd.f32 %v855, 1.0
  %v857 = vrcp.pop %v856
  %v858 = vmul.f32 1.0, %v857
  %v859 = vtanh.pop %v852
  %v861 = vrot.slane %v761, 7
  %v863 = vmul.f32 %v858, %v861
  %865 = vrot.lane.b32.xlu0 %v859, 64
  %v866 = vpop.permute.xlu0 %865
  %v868 = vmul.f32 %v858, %v866
  %870 = vrot.lane.b32.xlu0 %v868, 32
  %v871 = vpop.permute.xlu0 %870
  %v873 = vadd.f32 %v863, %v871
  %v874 = vtanh.pop %v873
  %876 = vrot.lane.b32.xlu0 %v874, 64
  %v877 = vpop.permute.xlu0 %876
  %v879 = vmul.f32 %v858, %v877
  %881 = vrot.lane.b32.xlu0 %v879, 32
  %v882 = vpop.permute.xlu0 %881
  %vm884 = vcmask 260102
  %885 = vst.msk [vmem:[#allocation2] sm:$0x40] %vm884, %v882
  %v886 = vrot.slane %v879, 6
  %887 = vrot.lane.b32.xlu0 %v886, 32
  %v888 = vpop.permute.xlu0 %887
  %v889 = vsel %vm39, %v888, 0
  %891 = vmatprep.subr.mxu0 0.0
  %892 = vmatpush1.msra.mxu0 0.0
  %893 = vmatprep.subr.mxu0 0.0
  %894 = vmatpush1.msra.mxu0 0.0
  %895 = vmatprep.subr.mxu0 0.0
  %896 = vmatpush1.msra.mxu0 0.0
  %897 = vmatprep.subr.mxu0 0.0
  %898 = vmatpush1.msra.mxu0 0.0
  %899 = vmatprep.subr.mxu0 0.0
  %900 = vmatpush1.msra.mxu0 0.0
  %901 = vmatprep.subr.mxu0 0.0
  %902 = vmatpush1.msra.mxu0 0.0
  %903 = vmatprep.subr.mxu0 0.0
  %904 = vmatpush1.msra.mxu0 0.0
  %905 = vmatprep.subr.mxu0 0.0
  %906 = vmatpush1.msra.mxu0 0.0
  %907 = vmatprep.subr.mxu0 0.0
  %908 = vmatpush1.msra.mxu0 0.0
  %909 = vmatprep.subr.mxu0 0.0
  %910 = vmatpush1.msra.mxu0 0.0
  %911 = vmatprep.subr.mxu0 0.0
  %912 = vmatpush1.msra.mxu0 0.0
  %913 = vmatprep.subr.mxu0 0.0
  %914 = vmatpush1.msra.mxu0 0.0
  %915 = vmatprep.subr.mxu0 0.0
  %916 = vmatpush1.msra.mxu0 %v30
  %917 = vmatprep.subr.mxu0 0.0
  %918 = vmatpush1.msra.mxu0 %v29
  %919 = vmatprep.subr.mxu0 0.0
  %920 = vmatpush1.msra.mxu0 %v28
  %921 = vmatprep.subr.mxu0 0.0
  %922 = vmatpush1.msra.mxu0 %v27
  %923 = vmatprep.subr.mxu0 0.0
  %924 = vmatpush2.msra.mxu0 0.0
  %925 = vmatprep.subr.mxu0 0.0
  %926 = vmatpush2.msra.mxu0 0.0
  %927 = vmatprep.subr.mxu0 0.0
  %928 = vmatpush2.msra.mxu0 0.0
  %929 = vmatprep.subr.mxu0 0.0
  %930 = vmatpush2.msra.mxu0 0.0
  %931 = vmatprep.subr.mxu0 0.0
  %932 = vmatpush2.msra.mxu0 0.0
  %933 = vmatprep.subr.mxu0 0.0
  %934 = vmatpush2.msra.mxu0 0.0
  %935 = vmatprep.subr.mxu0 0.0
  %936 = vmatpush2.msra.mxu0 0.0
  %937 = vmatprep.subr.mxu0 0.0
  %938 = vmatpush2.msra.mxu0 0.0
  %939 = vmatprep.subr.mxu0 0.0
  %940 = vmatpush2.msra.mxu0 0.0
  %941 = vmatprep.subr.mxu0 0.0
  %942 = vmatpush2.msra.mxu0 0.0
  %943 = vmatprep.subr.mxu0 0.0
  %944 = vmatpush2.msra.mxu0 0.0
  %945 = vmatprep.subr.mxu0 0.0
  %946 = vmatpush2.msra.mxu0 0.0
  %947 = vmatprep.subr.mxu0 0.0
  %948 = vmatpush2.msra.mxu0 0.0
  %949 = vmatprep.subr.mxu0 0.0
  %950 = vmatpush2.msra.mxu0 0.0
  %951 = vmatprep.subr.mxu0 0.0
  %952 = vmatpush2.msra.mxu0 0.0
  %953 = vmatprep.subr.mxu0 0.0
  %954 = vmatpush2.msra.mxu0 0.0
  %955 = vmatprep.mubr.f32.mxu0 0.0
  %956 = vmatmul.mubr.f32.gmra.mxu0 %v889
  %v957 = vpop.f32.mrf.mxu0
  %v958 = vadd.f32 0.0, %v957
  %v959 = vpop.f32.mrf.mxu0
  %960 = vdwg.mxu0
  %v962 = vrot.slane %v958, 1
  %v964 = vadd.f32 %v110, %v962
  %v965 = vxor.u32 %v964, 2147483648
  %v966 = vmul.f32 %v965, 1.442695
  %v967 = vpow.pop %v966
  %v968 = vadd.f32 %v967, 1.0
  %v969 = vrcp.pop %v968
  %v970 = vmul.f32 1.0, %v969
  %v971 = vtanh.pop %v964
  %v973 = vrot.slane %v873, 7
  %v975 = vmul.f32 %v970, %v973
  %977 = vrot.lane.b32.xlu0 %v971, 64
  %v978 = vpop.permute.xlu0 %977
  %v980 = vmul.f32 %v970, %v978
  %982 = vrot.lane.b32.xlu0 %v980, 32
  %v983 = vpop.permute.xlu0 %982
  %v985 = vadd.f32 %v975, %v983
  %v986 = vtanh.pop %v985
  %988 = vrot.lane.b32.xlu0 %v986, 64
  %v989 = vpop.permute.xlu0 %988
  %v991 = vmul.f32 %v970, %v989
  %993 = vrot.lane.b32.xlu0 %v991, 32
  %v994 = vpop.permute.xlu0 %993
  %vm996 = vcmask 261127
  %997 = vst.msk [vmem:[#allocation2] sm:$0x80] %vm996, %v994
  %v998 = vld [vmem:[%s0 + $0x8] sm:$0xff]
  %v1000 = vsel %vm39, %v998, 0
  %1002 = vmatprep.subr.mxu0 0.0
  %1003 = vmatpush1.msra.mxu0 0.0
  %1004 = vmatprep.subr.mxu0 0.0
  %1005 = vmatpush1.msra.mxu0 0.0
  %1006 = vmatprep.subr.mxu0 0.0
  %1007 = vmatpush1.msra.mxu0 0.0
  %1008 = vmatprep.subr.mxu0 0.0
  %1009 = vmatpush1.msra.mxu0 0.0
  %1010 = vmatprep.subr.mxu0 0.0
  %1011 = vmatpush1.msra.mxu0 0.0
  %1012 = vmatprep.subr.mxu0 0.0
  %1013 = vmatpush1.msra.mxu0 0.0
  %1014 = vmatprep.subr.mxu0 0.0
  %1015 = vmatpush1.msra.mxu0 0.0
  %1016 = vmatprep.subr.mxu0 0.0
  %1017 = vmatpush1.msra.mxu0 0.0
  %1018 = vmatprep.subr.mxu0 0.0
  %1019 = vmatpush1.msra.mxu0 0.0
  %1020 = vmatprep.subr.mxu0 0.0
  %1021 = vmatpush1.msra.mxu0 0.0
  %1022 = vmatprep.subr.mxu0 0.0
  %1023 = vmatpush1.msra.mxu0 0.0
  %1024 = vmatprep.subr.mxu0 0.0
  %1025 = vmatpush1.msra.mxu0 0.0
  %1026 = vmatprep.subr.mxu0 0.0
  %1027 = vmatpush1.msra.mxu0 %v26
  %1028 = vmatprep.subr.mxu0 0.0
  %1029 = vmatpush1.msra.mxu0 %v25
  %1030 = vmatprep.subr.mxu0 0.0
  %1031 = vmatpush1.msra.mxu0 %v24
  %1032 = vmatprep.subr.mxu0 0.0
  %1033 = vmatpush1.msra.mxu0 %v23
  %1034 = vmatprep.subr.mxu0 0.0
  %1035 = vmatpush2.msra.mxu0 0.0
  %1036 = vmatprep.subr.mxu0 0.0
  %1037 = vmatpush2.msra.mxu0 0.0
  %1038 = vmatprep.subr.mxu0 0.0
  %1039 = vmatpush2.msra.mxu0 0.0
  %1040 = vmatprep.subr.mxu0 0.0
  %1041 = vmatpush2.msra.mxu0 0.0
  %1042 = vmatprep.subr.mxu0 0.0
  %1043 = vmatpush2.msra.mxu0 0.0
  %1044 = vmatprep.subr.mxu0 0.0
  %1045 = vmatpush2.msra.mxu0 0.0
  %1046 = vmatprep.subr.mxu0 0.0
  %1047 = vmatpush2.msra.mxu0 0.0
  %1048 = vmatprep.subr.mxu0 0.0
  %1049 = vmatpush2.msra.mxu0 0.0
  %1050 = vmatprep.subr.mxu0 0.0
  %1051 = vmatpush2.msra.mxu0 0.0
  %1052 = vmatprep.subr.mxu0 0.0
  %1053 = vmatpush2.msra.mxu0 0.0
  %1054 = vmatprep.subr.mxu0 0.0
  %1055 = vmatpush2.msra.mxu0 0.0
  %1056 = vmatprep.subr.mxu0 0.0
  %1057 = vmatpush2.msra.mxu0 0.0
  %1058 = vmatprep.subr.mxu0 0.0
  %1059 = vmatpush2.msra.mxu0 0.0
  %1060 = vmatprep.subr.mxu0 0.0
  %1061 = vmatpush2.msra.mxu0 0.0
  %1062 = vmatprep.subr.mxu0 0.0
  %1063 = vmatpush2.msra.mxu0 0.0
  %1064 = vmatprep.subr.mxu0 0.0
  %1065 = vmatpush2.msra.mxu0 0.0
  %1066 = vmatprep.mubr.f32.mxu0 0.0
  %1067 = vmatmul.mubr.f32.gmra.mxu0 %v1000
  %v1068 = vpop.f32.mrf.mxu0
  %v1069 = vadd.f32 %v37, %v1068
  %v1070 = vpop.f32.mrf.mxu0
  %1071 = vdwg.mxu0
  %v1072 = vadd.f32 %v1069, %v183
  %v1073 = vxor.u32 %v1072, 2147483648
  %v1074 = vmul.f32 %v1073, 1.442695
  %v1075 = vpow.pop %v1074
  %v1076 = vadd.f32 %v1075, 1.0
  %v1077 = vrcp.pop %v1076
  %v1078 = vmul.f32 1.0, %v1077
  %v1079 = vtanh.pop %v1072
  %v1080 = vmul.f32 %v1078, 0.0
  %1082 = vrot.lane.b32.xlu0 %v1079, 64
  %v1083 = vpop.permute.xlu0 %1082
  %v1085 = vmul.f32 %v1078, %v1083
  %1087 = vrot.lane.b32.xlu0 %v1085, 32
  %v1088 = vpop.permute.xlu0 %1087
  %v1090 = vadd.f32 %v1080, %v1088
  %v1091 = vtanh.pop %v1090
  %1093 = vrot.lane.b32.xlu0 %v1091, 64
  %v1094 = vpop.permute.xlu0 %1093
  %v1096 = vmul.f32 %v1078, %v1094
  %1098 = vrot.lane.b32.xlu0 %v1096, 32
  %v1099 = vpop.permute.xlu0 %1098
  %1101 = vst.msk [vmem:[#allocation2 + $0x8] sm:$0x1] %vm215, %v1099
  %v1102 = vsel %vm39, %v1099, 0
  %1104 = vmatprep.subr.mxu0 0.0
  %1105 = vmatpush1.msra.mxu0 0.0
  %1106 = vmatprep.subr.mxu0 0.0
  %1107 = vmatpush1.msra.mxu0 0.0
  %1108 = vmatprep.subr.mxu0 0.0
  %1109 = vmatpush1.msra.mxu0 0.0
  %1110 = vmatprep.subr.mxu0 0.0
  %1111 = vmatpush1.msra.mxu0 0.0
  %1112 = vmatprep.subr.mxu0 0.0
  %1113 = vmatpush1.msra.mxu0 0.0
  %1114 = vmatprep.subr.mxu0 0.0
  %1115 = vmatpush1.msra.mxu0 0.0
  %1116 = vmatprep.subr.mxu0 0.0
  %1117 = vmatpush1.msra.mxu0 0.0
  %1118 = vmatprep.subr.mxu0 0.0
  %1119 = vmatpush1.msra.mxu0 0.0
  %1120 = vmatprep.subr.mxu0 0.0
  %1121 = vmatpush1.msra.mxu0 0.0
  %1122 = vmatprep.subr.mxu0 0.0
  %1123 = vmatpush1.msra.mxu0 0.0
  %1124 = vmatprep.subr.mxu0 0.0
  %1125 = vmatpush1.msra.mxu0 0.0
  %1126 = vmatprep.subr.mxu0 0.0
  %1127 = vmatpush1.msra.mxu0 0.0
  %1128 = vmatprep.subr.mxu0 0.0
  %1129 = vmatpush1.msra.mxu0 %v30
  %1130 = vmatprep.subr.mxu0 0.0
  %1131 = vmatpush1.msra.mxu0 %v29
  %1132 = vmatprep.subr.mxu0 0.0
  %1133 = vmatpush1.msra.mxu0 %v28
  %1134 = vmatprep.subr.mxu0 0.0
  %1135 = vmatpush1.msra.mxu0 %v27
  %1136 = vmatprep.subr.mxu0 0.0
  %1137 = vmatpush2.msra.mxu0 0.0
  %1138 = vmatprep.subr.mxu0 0.0
  %1139 = vmatpush2.msra.mxu0 0.0
  %1140 = vmatprep.subr.mxu0 0.0
  %1141 = vmatpush2.msra.mxu0 0.0
  %1142 = vmatprep.subr.mxu0 0.0
  %1143 = vmatpush2.msra.mxu0 0.0
  %1144 = vmatprep.subr.mxu0 0.0
  %1145 = vmatpush2.msra.mxu0 0.0
  %1146 = vmatprep.subr.mxu0 0.0
  %1147 = vmatpush2.msra.mxu0 0.0
  %1148 = vmatprep.subr.mxu0 0.0
  %1149 = vmatpush2.msra.mxu0 0.0
  %1150 = vmatprep.subr.mxu0 0.0
  %1151 = vmatpush2.msra.mxu0 0.0
  %1152 = vmatprep.subr.mxu0 0.0
  %1153 = vmatpush2.msra.mxu0 0.0
  %1154 = vmatprep.subr.mxu0 0.0
  %1155 = vmatpush2.msra.mxu0 0.0
  %1156 = vmatprep.subr.mxu0 0.0
  %1157 = vmatpush2.msra.mxu0 0.0
  %1158 = vmatprep.subr.mxu0 0.0
  %1159 = vmatpush2.msra.mxu0 0.0
  %1160 = vmatprep.subr.mxu0 0.0
  %1161 = vmatpush2.msra.mxu0 0.0
  %1162 = vmatprep.subr.mxu0 0.0
  %1163 = vmatpush2.msra.mxu0 0.0
  %1164 = vmatprep.subr.mxu0 0.0
  %1165 = vmatpush2.msra.mxu0 0.0
  %1166 = vmatprep.subr.mxu0 0.0
  %1167 = vmatpush2.msra.mxu0 0.0
  %1168 = vmatprep.mubr.f32.mxu0 0.0
  %1169 = vmatmul.mubr.f32.gmra.mxu0 %v1102
  %v1170 = vpop.f32.mrf.mxu0
  %v1171 = vadd.f32 0.0, %v1170
  %v1172 = vpop.f32.mrf.mxu0
  %1173 = vdwg.mxu0
  %v1175 = vrot.slane %v1171, 7
  %v1177 = vadd.f32 %v1069, %v1175
  %v1178 = vxor.u32 %v1177, 2147483648
  %v1179 = vmul.f32 %v1178, 1.442695
  %v1180 = vpow.pop %v1179
  %v1181 = vadd.f32 %v1180, 1.0
  %v1182 = vrcp.pop %v1181
  %v1183 = vmul.f32 1.0, %v1182
  %v1184 = vtanh.pop %v1177
  %v1186 = vrot.slane %v1090, 7
  %v1188 = vmul.f32 %v1183, %v1186
  %1190 = vrot.lane.b32.xlu0 %v1184, 64
  %v1191 = vpop.permute.xlu0 %1190
  %v1193 = vmul.f32 %v1183, %v1191
  %1195 = vrot.lane.b32.xlu0 %v1193, 32
  %v1196 = vpop.permute.xlu0 %1195
  %v1198 = vadd.f32 %v1188, %v1196
  %v1199 = vtanh.pop %v1198
  %1201 = vrot.lane.b32.xlu0 %v1199, 64
  %v1202 = vpop.permute.xlu0 %1201
  %v1204 = vmul.f32 %v1183, %v1202
  %1206 = vrot.lane.b32.xlu0 %v1204, 32
  %v1207 = vpop.permute.xlu0 %1206
  %1209 = vst.msk [vmem:[#allocation2 + $0x8] sm:$0x2] %vm324, %v1207
  %v1210 = vrot.slane %v1204, 1
  %1211 = vrot.lane.b32.xlu0 %v1210, 32
  %v1212 = vpop.permute.xlu0 %1211
  %v1213 = vsel %vm39, %v1212, 0
  %1215 = vmatprep.subr.mxu0 0.0
  %1216 = vmatpush1.msra.mxu0 0.0
  %1217 = vmatprep.subr.mxu0 0.0
  %1218 = vmatpush1.msra.mxu0 0.0
  %1219 = vmatprep.subr.mxu0 0.0
  %1220 = vmatpush1.msra.mxu0 0.0
  %1221 = vmatprep.subr.mxu0 0.0
  %1222 = vmatpush1.msra.mxu0 0.0
  %1223 = vmatprep.subr.mxu0 0.0
  %1224 = vmatpush1.msra.mxu0 0.0
  %1225 = vmatprep.subr.mxu0 0.0
  %1226 = vmatpush1.msra.mxu0 0.0
  %1227 = vmatprep.subr.mxu0 0.0
  %1228 = vmatpush1.msra.mxu0 0.0
  %1229 = vmatprep.subr.mxu0 0.0
  %1230 = vmatpush1.msra.mxu0 0.0
  %1231 = vmatprep.subr.mxu0 0.0
  %1232 = vmatpush1.msra.mxu0 0.0
  %1233 = vmatprep.subr.mxu0 0.0
  %1234 = vmatpush1.msra.mxu0 0.0
  %1235 = vmatprep.subr.mxu0 0.0
  %1236 = vmatpush1.msra.mxu0 0.0
  %1237 = vmatprep.subr.mxu0 0.0
  %1238 = vmatpush1.msra.mxu0 0.0
  %1239 = vmatprep.subr.mxu0 0.0
  %1240 = vmatpush1.msra.mxu0 %v30
  %1241 = vmatprep.subr.mxu0 0.0
  %1242 = vmatpush1.msra.mxu0 %v29
  %1243 = vmatprep.subr.mxu0 0.0
  %1244 = vmatpush1.msra.mxu0 %v28
  %1245 = vmatprep.subr.mxu0 0.0
  %1246 = vmatpush1.msra.mxu0 %v27
  %1247 = vmatprep.subr.mxu0 0.0
  %1248 = vmatpush2.msra.mxu0 0.0
  %1249 = vmatprep.subr.mxu0 0.0
  %1250 = vmatpush2.msra.mxu0 0.0
  %1251 = vmatprep.subr.mxu0 0.0
  %1252 = vmatpush2.msra.mxu0 0.0
  %1253 = vmatprep.subr.mxu0 0.0
  %1254 = vmatpush2.msra.mxu0 0.0
  %1255 = vmatprep.subr.mxu0 0.0
  %1256 = vmatpush2.msra.mxu0 0.0
  %1257 = vmatprep.subr.mxu0 0.0
  %1258 = vmatpush2.msra.mxu0 0.0
  %1259 = vmatprep.subr.mxu0 0.0
  %1260 = vmatpush2.msra.mxu0 0.0
  %1261 = vmatprep.subr.mxu0 0.0
  %1262 = vmatpush2.msra.mxu0 0.0
  %1263 = vmatprep.subr.mxu0 0.0
  %1264 = vmatpush2.msra.mxu0 0.0
  %1265 = vmatprep.subr.mxu0 0.0
  %1266 = vmatpush2.msra.mxu0 0.0
  %1267 = vmatprep.subr.mxu0 0.0
  %1268 = vmatpush2.msra.mxu0 0.0
  %1269 = vmatprep.subr.mxu0 0.0
  %1270 = vmatpush2.msra.mxu0 0.0
  %1271 = vmatprep.subr.mxu0 0.0
  %1272 = vmatpush2.msra.mxu0 0.0
  %1273 = vmatprep.subr.mxu0 0.0
  %1274 = vmatpush2.msra.mxu0 0.0
  %1275 = vmatprep.subr.mxu0 0.0
  %1276 = vmatpush2.msra.mxu0 0.0
  %1277 = vmatprep.subr.mxu0 0.0
  %1278 = vmatpush2.msra.mxu0 0.0
  %1279 = vmatprep.mubr.f32.mxu0 0.0
  %1280 = vmatmul.mubr.f32.gmra.mxu0 %v1213
  %v1281 = vpop.f32.mrf.mxu0
  %v1282 = vadd.f32 0.0, %v1281
  %v1283 = vpop.f32.mrf.mxu0
  %1284 = vdwg.mxu0
  %v1286 = vrot.slane %v1282, 6
  %v1288 = vadd.f32 %v1069, %v1286
  %v1289 = vxor.u32 %v1288, 2147483648
  %v1290 = vmul.f32 %v1289, 1.442695
  %v1291 = vpow.pop %v1290
  %v1292 = vadd.f32 %v1291, 1.0
  %v1293 = vrcp.pop %v1292
  %v1294 = vmul.f32 1.0, %v1293
  %v1295 = vtanh.pop %v1288
  %v1297 = vrot.slane %v1198, 7
  %v1299 = vmul.f32 %v1294, %v1297
  %1301 = vrot.lane.b32.xlu0 %v1295, 64
  %v1302 = vpop.permute.xlu0 %1301
  %v1304 = vmul.f32 %v1294, %v1302
  %1306 = vrot.lane.b32.xlu0 %v1304, 32
  %v1307 = vpop.permute.xlu0 %1306
  %v1309 = vadd.f32 %v1299, %v1307
  %v1310 = vtanh.pop %v1309
  %1312 = vrot.lane.b32.xlu0 %v1310, 64
  %v1313 = vpop.permute.xlu0 %1312
  %v1315 = vmul.f32 %v1294, %v1313
  %1317 = vrot.lane.b32.xlu0 %v1315, 32
  %v1318 = vpop.permute.xlu0 %1317
  %1320 = vst.msk [vmem:[#allocation2 + $0x8] sm:$0x4] %vm436, %v1318
  %v1321 = vrot.slane %v1315, 2
  %1322 = vrot.lane.b32.xlu0 %v1321, 32
  %v1323 = vpop.permute.xlu0 %1322
  %v1324 = vsel %vm39, %v1323, 0
  %1326 = vmatprep.subr.mxu0 0.0
  %1327 = vmatpush1.msra.mxu0 0.0
  %1328 = vmatprep.subr.mxu0 0.0
  %1329 = vmatpush1.msra.mxu0 0.0
  %1330 = vmatprep.subr.mxu0 0.0
  %1331 = vmatpush1.msra.mxu0 0.0
  %1332 = vmatprep.subr.mxu0 0.0
  %1333 = vmatpush1.msra.mxu0 0.0
  %1334 = vmatprep.subr.mxu0 0.0
  %1335 = vmatpush1.msra.mxu0 0.0
  %1336 = vmatprep.subr.mxu0 0.0
  %1337 = vmatpush1.msra.mxu0 0.0
  %1338 = vmatprep.subr.mxu0 0.0
  %1339 = vmatpush1.msra.mxu0 0.0
  %1340 = vmatprep.subr.mxu0 0.0
  %1341 = vmatpush1.msra.mxu0 0.0
  %1342 = vmatprep.subr.mxu0 0.0
  %1343 = vmatpush1.msra.mxu0 0.0
  %1344 = vmatprep.subr.mxu0 0.0
  %1345 = vmatpush1.msra.mxu0 0.0
  %1346 = vmatprep.subr.mxu0 0.0
  %1347 = vmatpush1.msra.mxu0 0.0
  %1348 = vmatprep.subr.mxu0 0.0
  %1349 = vmatpush1.msra.mxu0 0.0
  %1350 = vmatprep.subr.mxu0 0.0
  %1351 = vmatpush1.msra.mxu0 %v30
  %1352 = vmatprep.subr.mxu0 0.0
  %1353 = vmatpush1.msra.mxu0 %v29
  %1354 = vmatprep.subr.mxu0 0.0
  %1355 = vmatpush1.msra.mxu0 %v28
  %1356 = vmatprep.subr.mxu0 0.0
  %1357 = vmatpush1.msra.mxu0 %v27
  %1358 = vmatprep.subr.mxu0 0.0
  %1359 = vmatpush2.msra.mxu0 0.0
  %1360 = vmatprep.subr.mxu0 0.0
  %1361 = vmatpush2.msra.mxu0 0.0
  %1362 = vmatprep.subr.mxu0 0.0
  %1363 = vmatpush2.msra.mxu0 0.0
  %1364 = vmatprep.subr.mxu0 0.0
  %1365 = vmatpush2.msra.mxu0 0.0
  %1366 = vmatprep.subr.mxu0 0.0
  %1367 = vmatpush2.msra.mxu0 0.0
  %1368 = vmatprep.subr.mxu0 0.0
  %1369 = vmatpush2.msra.mxu0 0.0
  %1370 = vmatprep.subr.mxu0 0.0
  %1371 = vmatpush2.msra.mxu0 0.0
  %1372 = vmatprep.subr.mxu0 0.0
  %1373 = vmatpush2.msra.mxu0 0.0
  %1374 = vmatprep.subr.mxu0 0.0
  %1375 = vmatpush2.msra.mxu0 0.0
  %1376 = vmatprep.subr.mxu0 0.0
  %1377 = vmatpush2.msra.mxu0 0.0
  %1378 = vmatprep.subr.mxu0 0.0
  %1379 = vmatpush2.msra.mxu0 0.0
  %1380 = vmatprep.subr.mxu0 0.0
  %1381 = vmatpush2.msra.mxu0 0.0
  %1382 = vmatprep.subr.mxu0 0.0
  %1383 = vmatpush2.msra.mxu0 0.0
  %1384 = vmatprep.subr.mxu0 0.0
  %1385 = vmatpush2.msra.mxu0 0.0
  %1386 = vmatprep.subr.mxu0 0.0
  %1387 = vmatpush2.msra.mxu0 0.0
  %1388 = vmatprep.subr.mxu0 0.0
  %1389 = vmatpush2.msra.mxu0 0.0
  %1390 = vmatprep.mubr.f32.mxu0 0.0
  %1391 = vmatmul.mubr.f32.gmra.mxu0 %v1324
  %v1392 = vpop.f32.mrf.mxu0
  %v1393 = vadd.f32 0.0, %v1392
  %v1394 = vpop.f32.mrf.mxu0
  %1395 = vdwg.mxu0
  %v1397 = vrot.slane %v1393, 5
  %v1399 = vadd.f32 %v1069, %v1397
  %v1400 = vxor.u32 %v1399, 2147483648
  %v1401 = vmul.f32 %v1400, 1.442695
  %v1402 = vpow.pop %v1401
  %v1403 = vadd.f32 %v1402, 1.0
  %v1404 = vrcp.pop %v1403
  %v1405 = vmul.f32 1.0, %v1404
  %v1406 = vtanh.pop %v1399
  %v1408 = vrot.slane %v1309, 7
  %v1410 = vmul.f32 %v1405, %v1408
  %1412 = vrot.lane.b32.xlu0 %v1406, 64
  %v1413 = vpop.permute.xlu0 %1412
  %v1415 = vmul.f32 %v1405, %v1413
  %1417 = vrot.lane.b32.xlu0 %v1415, 32
  %v1418 = vpop.permute.xlu0 %1417
  %v1420 = vadd.f32 %v1410, %v1418
  %v1421 = vtanh.pop %v1420
  %1423 = vrot.lane.b32.xlu0 %v1421, 64
  %v1424 = vpop.permute.xlu0 %1423
  %v1426 = vmul.f32 %v1405, %v1424
  %1428 = vrot.lane.b32.xlu0 %v1426, 32
  %v1429 = vpop.permute.xlu0 %1428
  %1431 = vst.msk [vmem:[#allocation2 + $0x8] sm:$0x8] %vm548, %v1429
  %v1432 = vrot.slane %v1426, 3
  %1433 = vrot.lane.b32.xlu0 %v1432, 32
  %v1434 = vpop.permute.xlu0 %1433
  %v1435 = vsel %vm39, %v1434, 0
  %1437 = vmatprep.subr.mxu0 0.0
  %1438 = vmatpush1.msra.mxu0 0.0
  %1439 = vmatprep.subr.mxu0 0.0
  %1440 = vmatpush1.msra.mxu0 0.0
  %1441 = vmatprep.subr.mxu0 0.0
  %1442 = vmatpush1.msra.mxu0 0.0
  %1443 = vmatprep.subr.mxu0 0.0
  %1444 = vmatpush1.msra.mxu0 0.0
  %1445 = vmatprep.subr.mxu0 0.0
  %1446 = vmatpush1.msra.mxu0 0.0
  %1447 = vmatprep.subr.mxu0 0.0
  %1448 = vmatpush1.msra.mxu0 0.0
  %1449 = vmatprep.subr.mxu0 0.0
  %1450 = vmatpush1.msra.mxu0 0.0
  %1451 = vmatprep.subr.mxu0 0.0
  %1452 = vmatpush1.msra.mxu0 0.0
  %1453 = vmatprep.subr.mxu0 0.0
  %1454 = vmatpush1.msra.mxu0 0.0
  %1455 = vmatprep.subr.mxu0 0.0
  %1456 = vmatpush1.msra.mxu0 0.0
  %1457 = vmatprep.subr.mxu0 0.0
  %1458 = vmatpush1.msra.mxu0 0.0
  %1459 = vmatprep.subr.mxu0 0.0
  %1460 = vmatpush1.msra.mxu0 0.0
  %1461 = vmatprep.subr.mxu0 0.0
  %1462 = vmatpush1.msra.mxu0 %v30
  %1463 = vmatprep.subr.mxu0 0.0
  %1464 = vmatpush1.msra.mxu0 %v29
  %1465 = vmatprep.subr.mxu0 0.0
  %1466 = vmatpush1.msra.mxu0 %v28
  %1467 = vmatprep.subr.mxu0 0.0
  %1468 = vmatpush1.msra.mxu0 %v27
  %1469 = vmatprep.subr.mxu0 0.0
  %1470 = vmatpush2.msra.mxu0 0.0
  %1471 = vmatprep.subr.mxu0 0.0
  %1472 = vmatpush2.msra.mxu0 0.0
  %1473 = vmatprep.subr.mxu0 0.0
  %1474 = vmatpush2.msra.mxu0 0.0
  %1475 = vmatprep.subr.mxu0 0.0
  %1476 = vmatpush2.msra.mxu0 0.0
  %1477 = vmatprep.subr.mxu0 0.0
  %1478 = vmatpush2.msra.mxu0 0.0
  %1479 = vmatprep.subr.mxu0 0.0
  %1480 = vmatpush2.msra.mxu0 0.0
  %1481 = vmatprep.subr.mxu0 0.0
  %1482 = vmatpush2.msra.mxu0 0.0
  %1483 = vmatprep.subr.mxu0 0.0
  %1484 = vmatpush2.msra.mxu0 0.0
  %1485 = vmatprep.subr.mxu0 0.0
  %1486 = vmatpush2.msra.mxu0 0.0
  %1487 = vmatprep.subr.mxu0 0.0
  %1488 = vmatpush2.msra.mxu0 0.0
  %1489 = vmatprep.subr.mxu0 0.0
  %1490 = vmatpush2.msra.mxu0 0.0
  %1491 = vmatprep.subr.mxu0 0.0
  %1492 = vmatpush2.msra.mxu0 0.0
  %1493 = vmatprep.subr.mxu0 0.0
  %1494 = vmatpush2.msra.mxu0 0.0
  %1495 = vmatprep.subr.mxu0 0.0
  %1496 = vmatpush2.msra.mxu0 0.0
  %1497 = vmatprep.subr.mxu0 0.0
  %1498 = vmatpush2.msra.mxu0 0.0
  %1499 = vmatprep.subr.mxu0 0.0
  %1500 = vmatpush2.msra.mxu0 0.0
  %1501 = vmatprep.mubr.f32.mxu0 0.0
  %1502 = vmatmul.mubr.f32.gmra.mxu0 %v1435
  %v1503 = vpop.f32.mrf.mxu0
  %v1504 = vadd.f32 0.0, %v1503
  %v1505 = vpop.f32.mrf.mxu0
  %1506 = vdwg.mxu0
  %v1508 = vrot.slane %v1504, 4
  %v1510 = vadd.f32 %v1069, %v1508
  %v1511 = vxor.u32 %v1510, 2147483648
  %v1512 = vmul.f32 %v1511, 1.442695
  %v1513 = vpow.pop %v1512
  %v1514 = vadd.f32 %v1513, 1.0
  %v1515 = vrcp.pop %v1514
  %v1516 = vmul.f32 1.0, %v1515
  %v1517 = vtanh.pop %v1510
  %v1519 = vrot.slane %v1420, 7
  %v1521 = vmul.f32 %v1516, %v1519
  %1523 = vrot.lane.b32.xlu0 %v1517, 64
  %v1524 = vpop.permute.xlu0 %1523
  %v1526 = vmul.f32 %v1516, %v1524
  %1528 = vrot.lane.b32.xlu0 %v1526, 32
  %v1529 = vpop.permute.xlu0 %1528
  %v1531 = vadd.f32 %v1521, %v1529
  %v1532 = vtanh.pop %v1531
  %1534 = vrot.lane.b32.xlu0 %v1532, 64
  %v1535 = vpop.permute.xlu0 %1534
  %v1537 = vmul.f32 %v1516, %v1535
  %1539 = vrot.lane.b32.xlu0 %v1537, 32
  %v1540 = vpop.permute.xlu0 %1539
  %1542 = vst.msk [vmem:[#allocation2 + $0x8] sm:$0x10] %vm660, %v1540
  %v1543 = vrot.slane %v1537, 4
  %1544 = vrot.lane.b32.xlu0 %v1543, 32
  %v1545 = vpop.permute.xlu0 %1544
  %v1546 = vsel %vm39, %v1545, 0
  %1548 = vmatprep.subr.mxu0 0.0
  %1549 = vmatpush1.msra.mxu0 0.0
  %1550 = vmatprep.subr.mxu0 0.0
  %1551 = vmatpush1.msra.mxu0 0.0
  %1552 = vmatprep.subr.mxu0 0.0
  %1553 = vmatpush1.msra.mxu0 0.0
  %1554 = vmatprep.subr.mxu0 0.0
  %1555 = vmatpush1.msra.mxu0 0.0
  %1556 = vmatprep.subr.mxu0 0.0
  %1557 = vmatpush1.msra.mxu0 0.0
  %1558 = vmatprep.subr.mxu0 0.0
  %1559 = vmatpush1.msra.mxu0 0.0
  %1560 = vmatprep.subr.mxu0 0.0
  %1561 = vmatpush1.msra.mxu0 0.0
  %1562 = vmatprep.subr.mxu0 0.0
  %1563 = vmatpush1.msra.mxu0 0.0
  %1564 = vmatprep.subr.mxu0 0.0
  %1565 = vmatpush1.msra.mxu0 0.0
  %1566 = vmatprep.subr.mxu0 0.0
  %1567 = vmatpush1.msra.mxu0 0.0
  %1568 = vmatprep.subr.mxu0 0.0
  %1569 = vmatpush1.msra.mxu0 0.0
  %1570 = vmatprep.subr.mxu0 0.0
  %1571 = vmatpush1.msra.mxu0 0.0
  %1572 = vmatprep.subr.mxu0 0.0
  %1573 = vmatpush1.msra.mxu0 %v30
  %1574 = vmatprep.subr.mxu0 0.0
  %1575 = vmatpush1.msra.mxu0 %v29
  %1576 = vmatprep.subr.mxu0 0.0
  %1577 = vmatpush1.msra.mxu0 %v28
  %1578 = vmatprep.subr.mxu0 0.0
  %1579 = vmatpush1.msra.mxu0 %v27
  %1580 = vmatprep.subr.mxu0 0.0
  %1581 = vmatpush2.msra.mxu0 0.0
  %1582 = vmatprep.subr.mxu0 0.0
  %1583 = vmatpush2.msra.mxu0 0.0
  %1584 = vmatprep.subr.mxu0 0.0
  %1585 = vmatpush2.msra.mxu0 0.0
  %1586 = vmatprep.subr.mxu0 0.0
  %1587 = vmatpush2.msra.mxu0 0.0
  %1588 = vmatprep.subr.mxu0 0.0
  %1589 = vmatpush2.msra.mxu0 0.0
  %1590 = vmatprep.subr.mxu0 0.0
  %1591 = vmatpush2.msra.mxu0 0.0
  %1592 = vmatprep.subr.mxu0 0.0
  %1593 = vmatpush2.msra.mxu0 0.0
  %1594 = vmatprep.subr.mxu0 0.0
  %1595 = vmatpush2.msra.mxu0 0.0
  %1596 = vmatprep.subr.mxu0 0.0
  %1597 = vmatpush2.msra.mxu0 0.0
  %1598 = vmatprep.subr.mxu0 0.0
  %1599 = vmatpush2.msra.mxu0 0.0
  %1600 = vmatprep.subr.mxu0 0.0
  %1601 = vmatpush2.msra.mxu0 0.0
  %1602 = vmatprep.subr.mxu0 0.0
  %1603 = vmatpush2.msra.mxu0 0.0
  %1604 = vmatprep.subr.mxu0 0.0
  %1605 = vmatpush2.msra.mxu0 0.0
  %1606 = vmatprep.subr.mxu0 0.0
  %1607 = vmatpush2.msra.mxu0 0.0
  %1608 = vmatprep.subr.mxu0 0.0
  %1609 = vmatpush2.msra.mxu0 0.0
  %1610 = vmatprep.subr.mxu0 0.0
  %1611 = vmatpush2.msra.mxu0 0.0
  %1612 = vmatprep.mubr.f32.mxu0 0.0
  %1613 = vmatmul.mubr.f32.gmra.mxu0 %v1546
  %v1614 = vpop.f32.mrf.mxu0
  %v1615 = vadd.f32 0.0, %v1614
  %v1616 = vpop.f32.mrf.mxu0
  %1617 = vdwg.mxu0
  %v1619 = vrot.slane %v1615, 3
  %v1621 = vadd.f32 %v1069, %v1619
  %v1622 = vxor.u32 %v1621, 2147483648
  %v1623 = vmul.f32 %v1622, 1.442695
  %v1624 = vpow.pop %v1623
  %v1625 = vadd.f32 %v1624, 1.0
  %v1626 = vrcp.pop %v1625
  %v1627 = vmul.f32 1.0, %v1626
  %v1628 = vtanh.pop %v1621
  %v1630 = vrot.slane %v1531, 7
  %v1632 = vmul.f32 %v1627, %v1630
  %1634 = vrot.lane.b32.xlu0 %v1628, 64
  %v1635 = vpop.permute.xlu0 %1634
  %v1637 = vmul.f32 %v1627, %v1635
  %1639 = vrot.lane.b32.xlu0 %v1637, 32
  %v1640 = vpop.permute.xlu0 %1639
  %v1642 = vadd.f32 %v1632, %v1640
  %v1643 = vtanh.pop %v1642
  %1645 = vrot.lane.b32.xlu0 %v1643, 64
  %v1646 = vpop.permute.xlu0 %1645
  %v1648 = vmul.f32 %v1627, %v1646
  %1650 = vrot.lane.b32.xlu0 %v1648, 32
  %v1651 = vpop.permute.xlu0 %1650
  %1653 = vst.msk [vmem:[#allocation2 + $0x8] sm:$0x20] %vm772, %v1651
  %v1654 = vrot.slane %v1648, 5
  %1655 = vrot.lane.b32.xlu0 %v1654, 32
  %v1656 = vpop.permute.xlu0 %1655
  %v1657 = vsel %vm39, %v1656, 0
  %1659 = vmatprep.subr.mxu0 0.0
  %1660 = vmatpush1.msra.mxu0 0.0
  %1661 = vmatprep.subr.mxu0 0.0
  %1662 = vmatpush1.msra.mxu0 0.0
  %1663 = vmatprep.subr.mxu0 0.0
  %1664 = vmatpush1.msra.mxu0 0.0
  %1665 = vmatprep.subr.mxu0 0.0
  %1666 = vmatpush1.msra.mxu0 0.0
  %1667 = vmatprep.subr.mxu0 0.0
  %1668 = vmatpush1.msra.mxu0 0.0
  %1669 = vmatprep.subr.mxu0 0.0
  %1670 = vmatpush1.msra.mxu0 0.0
  %1671 = vmatprep.subr.mxu0 0.0
  %1672 = vmatpush1.msra.mxu0 0.0
  %1673 = vmatprep.subr.mxu0 0.0
  %1674 = vmatpush1.msra.mxu0 0.0
  %1675 = vmatprep.subr.mxu0 0.0
  %1676 = vmatpush1.msra.mxu0 0.0
  %1677 = vmatprep.subr.mxu0 0.0
  %1678 = vmatpush1.msra.mxu0 0.0
  %1679 = vmatprep.subr.mxu0 0.0
  %1680 = vmatpush1.msra.mxu0 0.0
  %1681 = vmatprep.subr.mxu0 0.0
  %1682 = vmatpush1.msra.mxu0 0.0
  %1683 = vmatprep.subr.mxu0 0.0
  %1684 = vmatpush1.msra.mxu0 %v30
  %1685 = vmatprep.subr.mxu0 0.0
  %1686 = vmatpush1.msra.mxu0 %v29
  %1687 = vmatprep.subr.mxu0 0.0
  %1688 = vmatpush1.msra.mxu0 %v28
  %1689 = vmatprep.subr.mxu0 0.0
  %1690 = vmatpush1.msra.mxu0 %v27
  %1691 = vmatprep.subr.mxu0 0.0
  %1692 = vmatpush2.msra.mxu0 0.0
  %1693 = vmatprep.subr.mxu0 0.0
  %1694 = vmatpush2.msra.mxu0 0.0
  %1695 = vmatprep.subr.mxu0 0.0
  %1696 = vmatpush2.msra.mxu0 0.0
  %1697 = vmatprep.subr.mxu0 0.0
  %1698 = vmatpush2.msra.mxu0 0.0
  %1699 = vmatprep.subr.mxu0 0.0
  %1700 = vmatpush2.msra.mxu0 0.0
  %1701 = vmatprep.subr.mxu0 0.0
  %1702 = vmatpush2.msra.mxu0 0.0
  %1703 = vmatprep.subr.mxu0 0.0
  %1704 = vmatpush2.msra.mxu0 0.0
  %1705 = vmatprep.subr.mxu0 0.0
  %1706 = vmatpush2.msra.mxu0 0.0
  %1707 = vmatprep.subr.mxu0 0.0
  %1708 = vmatpush2.msra.mxu0 0.0
  %1709 = vmatprep.subr.mxu0 0.0
  %1710 = vmatpush2.msra.mxu0 0.0
  %1711 = vmatprep.subr.mxu0 0.0
  %1712 = vmatpush2.msra.mxu0 0.0
  %1713 = vmatprep.subr.mxu0 0.0
  %1714 = vmatpush2.msra.mxu0 0.0
  %1715 = vmatprep.subr.mxu0 0.0
  %1716 = vmatpush2.msra.mxu0 0.0
  %1717 = vmatprep.subr.mxu0 0.0
  %1718 = vmatpush2.msra.mxu0 0.0
  %1719 = vmatprep.subr.mxu0 0.0
  %1720 = vmatpush2.msra.mxu0 0.0
  %1721 = vmatprep.subr.mxu0 0.0
  %1722 = vmatpush2.msra.mxu0 0.0
  %1723 = vmatprep.mubr.f32.mxu0 0.0
  %1724 = vmatmul.mubr.f32.gmra.mxu0 %v1657
  %v1725 = vpop.f32.mrf.mxu0
  %v1726 = vadd.f32 0.0, %v1725
  %v1727 = vpop.f32.mrf.mxu0
  %1728 = vdwg.mxu0
  %v1730 = vrot.slane %v1726, 2
  %v1732 = vadd.f32 %v1069, %v1730
  %v1733 = vxor.u32 %v1732, 2147483648
  %v1734 = vmul.f32 %v1733, 1.442695
  %v1735 = vpow.pop %v1734
  %v1736 = vadd.f32 %v1735, 1.0
  %v1737 = vrcp.pop %v1736
  %v1738 = vmul.f32 1.0, %v1737
  %v1739 = vtanh.pop %v1732
  %v1741 = vrot.slane %v1642, 7
  %v1743 = vmul.f32 %v1738, %v1741
  %1745 = vrot.lane.b32.xlu0 %v1739, 64
  %v1746 = vpop.permute.xlu0 %1745
  %v1748 = vmul.f32 %v1738, %v1746
  %1750 = vrot.lane.b32.xlu0 %v1748, 32
  %v1751 = vpop.permute.xlu0 %1750
  %v1753 = vadd.f32 %v1743, %v1751
  %v1754 = vtanh.pop %v1753
  %1756 = vrot.lane.b32.xlu0 %v1754, 64
  %v1757 = vpop.permute.xlu0 %1756
  %v1759 = vmul.f32 %v1738, %v1757
  %1761 = vrot.lane.b32.xlu0 %v1759, 32
  %v1762 = vpop.permute.xlu0 %1761
  %1764 = vst.msk [vmem:[#allocation2 + $0x8] sm:$0x40] %vm884, %v1762
  %v1765 = vrot.slane %v1759, 6
  %1766 = vrot.lane.b32.xlu0 %v1765, 32
  %v1767 = vpop.permute.xlu0 %1766
  %v1768 = vsel %vm39, %v1767, 0
  %1770 = vmatprep.subr.mxu0 0.0
  %1771 = vmatpush1.msra.mxu0 0.0
  %1772 = vmatprep.subr.mxu0 0.0
  %1773 = vmatpush1.msra.mxu0 0.0
  %1774 = vmatprep.subr.mxu0 0.0
  %1775 = vmatpush1.msra.mxu0 0.0
  %1776 = vmatprep.subr.mxu0 0.0
  %1777 = vmatpush1.msra.mxu0 0.0
  %1778 = vmatprep.subr.mxu0 0.0
  %1779 = vmatpush1.msra.mxu0 0.0
  %1780 = vmatprep.subr.mxu0 0.0
  %1781 = vmatpush1.msra.mxu0 0.0
  %1782 = vmatprep.subr.mxu0 0.0
  %1783 = vmatpush1.msra.mxu0 0.0
  %1784 = vmatprep.subr.mxu0 0.0
  %1785 = vmatpush1.msra.mxu0 0.0
  %1786 = vmatprep.subr.mxu0 0.0
  %1787 = vmatpush1.msra.mxu0 0.0
  %1788 = vmatprep.subr.mxu0 0.0
  %1789 = vmatpush1.msra.mxu0 0.0
  %1790 = vmatprep.subr.mxu0 0.0
  %1791 = vmatpush1.msra.mxu0 0.0
  %1792 = vmatprep.subr.mxu0 0.0
  %1793 = vmatpush1.msra.mxu0 0.0
  %1794 = vmatprep.subr.mxu0 0.0
  %1795 = vmatpush1.msra.mxu0 %v30
  %1796 = vmatprep.subr.mxu0 0.0
  %1797 = vmatpush1.msra.mxu0 %v29
  %1798 = vmatprep.subr.mxu0 0.0
  %1799 = vmatpush1.msra.mxu0 %v28
  %1800 = vmatprep.subr.mxu0 0.0
  %1801 = vmatpush1.msra.mxu0 %v27
  %1802 = vmatprep.subr.mxu0 0.0
  %1803 = vmatpush2.msra.mxu0 0.0
  %1804 = vmatprep.subr.mxu0 0.0
  %1805 = vmatpush2.msra.mxu0 0.0
  %1806 = vmatprep.subr.mxu0 0.0
  %1807 = vmatpush2.msra.mxu0 0.0
  %1808 = vmatprep.subr.mxu0 0.0
  %1809 = vmatpush2.msra.mxu0 0.0
  %1810 = vmatprep.subr.mxu0 0.0
  %1811 = vmatpush2.msra.mxu0 0.0
  %1812 = vmatprep.subr.mxu0 0.0
  %1813 = vmatpush2.msra.mxu0 0.0
  %1814 = vmatprep.subr.mxu0 0.0
  %1815 = vmatpush2.msra.mxu0 0.0
  %1816 = vmatprep.subr.mxu0 0.0
  %1817 = vmatpush2.msra.mxu0 0.0
  %1818 = vmatprep.subr.mxu0 0.0
  %1819 = vmatpush2.msra.mxu0 0.0
  %1820 = vmatprep.subr.mxu0 0.0
  %1821 = vmatpush2.msra.mxu0 0.0
  %1822 = vmatprep.subr.mxu0 0.0
  %1823 = vmatpush2.msra.mxu0 0.0
  %1824 = vmatprep.subr.mxu0 0.0
  %1825 = vmatpush2.msra.mxu0 0.0
  %1826 = vmatprep.subr.mxu0 0.0
  %1827 = vmatpush2.msra.mxu0 0.0
  %1828 = vmatprep.subr.mxu0 0.0
  %1829 = vmatpush2.msra.mxu0 0.0
  %1830 = vmatprep.subr.mxu0 0.0
  %1831 = vmatpush2.msra.mxu0 0.0
  %1832 = vmatprep.subr.mxu0 0.0
  %1833 = vmatpush2.msra.mxu0 0.0
  %1834 = vmatprep.mubr.f32.mxu0 0.0
  %1835 = vmatmul.mubr.f32.gmra.mxu0 %v1768
  %v1836 = vpop.f32.mrf.mxu0
  %v1837 = vadd.f32 0.0, %v1836
  %v1838 = vpop.f32.mrf.mxu0
  %1839 = vdwg.mxu0
  %v1841 = vrot.slane %v1837, 1
  %v1843 = vadd.f32 %v1069, %v1841
  %v1844 = vxor.u32 %v1843, 2147483648
  %v1845 = vmul.f32 %v1844, 1.442695
  %v1846 = vpow.pop %v1845
  %v1847 = vadd.f32 %v1846, 1.0
  %v1848 = vrcp.pop %v1847
  %v1849 = vmul.f32 1.0, %v1848
  %v1850 = vtanh.pop %v1843
  %v1852 = vrot.slane %v1753, 7
  %v1854 = vmul.f32 %v1849, %v1852
  %1856 = vrot.lane.b32.xlu0 %v1850, 64
  %v1857 = vpop.permute.xlu0 %1856
  %v1859 = vmul.f32 %v1849, %v1857
  %1861 = vrot.lane.b32.xlu0 %v1859, 32
  %v1862 = vpop.permute.xlu0 %1861
  %v1864 = vadd.f32 %v1854, %v1862
  %v1865 = vtanh.pop %v1864
  %1867 = vrot.lane.b32.xlu0 %v1865, 64
  %v1868 = vpop.permute.xlu0 %1867
  %v1870 = vmul.f32 %v1849, %v1868
  %1872 = vrot.lane.b32.xlu0 %v1870, 32
  %v1873 = vpop.permute.xlu0 %1872
  %1875 = vst.msk [vmem:[#allocation2 + $0x8] sm:$0x80] %vm996, %v1873
  %s1876 = scalar_lea.vmem %s1, 32
  %v1877 = vld [vmem:[%s1876] sm:$0xff]
  %v1878 = vld [vmem:[%s1876 + $0x8] sm:$0xff]
  %v1879 = vld [vmem:[%s1876 + $0x10] sm:$0xff]
  %v1880 = vld [vmem:[%s1876 + $0x18] sm:$0xff]
  %s1881 = scalar_lea.vmem %s2, 32
  %v1882 = vld [vmem:[%s1881] sm:$0xff]
  %v1883 = vld [vmem:[%s1881 + $0x8] sm:$0xff]
  %v1884 = vld [vmem:[%s1881 + $0x10] sm:$0xff]
  %v1885 = vld [vmem:[%s1881 + $0x18] sm:$0xff]
  %s1886 = scalar_lea.vmem %s3, 1
  %v1887 = vld [vmem:[%s1886] sm:$0x1]
  %v1888 = vld [vmem:[%s0] sm:$0xff]
  %v1890 = vlaneseq
  %v1891 = vshrl.u32 %v1890, 7
  %v1892 = vsub.s32 0, %v1891
  %v1893 = vrot.slane %v1887, %v1892
  %v1896 = vsel %vm39, %v1888, 0
  %1898 = vmatprep.subr.mxu0 0.0
  %1899 = vmatpush1.msra.mxu0 0.0
  %1900 = vmatprep.subr.mxu0 0.0
  %1901 = vmatpush1.msra.mxu0 0.0
  %1902 = vmatprep.subr.mxu0 0.0
  %1903 = vmatpush1.msra.mxu0 0.0
  %1904 = vmatprep.subr.mxu0 0.0
  %1905 = vmatpush1.msra.mxu0 0.0
  %1906 = vmatprep.subr.mxu0 0.0
  %1907 = vmatpush1.msra.mxu0 0.0
  %1908 = vmatprep.subr.mxu0 0.0
  %1909 = vmatpush1.msra.mxu0 0.0
  %1910 = vmatprep.subr.mxu0 0.0
  %1911 = vmatpush1.msra.mxu0 0.0
  %1912 = vmatprep.subr.mxu0 0.0
  %1913 = vmatpush1.msra.mxu0 0.0
  %1914 = vmatprep.subr.mxu0 0.0
  %1915 = vmatpush1.msra.mxu0 0.0
  %1916 = vmatprep.subr.mxu0 0.0
  %1917 = vmatpush1.msra.mxu0 0.0
  %1918 = vmatprep.subr.mxu0 0.0
  %1919 = vmatpush1.msra.mxu0 0.0
  %1920 = vmatprep.subr.mxu0 0.0
  %1921 = vmatpush1.msra.mxu0 0.0
  %1922 = vmatprep.subr.mxu0 0.0
  %1923 = vmatpush1.msra.mxu0 %v1880
  %1924 = vmatprep.subr.mxu0 0.0
  %1925 = vmatpush1.msra.mxu0 %v1879
  %1926 = vmatprep.subr.mxu0 0.0
  %1927 = vmatpush1.msra.mxu0 %v1878
  %1928 = vmatprep.subr.mxu0 0.0
  %1929 = vmatpush1.msra.mxu0 %v1877
  %1930 = vmatprep.subr.mxu0 0.0
  %1931 = vmatpush2.msra.mxu0 0.0
  %1932 = vmatprep.subr.mxu0 0.0
  %1933 = vmatpush2.msra.mxu0 0.0
  %1934 = vmatprep.subr.mxu0 0.0
  %1935 = vmatpush2.msra.mxu0 0.0
  %1936 = vmatprep.subr.mxu0 0.0
  %1937 = vmatpush2.msra.mxu0 0.0
  %1938 = vmatprep.subr.mxu0 0.0
  %1939 = vmatpush2.msra.mxu0 0.0
  %1940 = vmatprep.subr.mxu0 0.0
  %1941 = vmatpush2.msra.mxu0 0.0
  %1942 = vmatprep.subr.mxu0 0.0
  %1943 = vmatpush2.msra.mxu0 0.0
  %1944 = vmatprep.subr.mxu0 0.0
  %1945 = vmatpush2.msra.mxu0 0.0
  %1946 = vmatprep.subr.mxu0 0.0
  %1947 = vmatpush2.msra.mxu0 0.0
  %1948 = vmatprep.subr.mxu0 0.0
  %1949 = vmatpush2.msra.mxu0 0.0
  %1950 = vmatprep.subr.mxu0 0.0
  %1951 = vmatpush2.msra.mxu0 0.0
  %1952 = vmatprep.subr.mxu0 0.0
  %1953 = vmatpush2.msra.mxu0 0.0
  %1954 = vmatprep.subr.mxu0 0.0
  %1955 = vmatpush2.msra.mxu0 0.0
  %1956 = vmatprep.subr.mxu0 0.0
  %1957 = vmatpush2.msra.mxu0 0.0
  %1958 = vmatprep.subr.mxu0 0.0
  %1959 = vmatpush2.msra.mxu0 0.0
  %1960 = vmatprep.subr.mxu0 0.0
  %1961 = vmatpush2.msra.mxu0 0.0
  %1962 = vmatprep.mubr.f32.mxu0 0.0
  %1963 = vmatmul.mubr.f32.gmra.mxu0 %v1896
  %v1964 = vpop.f32.mrf.mxu0
  %v1965 = vadd.f32 %v1893, %v1964
  %v1966 = vpop.f32.mrf.mxu0
  %1967 = vdwg.mxu0
  %1968 = vmatprep.subr.mxu0 0.0
  %1969 = vmatpush1.msra.mxu0 0.0
  %1970 = vmatprep.subr.mxu0 0.0
  %1971 = vmatpush1.msra.mxu0 0.0
  %1972 = vmatprep.subr.mxu0 0.0
  %1973 = vmatpush1.msra.mxu0 0.0
  %1974 = vmatprep.subr.mxu0 0.0
  %1975 = vmatpush1.msra.mxu0 0.0
  %1976 = vmatprep.subr.mxu0 0.0
  %1977 = vmatpush1.msra.mxu0 0.0
  %1978 = vmatprep.subr.mxu0 0.0
  %1979 = vmatpush1.msra.mxu0 0.0
  %1980 = vmatprep.subr.mxu0 0.0
  %1981 = vmatpush1.msra.mxu0 0.0
  %1982 = vmatprep.subr.mxu0 0.0
  %1983 = vmatpush1.msra.mxu0 0.0
  %1984 = vmatprep.subr.mxu0 0.0
  %1985 = vmatpush1.msra.mxu0 0.0
  %1986 = vmatprep.subr.mxu0 0.0
  %1987 = vmatpush1.msra.mxu0 0.0
  %1988 = vmatprep.subr.mxu0 0.0
  %1989 = vmatpush1.msra.mxu0 0.0
  %1990 = vmatprep.subr.mxu0 0.0
  %1991 = vmatpush1.msra.mxu0 0.0
  %1992 = vmatprep.subr.mxu0 0.0
  %1993 = vmatpush1.msra.mxu0 %v1885
  %1994 = vmatprep.subr.mxu0 0.0
  %1995 = vmatpush1.msra.mxu0 %v1884
  %1996 = vmatprep.subr.mxu0 0.0
  %1997 = vmatpush1.msra.mxu0 %v1883
  %1998 = vmatprep.subr.mxu0 0.0
  %1999 = vmatpush1.msra.mxu0 %v1882
  %2000 = vmatprep.subr.mxu0 0.0
  %2001 = vmatpush2.msra.mxu0 0.0
  %2002 = vmatprep.subr.mxu0 0.0
  %2003 = vmatpush2.msra.mxu0 0.0
  %2004 = vmatprep.subr.mxu0 0.0
  %2005 = vmatpush2.msra.mxu0 0.0
  %2006 = vmatprep.subr.mxu0 0.0
  %2007 = vmatpush2.msra.mxu0 0.0
  %2008 = vmatprep.subr.mxu0 0.0
  %2009 = vmatpush2.msra.mxu0 0.0
  %2010 = vmatprep.subr.mxu0 0.0
  %2011 = vmatpush2.msra.mxu0 0.0
  %2012 = vmatprep.subr.mxu0 0.0
  %2013 = vmatpush2.msra.mxu0 0.0
  %2014 = vmatprep.subr.mxu0 0.0
  %2015 = vmatpush2.msra.mxu0 0.0
  %2016 = vmatprep.subr.mxu0 0.0
  %2017 = vmatpush2.msra.mxu0 0.0
  %2018 = vmatprep.subr.mxu0 0.0
  %2019 = vmatpush2.msra.mxu0 0.0
  %2020 = vmatprep.subr.mxu0 0.0
  %2021 = vmatpush2.msra.mxu0 0.0
  %2022 = vmatprep.subr.mxu0 0.0
  %2023 = vmatpush2.msra.mxu0 0.0
  %2024 = vmatprep.subr.mxu0 0.0
  %2025 = vmatpush2.msra.mxu0 0.0
  %2026 = vmatprep.subr.mxu0 0.0
  %2027 = vmatpush2.msra.mxu0 0.0
  %2028 = vmatprep.subr.mxu0 0.0
  %2029 = vmatpush2.msra.mxu0 0.0
  %2030 = vmatprep.subr.mxu0 0.0
  %2031 = vmatpush2.msra.mxu0 0.0
  %2032 = vmatprep.mubr.f32.mxu0 0.0
  %2033 = vmatmul.mubr.f32.gmra.mxu0 %v114
  %v2034 = vpop.f32.mrf.mxu0
  %v2035 = vadd.f32 0.0, %v2034
  %v2036 = vpop.f32.mrf.mxu0
  %2037 = vdwg.mxu0
  %v2039 = vrot.slane %v2035, 1
  %v2041 = vadd.f32 %v1965, %v2039
  %v2042 = vxor.u32 %v2041, 2147483648
  %v2043 = vmul.f32 %v2042, 1.442695
  %v2044 = vpow.pop %v2043
  %v2045 = vadd.f32 %v2044, 1.0
  %v2046 = vrcp.pop %v2045
  %v2047 = vmul.f32 1.0, %v2046
  %v2048 = vtanh.pop %v2041
  %v2049 = vmul.f32 %v2047, 0.0
  %2051 = vrot.lane.b32.xlu0 %v2048, 64
  %v2052 = vpop.permute.xlu0 %2051
  %v2054 = vmul.f32 %v2047, %v2052
  %2056 = vrot.lane.b32.xlu0 %v2054, 32
  %v2057 = vpop.permute.xlu0 %2056
  %v2059 = vadd.f32 %v2049, %v2057
  %v2060 = vtanh.pop %v2059
  %2062 = vrot.lane.b32.xlu0 %v2060, 64
  %v2063 = vpop.permute.xlu0 %2062
  %v2065 = vmul.f32 %v2047, %v2063
  %2067 = vrot.lane.b32.xlu0 %v2065, 32
  %v2068 = vpop.permute.xlu0 %2067
  %2070 = vst.msk [vmem:[#allocation2 + $0x10] sm:$0x80] %vm996, %v2068
  %v2071 = vrot.slane %v2065, 7
  %2072 = vrot.lane.b32.xlu0 %v2071, 32
  %v2073 = vpop.permute.xlu0 %2072
  %v2074 = vsel %vm39, %v2073, 0
  %2076 = vmatprep.subr.mxu0 0.0
  %2077 = vmatpush1.msra.mxu0 0.0
  %2078 = vmatprep.subr.mxu0 0.0
  %2079 = vmatpush1.msra.mxu0 0.0
  %2080 = vmatprep.subr.mxu0 0.0
  %2081 = vmatpush1.msra.mxu0 0.0
  %2082 = vmatprep.subr.mxu0 0.0
  %2083 = vmatpush1.msra.mxu0 0.0
  %2084 = vmatprep.subr.mxu0 0.0
  %2085 = vmatpush1.msra.mxu0 0.0
  %2086 = vmatprep.subr.mxu0 0.0
  %2087 = vmatpush1.msra.mxu0 0.0
  %2088 = vmatprep.subr.mxu0 0.0
  %2089 = vmatpush1.msra.mxu0 0.0
  %2090 = vmatprep.subr.mxu0 0.0
  %2091 = vmatpush1.msra.mxu0 0.0
  %2092 = vmatprep.subr.mxu0 0.0
  %2093 = vmatpush1.msra.mxu0 0.0
  %2094 = vmatprep.subr.mxu0 0.0
  %2095 = vmatpush1.msra.mxu0 0.0
  %2096 = vmatprep.subr.mxu0 0.0
  %2097 = vmatpush1.msra.mxu0 0.0
  %2098 = vmatprep.subr.mxu0 0.0
  %2099 = vmatpush1.msra.mxu0 0.0
  %2100 = vmatprep.subr.mxu0 0.0
  %2101 = vmatpush1.msra.mxu0 %v1885
  %2102 = vmatprep.subr.mxu0 0.0
  %2103 = vmatpush1.msra.mxu0 %v1884
  %2104 = vmatprep.subr.mxu0 0.0
  %2105 = vmatpush1.msra.mxu0 %v1883
  %2106 = vmatprep.subr.mxu0 0.0
  %2107 = vmatpush1.msra.mxu0 %v1882
  %2108 = vmatprep.subr.mxu0 0.0
  %2109 = vmatpush2.msra.mxu0 0.0
  %2110 = vmatprep.subr.mxu0 0.0
  %2111 = vmatpush2.msra.mxu0 0.0
  %2112 = vmatprep.subr.mxu0 0.0
  %2113 = vmatpush2.msra.mxu0 0.0
  %2114 = vmatprep.subr.mxu0 0.0
  %2115 = vmatpush2.msra.mxu0 0.0
  %2116 = vmatprep.subr.mxu0 0.0
  %2117 = vmatpush2.msra.mxu0 0.0
  %2118 = vmatprep.subr.mxu0 0.0
  %2119 = vmatpush2.msra.mxu0 0.0
  %2120 = vmatprep.subr.mxu0 0.0
  %2121 = vmatpush2.msra.mxu0 0.0
  %2122 = vmatprep.subr.mxu0 0.0
  %2123 = vmatpush2.msra.mxu0 0.0
  %2124 = vmatprep.subr.mxu0 0.0
  %2125 = vmatpush2.msra.mxu0 0.0
  %2126 = vmatprep.subr.mxu0 0.0
  %2127 = vmatpush2.msra.mxu0 0.0
  %2128 = vmatprep.subr.mxu0 0.0
  %2129 = vmatpush2.msra.mxu0 0.0
  %2130 = vmatprep.subr.mxu0 0.0
  %2131 = vmatpush2.msra.mxu0 0.0
  %2132 = vmatprep.subr.mxu0 0.0
  %2133 = vmatpush2.msra.mxu0 0.0
  %2134 = vmatprep.subr.mxu0 0.0
  %2135 = vmatpush2.msra.mxu0 0.0
  %2136 = vmatprep.subr.mxu0 0.0
  %2137 = vmatpush2.msra.mxu0 0.0
  %2138 = vmatprep.subr.mxu0 0.0
  %2139 = vmatpush2.msra.mxu0 0.0
  %2140 = vmatprep.mubr.f32.mxu0 0.0
  %2141 = vmatmul.mubr.f32.gmra.mxu0 %v2074
  %v2142 = vpop.f32.mrf.mxu0
  %v2143 = vadd.f32 0.0, %v2142
  %v2144 = vpop.f32.mrf.mxu0
  %2145 = vdwg.mxu0
  %v2147 = vrot.slane %v2143, 2
  %v2149 = vadd.f32 %v1965, %v2147
  %v2150 = vxor.u32 %v2149, 2147483648
  %v2151 = vmul.f32 %v2150, 1.442695
  %v2152 = vpow.pop %v2151
  %v2153 = vadd.f32 %v2152, 1.0
  %v2154 = vrcp.pop %v2153
  %v2155 = vmul.f32 1.0, %v2154
  %v2156 = vtanh.pop %v2149
  %v2158 = vrot.slane %v2059, 1
  %v2160 = vmul.f32 %v2155, %v2158
  %2162 = vrot.lane.b32.xlu0 %v2156, 64
  %v2163 = vpop.permute.xlu0 %2162
  %v2165 = vmul.f32 %v2155, %v2163
  %2167 = vrot.lane.b32.xlu0 %v2165, 32
  %v2168 = vpop.permute.xlu0 %2167
  %v2170 = vadd.f32 %v2160, %v2168
  %v2171 = vtanh.pop %v2170
  %2173 = vrot.lane.b32.xlu0 %v2171, 64
  %v2174 = vpop.permute.xlu0 %2173
  %v2176 = vmul.f32 %v2155, %v2174
  %2178 = vrot.lane.b32.xlu0 %v2176, 32
  %v2179 = vpop.permute.xlu0 %2178
  %2181 = vst.msk [vmem:[#allocation2 + $0x10] sm:$0x40] %vm884, %v2179
  %v2182 = vrot.slane %v2176, 6
  %2183 = vrot.lane.b32.xlu0 %v2182, 32
  %v2184 = vpop.permute.xlu0 %2183
  %v2185 = vsel %vm39, %v2184, 0
  %2187 = vmatprep.subr.mxu0 0.0
  %2188 = vmatpush1.msra.mxu0 0.0
  %2189 = vmatprep.subr.mxu0 0.0
  %2190 = vmatpush1.msra.mxu0 0.0
  %2191 = vmatprep.subr.mxu0 0.0
  %2192 = vmatpush1.msra.mxu0 0.0
  %2193 = vmatprep.subr.mxu0 0.0
  %2194 = vmatpush1.msra.mxu0 0.0
  %2195 = vmatprep.subr.mxu0 0.0
  %2196 = vmatpush1.msra.mxu0 0.0
  %2197 = vmatprep.subr.mxu0 0.0
  %2198 = vmatpush1.msra.mxu0 0.0
  %2199 = vmatprep.subr.mxu0 0.0
  %2200 = vmatpush1.msra.mxu0 0.0
  %2201 = vmatprep.subr.mxu0 0.0
  %2202 = vmatpush1.msra.mxu0 0.0
  %2203 = vmatprep.subr.mxu0 0.0
  %2204 = vmatpush1.msra.mxu0 0.0
  %2205 = vmatprep.subr.mxu0 0.0
  %2206 = vmatpush1.msra.mxu0 0.0
  %2207 = vmatprep.subr.mxu0 0.0
  %2208 = vmatpush1.msra.mxu0 0.0
  %2209 = vmatprep.subr.mxu0 0.0
  %2210 = vmatpush1.msra.mxu0 0.0
  %2211 = vmatprep.subr.mxu0 0.0
  %2212 = vmatpush1.msra.mxu0 %v1885
  %2213 = vmatprep.subr.mxu0 0.0
  %2214 = vmatpush1.msra.mxu0 %v1884
  %2215 = vmatprep.subr.mxu0 0.0
  %2216 = vmatpush1.msra.mxu0 %v1883
  %2217 = vmatprep.subr.mxu0 0.0
  %2218 = vmatpush1.msra.mxu0 %v1882
  %2219 = vmatprep.subr.mxu0 0.0
  %2220 = vmatpush2.msra.mxu0 0.0
  %2221 = vmatprep.subr.mxu0 0.0
  %2222 = vmatpush2.msra.mxu0 0.0
  %2223 = vmatprep.subr.mxu0 0.0
  %2224 = vmatpush2.msra.mxu0 0.0
  %2225 = vmatprep.subr.mxu0 0.0
  %2226 = vmatpush2.msra.mxu0 0.0
  %2227 = vmatprep.subr.mxu0 0.0
  %2228 = vmatpush2.msra.mxu0 0.0
  %2229 = vmatprep.subr.mxu0 0.0
  %2230 = vmatpush2.msra.mxu0 0.0
  %2231 = vmatprep.subr.mxu0 0.0
  %2232 = vmatpush2.msra.mxu0 0.0
  %2233 = vmatprep.subr.mxu0 0.0
  %2234 = vmatpush2.msra.mxu0 0.0
  %2235 = vmatprep.subr.mxu0 0.0
  %2236 = vmatpush2.msra.mxu0 0.0
  %2237 = vmatprep.subr.mxu0 0.0
  %2238 = vmatpush2.msra.mxu0 0.0
  %2239 = vmatprep.subr.mxu0 0.0
  %2240 = vmatpush2.msra.mxu0 0.0
  %2241 = vmatprep.subr.mxu0 0.0
  %2242 = vmatpush2.msra.mxu0 0.0
  %2243 = vmatprep.subr.mxu0 0.0
  %2244 = vmatpush2.msra.mxu0 0.0
  %2245 = vmatprep.subr.mxu0 0.0
  %2246 = vmatpush2.msra.mxu0 0.0
  %2247 = vmatprep.subr.mxu0 0.0
  %2248 = vmatpush2.msra.mxu0 0.0
  %2249 = vmatprep.subr.mxu0 0.0
  %2250 = vmatpush2.msra.mxu0 0.0
  %2251 = vmatprep.mubr.f32.mxu0 0.0
  %2252 = vmatmul.mubr.f32.gmra.mxu0 %v2185
  %v2253 = vpop.f32.mrf.mxu0
  %v2254 = vadd.f32 0.0, %v2253
  %v2255 = vpop.f32.mrf.mxu0
  %2256 = vdwg.mxu0
  %v2258 = vrot.slane %v2254, 3
  %v2260 = vadd.f32 %v1965, %v2258
  %v2261 = vxor.u32 %v2260, 2147483648
  %v2262 = vmul.f32 %v2261, 1.442695
  %v2263 = vpow.pop %v2262
  %v2264 = vadd.f32 %v2263, 1.0
  %v2265 = vrcp.pop %v2264
  %v2266 = vmul.f32 1.0, %v2265
  %v2267 = vtanh.pop %v2260
  %v2269 = vrot.slane %v2170, 1
  %v2271 = vmul.f32 %v2266, %v2269
  %2273 = vrot.lane.b32.xlu0 %v2267, 64
  %v2274 = vpop.permute.xlu0 %2273
  %v2276 = vmul.f32 %v2266, %v2274
  %2278 = vrot.lane.b32.xlu0 %v2276, 32
  %v2279 = vpop.permute.xlu0 %2278
  %v2281 = vadd.f32 %v2271, %v2279
  %v2282 = vtanh.pop %v2281
  %2284 = vrot.lane.b32.xlu0 %v2282, 64
  %v2285 = vpop.permute.xlu0 %2284
  %v2287 = vmul.f32 %v2266, %v2285
  %2289 = vrot.lane.b32.xlu0 %v2287, 32
  %v2290 = vpop.permute.xlu0 %2289
  %2292 = vst.msk [vmem:[#allocation2 + $0x10] sm:$0x20] %vm772, %v2290
  %v2293 = vrot.slane %v2287, 5
  %2294 = vrot.lane.b32.xlu0 %v2293, 32
  %v2295 = vpop.permute.xlu0 %2294
  %v2296 = vsel %vm39, %v2295, 0
  %2298 = vmatprep.subr.mxu0 0.0
  %2299 = vmatpush1.msra.mxu0 0.0
  %2300 = vmatprep.subr.mxu0 0.0
  %2301 = vmatpush1.msra.mxu0 0.0
  %2302 = vmatprep.subr.mxu0 0.0
  %2303 = vmatpush1.msra.mxu0 0.0
  %2304 = vmatprep.subr.mxu0 0.0
  %2305 = vmatpush1.msra.mxu0 0.0
  %2306 = vmatprep.subr.mxu0 0.0
  %2307 = vmatpush1.msra.mxu0 0.0
  %2308 = vmatprep.subr.mxu0 0.0
  %2309 = vmatpush1.msra.mxu0 0.0
  %2310 = vmatprep.subr.mxu0 0.0
  %2311 = vmatpush1.msra.mxu0 0.0
  %2312 = vmatprep.subr.mxu0 0.0
  %2313 = vmatpush1.msra.mxu0 0.0
  %2314 = vmatprep.subr.mxu0 0.0
  %2315 = vmatpush1.msra.mxu0 0.0
  %2316 = vmatprep.subr.mxu0 0.0
  %2317 = vmatpush1.msra.mxu0 0.0
  %2318 = vmatprep.subr.mxu0 0.0
  %2319 = vmatpush1.msra.mxu0 0.0
  %2320 = vmatprep.subr.mxu0 0.0
  %2321 = vmatpush1.msra.mxu0 0.0
  %2322 = vmatprep.subr.mxu0 0.0
  %2323 = vmatpush1.msra.mxu0 %v1885
  %2324 = vmatprep.subr.mxu0 0.0
  %2325 = vmatpush1.msra.mxu0 %v1884
  %2326 = vmatprep.subr.mxu0 0.0
  %2327 = vmatpush1.msra.mxu0 %v1883
  %2328 = vmatprep.subr.mxu0 0.0
  %2329 = vmatpush1.msra.mxu0 %v1882
  %2330 = vmatprep.subr.mxu0 0.0
  %2331 = vmatpush2.msra.mxu0 0.0
  %2332 = vmatprep.subr.mxu0 0.0
  %2333 = vmatpush2.msra.mxu0 0.0
  %2334 = vmatprep.subr.mxu0 0.0
  %2335 = vmatpush2.msra.mxu0 0.0
  %2336 = vmatprep.subr.mxu0 0.0
  %2337 = vmatpush2.msra.mxu0 0.0
  %2338 = vmatprep.subr.mxu0 0.0
  %2339 = vmatpush2.msra.mxu0 0.0
  %2340 = vmatprep.subr.mxu0 0.0
  %2341 = vmatpush2.msra.mxu0 0.0
  %2342 = vmatprep.subr.mxu0 0.0
  %2343 = vmatpush2.msra.mxu0 0.0
  %2344 = vmatprep.subr.mxu0 0.0
  %2345 = vmatpush2.msra.mxu0 0.0
  %2346 = vmatprep.subr.mxu0 0.0
  %2347 = vmatpush2.msra.mxu0 0.0
  %2348 = vmatprep.subr.mxu0 0.0
  %2349 = vmatpush2.msra.mxu0 0.0
  %2350 = vmatprep.subr.mxu0 0.0
  %2351 = vmatpush2.msra.mxu0 0.0
  %2352 = vmatprep.subr.mxu0 0.0
  %2353 = vmatpush2.msra.mxu0 0.0
  %2354 = vmatprep.subr.mxu0 0.0
  %2355 = vmatpush2.msra.mxu0 0.0
  %2356 = vmatprep.subr.mxu0 0.0
  %2357 = vmatpush2.msra.mxu0 0.0
  %2358 = vmatprep.subr.mxu0 0.0
  %2359 = vmatpush2.msra.mxu0 0.0
  %2360 = vmatprep.subr.mxu0 0.0
  %2361 = vmatpush2.msra.mxu0 0.0
  %2362 = vmatprep.mubr.f32.mxu0 0.0
  %2363 = vmatmul.mubr.f32.gmra.mxu0 %v2296
  %v2364 = vpop.f32.mrf.mxu0
  %v2365 = vadd.f32 0.0, %v2364
  %v2366 = vpop.f32.mrf.mxu0
  %2367 = vdwg.mxu0
  %v2369 = vrot.slane %v2365, 4
  %v2371 = vadd.f32 %v1965, %v2369
  %v2372 = vxor.u32 %v2371, 2147483648
  %v2373 = vmul.f32 %v2372, 1.442695
  %v2374 = vpow.pop %v2373
  %v2375 = vadd.f32 %v2374, 1.0
  %v2376 = vrcp.pop %v2375
  %v2377 = vmul.f32 1.0, %v2376
  %v2378 = vtanh.pop %v2371
  %v2380 = vrot.slane %v2281, 1
  %v2382 = vmul.f32 %v2377, %v2380
  %2384 = vrot.lane.b32.xlu0 %v2378, 64
  %v2385 = vpop.permute.xlu0 %2384
  %v2387 = vmul.f32 %v2377, %v2385
  %2389 = vrot.lane.b32.xlu0 %v2387, 32
  %v2390 = vpop.permute.xlu0 %2389
  %v2392 = vadd.f32 %v2382, %v2390
  %v2393 = vtanh.pop %v2392
  %2395 = vrot.lane.b32.xlu0 %v2393, 64
  %v2396 = vpop.permute.xlu0 %2395
  %v2398 = vmul.f32 %v2377, %v2396
  %2400 = vrot.lane.b32.xlu0 %v2398, 32
  %v2401 = vpop.permute.xlu0 %2400
  %2403 = vst.msk [vmem:[#allocation2 + $0x10] sm:$0x10] %vm660, %v2401
  %v2404 = vrot.slane %v2398, 4
  %2405 = vrot.lane.b32.xlu0 %v2404, 32
  %v2406 = vpop.permute.xlu0 %2405
  %v2407 = vsel %vm39, %v2406, 0
  %2409 = vmatprep.subr.mxu0 0.0
  %2410 = vmatpush1.msra.mxu0 0.0
  %2411 = vmatprep.subr.mxu0 0.0
  %2412 = vmatpush1.msra.mxu0 0.0
  %2413 = vmatprep.subr.mxu0 0.0
  %2414 = vmatpush1.msra.mxu0 0.0
  %2415 = vmatprep.subr.mxu0 0.0
  %2416 = vmatpush1.msra.mxu0 0.0
  %2417 = vmatprep.subr.mxu0 0.0
  %2418 = vmatpush1.msra.mxu0 0.0
  %2419 = vmatprep.subr.mxu0 0.0
  %2420 = vmatpush1.msra.mxu0 0.0
  %2421 = vmatprep.subr.mxu0 0.0
  %2422 = vmatpush1.msra.mxu0 0.0
  %2423 = vmatprep.subr.mxu0 0.0
  %2424 = vmatpush1.msra.mxu0 0.0
  %2425 = vmatprep.subr.mxu0 0.0
  %2426 = vmatpush1.msra.mxu0 0.0
  %2427 = vmatprep.subr.mxu0 0.0
  %2428 = vmatpush1.msra.mxu0 0.0
  %2429 = vmatprep.subr.mxu0 0.0
  %2430 = vmatpush1.msra.mxu0 0.0
  %2431 = vmatprep.subr.mxu0 0.0
  %2432 = vmatpush1.msra.mxu0 0.0
  %2433 = vmatprep.subr.mxu0 0.0
  %2434 = vmatpush1.msra.mxu0 %v1885
  %2435 = vmatprep.subr.mxu0 0.0
  %2436 = vmatpush1.msra.mxu0 %v1884
  %2437 = vmatprep.subr.mxu0 0.0
  %2438 = vmatpush1.msra.mxu0 %v1883
  %2439 = vmatprep.subr.mxu0 0.0
  %2440 = vmatpush1.msra.mxu0 %v1882
  %2441 = vmatprep.subr.mxu0 0.0
  %2442 = vmatpush2.msra.mxu0 0.0
  %2443 = vmatprep.subr.mxu0 0.0
  %2444 = vmatpush2.msra.mxu0 0.0
  %2445 = vmatprep.subr.mxu0 0.0
  %2446 = vmatpush2.msra.mxu0 0.0
  %2447 = vmatprep.subr.mxu0 0.0
  %2448 = vmatpush2.msra.mxu0 0.0
  %2449 = vmatprep.subr.mxu0 0.0
  %2450 = vmatpush2.msra.mxu0 0.0
  %2451 = vmatprep.subr.mxu0 0.0
  %2452 = vmatpush2.msra.mxu0 0.0
  %2453 = vmatprep.subr.mxu0 0.0
  %2454 = vmatpush2.msra.mxu0 0.0
  %2455 = vmatprep.subr.mxu0 0.0
  %2456 = vmatpush2.msra.mxu0 0.0
  %2457 = vmatprep.subr.mxu0 0.0
  %2458 = vmatpush2.msra.mxu0 0.0
  %2459 = vmatprep.subr.mxu0 0.0
  %2460 = vmatpush2.msra.mxu0 0.0
  %2461 = vmatprep.subr.mxu0 0.0
  %2462 = vmatpush2.msra.mxu0 0.0
  %2463 = vmatprep.subr.mxu0 0.0
  %2464 = vmatpush2.msra.mxu0 0.0
  %2465 = vmatprep.subr.mxu0 0.0
  %2466 = vmatpush2.msra.mxu0 0.0
  %2467 = vmatprep.subr.mxu0 0.0
  %2468 = vmatpush2.msra.mxu0 0.0
  %2469 = vmatprep.subr.mxu0 0.0
  %2470 = vmatpush2.msra.mxu0 0.0
  %2471 = vmatprep.subr.mxu0 0.0
  %2472 = vmatpush2.msra.mxu0 0.0
  %2473 = vmatprep.mubr.f32.mxu0 0.0
  %2474 = vmatmul.mubr.f32.gmra.mxu0 %v2407
  %v2475 = vpop.f32.mrf.mxu0
  %v2476 = vadd.f32 0.0, %v2475
  %v2477 = vpop.f32.mrf.mxu0
  %2478 = vdwg.mxu0
  %v2480 = vrot.slane %v2476, 5
  %v2482 = vadd.f32 %v1965, %v2480
  %v2483 = vxor.u32 %v2482, 2147483648
  %v2484 = vmul.f32 %v2483, 1.442695
  %v2485 = vpow.pop %v2484
  %v2486 = vadd.f32 %v2485, 1.0
  %v2487 = vrcp.pop %v2486
  %v2488 = vmul.f32 1.0, %v2487
  %v2489 = vtanh.pop %v2482
  %v2491 = vrot.slane %v2392, 1
  %v2493 = vmul.f32 %v2488, %v2491
  %2495 = vrot.lane.b32.xlu0 %v2489, 64
  %v2496 = vpop.permute.xlu0 %2495
  %v2498 = vmul.f32 %v2488, %v2496
  %2500 = vrot.lane.b32.xlu0 %v2498, 32
  %v2501 = vpop.permute.xlu0 %2500
  %v2503 = vadd.f32 %v2493, %v2501
  %v2504 = vtanh.pop %v2503
  %2506 = vrot.lane.b32.xlu0 %v2504, 64
  %v2507 = vpop.permute.xlu0 %2506
  %v2509 = vmul.f32 %v2488, %v2507
  %2511 = vrot.lane.b32.xlu0 %v2509, 32
  %v2512 = vpop.permute.xlu0 %2511
  %2514 = vst.msk [vmem:[#allocation2 + $0x10] sm:$0x8] %vm548, %v2512
  %v2515 = vrot.slane %v2509, 3
  %2516 = vrot.lane.b32.xlu0 %v2515, 32
  %v2517 = vpop.permute.xlu0 %2516
  %v2518 = vsel %vm39, %v2517, 0
  %2520 = vmatprep.subr.mxu0 0.0
  %2521 = vmatpush1.msra.mxu0 0.0
  %2522 = vmatprep.subr.mxu0 0.0
  %2523 = vmatpush1.msra.mxu0 0.0
  %2524 = vmatprep.subr.mxu0 0.0
  %2525 = vmatpush1.msra.mxu0 0.0
  %2526 = vmatprep.subr.mxu0 0.0
  %2527 = vmatpush1.msra.mxu0 0.0
  %2528 = vmatprep.subr.mxu0 0.0
  %2529 = vmatpush1.msra.mxu0 0.0
  %2530 = vmatprep.subr.mxu0 0.0
  %2531 = vmatpush1.msra.mxu0 0.0
  %2532 = vmatprep.subr.mxu0 0.0
  %2533 = vmatpush1.msra.mxu0 0.0
  %2534 = vmatprep.subr.mxu0 0.0
  %2535 = vmatpush1.msra.mxu0 0.0
  %2536 = vmatprep.subr.mxu0 0.0
  %2537 = vmatpush1.msra.mxu0 0.0
  %2538 = vmatprep.subr.mxu0 0.0
  %2539 = vmatpush1.msra.mxu0 0.0
  %2540 = vmatprep.subr.mxu0 0.0
  %2541 = vmatpush1.msra.mxu0 0.0
  %2542 = vmatprep.subr.mxu0 0.0
  %2543 = vmatpush1.msra.mxu0 0.0
  %2544 = vmatprep.subr.mxu0 0.0
  %2545 = vmatpush1.msra.mxu0 %v1885
  %2546 = vmatprep.subr.mxu0 0.0
  %2547 = vmatpush1.msra.mxu0 %v1884
  %2548 = vmatprep.subr.mxu0 0.0
  %2549 = vmatpush1.msra.mxu0 %v1883
  %2550 = vmatprep.subr.mxu0 0.0
  %2551 = vmatpush1.msra.mxu0 %v1882
  %2552 = vmatprep.subr.mxu0 0.0
  %2553 = vmatpush2.msra.mxu0 0.0
  %2554 = vmatprep.subr.mxu0 0.0
  %2555 = vmatpush2.msra.mxu0 0.0
  %2556 = vmatprep.subr.mxu0 0.0
  %2557 = vmatpush2.msra.mxu0 0.0
  %2558 = vmatprep.subr.mxu0 0.0
  %2559 = vmatpush2.msra.mxu0 0.0
  %2560 = vmatprep.subr.mxu0 0.0
  %2561 = vmatpush2.msra.mxu0 0.0
  %2562 = vmatprep.subr.mxu0 0.0
  %2563 = vmatpush2.msra.mxu0 0.0
  %2564 = vmatprep.subr.mxu0 0.0
  %2565 = vmatpush2.msra.mxu0 0.0
  %2566 = vmatprep.subr.mxu0 0.0
  %2567 = vmatpush2.msra.mxu0 0.0
  %2568 = vmatprep.subr.mxu0 0.0
  %2569 = vmatpush2.msra.mxu0 0.0
  %2570 = vmatprep.subr.mxu0 0.0
  %2571 = vmatpush2.msra.mxu0 0.0
  %2572 = vmatprep.subr.mxu0 0.0
  %2573 = vmatpush2.msra.mxu0 0.0
  %2574 = vmatprep.subr.mxu0 0.0
  %2575 = vmatpush2.msra.mxu0 0.0
  %2576 = vmatprep.subr.mxu0 0.0
  %2577 = vmatpush2.msra.mxu0 0.0
  %2578 = vmatprep.subr.mxu0 0.0
  %2579 = vmatpush2.msra.mxu0 0.0
  %2580 = vmatprep.subr.mxu0 0.0
  %2581 = vmatpush2.msra.mxu0 0.0
  %2582 = vmatprep.subr.mxu0 0.0
  %2583 = vmatpush2.msra.mxu0 0.0
  %2584 = vmatprep.mubr.f32.mxu0 0.0
  %2585 = vmatmul.mubr.f32.gmra.mxu0 %v2518
  %v2586 = vpop.f32.mrf.mxu0
  %v2587 = vadd.f32 0.0, %v2586
  %v2588 = vpop.f32.mrf.mxu0
  %2589 = vdwg.mxu0
  %v2591 = vrot.slane %v2587, 6
  %v2593 = vadd.f32 %v1965, %v2591
  %v2594 = vxor.u32 %v2593, 2147483648
  %v2595 = vmul.f32 %v2594, 1.442695
  %v2596 = vpow.pop %v2595
  %v2597 = vadd.f32 %v2596, 1.0
  %v2598 = vrcp.pop %v2597
  %v2599 = vmul.f32 1.0, %v2598
  %v2600 = vtanh.pop %v2593
  %v2602 = vrot.slane %v2503, 1
  %v2604 = vmul.f32 %v2599, %v2602
  %2606 = vrot.lane.b32.xlu0 %v2600, 64
  %v2607 = vpop.permute.xlu0 %2606
  %v2609 = vmul.f32 %v2599, %v2607
  %2611 = vrot.lane.b32.xlu0 %v2609, 32
  %v2612 = vpop.permute.xlu0 %2611
  %v2614 = vadd.f32 %v2604, %v2612
  %v2615 = vtanh.pop %v2614
  %2617 = vrot.lane.b32.xlu0 %v2615, 64
  %v2618 = vpop.permute.xlu0 %2617
  %v2620 = vmul.f32 %v2599, %v2618
  %2622 = vrot.lane.b32.xlu0 %v2620, 32
  %v2623 = vpop.permute.xlu0 %2622
  %2625 = vst.msk [vmem:[#allocation2 + $0x10] sm:$0x4] %vm436, %v2623
  %v2626 = vrot.slane %v2620, 2
  %2627 = vrot.lane.b32.xlu0 %v2626, 32
  %v2628 = vpop.permute.xlu0 %2627
  %v2629 = vsel %vm39, %v2628, 0
  %2631 = vmatprep.subr.mxu0 0.0
  %2632 = vmatpush1.msra.mxu0 0.0
  %2633 = vmatprep.subr.mxu0 0.0
  %2634 = vmatpush1.msra.mxu0 0.0
  %2635 = vmatprep.subr.mxu0 0.0
  %2636 = vmatpush1.msra.mxu0 0.0
  %2637 = vmatprep.subr.mxu0 0.0
  %2638 = vmatpush1.msra.mxu0 0.0
  %2639 = vmatprep.subr.mxu0 0.0
  %2640 = vmatpush1.msra.mxu0 0.0
  %2641 = vmatprep.subr.mxu0 0.0
  %2642 = vmatpush1.msra.mxu0 0.0
  %2643 = vmatprep.subr.mxu0 0.0
  %2644 = vmatpush1.msra.mxu0 0.0
  %2645 = vmatprep.subr.mxu0 0.0
  %2646 = vmatpush1.msra.mxu0 0.0
  %2647 = vmatprep.subr.mxu0 0.0
  %2648 = vmatpush1.msra.mxu0 0.0
  %2649 = vmatprep.subr.mxu0 0.0
  %2650 = vmatpush1.msra.mxu0 0.0
  %2651 = vmatprep.subr.mxu0 0.0
  %2652 = vmatpush1.msra.mxu0 0.0
  %2653 = vmatprep.subr.mxu0 0.0
  %2654 = vmatpush1.msra.mxu0 0.0
  %2655 = vmatprep.subr.mxu0 0.0
  %2656 = vmatpush1.msra.mxu0 %v1885
  %2657 = vmatprep.subr.mxu0 0.0
  %2658 = vmatpush1.msra.mxu0 %v1884
  %2659 = vmatprep.subr.mxu0 0.0
  %2660 = vmatpush1.msra.mxu0 %v1883
  %2661 = vmatprep.subr.mxu0 0.0
  %2662 = vmatpush1.msra.mxu0 %v1882
  %2663 = vmatprep.subr.mxu0 0.0
  %2664 = vmatpush2.msra.mxu0 0.0
  %2665 = vmatprep.subr.mxu0 0.0
  %2666 = vmatpush2.msra.mxu0 0.0
  %2667 = vmatprep.subr.mxu0 0.0
  %2668 = vmatpush2.msra.mxu0 0.0
  %2669 = vmatprep.subr.mxu0 0.0
  %2670 = vmatpush2.msra.mxu0 0.0
  %2671 = vmatprep.subr.mxu0 0.0
  %2672 = vmatpush2.msra.mxu0 0.0
  %2673 = vmatprep.subr.mxu0 0.0
  %2674 = vmatpush2.msra.mxu0 0.0
  %2675 = vmatprep.subr.mxu0 0.0
  %2676 = vmatpush2.msra.mxu0 0.0
  %2677 = vmatprep.subr.mxu0 0.0
  %2678 = vmatpush2.msra.mxu0 0.0
  %2679 = vmatprep.subr.mxu0 0.0
  %2680 = vmatpush2.msra.mxu0 0.0
  %2681 = vmatprep.subr.mxu0 0.0
  %2682 = vmatpush2.msra.mxu0 0.0
  %2683 = vmatprep.subr.mxu0 0.0
  %2684 = vmatpush2.msra.mxu0 0.0
  %2685 = vmatprep.subr.mxu0 0.0
  %2686 = vmatpush2.msra.mxu0 0.0
  %2687 = vmatprep.subr.mxu0 0.0
  %2688 = vmatpush2.msra.mxu0 0.0
  %2689 = vmatprep.subr.mxu0 0.0
  %2690 = vmatpush2.msra.mxu0 0.0
  %2691 = vmatprep.subr.mxu0 0.0
  %2692 = vmatpush2.msra.mxu0 0.0
  %2693 = vmatprep.subr.mxu0 0.0
  %2694 = vmatpush2.msra.mxu0 0.0
  %2695 = vmatprep.mubr.f32.mxu0 0.0
  %2696 = vmatmul.mubr.f32.gmra.mxu0 %v2629
  %v2697 = vpop.f32.mrf.mxu0
  %v2698 = vadd.f32 0.0, %v2697
  %v2699 = vpop.f32.mrf.mxu0
  %2700 = vdwg.mxu0
  %v2702 = vrot.slane %v2698, 7
  %v2704 = vadd.f32 %v1965, %v2702
  %v2705 = vxor.u32 %v2704, 2147483648
  %v2706 = vmul.f32 %v2705, 1.442695
  %v2707 = vpow.pop %v2706
  %v2708 = vadd.f32 %v2707, 1.0
  %v2709 = vrcp.pop %v2708
  %v2710 = vmul.f32 1.0, %v2709
  %v2711 = vtanh.pop %v2704
  %v2713 = vrot.slane %v2614, 1
  %v2715 = vmul.f32 %v2710, %v2713
  %2717 = vrot.lane.b32.xlu0 %v2711, 64
  %v2718 = vpop.permute.xlu0 %2717
  %v2720 = vmul.f32 %v2710, %v2718
  %2722 = vrot.lane.b32.xlu0 %v2720, 32
  %v2723 = vpop.permute.xlu0 %2722
  %v2725 = vadd.f32 %v2715, %v2723
  %v2726 = vtanh.pop %v2725
  %2728 = vrot.lane.b32.xlu0 %v2726, 64
  %v2729 = vpop.permute.xlu0 %2728
  %v2731 = vmul.f32 %v2710, %v2729
  %2733 = vrot.lane.b32.xlu0 %v2731, 32
  %v2734 = vpop.permute.xlu0 %2733
  %2736 = vst.msk [vmem:[#allocation2 + $0x10] sm:$0x2] %vm324, %v2734
  %v2737 = vrot.slane %v2731, 1
  %2738 = vrot.lane.b32.xlu0 %v2737, 32
  %v2739 = vpop.permute.xlu0 %2738
  %v2740 = vsel %vm39, %v2739, 0
  %2742 = vmatprep.subr.mxu0 0.0
  %2743 = vmatpush1.msra.mxu0 0.0
  %2744 = vmatprep.subr.mxu0 0.0
  %2745 = vmatpush1.msra.mxu0 0.0
  %2746 = vmatprep.subr.mxu0 0.0
  %2747 = vmatpush1.msra.mxu0 0.0
  %2748 = vmatprep.subr.mxu0 0.0
  %2749 = vmatpush1.msra.mxu0 0.0
  %2750 = vmatprep.subr.mxu0 0.0
  %2751 = vmatpush1.msra.mxu0 0.0
  %2752 = vmatprep.subr.mxu0 0.0
  %2753 = vmatpush1.msra.mxu0 0.0
  %2754 = vmatprep.subr.mxu0 0.0
  %2755 = vmatpush1.msra.mxu0 0.0
  %2756 = vmatprep.subr.mxu0 0.0
  %2757 = vmatpush1.msra.mxu0 0.0
  %2758 = vmatprep.subr.mxu0 0.0
  %2759 = vmatpush1.msra.mxu0 0.0
  %2760 = vmatprep.subr.mxu0 0.0
  %2761 = vmatpush1.msra.mxu0 0.0
  %2762 = vmatprep.subr.mxu0 0.0
  %2763 = vmatpush1.msra.mxu0 0.0
  %2764 = vmatprep.subr.mxu0 0.0
  %2765 = vmatpush1.msra.mxu0 0.0
  %2766 = vmatprep.subr.mxu0 0.0
  %2767 = vmatpush1.msra.mxu0 %v1885
  %2768 = vmatprep.subr.mxu0 0.0
  %2769 = vmatpush1.msra.mxu0 %v1884
  %2770 = vmatprep.subr.mxu0 0.0
  %2771 = vmatpush1.msra.mxu0 %v1883
  %2772 = vmatprep.subr.mxu0 0.0
  %2773 = vmatpush1.msra.mxu0 %v1882
  %2774 = vmatprep.subr.mxu0 0.0
  %2775 = vmatpush2.msra.mxu0 0.0
  %2776 = vmatprep.subr.mxu0 0.0
  %2777 = vmatpush2.msra.mxu0 0.0
  %2778 = vmatprep.subr.mxu0 0.0
  %2779 = vmatpush2.msra.mxu0 0.0
  %2780 = vmatprep.subr.mxu0 0.0
  %2781 = vmatpush2.msra.mxu0 0.0
  %2782 = vmatprep.subr.mxu0 0.0
  %2783 = vmatpush2.msra.mxu0 0.0
  %2784 = vmatprep.subr.mxu0 0.0
  %2785 = vmatpush2.msra.mxu0 0.0
  %2786 = vmatprep.subr.mxu0 0.0
  %2787 = vmatpush2.msra.mxu0 0.0
  %2788 = vmatprep.subr.mxu0 0.0
  %2789 = vmatpush2.msra.mxu0 0.0
  %2790 = vmatprep.subr.mxu0 0.0
  %2791 = vmatpush2.msra.mxu0 0.0
  %2792 = vmatprep.subr.mxu0 0.0
  %2793 = vmatpush2.msra.mxu0 0.0
  %2794 = vmatprep.subr.mxu0 0.0
  %2795 = vmatpush2.msra.mxu0 0.0
  %2796 = vmatprep.subr.mxu0 0.0
  %2797 = vmatpush2.msra.mxu0 0.0
  %2798 = vmatprep.subr.mxu0 0.0
  %2799 = vmatpush2.msra.mxu0 0.0
  %2800 = vmatprep.subr.mxu0 0.0
  %2801 = vmatpush2.msra.mxu0 0.0
  %2802 = vmatprep.subr.mxu0 0.0
  %2803 = vmatpush2.msra.mxu0 0.0
  %2804 = vmatprep.subr.mxu0 0.0
  %2805 = vmatpush2.msra.mxu0 0.0
  %2806 = vmatprep.mubr.f32.mxu0 0.0
  %2807 = vmatmul.mubr.f32.gmra.mxu0 %v2740
  %v2808 = vpop.f32.mrf.mxu0
  %v2809 = vadd.f32 0.0, %v2808
  %v2810 = vpop.f32.mrf.mxu0
  %2811 = vdwg.mxu0
  %v2812 = vadd.f32 %v1965, %v2809
  %v2813 = vxor.u32 %v2812, 2147483648
  %v2814 = vmul.f32 %v2813, 1.442695
  %v2815 = vpow.pop %v2814
  %v2816 = vadd.f32 %v2815, 1.0
  %v2817 = vrcp.pop %v2816
  %v2818 = vmul.f32 1.0, %v2817
  %v2819 = vtanh.pop %v2812
  %v2821 = vrot.slane %v2725, 1
  %v2823 = vmul.f32 %v2818, %v2821
  %2825 = vrot.lane.b32.xlu0 %v2819, 64
  %v2826 = vpop.permute.xlu0 %2825
  %v2828 = vmul.f32 %v2818, %v2826
  %2830 = vrot.lane.b32.xlu0 %v2828, 32
  %v2831 = vpop.permute.xlu0 %2830
  %v2833 = vadd.f32 %v2823, %v2831
  %v2834 = vtanh.pop %v2833
  %2836 = vrot.lane.b32.xlu0 %v2834, 64
  %v2837 = vpop.permute.xlu0 %2836
  %v2839 = vmul.f32 %v2818, %v2837
  %2841 = vrot.lane.b32.xlu0 %v2839, 32
  %v2842 = vpop.permute.xlu0 %2841
  %2844 = vst.msk [vmem:[#allocation2 + $0x10] sm:$0x1] %vm215, %v2842
  %v2845 = vld [vmem:[%s0 + $0x8] sm:$0xff]
  %v2847 = vsel %vm39, %v2845, 0
  %2849 = vmatprep.subr.mxu0 0.0
  %2850 = vmatpush1.msra.mxu0 0.0
  %2851 = vmatprep.subr.mxu0 0.0
  %2852 = vmatpush1.msra.mxu0 0.0
  %2853 = vmatprep.subr.mxu0 0.0
  %2854 = vmatpush1.msra.mxu0 0.0
  %2855 = vmatprep.subr.mxu0 0.0
  %2856 = vmatpush1.msra.mxu0 0.0
  %2857 = vmatprep.subr.mxu0 0.0
  %2858 = vmatpush1.msra.mxu0 0.0
  %2859 = vmatprep.subr.mxu0 0.0
  %2860 = vmatpush1.msra.mxu0 0.0
  %2861 = vmatprep.subr.mxu0 0.0
  %2862 = vmatpush1.msra.mxu0 0.0
  %2863 = vmatprep.subr.mxu0 0.0
  %2864 = vmatpush1.msra.mxu0 0.0
  %2865 = vmatprep.subr.mxu0 0.0
  %2866 = vmatpush1.msra.mxu0 0.0
  %2867 = vmatprep.subr.mxu0 0.0
  %2868 = vmatpush1.msra.mxu0 0.0
  %2869 = vmatprep.subr.mxu0 0.0
  %2870 = vmatpush1.msra.mxu0 0.0
  %2871 = vmatprep.subr.mxu0 0.0
  %2872 = vmatpush1.msra.mxu0 0.0
  %2873 = vmatprep.subr.mxu0 0.0
  %2874 = vmatpush1.msra.mxu0 %v1880
  %2875 = vmatprep.subr.mxu0 0.0
  %2876 = vmatpush1.msra.mxu0 %v1879
  %2877 = vmatprep.subr.mxu0 0.0
  %2878 = vmatpush1.msra.mxu0 %v1878
  %2879 = vmatprep.subr.mxu0 0.0
  %2880 = vmatpush1.msra.mxu0 %v1877
  %2881 = vmatprep.subr.mxu0 0.0
  %2882 = vmatpush2.msra.mxu0 0.0
  %2883 = vmatprep.subr.mxu0 0.0
  %2884 = vmatpush2.msra.mxu0 0.0
  %2885 = vmatprep.subr.mxu0 0.0
  %2886 = vmatpush2.msra.mxu0 0.0
  %2887 = vmatprep.subr.mxu0 0.0
  %2888 = vmatpush2.msra.mxu0 0.0
  %2889 = vmatprep.subr.mxu0 0.0
  %2890 = vmatpush2.msra.mxu0 0.0
  %2891 = vmatprep.subr.mxu0 0.0
  %2892 = vmatpush2.msra.mxu0 0.0
  %2893 = vmatprep.subr.mxu0 0.0
  %2894 = vmatpush2.msra.mxu0 0.0
  %2895 = vmatprep.subr.mxu0 0.0
  %2896 = vmatpush2.msra.mxu0 0.0
  %2897 = vmatprep.subr.mxu0 0.0
  %2898 = vmatpush2.msra.mxu0 0.0
  %2899 = vmatprep.subr.mxu0 0.0
  %2900 = vmatpush2.msra.mxu0 0.0
  %2901 = vmatprep.subr.mxu0 0.0
  %2902 = vmatpush2.msra.mxu0 0.0
  %2903 = vmatprep.subr.mxu0 0.0
  %2904 = vmatpush2.msra.mxu0 0.0
  %2905 = vmatprep.subr.mxu0 0.0
  %2906 = vmatpush2.msra.mxu0 0.0
  %2907 = vmatprep.subr.mxu0 0.0
  %2908 = vmatpush2.msra.mxu0 0.0
  %2909 = vmatprep.subr.mxu0 0.0
  %2910 = vmatpush2.msra.mxu0 0.0
  %2911 = vmatprep.subr.mxu0 0.0
  %2912 = vmatpush2.msra.mxu0 0.0
  %2913 = vmatprep.mubr.f32.mxu0 0.0
  %2914 = vmatmul.mubr.f32.gmra.mxu0 %v2847
  %v2915 = vpop.f32.mrf.mxu0
  %v2916 = vadd.f32 %v1893, %v2915
  %v2917 = vpop.f32.mrf.mxu0
  %2918 = vdwg.mxu0
  %v2919 = vadd.f32 %v2916, %v2039
  %v2920 = vxor.u32 %v2919, 2147483648
  %v2921 = vmul.f32 %v2920, 1.442695
  %v2922 = vpow.pop %v2921
  %v2923 = vadd.f32 %v2922, 1.0
  %v2924 = vrcp.pop %v2923
  %v2925 = vmul.f32 1.0, %v2924
  %v2926 = vtanh.pop %v2919
  %v2927 = vmul.f32 %v2925, 0.0
  %2929 = vrot.lane.b32.xlu0 %v2926, 64
  %v2930 = vpop.permute.xlu0 %2929
  %v2932 = vmul.f32 %v2925, %v2930
  %2934 = vrot.lane.b32.xlu0 %v2932, 32
  %v2935 = vpop.permute.xlu0 %2934
  %v2937 = vadd.f32 %v2927, %v2935
  %v2938 = vtanh.pop %v2937
  %2940 = vrot.lane.b32.xlu0 %v2938, 64
  %v2941 = vpop.permute.xlu0 %2940
  %v2943 = vmul.f32 %v2925, %v2941
  %2945 = vrot.lane.b32.xlu0 %v2943, 32
  %v2946 = vpop.permute.xlu0 %2945
  %2948 = vst.msk [vmem:[#allocation2 + $0x18] sm:$0x80] %vm996, %v2946
  %v2949 = vrot.slane %v2943, 7
  %2950 = vrot.lane.b32.xlu0 %v2949, 32
  %v2951 = vpop.permute.xlu0 %2950
  %v2952 = vsel %vm39, %v2951, 0
  %2954 = vmatprep.subr.mxu0 0.0
  %2955 = vmatpush1.msra.mxu0 0.0
  %2956 = vmatprep.subr.mxu0 0.0
  %2957 = vmatpush1.msra.mxu0 0.0
  %2958 = vmatprep.subr.mxu0 0.0
  %2959 = vmatpush1.msra.mxu0 0.0
  %2960 = vmatprep.subr.mxu0 0.0
  %2961 = vmatpush1.msra.mxu0 0.0
  %2962 = vmatprep.subr.mxu0 0.0
  %2963 = vmatpush1.msra.mxu0 0.0
  %2964 = vmatprep.subr.mxu0 0.0
  %2965 = vmatpush1.msra.mxu0 0.0
  %2966 = vmatprep.subr.mxu0 0.0
  %2967 = vmatpush1.msra.mxu0 0.0
  %2968 = vmatprep.subr.mxu0 0.0
  %2969 = vmatpush1.msra.mxu0 0.0
  %2970 = vmatprep.subr.mxu0 0.0
  %2971 = vmatpush1.msra.mxu0 0.0
  %2972 = vmatprep.subr.mxu0 0.0
  %2973 = vmatpush1.msra.mxu0 0.0
  %2974 = vmatprep.subr.mxu0 0.0
  %2975 = vmatpush1.msra.mxu0 0.0
  %2976 = vmatprep.subr.mxu0 0.0
  %2977 = vmatpush1.msra.mxu0 0.0
  %2978 = vmatprep.subr.mxu0 0.0
  %2979 = vmatpush1.msra.mxu0 %v1885
  %2980 = vmatprep.subr.mxu0 0.0
  %2981 = vmatpush1.msra.mxu0 %v1884
  %2982 = vmatprep.subr.mxu0 0.0
  %2983 = vmatpush1.msra.mxu0 %v1883
  %2984 = vmatprep.subr.mxu0 0.0
  %2985 = vmatpush1.msra.mxu0 %v1882
  %2986 = vmatprep.subr.mxu0 0.0
  %2987 = vmatpush2.msra.mxu0 0.0
  %2988 = vmatprep.subr.mxu0 0.0
  %2989 = vmatpush2.msra.mxu0 0.0
  %2990 = vmatprep.subr.mxu0 0.0
  %2991 = vmatpush2.msra.mxu0 0.0
  %2992 = vmatprep.subr.mxu0 0.0
  %2993 = vmatpush2.msra.mxu0 0.0
  %2994 = vmatprep.subr.mxu0 0.0
  %2995 = vmatpush2.msra.mxu0 0.0
  %2996 = vmatprep.subr.mxu0 0.0
  %2997 = vmatpush2.msra.mxu0 0.0
  %2998 = vmatprep.subr.mxu0 0.0
  %2999 = vmatpush2.msra.mxu0 0.0
  %3000 = vmatprep.subr.mxu0 0.0
  %3001 = vmatpush2.msra.mxu0 0.0
  %3002 = vmatprep.subr.mxu0 0.0
  %3003 = vmatpush2.msra.mxu0 0.0
  %3004 = vmatprep.subr.mxu0 0.0
  %3005 = vmatpush2.msra.mxu0 0.0
  %3006 = vmatprep.subr.mxu0 0.0
  %3007 = vmatpush2.msra.mxu0 0.0
  %3008 = vmatprep.subr.mxu0 0.0
  %3009 = vmatpush2.msra.mxu0 0.0
  %3010 = vmatprep.subr.mxu0 0.0
  %3011 = vmatpush2.msra.mxu0 0.0
  %3012 = vmatprep.subr.mxu0 0.0
  %3013 = vmatpush2.msra.mxu0 0.0
  %3014 = vmatprep.subr.mxu0 0.0
  %3015 = vmatpush2.msra.mxu0 0.0
  %3016 = vmatprep.subr.mxu0 0.0
  %3017 = vmatpush2.msra.mxu0 0.0
  %3018 = vmatprep.mubr.f32.mxu0 0.0
  %3019 = vmatmul.mubr.f32.gmra.mxu0 %v2952
  %v3020 = vpop.f32.mrf.mxu0
  %v3021 = vadd.f32 0.0, %v3020
  %v3022 = vpop.f32.mrf.mxu0
  %3023 = vdwg.mxu0
  %v3025 = vrot.slane %v3021, 2
  %v3027 = vadd.f32 %v2916, %v3025
  %v3028 = vxor.u32 %v3027, 2147483648
  %v3029 = vmul.f32 %v3028, 1.442695
  %v3030 = vpow.pop %v3029
  %v3031 = vadd.f32 %v3030, 1.0
  %v3032 = vrcp.pop %v3031
  %v3033 = vmul.f32 1.0, %v3032
  %v3034 = vtanh.pop %v3027
  %v3036 = vrot.slane %v2937, 1
  %v3038 = vmul.f32 %v3033, %v3036
  %3040 = vrot.lane.b32.xlu0 %v3034, 64
  %v3041 = vpop.permute.xlu0 %3040
  %v3043 = vmul.f32 %v3033, %v3041
  %3045 = vrot.lane.b32.xlu0 %v3043, 32
  %v3046 = vpop.permute.xlu0 %3045
  %v3048 = vadd.f32 %v3038, %v3046
  %v3049 = vtanh.pop %v3048
  %3051 = vrot.lane.b32.xlu0 %v3049, 64
  %v3052 = vpop.permute.xlu0 %3051
  %v3054 = vmul.f32 %v3033, %v3052
  %3056 = vrot.lane.b32.xlu0 %v3054, 32
  %v3057 = vpop.permute.xlu0 %3056
  %3059 = vst.msk [vmem:[#allocation2 + $0x18] sm:$0x40] %vm884, %v3057
  %v3060 = vrot.slane %v3054, 6
  %3061 = vrot.lane.b32.xlu0 %v3060, 32
  %v3062 = vpop.permute.xlu0 %3061
  %v3063 = vsel %vm39, %v3062, 0
  %3065 = vmatprep.subr.mxu0 0.0
  %3066 = vmatpush1.msra.mxu0 0.0
  %3067 = vmatprep.subr.mxu0 0.0
  %3068 = vmatpush1.msra.mxu0 0.0
  %3069 = vmatprep.subr.mxu0 0.0
  %3070 = vmatpush1.msra.mxu0 0.0
  %3071 = vmatprep.subr.mxu0 0.0
  %3072 = vmatpush1.msra.mxu0 0.0
  %3073 = vmatprep.subr.mxu0 0.0
  %3074 = vmatpush1.msra.mxu0 0.0
  %3075 = vmatprep.subr.mxu0 0.0
  %3076 = vmatpush1.msra.mxu0 0.0
  %3077 = vmatprep.subr.mxu0 0.0
  %3078 = vmatpush1.msra.mxu0 0.0
  %3079 = vmatprep.subr.mxu0 0.0
  %3080 = vmatpush1.msra.mxu0 0.0
  %3081 = vmatprep.subr.mxu0 0.0
  %3082 = vmatpush1.msra.mxu0 0.0
  %3083 = vmatprep.subr.mxu0 0.0
  %3084 = vmatpush1.msra.mxu0 0.0
  %3085 = vmatprep.subr.mxu0 0.0
  %3086 = vmatpush1.msra.mxu0 0.0
  %3087 = vmatprep.subr.mxu0 0.0
  %3088 = vmatpush1.msra.mxu0 0.0
  %3089 = vmatprep.subr.mxu0 0.0
  %3090 = vmatpush1.msra.mxu0 %v1885
  %3091 = vmatprep.subr.mxu0 0.0
  %3092 = vmatpush1.msra.mxu0 %v1884
  %3093 = vmatprep.subr.mxu0 0.0
  %3094 = vmatpush1.msra.mxu0 %v1883
  %3095 = vmatprep.subr.mxu0 0.0
  %3096 = vmatpush1.msra.mxu0 %v1882
  %3097 = vmatprep.subr.mxu0 0.0
  %3098 = vmatpush2.msra.mxu0 0.0
  %3099 = vmatprep.subr.mxu0 0.0
  %3100 = vmatpush2.msra.mxu0 0.0
  %3101 = vmatprep.subr.mxu0 0.0
  %3102 = vmatpush2.msra.mxu0 0.0
  %3103 = vmatprep.subr.mxu0 0.0
  %3104 = vmatpush2.msra.mxu0 0.0
  %3105 = vmatprep.subr.mxu0 0.0
  %3106 = vmatpush2.msra.mxu0 0.0
  %3107 = vmatprep.subr.mxu0 0.0
  %3108 = vmatpush2.msra.mxu0 0.0
  %3109 = vmatprep.subr.mxu0 0.0
  %3110 = vmatpush2.msra.mxu0 0.0
  %3111 = vmatprep.subr.mxu0 0.0
  %3112 = vmatpush2.msra.mxu0 0.0
  %3113 = vmatprep.subr.mxu0 0.0
  %3114 = vmatpush2.msra.mxu0 0.0
  %3115 = vmatprep.subr.mxu0 0.0
  %3116 = vmatpush2.msra.mxu0 0.0
  %3117 = vmatprep.subr.mxu0 0.0
  %3118 = vmatpush2.msra.mxu0 0.0
  %3119 = vmatprep.subr.mxu0 0.0
  %3120 = vmatpush2.msra.mxu0 0.0
  %3121 = vmatprep.subr.mxu0 0.0
  %3122 = vmatpush2.msra.mxu0 0.0
  %3123 = vmatprep.subr.mxu0 0.0
  %3124 = vmatpush2.msra.mxu0 0.0
  %3125 = vmatprep.subr.mxu0 0.0
  %3126 = vmatpush2.msra.mxu0 0.0
  %3127 = vmatprep.subr.mxu0 0.0
  %3128 = vmatpush2.msra.mxu0 0.0
  %3129 = vmatprep.mubr.f32.mxu0 0.0
  %3130 = vmatmul.mubr.f32.gmra.mxu0 %v3063
  %v3131 = vpop.f32.mrf.mxu0
  %v3132 = vadd.f32 0.0, %v3131
  %v3133 = vpop.f32.mrf.mxu0
  %3134 = vdwg.mxu0
  %v3136 = vrot.slane %v3132, 3
  %v3138 = vadd.f32 %v2916, %v3136
  %v3139 = vxor.u32 %v3138, 2147483648
  %v3140 = vmul.f32 %v3139, 1.442695
  %v3141 = vpow.pop %v3140
  %v3142 = vadd.f32 %v3141, 1.0
  %v3143 = vrcp.pop %v3142
  %v3144 = vmul.f32 1.0, %v3143
  %v3145 = vtanh.pop %v3138
  %v3147 = vrot.slane %v3048, 1
  %v3149 = vmul.f32 %v3144, %v3147
  %3151 = vrot.lane.b32.xlu0 %v3145, 64
  %v3152 = vpop.permute.xlu0 %3151
  %v3154 = vmul.f32 %v3144, %v3152
  %3156 = vrot.lane.b32.xlu0 %v3154, 32
  %v3157 = vpop.permute.xlu0 %3156
  %v3159 = vadd.f32 %v3149, %v3157
  %v3160 = vtanh.pop %v3159
  %3162 = vrot.lane.b32.xlu0 %v3160, 64
  %v3163 = vpop.permute.xlu0 %3162
  %v3165 = vmul.f32 %v3144, %v3163
  %3167 = vrot.lane.b32.xlu0 %v3165, 32
  %v3168 = vpop.permute.xlu0 %3167
  %3170 = vst.msk [vmem:[#allocation2 + $0x18] sm:$0x20] %vm772, %v3168
  %v3171 = vrot.slane %v3165, 5
  %3172 = vrot.lane.b32.xlu0 %v3171, 32
  %v3173 = vpop.permute.xlu0 %3172
  %v3174 = vsel %vm39, %v3173, 0
  %3176 = vmatprep.subr.mxu0 0.0
  %3177 = vmatpush1.msra.mxu0 0.0
  %3178 = vmatprep.subr.mxu0 0.0
  %3179 = vmatpush1.msra.mxu0 0.0
  %3180 = vmatprep.subr.mxu0 0.0
  %3181 = vmatpush1.msra.mxu0 0.0
  %3182 = vmatprep.subr.mxu0 0.0
  %3183 = vmatpush1.msra.mxu0 0.0
  %3184 = vmatprep.subr.mxu0 0.0
  %3185 = vmatpush1.msra.mxu0 0.0
  %3186 = vmatprep.subr.mxu0 0.0
  %3187 = vmatpush1.msra.mxu0 0.0
  %3188 = vmatprep.subr.mxu0 0.0
  %3189 = vmatpush1.msra.mxu0 0.0
  %3190 = vmatprep.subr.mxu0 0.0
  %3191 = vmatpush1.msra.mxu0 0.0
  %3192 = vmatprep.subr.mxu0 0.0
  %3193 = vmatpush1.msra.mxu0 0.0
  %3194 = vmatprep.subr.mxu0 0.0
  %3195 = vmatpush1.msra.mxu0 0.0
  %3196 = vmatprep.subr.mxu0 0.0
  %3197 = vmatpush1.msra.mxu0 0.0
  %3198 = vmatprep.subr.mxu0 0.0
  %3199 = vmatpush1.msra.mxu0 0.0
  %3200 = vmatprep.subr.mxu0 0.0
  %3201 = vmatpush1.msra.mxu0 %v1885
  %3202 = vmatprep.subr.mxu0 0.0
  %3203 = vmatpush1.msra.mxu0 %v1884
  %3204 = vmatprep.subr.mxu0 0.0
  %3205 = vmatpush1.msra.mxu0 %v1883
  %3206 = vmatprep.subr.mxu0 0.0
  %3207 = vmatpush1.msra.mxu0 %v1882
  %3208 = vmatprep.subr.mxu0 0.0
  %3209 = vmatpush2.msra.mxu0 0.0
  %3210 = vmatprep.subr.mxu0 0.0
  %3211 = vmatpush2.msra.mxu0 0.0
  %3212 = vmatprep.subr.mxu0 0.0
  %3213 = vmatpush2.msra.mxu0 0.0
  %3214 = vmatprep.subr.mxu0 0.0
  %3215 = vmatpush2.msra.mxu0 0.0
  %3216 = vmatprep.subr.mxu0 0.0
  %3217 = vmatpush2.msra.mxu0 0.0
  %3218 = vmatprep.subr.mxu0 0.0
  %3219 = vmatpush2.msra.mxu0 0.0
  %3220 = vmatprep.subr.mxu0 0.0
  %3221 = vmatpush2.msra.mxu0 0.0
  %3222 = vmatprep.subr.mxu0 0.0
  %3223 = vmatpush2.msra.mxu0 0.0
  %3224 = vmatprep.subr.mxu0 0.0
  %3225 = vmatpush2.msra.mxu0 0.0
  %3226 = vmatprep.subr.mxu0 0.0
  %3227 = vmatpush2.msra.mxu0 0.0
  %3228 = vmatprep.subr.mxu0 0.0
  %3229 = vmatpush2.msra.mxu0 0.0
  %3230 = vmatprep.subr.mxu0 0.0
  %3231 = vmatpush2.msra.mxu0 0.0
  %3232 = vmatprep.subr.mxu0 0.0
  %3233 = vmatpush2.msra.mxu0 0.0
  %3234 = vmatprep.subr.mxu0 0.0
  %3235 = vmatpush2.msra.mxu0 0.0
  %3236 = vmatprep.subr.mxu0 0.0
  %3237 = vmatpush2.msra.mxu0 0.0
  %3238 = vmatprep.subr.mxu0 0.0
  %3239 = vmatpush2.msra.mxu0 0.0
  %3240 = vmatprep.mubr.f32.mxu0 0.0
  %3241 = vmatmul.mubr.f32.gmra.mxu0 %v3174
  %v3242 = vpop.f32.mrf.mxu0
  %v3243 = vadd.f32 0.0, %v3242
  %v3244 = vpop.f32.mrf.mxu0
  %3245 = vdwg.mxu0
  %v3247 = vrot.slane %v3243, 4
  %v3249 = vadd.f32 %v2916, %v3247
  %v3250 = vxor.u32 %v3249, 2147483648
  %v3251 = vmul.f32 %v3250, 1.442695
  %v3252 = vpow.pop %v3251
  %v3253 = vadd.f32 %v3252, 1.0
  %v3254 = vrcp.pop %v3253
  %v3255 = vmul.f32 1.0, %v3254
  %v3256 = vtanh.pop %v3249
  %v3258 = vrot.slane %v3159, 1
  %v3260 = vmul.f32 %v3255, %v3258
  %3262 = vrot.lane.b32.xlu0 %v3256, 64
  %v3263 = vpop.permute.xlu0 %3262
  %v3265 = vmul.f32 %v3255, %v3263
  %3267 = vrot.lane.b32.xlu0 %v3265, 32
  %v3268 = vpop.permute.xlu0 %3267
  %v3270 = vadd.f32 %v3260, %v3268
  %v3271 = vtanh.pop %v3270
  %3273 = vrot.lane.b32.xlu0 %v3271, 64
  %v3274 = vpop.permute.xlu0 %3273
  %v3276 = vmul.f32 %v3255, %v3274
  %3278 = vrot.lane.b32.xlu0 %v3276, 32
  %v3279 = vpop.permute.xlu0 %3278
  %3281 = vst.msk [vmem:[#allocation2 + $0x18] sm:$0x10] %vm660, %v3279
  %v3282 = vrot.slane %v3276, 4
  %3283 = vrot.lane.b32.xlu0 %v3282, 32
  %v3284 = vpop.permute.xlu0 %3283
  %v3285 = vsel %vm39, %v3284, 0
  %3287 = vmatprep.subr.mxu0 0.0
  %3288 = vmatpush1.msra.mxu0 0.0
  %3289 = vmatprep.subr.mxu0 0.0
  %3290 = vmatpush1.msra.mxu0 0.0
  %3291 = vmatprep.subr.mxu0 0.0
  %3292 = vmatpush1.msra.mxu0 0.0
  %3293 = vmatprep.subr.mxu0 0.0
  %3294 = vmatpush1.msra.mxu0 0.0
  %3295 = vmatprep.subr.mxu0 0.0
  %3296 = vmatpush1.msra.mxu0 0.0
  %3297 = vmatprep.subr.mxu0 0.0
  %3298 = vmatpush1.msra.mxu0 0.0
  %3299 = vmatprep.subr.mxu0 0.0
  %3300 = vmatpush1.msra.mxu0 0.0
  %3301 = vmatprep.subr.mxu0 0.0
  %3302 = vmatpush1.msra.mxu0 0.0
  %3303 = vmatprep.subr.mxu0 0.0
  %3304 = vmatpush1.msra.mxu0 0.0
  %3305 = vmatprep.subr.mxu0 0.0
  %3306 = vmatpush1.msra.mxu0 0.0
  %3307 = vmatprep.subr.mxu0 0.0
  %3308 = vmatpush1.msra.mxu0 0.0
  %3309 = vmatprep.subr.mxu0 0.0
  %3310 = vmatpush1.msra.mxu0 0.0
  %3311 = vmatprep.subr.mxu0 0.0
  %3312 = vmatpush1.msra.mxu0 %v1885
  %3313 = vmatprep.subr.mxu0 0.0
  %3314 = vmatpush1.msra.mxu0 %v1884
  %3315 = vmatprep.subr.mxu0 0.0
  %3316 = vmatpush1.msra.mxu0 %v1883
  %3317 = vmatprep.subr.mxu0 0.0
  %3318 = vmatpush1.msra.mxu0 %v1882
  %3319 = vmatprep.subr.mxu0 0.0
  %3320 = vmatpush2.msra.mxu0 0.0
  %3321 = vmatprep.subr.mxu0 0.0
  %3322 = vmatpush2.msra.mxu0 0.0
  %3323 = vmatprep.subr.mxu0 0.0
  %3324 = vmatpush2.msra.mxu0 0.0
  %3325 = vmatprep.subr.mxu0 0.0
  %3326 = vmatpush2.msra.mxu0 0.0
  %3327 = vmatprep.subr.mxu0 0.0
  %3328 = vmatpush2.msra.mxu0 0.0
  %3329 = vmatprep.subr.mxu0 0.0
  %3330 = vmatpush2.msra.mxu0 0.0
  %3331 = vmatprep.subr.mxu0 0.0
  %3332 = vmatpush2.msra.mxu0 0.0
  %3333 = vmatprep.subr.mxu0 0.0
  %3334 = vmatpush2.msra.mxu0 0.0
  %3335 = vmatprep.subr.mxu0 0.0
  %3336 = vmatpush2.msra.mxu0 0.0
  %3337 = vmatprep.subr.mxu0 0.0
  %3338 = vmatpush2.msra.mxu0 0.0
  %3339 = vmatprep.subr.mxu0 0.0
  %3340 = vmatpush2.msra.mxu0 0.0
  %3341 = vmatprep.subr.mxu0 0.0
  %3342 = vmatpush2.msra.mxu0 0.0
  %3343 = vmatprep.subr.mxu0 0.0
  %3344 = vmatpush2.msra.mxu0 0.0
  %3345 = vmatprep.subr.mxu0 0.0
  %3346 = vmatpush2.msra.mxu0 0.0
  %3347 = vmatprep.subr.mxu0 0.0
  %3348 = vmatpush2.msra.mxu0 0.0
  %3349 = vmatprep.subr.mxu0 0.0
  %3350 = vmatpush2.msra.mxu0 0.0
  %3351 = vmatprep.mubr.f32.mxu0 0.0
  %3352 = vmatmul.mubr.f32.gmra.mxu0 %v3285
  %v3353 = vpop.f32.mrf.mxu0
  %v3354 = vadd.f32 0.0, %v3353
  %v3355 = vpop.f32.mrf.mxu0
  %3356 = vdwg.mxu0
  %v3358 = vrot.slane %v3354, 5
  %v3360 = vadd.f32 %v2916, %v3358
  %v3361 = vxor.u32 %v3360, 2147483648
  %v3362 = vmul.f32 %v3361, 1.442695
  %v3363 = vpow.pop %v3362
  %v3364 = vadd.f32 %v3363, 1.0
  %v3365 = vrcp.pop %v3364
  %v3366 = vmul.f32 1.0, %v3365
  %v3367 = vtanh.pop %v3360
  %v3369 = vrot.slane %v3270, 1
  %v3371 = vmul.f32 %v3366, %v3369
  %3373 = vrot.lane.b32.xlu0 %v3367, 64
  %v3374 = vpop.permute.xlu0 %3373
  %v3376 = vmul.f32 %v3366, %v3374
  %3378 = vrot.lane.b32.xlu0 %v3376, 32
  %v3379 = vpop.permute.xlu0 %3378
  %v3381 = vadd.f32 %v3371, %v3379
  %v3382 = vtanh.pop %v3381
  %3384 = vrot.lane.b32.xlu0 %v3382, 64
  %v3385 = vpop.permute.xlu0 %3384
  %v3387 = vmul.f32 %v3366, %v3385
  %3389 = vrot.lane.b32.xlu0 %v3387, 32
  %v3390 = vpop.permute.xlu0 %3389
  %3392 = vst.msk [vmem:[#allocation2 + $0x18] sm:$0x8] %vm548, %v3390
  %v3393 = vrot.slane %v3387, 3
  %3394 = vrot.lane.b32.xlu0 %v3393, 32
  %v3395 = vpop.permute.xlu0 %3394
  %v3396 = vsel %vm39, %v3395, 0
  %3398 = vmatprep.subr.mxu0 0.0
  %3399 = vmatpush1.msra.mxu0 0.0
  %3400 = vmatprep.subr.mxu0 0.0
  %3401 = vmatpush1.msra.mxu0 0.0
  %3402 = vmatprep.subr.mxu0 0.0
  %3403 = vmatpush1.msra.mxu0 0.0
  %3404 = vmatprep.subr.mxu0 0.0
  %3405 = vmatpush1.msra.mxu0 0.0
  %3406 = vmatprep.subr.mxu0 0.0
  %3407 = vmatpush1.msra.mxu0 0.0
  %3408 = vmatprep.subr.mxu0 0.0
  %3409 = vmatpush1.msra.mxu0 0.0
  %3410 = vmatprep.subr.mxu0 0.0
  %3411 = vmatpush1.msra.mxu0 0.0
  %3412 = vmatprep.subr.mxu0 0.0
  %3413 = vmatpush1.msra.mxu0 0.0
  %3414 = vmatprep.subr.mxu0 0.0
  %3415 = vmatpush1.msra.mxu0 0.0
  %3416 = vmatprep.subr.mxu0 0.0
  %3417 = vmatpush1.msra.mxu0 0.0
  %3418 = vmatprep.subr.mxu0 0.0
  %3419 = vmatpush1.msra.mxu0 0.0
  %3420 = vmatprep.subr.mxu0 0.0
  %3421 = vmatpush1.msra.mxu0 0.0
  %3422 = vmatprep.subr.mxu0 0.0
  %3423 = vmatpush1.msra.mxu0 %v1885
  %3424 = vmatprep.subr.mxu0 0.0
  %3425 = vmatpush1.msra.mxu0 %v1884
  %3426 = vmatprep.subr.mxu0 0.0
  %3427 = vmatpush1.msra.mxu0 %v1883
  %3428 = vmatprep.subr.mxu0 0.0
  %3429 = vmatpush1.msra.mxu0 %v1882
  %3430 = vmatprep.subr.mxu0 0.0
  %3431 = vmatpush2.msra.mxu0 0.0
  %3432 = vmatprep.subr.mxu0 0.0
  %3433 = vmatpush2.msra.mxu0 0.0
  %3434 = vmatprep.subr.mxu0 0.0
  %3435 = vmatpush2.msra.mxu0 0.0
  %3436 = vmatprep.subr.mxu0 0.0
  %3437 = vmatpush2.msra.mxu0 0.0
  %3438 = vmatprep.subr.mxu0 0.0
  %3439 = vmatpush2.msra.mxu0 0.0
  %3440 = vmatprep.subr.mxu0 0.0
  %3441 = vmatpush2.msra.mxu0 0.0
  %3442 = vmatprep.subr.mxu0 0.0
  %3443 = vmatpush2.msra.mxu0 0.0
  %3444 = vmatprep.subr.mxu0 0.0
  %3445 = vmatpush2.msra.mxu0 0.0
  %3446 = vmatprep.subr.mxu0 0.0
  %3447 = vmatpush2.msra.mxu0 0.0
  %3448 = vmatprep.subr.mxu0 0.0
  %3449 = vmatpush2.msra.mxu0 0.0
  %3450 = vmatprep.subr.mxu0 0.0
  %3451 = vmatpush2.msra.mxu0 0.0
  %3452 = vmatprep.subr.mxu0 0.0
  %3453 = vmatpush2.msra.mxu0 0.0
  %3454 = vmatprep.subr.mxu0 0.0
  %3455 = vmatpush2.msra.mxu0 0.0
  %3456 = vmatprep.subr.mxu0 0.0
  %3457 = vmatpush2.msra.mxu0 0.0
  %3458 = vmatprep.subr.mxu0 0.0
  %3459 = vmatpush2.msra.mxu0 0.0
  %3460 = vmatprep.subr.mxu0 0.0
  %3461 = vmatpush2.msra.mxu0 0.0
  %3462 = vmatprep.mubr.f32.mxu0 0.0
  %3463 = vmatmul.mubr.f32.gmra.mxu0 %v3396
  %v3464 = vpop.f32.mrf.mxu0
  %v3465 = vadd.f32 0.0, %v3464
  %v3466 = vpop.f32.mrf.mxu0
  %3467 = vdwg.mxu0
  %v3469 = vrot.slane %v3465, 6
  %v3471 = vadd.f32 %v2916, %v3469
  %v3472 = vxor.u32 %v3471, 2147483648
  %v3473 = vmul.f32 %v3472, 1.442695
  %v3474 = vpow.pop %v3473
  %v3475 = vadd.f32 %v3474, 1.0
  %v3476 = vrcp.pop %v3475
  %v3477 = vmul.f32 1.0, %v3476
  %v3478 = vtanh.pop %v3471
  %v3480 = vrot.slane %v3381, 1
  %v3482 = vmul.f32 %v3477, %v3480
  %3484 = vrot.lane.b32.xlu0 %v3478, 64
  %v3485 = vpop.permute.xlu0 %3484
  %v3487 = vmul.f32 %v3477, %v3485
  %3489 = vrot.lane.b32.xlu0 %v3487, 32
  %v3490 = vpop.permute.xlu0 %3489
  %v3492 = vadd.f32 %v3482, %v3490
  %v3493 = vtanh.pop %v3492
  %3495 = vrot.lane.b32.xlu0 %v3493, 64
  %v3496 = vpop.permute.xlu0 %3495
  %v3498 = vmul.f32 %v3477, %v3496
  %3500 = vrot.lane.b32.xlu0 %v3498, 32
  %v3501 = vpop.permute.xlu0 %3500
  %3503 = vst.msk [vmem:[#allocation2 + $0x18] sm:$0x4] %vm436, %v3501
  %v3504 = vrot.slane %v3498, 2
  %3505 = vrot.lane.b32.xlu0 %v3504, 32
  %v3506 = vpop.permute.xlu0 %3505
  %v3507 = vsel %vm39, %v3506, 0
  %3509 = vmatprep.subr.mxu0 0.0
  %3510 = vmatpush1.msra.mxu0 0.0
  %3511 = vmatprep.subr.mxu0 0.0
  %3512 = vmatpush1.msra.mxu0 0.0
  %3513 = vmatprep.subr.mxu0 0.0
  %3514 = vmatpush1.msra.mxu0 0.0
  %3515 = vmatprep.subr.mxu0 0.0
  %3516 = vmatpush1.msra.mxu0 0.0
  %3517 = vmatprep.subr.mxu0 0.0
  %3518 = vmatpush1.msra.mxu0 0.0
  %3519 = vmatprep.subr.mxu0 0.0
  %3520 = vmatpush1.msra.mxu0 0.0
  %3521 = vmatprep.subr.mxu0 0.0
  %3522 = vmatpush1.msra.mxu0 0.0
  %3523 = vmatprep.subr.mxu0 0.0
  %3524 = vmatpush1.msra.mxu0 0.0
  %3525 = vmatprep.subr.mxu0 0.0
  %3526 = vmatpush1.msra.mxu0 0.0
  %3527 = vmatprep.subr.mxu0 0.0
  %3528 = vmatpush1.msra.mxu0 0.0
  %3529 = vmatprep.subr.mxu0 0.0
  %3530 = vmatpush1.msra.mxu0 0.0
  %3531 = vmatprep.subr.mxu0 0.0
  %3532 = vmatpush1.msra.mxu0 0.0
  %3533 = vmatprep.subr.mxu0 0.0
  %3534 = vmatpush1.msra.mxu0 %v1885
  %3535 = vmatprep.subr.mxu0 0.0
  %3536 = vmatpush1.msra.mxu0 %v1884
  %3537 = vmatprep.subr.mxu0 0.0
  %3538 = vmatpush1.msra.mxu0 %v1883
  %3539 = vmatprep.subr.mxu0 0.0
  %3540 = vmatpush1.msra.mxu0 %v1882
  %3541 = vmatprep.subr.mxu0 0.0
  %3542 = vmatpush2.msra.mxu0 0.0
  %3543 = vmatprep.subr.mxu0 0.0
  %3544 = vmatpush2.msra.mxu0 0.0
  %3545 = vmatprep.subr.mxu0 0.0
  %3546 = vmatpush2.msra.mxu0 0.0
  %3547 = vmatprep.subr.mxu0 0.0
  %3548 = vmatpush2.msra.mxu0 0.0
  %3549 = vmatprep.subr.mxu0 0.0
  %3550 = vmatpush2.msra.mxu0 0.0
  %3551 = vmatprep.subr.mxu0 0.0
  %3552 = vmatpush2.msra.mxu0 0.0
  %3553 = vmatprep.subr.mxu0 0.0
  %3554 = vmatpush2.msra.mxu0 0.0
  %3555 = vmatprep.subr.mxu0 0.0
  %3556 = vmatpush2.msra.mxu0 0.0
  %3557 = vmatprep.subr.mxu0 0.0
  %3558 = vmatpush2.msra.mxu0 0.0
  %3559 = vmatprep.subr.mxu0 0.0
  %3560 = vmatpush2.msra.mxu0 0.0
  %3561 = vmatprep.subr.mxu0 0.0
  %3562 = vmatpush2.msra.mxu0 0.0
  %3563 = vmatprep.subr.mxu0 0.0
  %3564 = vmatpush2.msra.mxu0 0.0
  %3565 = vmatprep.subr.mxu0 0.0
  %3566 = vmatpush2.msra.mxu0 0.0
  %3567 = vmatprep.subr.mxu0 0.0
  %3568 = vmatpush2.msra.mxu0 0.0
  %3569 = vmatprep.subr.mxu0 0.0
  %3570 = vmatpush2.msra.mxu0 0.0
  %3571 = vmatprep.subr.mxu0 0.0
  %3572 = vmatpush2.msra.mxu0 0.0
  %3573 = vmatprep.mubr.f32.mxu0 0.0
  %3574 = vmatmul.mubr.f32.gmra.mxu0 %v3507
  %v3575 = vpop.f32.mrf.mxu0
  %v3576 = vadd.f32 0.0, %v3575
  %v3577 = vpop.f32.mrf.mxu0
  %3578 = vdwg.mxu0
  %v3580 = vrot.slane %v3576, 7
  %v3582 = vadd.f32 %v2916, %v3580
  %v3583 = vxor.u32 %v3582, 2147483648
  %v3584 = vmul.f32 %v3583, 1.442695
  %v3585 = vpow.pop %v3584
  %v3586 = vadd.f32 %v3585, 1.0
  %v3587 = vrcp.pop %v3586
  %v3588 = vmul.f32 1.0, %v3587
  %v3589 = vtanh.pop %v3582
  %v3591 = vrot.slane %v3492, 1
  %v3593 = vmul.f32 %v3588, %v3591
  %3595 = vrot.lane.b32.xlu0 %v3589, 64
  %v3596 = vpop.permute.xlu0 %3595
  %v3598 = vmul.f32 %v3588, %v3596
  %3600 = vrot.lane.b32.xlu0 %v3598, 32
  %v3601 = vpop.permute.xlu0 %3600
  %v3603 = vadd.f32 %v3593, %v3601
  %v3604 = vtanh.pop %v3603
  %3606 = vrot.lane.b32.xlu0 %v3604, 64
  %v3607 = vpop.permute.xlu0 %3606
  %v3609 = vmul.f32 %v3588, %v3607
  %3611 = vrot.lane.b32.xlu0 %v3609, 32
  %v3612 = vpop.permute.xlu0 %3611
  %3614 = vst.msk [vmem:[#allocation2 + $0x18] sm:$0x2] %vm324, %v3612
  %v3615 = vrot.slane %v3609, 1
  %3616 = vrot.lane.b32.xlu0 %v3615, 32
  %v3617 = vpop.permute.xlu0 %3616
  %v3618 = vsel %vm39, %v3617, 0
  %3620 = vmatprep.subr.mxu0 0.0
  %3621 = vmatpush1.msra.mxu0 0.0
  %3622 = vmatprep.subr.mxu0 0.0
  %3623 = vmatpush1.msra.mxu0 0.0
  %3624 = vmatprep.subr.mxu0 0.0
  %3625 = vmatpush1.msra.mxu0 0.0
  %3626 = vmatprep.subr.mxu0 0.0
  %3627 = vmatpush1.msra.mxu0 0.0
  %3628 = vmatprep.subr.mxu0 0.0
  %3629 = vmatpush1.msra.mxu0 0.0
  %3630 = vmatprep.subr.mxu0 0.0
  %3631 = vmatpush1.msra.mxu0 0.0
  %3632 = vmatprep.subr.mxu0 0.0
  %3633 = vmatpush1.msra.mxu0 0.0
  %3634 = vmatprep.subr.mxu0 0.0
  %3635 = vmatpush1.msra.mxu0 0.0
  %3636 = vmatprep.subr.mxu0 0.0
  %3637 = vmatpush1.msra.mxu0 0.0
  %3638 = vmatprep.subr.mxu0 0.0
  %3639 = vmatpush1.msra.mxu0 0.0
  %3640 = vmatprep.subr.mxu0 0.0
  %3641 = vmatpush1.msra.mxu0 0.0
  %3642 = vmatprep.subr.mxu0 0.0
  %3643 = vmatpush1.msra.mxu0 0.0
  %3644 = vmatprep.subr.mxu0 0.0
  %3645 = vmatpush1.msra.mxu0 %v1885
  %3646 = vmatprep.subr.mxu0 0.0
  %3647 = vmatpush1.msra.mxu0 %v1884
  %3648 = vmatprep.subr.mxu0 0.0
  %3649 = vmatpush1.msra.mxu0 %v1883
  %3650 = vmatprep.subr.mxu0 0.0
  %3651 = vmatpush1.msra.mxu0 %v1882
  %3652 = vmatprep.subr.mxu0 0.0
  %3653 = vmatpush2.msra.mxu0 0.0
  %3654 = vmatprep.subr.mxu0 0.0
  %3655 = vmatpush2.msra.mxu0 0.0
  %3656 = vmatprep.subr.mxu0 0.0
  %3657 = vmatpush2.msra.mxu0 0.0
  %3658 = vmatprep.subr.mxu0 0.0
  %3659 = vmatpush2.msra.mxu0 0.0
  %3660 = vmatprep.subr.mxu0 0.0
  %3661 = vmatpush2.msra.mxu0 0.0
  %3662 = vmatprep.subr.mxu0 0.0
  %3663 = vmatpush2.msra.mxu0 0.0
  %3664 = vmatprep.subr.mxu0 0.0
  %3665 = vmatpush2.msra.mxu0 0.0
  %3666 = vmatprep.subr.mxu0 0.0
  %3667 = vmatpush2.msra.mxu0 0.0
  %3668 = vmatprep.subr.mxu0 0.0
  %3669 = vmatpush2.msra.mxu0 0.0
  %3670 = vmatprep.subr.mxu0 0.0
  %3671 = vmatpush2.msra.mxu0 0.0
  %3672 = vmatprep.subr.mxu0 0.0
  %3673 = vmatpush2.msra.mxu0 0.0
  %3674 = vmatprep.subr.mxu0 0.0
  %3675 = vmatpush2.msra.mxu0 0.0
  %3676 = vmatprep.subr.mxu0 0.0
  %3677 = vmatpush2.msra.mxu0 0.0
  %3678 = vmatprep.subr.mxu0 0.0
  %3679 = vmatpush2.msra.mxu0 0.0
  %3680 = vmatprep.subr.mxu0 0.0
  %3681 = vmatpush2.msra.mxu0 0.0
  %3682 = vmatprep.subr.mxu0 0.0
  %3683 = vmatpush2.msra.mxu0 0.0
  %3684 = vmatprep.mubr.f32.mxu0 0.0
  %3685 = vmatmul.mubr.f32.gmra.mxu0 %v3618
  %v3686 = vpop.f32.mrf.mxu0
  %v3687 = vadd.f32 0.0, %v3686
  %v3688 = vpop.f32.mrf.mxu0
  %3689 = vdwg.mxu0
  %v3690 = vadd.f32 %v2916, %v3687
  %v3691 = vxor.u32 %v3690, 2147483648
  %v3692 = vmul.f32 %v3691, 1.442695
  %v3693 = vpow.pop %v3692
  %v3694 = vadd.f32 %v3693, 1.0
  %v3695 = vrcp.pop %v3694
  %v3696 = vmul.f32 1.0, %v3695
  %v3697 = vtanh.pop %v3690
  %v3699 = vrot.slane %v3603, 1
  %v3701 = vmul.f32 %v3696, %v3699
  %3703 = vrot.lane.b32.xlu0 %v3697, 64
  %v3704 = vpop.permute.xlu0 %3703
  %v3706 = vmul.f32 %v3696, %v3704
  %3708 = vrot.lane.b32.xlu0 %v3706, 32
  %v3709 = vpop.permute.xlu0 %3708
  %v3711 = vadd.f32 %v3701, %v3709
  %v3712 = vtanh.pop %v3711
  %3714 = vrot.lane.b32.xlu0 %v3712, 64
  %v3715 = vpop.permute.xlu0 %3714
  %v3717 = vmul.f32 %v3696, %v3715
  %3719 = vrot.lane.b32.xlu0 %v3717, 32
  %v3720 = vpop.permute.xlu0 %3719
  %3722 = vst.msk [vmem:[#allocation2 + $0x18] sm:$0x1] %vm215, %v3720
  %v3723 = vld [vmem:[#allocation2] sm:$0xff]
  %v3724 = vld [vmem:[#allocation2 + $0x8] sm:$0xff]
  %v3725 = vld [vmem:[#allocation2 + $0x10] sm:$0xff]
  %v3726 = vld [vmem:[#allocation2 + $0x18] sm:$0xff]
  %v3727 = vld [vmem:[%s4] sm:$0xff]
  %v3728 = vld [vmem:[%s4 + $0x8] sm:$0xff]
  %v3729 = vld [vmem:[%s4 + $0x10] sm:$0xff]
  %v3730 = vld [vmem:[%s4 + $0x18] sm:$0xff]
  %v3731 = vld [vmem:[%s4 + $0x20] sm:$0xff]
  %v3732 = vld [vmem:[%s4 + $0x28] sm:$0xff]
  %v3733 = vld [vmem:[%s4 + $0x30] sm:$0xff]
  %v3734 = vld [vmem:[%s4 + $0x38] sm:$0xff]
  %v3736 = vsel %vm39, %v3725, 0
  %v3739 = vsel %vm39, %v3726, 0
  %3741 = vmatprep.subr.mxu0 0.0
  %3742 = vmatpush1.msra.mxu0 0.0
  %3743 = vmatprep.subr.mxu0 0.0
  %3744 = vmatpush1.msra.mxu0 0.0
  %3745 = vmatprep.subr.mxu0 0.0
  %3746 = vmatpush1.msra.mxu0 0.0
  %3747 = vmatprep.subr.mxu0 0.0
  %3748 = vmatpush1.msra.mxu0 0.0
  %3749 = vmatprep.subr.mxu0 0.0
  %3750 = vmatpush1.msra.mxu0 0.0
  %3751 = vmatprep.subr.mxu0 0.0
  %3752 = vmatpush1.msra.mxu0 0.0
  %3753 = vmatprep.subr.mxu0 0.0
  %3754 = vmatpush1.msra.mxu0 0.0
  %3755 = vmatprep.subr.mxu0 0.0
  %3756 = vmatpush1.msra.mxu0 0.0
  %3757 = vmatprep.subr.mxu0 0.0
  %3758 = vmatpush1.msra.mxu0 0.0
  %3759 = vmatprep.subr.mxu0 0.0
  %3760 = vmatpush1.msra.mxu0 0.0
  %3761 = vmatprep.subr.mxu0 0.0
  %3762 = vmatpush1.msra.mxu0 0.0
  %3763 = vmatprep.subr.mxu0 0.0
  %3764 = vmatpush1.msra.mxu0 0.0
  %3765 = vmatprep.subr.mxu0 0.0
  %3766 = vmatpush1.msra.mxu0 %v3734
  %3767 = vmatprep.subr.mxu0 0.0
  %3768 = vmatpush1.msra.mxu0 %v3733
  %3769 = vmatprep.subr.mxu0 0.0
  %3770 = vmatpush1.msra.mxu0 %v3732
  %3771 = vmatprep.subr.mxu0 0.0
  %3772 = vmatpush1.msra.mxu0 %v3731
  %3773 = vmatprep.subr.mxu0 0.0
  %3774 = vmatpush2.msra.mxu0 0.0
  %3775 = vmatprep.subr.mxu0 0.0
  %3776 = vmatpush2.msra.mxu0 0.0
  %3777 = vmatprep.subr.mxu0 0.0
  %3778 = vmatpush2.msra.mxu0 0.0
  %3779 = vmatprep.subr.mxu0 0.0
  %3780 = vmatpush2.msra.mxu0 0.0
  %3781 = vmatprep.subr.mxu0 0.0
  %3782 = vmatpush2.msra.mxu0 0.0
  %3783 = vmatprep.subr.mxu0 0.0
  %3784 = vmatpush2.msra.mxu0 0.0
  %3785 = vmatprep.subr.mxu0 0.0
  %3786 = vmatpush2.msra.mxu0 0.0
  %3787 = vmatprep.subr.mxu0 0.0
  %3788 = vmatpush2.msra.mxu0 0.0
  %3789 = vmatprep.subr.mxu0 0.0
  %3790 = vmatpush2.msra.mxu0 0.0
  %3791 = vmatprep.subr.mxu0 0.0
  %3792 = vmatpush2.msra.mxu0 0.0
  %3793 = vmatprep.subr.mxu0 0.0
  %3794 = vmatpush2.msra.mxu0 0.0
  %3795 = vmatprep.subr.mxu0 0.0
  %3796 = vmatpush2.msra.mxu0 0.0
  %3797 = vmatprep.subr.mxu0 0.0
  %3798 = vmatpush2.msra.mxu0 0.0
  %3799 = vmatprep.subr.mxu0 0.0
  %3800 = vmatpush2.msra.mxu0 0.0
  %3801 = vmatprep.subr.mxu0 0.0
  %3802 = vmatpush2.msra.mxu0 0.0
  %3803 = vmatprep.subr.mxu0 0.0
  %3804 = vmatpush2.msra.mxu0 0.0
  %3805 = vmatprep.mubr.f32.mxu0 0.0
  %3806 = vmatmul.mubr.f32.gmra.mxu0 %v3736
  %v3807 = vpop.f32.mrf.mxu0
  %v3808 = vadd.f32 0.0, %v3807
  %v3809 = vpop.f32.mrf.mxu0
  %3810 = vmatprep.mubr.f32.mxu0 0.0
  %3811 = vmatmul.mubr.f32.gmra.mxu0 %v3739
  %v3812 = vpop.f32.mrf.mxu0
  %v3813 = vadd.f32 0.0, %v3812
  %v3814 = vpop.f32.mrf.mxu0
  %3815 = vdwg.mxu0
  %v3817 = vsel %vm39, %v3723, 0
  %v3820 = vsel %vm39, %v3724, 0
  %3822 = vmatprep.subr.mxu0 0.0
  %3823 = vmatpush1.msra.mxu0 0.0
  %3824 = vmatprep.subr.mxu0 0.0
  %3825 = vmatpush1.msra.mxu0 0.0
  %3826 = vmatprep.subr.mxu0 0.0
  %3827 = vmatpush1.msra.mxu0 0.0
  %3828 = vmatprep.subr.mxu0 0.0
  %3829 = vmatpush1.msra.mxu0 0.0
  %3830 = vmatprep.subr.mxu0 0.0
  %3831 = vmatpush1.msra.mxu0 0.0
  %3832 = vmatprep.subr.mxu0 0.0
  %3833 = vmatpush1.msra.mxu0 0.0
  %3834 = vmatprep.subr.mxu0 0.0
  %3835 = vmatpush1.msra.mxu0 0.0
  %3836 = vmatprep.subr.mxu0 0.0
  %3837 = vmatpush1.msra.mxu0 0.0
  %3838 = vmatprep.subr.mxu0 0.0
  %3839 = vmatpush1.msra.mxu0 0.0
  %3840 = vmatprep.subr.mxu0 0.0
  %3841 = vmatpush1.msra.mxu0 0.0
  %3842 = vmatprep.subr.mxu0 0.0
  %3843 = vmatpush1.msra.mxu0 0.0
  %3844 = vmatprep.subr.mxu0 0.0
  %3845 = vmatpush1.msra.mxu0 0.0
  %3846 = vmatprep.subr.mxu0 0.0
  %3847 = vmatpush1.msra.mxu0 %v3730
  %3848 = vmatprep.subr.mxu0 0.0
  %3849 = vmatpush1.msra.mxu0 %v3729
  %3850 = vmatprep.subr.mxu0 0.0
  %3851 = vmatpush1.msra.mxu0 %v3728
  %3852 = vmatprep.subr.mxu0 0.0
  %3853 = vmatpush1.msra.mxu0 %v3727
  %3854 = vmatprep.subr.mxu0 0.0
  %3855 = vmatpush2.msra.mxu0 0.0
  %3856 = vmatprep.subr.mxu0 0.0
  %3857 = vmatpush2.msra.mxu0 0.0
  %3858 = vmatprep.subr.mxu0 0.0
  %3859 = vmatpush2.msra.mxu0 0.0
  %3860 = vmatprep.subr.mxu0 0.0
  %3861 = vmatpush2.msra.mxu0 0.0
  %3862 = vmatprep.subr.mxu0 0.0
  %3863 = vmatpush2.msra.mxu0 0.0
  %3864 = vmatprep.subr.mxu0 0.0
  %3865 = vmatpush2.msra.mxu0 0.0
  %3866 = vmatprep.subr.mxu0 0.0
  %3867 = vmatpush2.msra.mxu0 0.0
  %3868 = vmatprep.subr.mxu0 0.0
  %3869 = vmatpush2.msra.mxu0 0.0
  %3870 = vmatprep.subr.mxu0 0.0
  %3871 = vmatpush2.msra.mxu0 0.0
  %3872 = vmatprep.subr.mxu0 0.0
  %3873 = vmatpush2.msra.mxu0 0.0
  %3874 = vmatprep.subr.mxu0 0.0
  %3875 = vmatpush2.msra.mxu0 0.0
  %3876 = vmatprep.subr.mxu0 0.0
  %3877 = vmatpush2.msra.mxu0 0.0
  %3878 = vmatprep.subr.mxu0 0.0
  %3879 = vmatpush2.msra.mxu0 0.0
  %3880 = vmatprep.subr.mxu0 0.0
  %3881 = vmatpush2.msra.mxu0 0.0
  %3882 = vmatprep.subr.mxu0 0.0
  %3883 = vmatpush2.msra.mxu0 0.0
  %3884 = vmatprep.subr.mxu0 0.0
  %3885 = vmatpush2.msra.mxu0 0.0
  %3886 = vmatprep.mubr.f32.mxu0 0.0
  %3887 = vmatmul.mubr.f32.gmra.mxu0 %v3817
  %v3888 = vpop.f32.mrf.mxu0
  %v3889 = vadd.f32 %v3808, %v3888
  %v3890 = vpop.f32.mrf.mxu0
  %3891 = vmatprep.mubr.f32.mxu0 0.0
  %3892 = vmatmul.mubr.f32.gmra.mxu0 %v3820
  %v3893 = vpop.f32.mrf.mxu0
  %v3894 = vadd.f32 %v3813, %v3893
  %v3895 = vpop.f32.mrf.mxu0
  %3896 = vdwg.mxu0
  %v3897 = vld [vmem:[%s5] sm:$0x1]
  %v3899 = vlaneseq
  %v3900 = vshrl.u32 %v3899, 7
  %v3901 = vsub.s32 0, %v3900
  %v3902 = vrot.slane %v3897, %v3901
  %v3904 = vadd.f32 %v3889, %v3902
  %v3905 = vadd.f32 %v3894, %v3902
  %vm3906 = vcmask 31744
  %3907 = vst.msk [vmem:[%s6] sm:$0xff] %vm3906, %v3904
  %3908 = vst.msk [vmem:[%s6 + $0x8] sm:$0xff] %vm3906, %v3905
  // Predicated region
  $region26: #{teacher_forward.3} parent=0 // pred_check
    _
  $region27: #{teacher_forward.3} parent=0 // pred_check_branch
    %3910 = sbr.rel (0) target = $region29
  $region28: #{teacher_forward.3} parent=0 // pred_region
    _
  $region29: #{teacher_forward.3} parent=0 // pred_fallthru
    _
  // Predicated region
  $region30: #{teacher_forward.3} parent=0 // pred_check
    _
  $region31: #{teacher_forward.3} parent=0 // pred_check_branch
    %3912 = sbr.rel (0) target = $region33
  $region32: #{teacher_forward.3} parent=0 // pred_region
    _
  $region33: #{teacher_forward.3} parent=0 // pred_fallthru
    _

</llo_original>
